<compile_context>
chip_gen: v5e
topology: v5e:2x2
jax: 0.10.0
libtpu: 0.0.40
codegen_flags: <defaults>
</compile_context>

<pallas_src>
import functools

import jax
import jax.numpy as jnp
from jax.experimental import pallas as pl
from jax.experimental.pallas import tpu as pltpu

NUM_CHANNELS = 3
NUM_CLASSES = 10
_LRELU_SLOPE = 0.2
_VMEM_LIMIT = 32 * 1024 * 1024


# ------------------------------ helpers ----------------------------------- #
def _batch_tile(batch):
    """Largest batch tile that still leaves a grid of >= 2 steps."""
    for tb in (8, 4, 2):
        if batch % tb == 0 and batch // tb >= 2:
            return tb
    return 1


def _s2d_flat_pad(x_bhwc):
    """(B,H,W,C) -> (B, 4, (Wo+1) + Ho*Wo, C) parity-plane layout (JAX glue).

    plane[rp*2+cp][(Wo+1) + oy*Wo + ox] = x[2*oy+rp, 2*ox+cp]; the first Wo+1
    rows are zeros so every 3x3 stride-2 tap becomes a contiguous slice inside
    the kernel (no strided access, no patch-matrix blowup).
    """
    B, H, W, C = x_bhwc.shape
    Ho, Wo = H // 2, W // 2
    x = x_bhwc.reshape(B, Ho, 2, Wo, 2, C)
    x = jnp.transpose(x, (0, 2, 4, 1, 3, 5))          # (B, rp, cp, Ho, Wo, C)
    x = x.reshape(B, 4, Ho * Wo, C)
    x = jnp.pad(x, ((0, 0), (0, 0), (Wo + 1, 0), (0, 0)))
    return x, Ho, Wo


# --------------------------- Pallas kernels -------------------------------- #
def _conv_kernel(xsp_ref, w_ref, b_ref, o_ref, *, tb, ho, wo, c_in, c_out, slope):
    """Conv2d(k=3, s=2, p=1) + LeakyReLU with im2col fused (9 taps, 2-D dots)."""
    m0 = ho * wo
    m = tb * m0
    acc = jnp.zeros((m, c_out), jnp.float32)       # taps with dx != 0
    acc_left = jnp.zeros((m, c_out), jnp.float32)  # dx == 0 taps (masked once below)
    for dy in range(3):
        row_start = 0 if dy == 0 else wo
        rp = 0 if dy == 1 else 1
        for dx in range(3):
            start = row_start + (0 if dx == 0 else 1)
            cp = 0 if dx == 1 else 1
            tap = xsp_ref[:, rp * 2 + cp, start:start + m0, :]   # (tb, m0, c_in)
            tap2d = tap.reshape(m, c_in)                         # merge sublanes
            contrib = jnp.dot(tap2d, w_ref[dy * 3 + dx],
                              preferred_element_type=jnp.float32)
            if dx == 0:
                acc_left = acc_left + contrib
            else:
                acc = acc + contrib
    # Zero the dx == 0 (left-column) contributions where ox == 0.
    not_left = (jax.lax.broadcasted_iota(jnp.int32, (m, 1), 0) % wo) != 0
    y = acc + jnp.where(not_left, acc_left, 0.0) + b_ref[...]
    y = jnp.where(y > 0, y, slope * y)                           # LeakyReLU(0.2)
    o_ref[...] = y.astype(o_ref.dtype)


def _tail_kernel(xsp_ref, w3_ref, b3_ref, wh_ref, bh_ref, w2_ref, b2_ref, o_ref,
                 *, tb, slope):
    """conv3 (128->256, 4x4->2x2) + LeakyReLU + flatten + disc/aux heads, fused."""
    u = jnp.zeros((tb, 256), jnp.float32)   # fused head: cols 0..127 aux1, col 128 disc
    for pos in range(4):                    # output positions, fully unrolled
        oy, ox = pos // 2, pos % 2
        acc = jnp.zeros((tb, 256), jnp.float32)
        for dy in range(3):
            r = 2 * oy + dy - 1
            if r < 0:                        # top zero-padding row: contributes 0
                continue
            for dx in range(3):
                c = 2 * ox + dx - 1
                if c < 0:                    # left zero-padding col: contributes 0
                    continue
                plane = (r % 2) * 2 + (c % 2)
                idx = 3 + (r // 2) * 2 + (c // 2)      # (Wo+1)=3 pad prefix
                tap = xsp_ref[:, plane, idx, :]        # (tb, 128) bf16
                acc = acc + jnp.dot(tap, w3_ref[dy * 3 + dx],
                                    preferred_element_type=jnp.float32)
        y = acc + b3_ref[...]
        y = jnp.where(y > 0, y, slope * y).astype(jnp.bfloat16)   # (tb, 256)
        # TODO(synk): nn.Dropout(0.6) is the identity at inference; training-mode
        # stochastic dropout (pltpu PRNG) is intentionally not applied here.
        u = u + jnp.dot(y, wh_ref[pos], preferred_element_type=jnp.float32)
    u = u + bh_ref[...]                                           # (tb, 256)

    hidden = jnp.maximum(u[:, 0:128], 0.0).astype(jnp.bfloat16)   # aux1 + ReLU
    lane256 = jax.lax.broadcasted_iota(jnp.int32, (tb, 256), 1)
    disc = jnp.sum(jnp.where(lane256 == 128, u, 0.0), axis=1, keepdims=True)  # (tb,1)

    aux = jnp.dot(hidden, w2_ref[...],
                  preferred_element_type=jnp.float32) + b2_ref[...]           # (tb,128)
    lane128 = jax.lax.broadcasted_iota(jnp.int32, (1, 128), 1)
    # Lane-dense combined output row: cols 0..9 = aux logits, col 10 = disc logit.
    o_ref[:, 0, :] = aux + disc * (lane128 == NUM_CLASSES).astype(jnp.float32)


# ------------------------------ wrappers ----------------------------------- #
def _conv3x3_s2_lrelu(x_bhwc, w9, b, *, slope=_LRELU_SLOPE):
    """Conv2d(k=3, s=2, p=1) + LeakyReLU, im2col fused into the kernel."""
    B, H, W, C_in = x_bhwc.shape
    K_in, C_out = w9.shape[1], w9.shape[2]
    xsp, Ho, Wo = _s2d_flat_pad(x_bhwc.astype(jnp.bfloat16))
    if K_in != C_in:                                     # conv0: pad K 3 -> 8
        xsp = jnp.pad(xsp, ((0, 0), (0, 0), (0, 0), (0, K_in - C_in)))
    tb = _batch_tile(B)
    M0, Lp = Ho * Wo, (Wo + 1) + Ho * Wo
    kernel = functools.partial(_conv_kernel, tb=tb, ho=Ho, wo=Wo,
                               c_in=K_in, c_out=C_out, slope=slope)
    out = pl.pallas_call(
        kernel,
        out_shape=jax.ShapeDtypeStruct((B * M0, C_out), jnp.bfloat16),
        grid=(B // tb,),
        in_specs=[
            pl.BlockSpec((tb, 4, Lp, K_in), lambda i: (i, 0, 0, 0)),
            pl.BlockSpec((9, K_in, C_out), lambda i: (0, 0, 0)),
            pl.BlockSpec((1, C_out), lambda i: (0, 0)),
        ],
        out_specs=pl.BlockSpec((tb * M0, C_out), lambda i: (i, 0)),
        compiler_params=pltpu.CompilerParams(
            dimension_semantics=("parallel",),
            vmem_limit_bytes=_VMEM_LIMIT),
    )(xsp, w9, b)
    return out.reshape(B, Ho, Wo, C_out)


def _tail(x_bhwc, w3, b3, wh, bh, w2, b2, *, slope=_LRELU_SLOPE):
    """Fused conv3 + flatten + disc head + aux head (Linear, ReLU, Linear)."""
    B = x_bhwc.shape[0]
    xsp, _, _ = _s2d_flat_pad(x_bhwc.astype(jnp.bfloat16))   # (B, 4, 7, 128)
    tb = _batch_tile(B)
    kernel = functools.partial(_tail_kernel, tb=tb, slope=slope)
    out = pl.pallas_call(
        kernel,
        out_shape=jax.ShapeDtypeStruct((B, 1, 128), jnp.float32),
        grid=(B // tb,),
        in_specs=[
            pl.BlockSpec((tb, 4, 7, 128), lambda i: (i, 0, 0, 0)),
            pl.BlockSpec((9, 128, 256), lambda i: (0, 0, 0)),
            pl.BlockSpec((1, 256), lambda i: (0, 0)),
            pl.BlockSpec((4, 256, 256), lambda i: (0, 0, 0)),
            pl.BlockSpec((1, 256), lambda i: (0, 0)),
            pl.BlockSpec((128, 128), lambda i: (0, 0)),
            pl.BlockSpec((1, 128), lambda i: (0, 0)),
        ],
        out_specs=pl.BlockSpec((tb, 1, 128), lambda i: (i, 0, 0)),
        compiler_params=pltpu.CompilerParams(
            dimension_semantics=("parallel",),
            vmem_limit_bytes=_VMEM_LIMIT),
    )(xsp, w3, b3, wh, bh, w2, b2)
    disc_logits = out[:, 0, NUM_CLASSES:NUM_CLASSES + 1]
    aux_logits = out[:, 0, 0:NUM_CLASSES]
    return disc_logits, aux_logits


# --------------------------- params (PyTorch layout) ----------------------- #
def init_params(key):
    def u(key, shape, fan_in):
        bound = 1.0 / jnp.sqrt(jnp.float32(fan_in))
        return jax.random.uniform(key, shape, jnp.float32, -bound, bound)

    ks = jax.random.split(key, 14)
    p = {}
    conv_shapes = [(64, NUM_CHANNELS, 3, 3), (128, 64, 3, 3),
                   (128, 128, 3, 3), (256, 128, 3, 3)]
    for i, shp in enumerate(conv_shapes):
        fan_in = shp[1] * shp[2] * shp[3]
        p[f"conv{i}_w"] = u(ks[2 * i], shp, fan_in)              # OIHW
        p[f"conv{i}_b"] = u(ks[2 * i + 1], (shp[0],), fan_in)
    feat = 256 * 2 * 2
    p["disc_w"] = u(ks[8], (feat, 1), feat)                      # (in, out)
    p["disc_b"] = u(ks[9], (1,), feat)
    p["aux1_w"] = u(ks[10], (feat, 128), feat)
    p["aux1_b"] = u(ks[11], (128,), feat)
    p["aux2_w"] = u(ks[12], (128, NUM_CLASSES), 128)
    p["aux2_b"] = u(ks[13], (NUM_CLASSES,), 128)
    return p


def _prepare_params(params):
    """One-time repack of PyTorch-layout params into kernel layouts (bf16)."""
    p = {}
    for i in range(4):
        w = params[f"conv{i}_w"]                                  # (Co, Ci, 3, 3)
        c_out, c_in = w.shape[0], w.shape[1]
        w9 = jnp.transpose(w, (2, 3, 1, 0)).reshape(9, c_in, c_out)
        if c_in % 8:                                              # conv0: 3 -> 8
            w9 = jnp.pad(w9, ((0, 0), (0, (-c_in) % 8), (0, 0)))
        p[f"conv{i}_w"] = w9.astype(jnp.bfloat16)
        p[f"conv{i}_b"] = params[f"conv{i}_b"].reshape(1, c_out).astype(jnp.float32)
    # Fused disc + aux1 head; rows permuted so an NHWC read of the conv3 output
    # matches PyTorch's NCHW Flatten order (feat index = c*4 + pos).
    wh = jnp.concatenate([params["aux1_w"], params["disc_w"]], axis=1)  # (1024,129)
    wh = wh.reshape(256, 4, 129).transpose(1, 0, 2)                      # (4,256,129)
    p["head1_w"] = jnp.pad(wh, ((0, 0), (0, 0), (0, 127))).astype(jnp.bfloat16)
    bh = jnp.concatenate([params["aux1_b"], params["disc_b"]])
    p["head1_b"] = jnp.pad(bh, (0, 127)).reshape(1, 256).astype(jnp.float32)
    p["head2_w"] = jnp.pad(params["aux2_w"],
                           ((0, 0), (0, 128 - NUM_CLASSES))).astype(jnp.bfloat16)
    p["head2_b"] = jnp.pad(params["aux2_b"],
                           (0, 128 - NUM_CLASSES)).reshape(1, 128).astype(jnp.float32)
    return p


# ------------------------------ forward ------------------------------------ #
def discriminator_forward(x_nchw, params):
    kp = _prepare_params(params)
    x = jnp.transpose(x_nchw, (0, 2, 3, 1)).astype(jnp.bfloat16)   # NCHW -> NHWC
    for i in range(3):                                             # conv0..conv2
        x = _conv3x3_s2_lrelu(x, kp[f"conv{i}_w"], kp[f"conv{i}_b"])
    # conv3 + flatten + dropout(identity) + disc/aux heads, fused.
    return _tail(x, kp["conv3_w"], kp["conv3_b"],
                 kp["head1_w"], kp["head1_b"], kp["head2_w"], kp["head2_b"])


if __name__ == "__main__":
    key = jax.random.PRNGKey(0)
    k_x, k_p = jax.random.split(key)
    # Input must be 32x32x3 so four stride-2 convs yield 256*2*2 features.
    x = jax.random.normal(k_x, (2, NUM_CHANNELS, 32, 32), jnp.float32)
    params = init_params(k_p)

    disc_logits, aux_logits = jax.jit(discriminator_forward)(x, params)
    jax.block_until_ready((disc_logits, aux_logits))

    assert disc_logits.shape == (2, 1)
    assert aux_logits.shape == (2, NUM_CLASSES)
    print("KERNEL_OK")
</pallas_src>

<mosaic_0001>
module attributes {stable_mosaic.version = 11 : i64} {
  func.func @_conv_kernel(%arg0: i32, %arg1: memref<1x4x273x8xbf16, #tpu.memory_space<vmem>>, %arg2: memref<9x8x64xbf16, #tpu.memory_space<vmem>>, %arg3: memref<1x64xf32, #tpu.memory_space<vmem>>, %arg4: memref<256x64xbf16, #tpu.memory_space<vmem>>) attributes {dimension_semantics = [#tpu.dimension_semantics<parallel>], iteration_bounds = array<i64: 2>, scalar_prefetch = 0 : i64, scratch_operands = 0 : i64, tpu.core_type = #tpu.core_type<tc>, window_params = [{transform_indices = @transform_0, window_bounds = array<i64: 1, 4, 273, 8>}, {pipeline_mode = #tpu.pipeline_mode<synchronous>, transform_indices = @transform_1, window_bounds = array<i64: 9, 8, 64>}, {pipeline_mode = #tpu.pipeline_mode<synchronous>, transform_indices = @transform_2, window_bounds = array<i64: 1, 64>}, {transform_indices = @transform_3, window_bounds = array<i64: 256, 64>}]} {
    %cst = arith.constant 0.000000e+00 : f32
    %0 = vector.broadcast %cst : f32 to vector<256x64xf32>
    %cst_0 = arith.constant 0.000000e+00 : f32
    %1 = vector.broadcast %cst_0 : f32 to vector<256x64xf32>
    %c0 = arith.constant 0 : index
    %c3 = arith.constant 3 : index
    %c0_1 = arith.constant 0 : index
    %c0_2 = arith.constant 0 : index
    %2 = vector.load %arg1[%c0, %c3, %c0_1, %c0_2] : memref<1x4x273x8xbf16, #tpu.memory_space<vmem>>, vector<1x1x256x8xbf16>
    %3 = vector.shape_cast %2 : vector<1x1x256x8xbf16> to vector<1x256x8xbf16>
    %4 = vector.shape_cast %3 : vector<1x256x8xbf16> to vector<256x8xbf16>
    %c0_3 = arith.constant 0 : index
    %c0_4 = arith.constant 0 : index
    %c0_5 = arith.constant 0 : index
    %5 = vector.load %arg2[%c0_3, %c0_4, %c0_5] : memref<9x8x64xbf16, #tpu.memory_space<vmem>>, vector<1x8x64xbf16>
    %6 = vector.shape_cast %5 : vector<1x8x64xbf16> to vector<8x64xbf16>
    %cst_6 = arith.constant dense<0.000000e+00> : vector<256x64xf32>
    %7 = tpu.matmul %4, %6, %cst_6 {dimension_numbers = #tpu.dot_dimension_numbers<[1], [0], [0], [1], [0, 0, 1, 1], [], []>} : vector<256x8xbf16>, vector<8x64xbf16>, vector<256x64xf32> -> vector<256x64xf32>
    %8 = arith.addf %1, %7 : vector<256x64xf32>
    %c0_7 = arith.constant 0 : index
    %c2 = arith.constant 2 : index
    %c1 = arith.constant 1 : index
    %c0_8 = arith.constant 0 : index
    %9 = vector.load %arg1[%c0_7, %c2, %c1, %c0_8] : memref<1x4x273x8xbf16, #tpu.memory_space<vmem>>, vector<1x1x256x8xbf16>
    %10 = vector.shape_cast %9 : vector<1x1x256x8xbf16> to vector<1x256x8xbf16>
    %11 = vector.shape_cast %10 : vector<1x256x8xbf16> to vector<256x8xbf16>
    %c1_9 = arith.constant 1 : index
    %c0_10 = arith.constant 0 : index
    %c0_11 = arith.constant 0 : index
    %12 = vector.load %arg2[%c1_9, %c0_10, %c0_11] : memref<9x8x64xbf16, #tpu.memory_space<vmem>>, vector<1x8x64xbf16>
    %13 = vector.shape_cast %12 : vector<1x8x64xbf16> to vector<8x64xbf16>
    %cst_12 = arith.constant dense<0.000000e+00> : vector<256x64xf32>
    %14 = tpu.matmul %11, %13, %cst_12 {dimension_numbers = #tpu.dot_dimension_numbers<[1], [0], [0], [1], [0, 0, 1, 1], [], []>} : vector<256x8xbf16>, vector<8x64xbf16>, vector<256x64xf32> -> vector<256x64xf32>
    %15 = arith.addf %0, %14 : vector<256x64xf32>
    %c0_13 = arith.constant 0 : index
    %c3_14 = arith.constant 3 : index
    %c1_15 = arith.constant 1 : index
    %c0_16 = arith.constant 0 : index
    %16 = vector.load %arg1[%c0_13, %c3_14, %c1_15, %c0_16] : memref<1x4x273x8xbf16, #tpu.memory_space<vmem>>, vector<1x1x256x8xbf16>
    %17 = vector.shape_cast %16 : vector<1x1x256x8xbf16> to vector<1x256x8xbf16>
    %18 = vector.shape_cast %17 : vector<1x256x8xbf16> to vector<256x8xbf16>
    %c2_17 = arith.constant 2 : index
    %c0_18 = arith.constant 0 : index
    %c0_19 = arith.constant 0 : index
    %19 = vector.load %arg2[%c2_17, %c0_18, %c0_19] : memref<9x8x64xbf16, #tpu.memory_space<vmem>>, vector<1x8x64xbf16>
    %20 = vector.shape_cast %19 : vector<1x8x64xbf16> to vector<8x64xbf16>
    %cst_20 = arith.constant dense<0.000000e+00> : vector<256x64xf32>
    %21 = tpu.matmul %18, %20, %cst_20 {dimension_numbers = #tpu.dot_dimension_numbers<[1], [0], [0], [1], [0, 0, 1, 1], [], []>} : vector<256x8xbf16>, vector<8x64xbf16>, vector<256x64xf32> -> vector<256x64xf32>
    %22 = arith.addf %15, %21 : vector<256x64xf32>
    %c0_21 = arith.constant 0 : index
    %c1_22 = arith.constant 1 : index
    %c16 = arith.constant 16 : index
    %c0_23 = arith.constant 0 : index
    %23 = vector.load %arg1[%c0_21, %c1_22, %c16, %c0_23] : memref<1x4x273x8xbf16, #tpu.memory_space<vmem>>, vector<1x1x256x8xbf16>
    %24 = vector.shape_cast %23 : vector<1x1x256x8xbf16> to vector<1x256x8xbf16>
    %25 = vector.shape_cast %24 : vector<1x256x8xbf16> to vector<256x8xbf16>
    %c3_24 = arith.constant 3 : index
    %c0_25 = arith.constant 0 : index
    %c0_26 = arith.constant 0 : index
    %26 = vector.load %arg2[%c3_24, %c0_25, %c0_26] : memref<9x8x64xbf16, #tpu.memory_space<vmem>>, vector<1x8x64xbf16>
    %27 = vector.shape_cast %26 : vector<1x8x64xbf16> to vector<8x64xbf16>
    %cst_27 = arith.constant dense<0.000000e+00> : vector<256x64xf32>
    %28 = tpu.matmul %25, %27, %cst_27 {dimension_numbers = #tpu.dot_dimension_numbers<[1], [0], [0], [1], [0, 0, 1, 1], [], []>} : vector<256x8xbf16>, vector<8x64xbf16>, vector<256x64xf32> -> vector<256x64xf32>
    %29 = arith.addf %8, %28 : vector<256x64xf32>
    %c0_28 = arith.constant 0 : index
    %c0_29 = arith.constant 0 : index
    %c17 = arith.constant 17 : index
    %c0_30 = arith.constant 0 : index
    %30 = vector.load %arg1[%c0_28, %c0_29, %c17, %c0_30] : memref<1x4x273x8xbf16, #tpu.memory_space<vmem>>, vector<1x1x256x8xbf16>
    %31 = vector.shape_cast %30 : vector<1x1x256x8xbf16> to vector<1x256x8xbf16>
    %32 = vector.shape_cast %31 : vector<1x256x8xbf16> to vector<256x8xbf16>
    %c4 = arith.constant 4 : index
    %c0_31 = arith.constant 0 : index
    %c0_32 = arith.constant 0 : index
    %33 = vector.load %arg2[%c4, %c0_31, %c0_32] : memref<9x8x64xbf16, #tpu.memory_space<vmem>>, vector<1x8x64xbf16>
    %34 = vector.shape_cast %33 : vector<1x8x64xbf16> to vector<8x64xbf16>
    %cst_33 = arith.constant dense<0.000000e+00> : vector<256x64xf32>
    %35 = tpu.matmul %32, %34, %cst_33 {dimension_numbers = #tpu.dot_dimension_numbers<[1], [0], [0], [1], [0, 0, 1, 1], [], []>} : vector<256x8xbf16>, vector<8x64xbf16>, vector<256x64xf32> -> vector<256x64xf32>
    %36 = arith.addf %22, %35 : vector<256x64xf32>
    %c0_34 = arith.constant 0 : index
    %c1_35 = arith.constant 1 : index
    %c17_36 = arith.constant 17 : index
    %c0_37 = arith.constant 0 : index
    %37 = vector.load %arg1[%c0_34, %c1_35, %c17_36, %c0_37] : memref<1x4x273x8xbf16, #tpu.memory_space<vmem>>, vector<1x1x256x8xbf16>
    %38 = vector.shape_cast %37 : vector<1x1x256x8xbf16> to vector<1x256x8xbf16>
    %39 = vector.shape_cast %38 : vector<1x256x8xbf16> to vector<256x8xbf16>
    %c5 = arith.constant 5 : index
    %c0_38 = arith.constant 0 : index
    %c0_39 = arith.constant 0 : index
    %40 = vector.load %arg2[%c5, %c0_38, %c0_39] : memref<9x8x64xbf16, #tpu.memory_space<vmem>>, vector<1x8x64xbf16>
    %41 = vector.shape_cast %40 : vector<1x8x64xbf16> to vector<8x64xbf16>
    %cst_40 = arith.constant dense<0.000000e+00> : vector<256x64xf32>
    %42 = tpu.matmul %39, %41, %cst_40 {dimension_numbers = #tpu.dot_dimension_numbers<[1], [0], [0], [1], [0, 0, 1, 1], [], []>} : vector<256x8xbf16>, vector<8x64xbf16>, vector<256x64xf32> -> vector<256x64xf32>
    %43 = arith.addf %36, %42 : vector<256x64xf32>
    %c0_41 = arith.constant 0 : index
    %c3_42 = arith.constant 3 : index
    %c16_43 = arith.constant 16 : index
    %c0_44 = arith.constant 0 : index
    %44 = vector.load %arg1[%c0_41, %c3_42, %c16_43, %c0_44] : memref<1x4x273x8xbf16, #tpu.memory_space<vmem>>, vector<1x1x256x8xbf16>
    %45 = vector.shape_cast %44 : vector<1x1x256x8xbf16> to vector<1x256x8xbf16>
    %46 = vector.shape_cast %45 : vector<1x256x8xbf16> to vector<256x8xbf16>
    %c6 = arith.constant 6 : index
    %c0_45 = arith.constant 0 : index
    %c0_46 = arith.constant 0 : index
    %47 = vector.load %arg2[%c6, %c0_45, %c0_46] : memref<9x8x64xbf16, #tpu.memory_space<vmem>>, vector<1x8x64xbf16>
    %48 = vector.shape_cast %47 : vector<1x8x64xbf16> to vector<8x64xbf16>
    %cst_47 = arith.constant dense<0.000000e+00> : vector<256x64xf32>
    %49 = tpu.matmul %46, %48, %cst_47 {dimension_numbers = #tpu.dot_dimension_numbers<[1], [0], [0], [1], [0, 0, 1, 1], [], []>} : vector<256x8xbf16>, vector<8x64xbf16>, vector<256x64xf32> -> vector<256x64xf32>
    %50 = arith.addf %29, %49 : vector<256x64xf32>
    %c0_48 = arith.constant 0 : index
    %c2_49 = arith.constant 2 : index
    %c17_50 = arith.constant 17 : index
    %c0_51 = arith.constant 0 : index
    %51 = vector.load %arg1[%c0_48, %c2_49, %c17_50, %c0_51] : memref<1x4x273x8xbf16, #tpu.memory_space<vmem>>, vector<1x1x256x8xbf16>
    %52 = vector.shape_cast %51 : vector<1x1x256x8xbf16> to vector<1x256x8xbf16>
    %53 = vector.shape_cast %52 : vector<1x256x8xbf16> to vector<256x8xbf16>
    %c7 = arith.constant 7 : index
    %c0_52 = arith.constant 0 : index
    %c0_53 = arith.constant 0 : index
    %54 = vector.load %arg2[%c7, %c0_52, %c0_53] : memref<9x8x64xbf16, #tpu.memory_space<vmem>>, vector<1x8x64xbf16>
    %55 = vector.shape_cast %54 : vector<1x8x64xbf16> to vector<8x64xbf16>
    %cst_54 = arith.constant dense<0.000000e+00> : vector<256x64xf32>
    %56 = tpu.matmul %53, %55, %cst_54 {dimension_numbers = #tpu.dot_dimension_numbers<[1], [0], [0], [1], [0, 0, 1, 1], [], []>} : vector<256x8xbf16>, vector<8x64xbf16>, vector<256x64xf32> -> vector<256x64xf32>
    %57 = arith.addf %43, %56 : vector<256x64xf32>
    %c0_55 = arith.constant 0 : index
    %c3_56 = arith.constant 3 : index
    %c17_57 = arith.constant 17 : index
    %c0_58 = arith.constant 0 : index
    %58 = vector.load %arg1[%c0_55, %c3_56, %c17_57, %c0_58] : memref<1x4x273x8xbf16, #tpu.memory_space<vmem>>, vector<1x1x256x8xbf16>
    %59 = vector.shape_cast %58 : vector<1x1x256x8xbf16> to vector<1x256x8xbf16>
    %60 = vector.shape_cast %59 : vector<1x256x8xbf16> to vector<256x8xbf16>
    %c8 = arith.constant 8 : index
    %c0_59 = arith.constant 0 : index
    %c0_60 = arith.constant 0 : index
    %61 = vector.load %arg2[%c8, %c0_59, %c0_60] : memref<9x8x64xbf16, #tpu.memory_space<vmem>>, vector<1x8x64xbf16>
    %62 = vector.shape_cast %61 : vector<1x8x64xbf16> to vector<8x64xbf16>
    %cst_61 = arith.constant dense<0.000000e+00> : vector<256x64xf32>
    %63 = tpu.matmul %60, %62, %cst_61 {dimension_numbers = #tpu.dot_dimension_numbers<[1], [0], [0], [1], [0, 0, 1, 1], [], []>} : vector<256x8xbf16>, vector<8x64xbf16>, vector<256x64xf32> -> vector<256x64xf32>
    %64 = arith.addf %57, %63 : vector<256x64xf32>
    %65 = tpu.iota {dimensions = array<i32: 0>} : vector<256x1xi32>
    %c16_i32 = arith.constant 16 : i32
    %c0_i32 = arith.constant 0 : i32
    %66 = arith.cmpi eq, %c16_i32, %c0_i32 : i32
    %c1_i32 = arith.constant 1 : i32
    %67 = arith.select %66, %c1_i32, %c16_i32 : i32
    %68 = vector.broadcast %67 : i32 to vector<256x1xi32>
    %69 = arith.remsi %65, %68 : vector<256x1xi32>
    %c0_i32_62 = arith.constant 0 : i32
    %70 = vector.broadcast %c0_i32_62 : i32 to vector<256x1xi32>
    %71 = arith.cmpi ne, %69, %70 : vector<256x1xi32>
    %c0_i32_63 = arith.constant 0 : i32
    %72 = vector.broadcast %c0_i32_63 : i32 to vector<256x1xi32>
    %73 = arith.cmpi slt, %69, %72 : vector<256x1xi32>
    %c0_i32_64 = arith.constant 0 : i32
    %74 = arith.cmpi slt, %67, %c0_i32_64 : i32
    %75 = vector.broadcast %74 : i1 to vector<256x1xi1>
    %76 = vector.broadcast %75 : vector<256x1xi1> to vector<256x1xi1>
    %77 = arith.xori %73, %76 : vector<256x1xi1>
    %78 = arith.andi %77, %71 : vector<256x1xi1>
    %79 = vector.broadcast %67 : i32 to vector<256x1xi32>
    %80 = arith.addi %69, %79 : vector<256x1xi32>
    %81 = arith.select %78, %80, %69 : vector<256x1xi1>, vector<256x1xi32>
    %c0_i32_65 = arith.constant 0 : i32
    %82 = vector.broadcast %c0_i32_65 : i32 to vector<256x1xi32>
    %83 = arith.cmpi ne, %81, %82 : vector<256x1xi32>
    %cst_66 = arith.constant 0.000000e+00 : f32
    %84 = vector.shape_cast %83 : vector<256x1xi1> to vector<256x1xi1>
    %85 = vector.broadcast %84 : vector<256x1xi1> to vector<256x64xi1>
    %86 = vector.broadcast %cst_66 : f32 to vector<256x64xf32>
    %87 = arith.select %85, %50, %86 : vector<256x64xi1>, vector<256x64xf32>
    %88 = arith.addf %64, %87 : vector<256x64xf32>
    %c0_67 = arith.constant 0 : index
    %c0_68 = arith.constant 0 : index
    %89 = vector.load %arg3[%c0_67, %c0_68] : memref<1x64xf32, #tpu.memory_space<vmem>>, vector<1x64xf32>
    %90 = vector.broadcast %89 : vector<1x64xf32> to vector<256x64xf32>
    %91 = arith.addf %88, %90 : vector<256x64xf32>
    %cst_69 = arith.constant 0.000000e+00 : f32
    %92 = vector.broadcast %cst_69 : f32 to vector<256x64xf32>
    %93 = arith.cmpf ogt, %91, %92 : vector<256x64xf32>
    %cst_70 = arith.constant 2.000000e-01 : f32
    %94 = vector.broadcast %cst_70 : f32 to vector<256x64xf32>
    %95 = arith.mulf %94, %91 : vector<256x64xf32>
    %96 = arith.select %93, %91, %95 : vector<256x64xi1>, vector<256x64xf32>
    %97 = arith.truncf %96 : vector<256x64xf32> to vector<256x64xbf16>
    %c0_71 = arith.constant 0 : index
    %c0_72 = arith.constant 0 : index
    %98 = vector.load %arg4[%c0_71, %c0_72] : memref<256x64xbf16, #tpu.memory_space<vmem>>, vector<256x64xbf16>
    tpu.vector_store %arg4[%c0_71, %c0_72], %97 {strides = array<i32>} : memref<256x64xbf16, #tpu.memory_space<vmem>>, vector<256x64xbf16>,
    return
  }
  func.func @transform_0(%arg0: i32) -> (i32, i32, i32, i32) {
    %c0_i32 = arith.constant 0 : i32
    %c0_i32_0 = arith.constant 0 : i32
    %c0_i32_1 = arith.constant 0 : i32
    %c0_i32_2 = arith.constant 0 : i32
    return %arg0, %c0_i32, %c0_i32_0, %c0_i32_1 : i32, i32, i32, i32
  }
  func.func @transform_1(%arg0: i32) -> (i32, i32, i32) {
    %c0_i32 = arith.constant 0 : i32
    %c0_i32_0 = arith.constant 0 : i32
    %c0_i32_1 = arith.constant 0 : i32
    %c0_i32_2 = arith.constant 0 : i32
    return %c0_i32, %c0_i32_0, %c0_i32_1 : i32, i32, i32
  }
  func.func @transform_2(%arg0: i32) -> (i32, i32) {
    %c0_i32 = arith.constant 0 : i32
    %c0_i32_0 = arith.constant 0 : i32
    %c0_i32_1 = arith.constant 0 : i32
    return %c0_i32, %c0_i32_0 : i32, i32
  }
  func.func @transform_3(%arg0: i32) -> (i32, i32) {
    %c0_i32 = arith.constant 0 : i32
    %c0_i32_0 = arith.constant 0 : i32
    return %arg0, %c0_i32 : i32, i32
  }
}

module attributes {stable_mosaic.version = 11 : i64} {
  func.func @_conv_kernel(%arg0: i32, %arg1: memref<1x4x73x64xbf16, #tpu.memory_space<vmem>>, %arg2: memref<9x64x128xbf16, #tpu.memory_space<vmem>>, %arg3: memref<1x128xf32, #tpu.memory_space<vmem>>, %arg4: memref<64x128xbf16, #tpu.memory_space<vmem>>) attributes {dimension_semantics = [#tpu.dimension_semantics<parallel>], iteration_bounds = array<i64: 2>, scalar_prefetch = 0 : i64, scratch_operands = 0 : i64, tpu.core_type = #tpu.core_type<tc>, window_params = [{transform_indices = @transform_0, window_bounds = array<i64: 1, 4, 73, 64>}, {pipeline_mode = #tpu.pipeline_mode<synchronous>, transform_indices = @transform_1, window_bounds = array<i64: 9, 64, 128>}, {pipeline_mode = #tpu.pipeline_mode<synchronous>, transform_indices = @transform_2, window_bounds = array<i64: 1, 128>}, {transform_indices = @transform_3, window_bounds = array<i64: 64, 128>}]} {
    %cst = arith.constant 0.000000e+00 : f32
    %0 = vector.broadcast %cst : f32 to vector<64x128xf32>
    %cst_0 = arith.constant 0.000000e+00 : f32
    %1 = vector.broadcast %cst_0 : f32 to vector<64x128xf32>
    %c0 = arith.constant 0 : index
    %c3 = arith.constant 3 : index
    %c0_1 = arith.constant 0 : index
    %c0_2 = arith.constant 0 : index
    %2 = vector.load %arg1[%c0, %c3, %c0_1, %c0_2] : memref<1x4x73x64xbf16, #tpu.memory_space<vmem>>, vector<1x1x64x64xbf16>
    %3 = vector.shape_cast %2 : vector<1x1x64x64xbf16> to vector<1x64x64xbf16>
    %4 = vector.shape_cast %3 : vector<1x64x64xbf16> to vector<64x64xbf16>
    %c0_3 = arith.constant 0 : index
    %c0_4 = arith.constant 0 : index
    %c0_5 = arith.constant 0 : index
    %5 = vector.load %arg2[%c0_3, %c0_4, %c0_5] : memref<9x64x128xbf16, #tpu.memory_space<vmem>>, vector<1x64x128xbf16>
    %6 = vector.shape_cast %5 : vector<1x64x128xbf16> to vector<64x128xbf16>
    %cst_6 = arith.constant dense<0.000000e+00> : vector<64x128xf32>
    %7 = tpu.matmul %4, %6, %cst_6 {dimension_numbers = #tpu.dot_dimension_numbers<[1], [0], [0], [1], [0, 0, 1, 1], [], []>} : vector<64x64xbf16>, vector<64x128xbf16>, vector<64x128xf32> -> vector<64x128xf32>
    %8 = arith.addf %1, %7 : vector<64x128xf32>
    %c0_7 = arith.constant 0 : index
    %c2 = arith.constant 2 : index
    %c1 = arith.constant 1 : index
    %c0_8 = arith.constant 0 : index
    %9 = vector.load %arg1[%c0_7, %c2, %c1, %c0_8] : memref<1x4x73x64xbf16, #tpu.memory_space<vmem>>, vector<1x1x64x64xbf16>
    %10 = vector.shape_cast %9 : vector<1x1x64x64xbf16> to vector<1x64x64xbf16>
    %11 = vector.shape_cast %10 : vector<1x64x64xbf16> to vector<64x64xbf16>
    %c1_9 = arith.constant 1 : index
    %c0_10 = arith.constant 0 : index
    %c0_11 = arith.constant 0 : index
    %12 = vector.load %arg2[%c1_9, %c0_10, %c0_11] : memref<9x64x128xbf16, #tpu.memory_space<vmem>>, vector<1x64x128xbf16>
    %13 = vector.shape_cast %12 : vector<1x64x128xbf16> to vector<64x128xbf16>
    %cst_12 = arith.constant dense<0.000000e+00> : vector<64x128xf32>
    %14 = tpu.matmul %11, %13, %cst_12 {dimension_numbers = #tpu.dot_dimension_numbers<[1], [0], [0], [1], [0, 0, 1, 1], [], []>} : vector<64x64xbf16>, vector<64x128xbf16>, vector<64x128xf32> -> vector<64x128xf32>
    %15 = arith.addf %0, %14 : vector<64x128xf32>
    %c0_13 = arith.constant 0 : index
    %c3_14 = arith.constant 3 : index
    %c1_15 = arith.constant 1 : index
    %c0_16 = arith.constant 0 : index
    %16 = vector.load %arg1[%c0_13, %c3_14, %c1_15, %c0_16] : memref<1x4x73x64xbf16, #tpu.memory_space<vmem>>, vector<1x1x64x64xbf16>
    %17 = vector.shape_cast %16 : vector<1x1x64x64xbf16> to vector<1x64x64xbf16>
    %18 = vector.shape_cast %17 : vector<1x64x64xbf16> to vector<64x64xbf16>
    %c2_17 = arith.constant 2 : index
    %c0_18 = arith.constant 0 : index
    %c0_19 = arith.constant 0 : index
    %19 = vector.load %arg2[%c2_17, %c0_18, %c0_19] : memref<9x64x128xbf16, #tpu.memory_space<vmem>>, vector<1x64x128xbf16>
    %20 = vector.shape_cast %19 : vector<1x64x128xbf16> to vector<64x128xbf16>
    %cst_20 = arith.constant dense<0.000000e+00> : vector<64x128xf32>
    %21 = tpu.matmul %18, %20, %cst_20 {dimension_numbers = #tpu.dot_dimension_numbers<[1], [0], [0], [1], [0, 0, 1, 1], [], []>} : vector<64x64xbf16>, vector<64x128xbf16>, vector<64x128xf32> -> vector<64x128xf32>
    %22 = arith.addf %15, %21 : vector<64x128xf32>
    %c0_21 = arith.constant 0 : index
    %c1_22 = arith.constant 1 : index
    %c8 = arith.constant 8 : index
    %c0_23 = arith.constant 0 : index
    %23 = vector.load %arg1[%c0_21, %c1_22, %c8, %c0_23] : memref<1x4x73x64xbf16, #tpu.memory_space<vmem>>, vector<1x1x64x64xbf16>
    %24 = vector.shape_cast %23 : vector<1x1x64x64xbf16> to vector<1x64x64xbf16>
    %25 = vector.shape_cast %24 : vector<1x64x64xbf16> to vector<64x64xbf16>
    %c3_24 = arith.constant 3 : index
    %c0_25 = arith.constant 0 : index
    %c0_26 = arith.constant 0 : index
    %26 = vector.load %arg2[%c3_24, %c0_25, %c0_26] : memref<9x64x128xbf16, #tpu.memory_space<vmem>>, vector<1x64x128xbf16>
    %27 = vector.shape_cast %26 : vector<1x64x128xbf16> to vector<64x128xbf16>
    %cst_27 = arith.constant dense<0.000000e+00> : vector<64x128xf32>
    %28 = tpu.matmul %25, %27, %cst_27 {dimension_numbers = #tpu.dot_dimension_numbers<[1], [0], [0], [1], [0, 0, 1, 1], [], []>} : vector<64x64xbf16>, vector<64x128xbf16>, vector<64x128xf32> -> vector<64x128xf32>
    %29 = arith.addf %8, %28 : vector<64x128xf32>
    %c0_28 = arith.constant 0 : index
    %c0_29 = arith.constant 0 : index
    %c9 = arith.constant 9 : index
    %c0_30 = arith.constant 0 : index
    %30 = vector.load %arg1[%c0_28, %c0_29, %c9, %c0_30] : memref<1x4x73x64xbf16, #tpu.memory_space<vmem>>, vector<1x1x64x64xbf16>
    %31 = vector.shape_cast %30 : vector<1x1x64x64xbf16> to vector<1x64x64xbf16>
    %32 = vector.shape_cast %31 : vector<1x64x64xbf16> to vector<64x64xbf16>
    %c4 = arith.constant 4 : index
    %c0_31 = arith.constant 0 : index
    %c0_32 = arith.constant 0 : index
    %33 = vector.load %arg2[%c4, %c0_31, %c0_32] : memref<9x64x128xbf16, #tpu.memory_space<vmem>>, vector<1x64x128xbf16>
    %34 = vector.shape_cast %33 : vector<1x64x128xbf16> to vector<64x128xbf16>
    %cst_33 = arith.constant dense<0.000000e+00> : vector<64x128xf32>
    %35 = tpu.matmul %32, %34, %cst_33 {dimension_numbers = #tpu.dot_dimension_numbers<[1], [0], [0], [1], [0, 0, 1, 1], [], []>} : vector<64x64xbf16>, vector<64x128xbf16>, vector<64x128xf32> -> vector<64x128xf32>
    %36 = arith.addf %22, %35 : vector<64x128xf32>
    %c0_34 = arith.constant 0 : index
    %c1_35 = arith.constant 1 : index
    %c9_36 = arith.constant 9 : index
    %c0_37 = arith.constant 0 : index
    %37 = vector.load %arg1[%c0_34, %c1_35, %c9_36, %c0_37] : memref<1x4x73x64xbf16, #tpu.memory_space<vmem>>, vector<1x1x64x64xbf16>
    %38 = vector.shape_cast %37 : vector<1x1x64x64xbf16> to vector<1x64x64xbf16>
    %39 = vector.shape_cast %38 : vector<1x64x64xbf16> to vector<64x64xbf16>
    %c5 = arith.constant 5 : index
    %c0_38 = arith.constant 0 : index
    %c0_39 = arith.constant 0 : index
    %40 = vector.load %arg2[%c5, %c0_38, %c0_39] : memref<9x64x128xbf16, #tpu.memory_space<vmem>>, vector<1x64x128xbf16>
    %41 = vector.shape_cast %40 : vector<1x64x128xbf16> to vector<64x128xbf16>
    %cst_40 = arith.constant dense<0.000000e+00> : vector<64x128xf32>
    %42 = tpu.matmul %39, %41, %cst_40 {dimension_numbers = #tpu.dot_dimension_numbers<[1], [0], [0], [1], [0, 0, 1, 1], [], []>} : vector<64x64xbf16>, vector<64x128xbf16>, vector<64x128xf32> -> vector<64x128xf32>
    %43 = arith.addf %36, %42 : vector<64x128xf32>
    %c0_41 = arith.constant 0 : index
    %c3_42 = arith.constant 3 : index
    %c8_43 = arith.constant 8 : index
    %c0_44 = arith.constant 0 : index
    %44 = vector.load %arg1[%c0_41, %c3_42, %c8_43, %c0_44] : memref<1x4x73x64xbf16, #tpu.memory_space<vmem>>, vector<1x1x64x64xbf16>
    %45 = vector.shape_cast %44 : vector<1x1x64x64xbf16> to vector<1x64x64xbf16>
    %46 = vector.shape_cast %45 : vector<1x64x64xbf16> to vector<64x64xbf16>
    %c6 = arith.constant 6 : index
    %c0_45 = arith.constant 0 : index
    %c0_46 = arith.constant 0 : index
    %47 = vector.load %arg2[%c6, %c0_45, %c0_46] : memref<9x64x128xbf16, #tpu.memory_space<vmem>>, vector<1x64x128xbf16>
    %48 = vector.shape_cast %47 : vector<1x64x128xbf16> to vector<64x128xbf16>
    %cst_47 = arith.constant dense<0.000000e+00> : vector<64x128xf32>
    %49 = tpu.matmul %46, %48, %cst_47 {dimension_numbers = #tpu.dot_dimension_numbers<[1], [0], [0], [1], [0, 0, 1, 1], [], []>} : vector<64x64xbf16>, vector<64x128xbf16>, vector<64x128xf32> -> vector<64x128xf32>
    %50 = arith.addf %29, %49 : vector<64x128xf32>
    %c0_48 = arith.constant 0 : index
    %c2_49 = arith.constant 2 : index
    %c9_50 = arith.constant 9 : index
    %c0_51 = arith.constant 0 : index
    %51 = vector.load %arg1[%c0_48, %c2_49, %c9_50, %c0_51] : memref<1x4x73x64xbf16, #tpu.memory_space<vmem>>, vector<1x1x64x64xbf16>
    %52 = vector.shape_cast %51 : vector<1x1x64x64xbf16> to vector<1x64x64xbf16>
    %53 = vector.shape_cast %52 : vector<1x64x64xbf16> to vector<64x64xbf16>
    %c7 = arith.constant 7 : index
    %c0_52 = arith.constant 0 : index
    %c0_53 = arith.constant 0 : index
    %54 = vector.load %arg2[%c7, %c0_52, %c0_53] : memref<9x64x128xbf16, #tpu.memory_space<vmem>>, vector<1x64x128xbf16>
    %55 = vector.shape_cast %54 : vector<1x64x128xbf16> to vector<64x128xbf16>
    %cst_54 = arith.constant dense<0.000000e+00> : vector<64x128xf32>
    %56 = tpu.matmul %53, %55, %cst_54 {dimension_numbers = #tpu.dot_dimension_numbers<[1], [0], [0], [1], [0, 0, 1, 1], [], []>} : vector<64x64xbf16>, vector<64x128xbf16>, vector<64x128xf32> -> vector<64x128xf32>
    %57 = arith.addf %43, %56 : vector<64x128xf32>
    %c0_55 = arith.constant 0 : index
    %c3_56 = arith.constant 3 : index
    %c9_57 = arith.constant 9 : index
    %c0_58 = arith.constant 0 : index
    %58 = vector.load %arg1[%c0_55, %c3_56, %c9_57, %c0_58] : memref<1x4x73x64xbf16, #tpu.memory_space<vmem>>, vector<1x1x64x64xbf16>
    %59 = vector.shape_cast %58 : vector<1x1x64x64xbf16> to vector<1x64x64xbf16>
    %60 = vector.shape_cast %59 : vector<1x64x64xbf16> to vector<64x64xbf16>
    %c8_59 = arith.constant 8 : index
    %c0_60 = arith.constant 0 : index
    %c0_61 = arith.constant 0 : index
    %61 = vector.load %arg2[%c8_59, %c0_60, %c0_61] : memref<9x64x128xbf16, #tpu.memory_space<vmem>>, vector<1x64x128xbf16>
    %62 = vector.shape_cast %61 : vector<1x64x128xbf16> to vector<64x128xbf16>
    %cst_62 = arith.constant dense<0.000000e+00> : vector<64x128xf32>
    %63 = tpu.matmul %60, %62, %cst_62 {dimension_numbers = #tpu.dot_dimension_numbers<[1], [0], [0], [1], [0, 0, 1, 1], [], []>} : vector<64x64xbf16>, vector<64x128xbf16>, vector<64x128xf32> -> vector<64x128xf32>
    %64 = arith.addf %57, %63 : vector<64x128xf32>
    %65 = tpu.iota {dimensions = array<i32: 0>} : vector<64x1xi32>
    %c8_i32 = arith.constant 8 : i32
    %c0_i32 = arith.constant 0 : i32
    %66 = arith.cmpi eq, %c8_i32, %c0_i32 : i32
    %c1_i32 = arith.constant 1 : i32
    %67 = arith.select %66, %c1_i32, %c8_i32 : i32
    %68 = vector.broadcast %67 : i32 to vector<64x1xi32>
    %69 = arith.remsi %65, %68 : vector<64x1xi32>
    %c0_i32_63 = arith.constant 0 : i32
    %70 = vector.broadcast %c0_i32_63 : i32 to vector<64x1xi32>
    %71 = arith.cmpi ne, %69, %70 : vector<64x1xi32>
    %c0_i32_64 = arith.constant 0 : i32
    %72 = vector.broadcast %c0_i32_64 : i32 to vector<64x1xi32>
    %73 = arith.cmpi slt, %69, %72 : vector<64x1xi32>
    %c0_i32_65 = arith.constant 0 : i32
    %74 = arith.cmpi slt, %67, %c0_i32_65 : i32
    %75 = vector.broadcast %74 : i1 to vector<64x1xi1>
    %76 = vector.broadcast %75 : vector<64x1xi1> to vector<64x1xi1>
    %77 = arith.xori %73, %76 : vector<64x1xi1>
    %78 = arith.andi %77, %71 : vector<64x1xi1>
    %79 = vector.broadcast %67 : i32 to vector<64x1xi32>
    %80 = arith.addi %69, %79 : vector<64x1xi32>
    %81 = arith.select %78, %80, %69 : vector<64x1xi1>, vector<64x1xi32>
    %c0_i32_66 = arith.constant 0 : i32
    %82 = vector.broadcast %c0_i32_66 : i32 to vector<64x1xi32>
    %83 = arith.cmpi ne, %81, %82 : vector<64x1xi32>
    %cst_67 = arith.constant 0.000000e+00 : f32
    %84 = vector.shape_cast %83 : vector<64x1xi1> to vector<64x1xi1>
    %85 = vector.broadcast %84 : vector<64x1xi1> to vector<64x128xi1>
    %86 = vector.broadcast %cst_67 : f32 to vector<64x128xf32>
    %87 = arith.select %85, %50, %86 : vector<64x128xi1>, vector<64x128xf32>
    %88 = arith.addf %64, %87 : vector<64x128xf32>
    %c0_68 = arith.constant 0 : index
    %c0_69 = arith.constant 0 : index
    %89 = vector.load %arg3[%c0_68, %c0_69] : memref<1x128xf32, #tpu.memory_space<vmem>>, vector<1x128xf32>
    %90 = vector.broadcast %89 : vector<1x128xf32> to vector<64x128xf32>
    %91 = arith.addf %88, %90 : vector<64x128xf32>
    %cst_70 = arith.constant 0.000000e+00 : f32
    %92 = vector.broadcast %cst_70 : f32 to vector<64x128xf32>
    %93 = arith.cmpf ogt, %91, %92 : vector<64x128xf32>
    %cst_71 = arith.constant 2.000000e-01 : f32
    %94 = vector.broadcast %cst_71 : f32 to vector<64x128xf32>
    %95 = arith.mulf %94, %91 : vector<64x128xf32>
    %96 = arith.select %93, %91, %95 : vector<64x128xi1>, vector<64x128xf32>
    %97 = arith.truncf %96 : vector<64x128xf32> to vector<64x128xbf16>
    %c0_72 = arith.constant 0 : index
    %c0_73 = arith.constant 0 : index
    %98 = vector.load %arg4[%c0_72, %c0_73] : memref<64x128xbf16, #tpu.memory_space<vmem>>, vector<64x128xbf16>
    tpu.vector_store %arg4[%c0_72, %c0_73], %97 {strides = array<i32>} : memref<64x128xbf16, #tpu.memory_space<vmem>>, vector<64x128xbf16>,
    return
  }
  func.func @transform_0(%arg0: i32) -> (i32, i32, i32, i32) {
    %c0_i32 = arith.constant 0 : i32
    %c0_i32_0 = arith.constant 0 : i32
    %c0_i32_1 = arith.constant 0 : i32
    %c0_i32_2 = arith.constant 0 : i32
    return %arg0, %c0_i32, %c0_i32_0, %c0_i32_1 : i32, i32, i32, i32
  }
  func.func @transform_1(%arg0: i32) -> (i32, i32, i32) {
    %c0_i32 = arith.constant 0 : i32
    %c0_i32_0 = arith.constant 0 : i32
    %c0_i32_1 = arith.constant 0 : i32
    %c0_i32_2 = arith.constant 0 : i32
    return %c0_i32, %c0_i32_0, %c0_i32_1 : i32, i32, i32
  }
  func.func @transform_2(%arg0: i32) -> (i32, i32) {
    %c0_i32 = arith.constant 0 : i32
    %c0_i32_0 = arith.constant 0 : i32
    %c0_i32_1 = arith.constant 0 : i32
    return %c0_i32, %c0_i32_0 : i32, i32
  }
  func.func @transform_3(%arg0: i32) -> (i32, i32) {
    %c0_i32 = arith.constant 0 : i32
    %c0_i32_0 = arith.constant 0 : i32
    return %arg0, %c0_i32 : i32, i32
  }
}

module attributes {stable_mosaic.version = 11 : i64} {
  func.func @_conv_kernel(%arg0: i32, %arg1: memref<1x4x21x128xbf16, #tpu.memory_space<vmem>>, %arg2: memref<9x128x128xbf16, #tpu.memory_space<vmem>>, %arg3: memref<1x128xf32, #tpu.memory_space<vmem>>, %arg4: memref<16x128xbf16, #tpu.memory_space<vmem>>) attributes {dimension_semantics = [#tpu.dimension_semantics<parallel>], iteration_bounds = array<i64: 2>, scalar_prefetch = 0 : i64, scratch_operands = 0 : i64, tpu.core_type = #tpu.core_type<tc>, window_params = [{transform_indices = @transform_0, window_bounds = array<i64: 1, 4, 21, 128>}, {pipeline_mode = #tpu.pipeline_mode<synchronous>, transform_indices = @transform_1, window_bounds = array<i64: 9, 128, 128>}, {pipeline_mode = #tpu.pipeline_mode<synchronous>, transform_indices = @transform_2, window_bounds = array<i64: 1, 128>}, {transform_indices = @transform_3, window_bounds = array<i64: 16, 128>}]} {
    %cst = arith.constant 0.000000e+00 : f32
    %0 = vector.broadcast %cst : f32 to vector<16x128xf32>
    %cst_0 = arith.constant 0.000000e+00 : f32
    %1 = vector.broadcast %cst_0 : f32 to vector<16x128xf32>
    %c0 = arith.constant 0 : index
    %c3 = arith.constant 3 : index
    %c0_1 = arith.constant 0 : index
    %c0_2 = arith.constant 0 : index
    %2 = vector.load %arg1[%c0, %c3, %c0_1, %c0_2] : memref<1x4x21x128xbf16, #tpu.memory_space<vmem>>, vector<1x1x16x128xbf16>
    %3 = vector.shape_cast %2 : vector<1x1x16x128xbf16> to vector<1x16x128xbf16>
    %4 = vector.shape_cast %3 : vector<1x16x128xbf16> to vector<16x128xbf16>
    %c0_3 = arith.constant 0 : index
    %c0_4 = arith.constant 0 : index
    %c0_5 = arith.constant 0 : index
    %5 = vector.load %arg2[%c0_3, %c0_4, %c0_5] : memref<9x128x128xbf16, #tpu.memory_space<vmem>>, vector<1x128x128xbf16>
    %6 = vector.shape_cast %5 : vector<1x128x128xbf16> to vector<128x128xbf16>
    %cst_6 = arith.constant dense<0.000000e+00> : vector<16x128xf32>
    %7 = tpu.matmul %4, %6, %cst_6 {dimension_numbers = #tpu.dot_dimension_numbers<[1], [0], [0], [1], [0, 0, 1, 1], [], []>} : vector<16x128xbf16>, vector<128x128xbf16>, vector<16x128xf32> -> vector<16x128xf32>
    %8 = arith.addf %1, %7 : vector<16x128xf32>
    %c0_7 = arith.constant 0 : index
    %c2 = arith.constant 2 : index
    %c1 = arith.constant 1 : index
    %c0_8 = arith.constant 0 : index
    %9 = vector.load %arg1[%c0_7, %c2, %c1, %c0_8] : memref<1x4x21x128xbf16, #tpu.memory_space<vmem>>, vector<1x1x16x128xbf16>
    %10 = vector.shape_cast %9 : vector<1x1x16x128xbf16> to vector<1x16x128xbf16>
    %11 = vector.shape_cast %10 : vector<1x16x128xbf16> to vector<16x128xbf16>
    %c1_9 = arith.constant 1 : index
    %c0_10 = arith.constant 0 : index
    %c0_11 = arith.constant 0 : index
    %12 = vector.load %arg2[%c1_9, %c0_10, %c0_11] : memref<9x128x128xbf16, #tpu.memory_space<vmem>>, vector<1x128x128xbf16>
    %13 = vector.shape_cast %12 : vector<1x128x128xbf16> to vector<128x128xbf16>
    %cst_12 = arith.constant dense<0.000000e+00> : vector<16x128xf32>
    %14 = tpu.matmul %11, %13, %cst_12 {dimension_numbers = #tpu.dot_dimension_numbers<[1], [0], [0], [1], [0, 0, 1, 1], [], []>} : vector<16x128xbf16>, vector<128x128xbf16>, vector<16x128xf32> -> vector<16x128xf32>
    %15 = arith.addf %0, %14 : vector<16x128xf32>
    %c0_13 = arith.constant 0 : index
    %c3_14 = arith.constant 3 : index
    %c1_15 = arith.constant 1 : index
    %c0_16 = arith.constant 0 : index
    %16 = vector.load %arg1[%c0_13, %c3_14, %c1_15, %c0_16] : memref<1x4x21x128xbf16, #tpu.memory_space<vmem>>, vector<1x1x16x128xbf16>
    %17 = vector.shape_cast %16 : vector<1x1x16x128xbf16> to vector<1x16x128xbf16>
    %18 = vector.shape_cast %17 : vector<1x16x128xbf16> to vector<16x128xbf16>
    %c2_17 = arith.constant 2 : index
    %c0_18 = arith.constant 0 : index
    %c0_19 = arith.constant 0 : index
    %19 = vector.load %arg2[%c2_17, %c0_18, %c0_19] : memref<9x128x128xbf16, #tpu.memory_space<vmem>>, vector<1x128x128xbf16>
    %20 = vector.shape_cast %19 : vector<1x128x128xbf16> to vector<128x128xbf16>
    %cst_20 = arith.constant dense<0.000000e+00> : vector<16x128xf32>
    %21 = tpu.matmul %18, %20, %cst_20 {dimension_numbers = #tpu.dot_dimension_numbers<[1], [0], [0], [1], [0, 0, 1, 1], [], []>} : vector<16x128xbf16>, vector<128x128xbf16>, vector<16x128xf32> -> vector<16x128xf32>
    %22 = arith.addf %15, %21 : vector<16x128xf32>
    %c0_21 = arith.constant 0 : index
    %c1_22 = arith.constant 1 : index
    %c4 = arith.constant 4 : index
    %c0_23 = arith.constant 0 : index
    %23 = vector.load %arg1[%c0_21, %c1_22, %c4, %c0_23] : memref<1x4x21x128xbf16, #tpu.memory_space<vmem>>, vector<1x1x16x128xbf16>
    %24 = vector.shape_cast %23 : vector<1x1x16x128xbf16> to vector<1x16x128xbf16>
    %25 = vector.shape_cast %24 : vector<1x16x128xbf16> to vector<16x128xbf16>
    %c3_24 = arith.constant 3 : index
    %c0_25 = arith.constant 0 : index
    %c0_26 = arith.constant 0 : index
    %26 = vector.load %arg2[%c3_24, %c0_25, %c0_26] : memref<9x128x128xbf16, #tpu.memory_space<vmem>>, vector<1x128x128xbf16>
    %27 = vector.shape_cast %26 : vector<1x128x128xbf16> to vector<128x128xbf16>
    %cst_27 = arith.constant dense<0.000000e+00> : vector<16x128xf32>
    %28 = tpu.matmul %25, %27, %cst_27 {dimension_numbers = #tpu.dot_dimension_numbers<[1], [0], [0], [1], [0, 0, 1, 1], [], []>} : vector<16x128xbf16>, vector<128x128xbf16>, vector<16x128xf32> -> vector<16x128xf32>
    %29 = arith.addf %8, %28 : vector<16x128xf32>
    %c0_28 = arith.constant 0 : index
    %c0_29 = arith.constant 0 : index
    %c5 = arith.constant 5 : index
    %c0_30 = arith.constant 0 : index
    %30 = vector.load %arg1[%c0_28, %c0_29, %c5, %c0_30] : memref<1x4x21x128xbf16, #tpu.memory_space<vmem>>, vector<1x1x16x128xbf16>
    %31 = vector.shape_cast %30 : vector<1x1x16x128xbf16> to vector<1x16x128xbf16>
    %32 = vector.shape_cast %31 : vector<1x16x128xbf16> to vector<16x128xbf16>
    %c4_31 = arith.constant 4 : index
    %c0_32 = arith.constant 0 : index
    %c0_33 = arith.constant 0 : index
    %33 = vector.load %arg2[%c4_31, %c0_32, %c0_33] : memref<9x128x128xbf16, #tpu.memory_space<vmem>>, vector<1x128x128xbf16>
    %34 = vector.shape_cast %33 : vector<1x128x128xbf16> to vector<128x128xbf16>
    %cst_34 = arith.constant dense<0.000000e+00> : vector<16x128xf32>
    %35 = tpu.matmul %32, %34, %cst_34 {dimension_numbers = #tpu.dot_dimension_numbers<[1], [0], [0], [1], [0, 0, 1, 1], [], []>} : vector<16x128xbf16>, vector<128x128xbf16>, vector<16x128xf32> -> vector<16x128xf32>
    %36 = arith.addf %22, %35 : vector<16x128xf32>
    %c0_35 = arith.constant 0 : index
    %c1_36 = arith.constant 1 : index
    %c5_37 = arith.constant 5 : index
    %c0_38 = arith.constant 0 : index
    %37 = vector.load %arg1[%c0_35, %c1_36, %c5_37, %c0_38] : memref<1x4x21x128xbf16, #tpu.memory_space<vmem>>, vector<1x1x16x128xbf16>
    %38 = vector.shape_cast %37 : vector<1x1x16x128xbf16> to vector<1x16x128xbf16>
    %39 = vector.shape_cast %38 : vector<1x16x128xbf16> to vector<16x128xbf16>
    %c5_39 = arith.constant 5 : index
    %c0_40 = arith.constant 0 : index
    %c0_41 = arith.constant 0 : index
    %40 = vector.load %arg2[%c5_39, %c0_40, %c0_41] : memref<9x128x128xbf16, #tpu.memory_space<vmem>>, vector<1x128x128xbf16>
    %41 = vector.shape_cast %40 : vector<1x128x128xbf16> to vector<128x128xbf16>
    %cst_42 = arith.constant dense<0.000000e+00> : vector<16x128xf32>
    %42 = tpu.matmul %39, %41, %cst_42 {dimension_numbers = #tpu.dot_dimension_numbers<[1], [0], [0], [1], [0, 0, 1, 1], [], []>} : vector<16x128xbf16>, vector<128x128xbf16>, vector<16x128xf32> -> vector<16x128xf32>
    %43 = arith.addf %36, %42 : vector<16x128xf32>
    %c0_43 = arith.constant 0 : index
    %c3_44 = arith.constant 3 : index
    %c4_45 = arith.constant 4 : index
    %c0_46 = arith.constant 0 : index
    %44 = vector.load %arg1[%c0_43, %c3_44, %c4_45, %c0_46] : memref<1x4x21x128xbf16, #tpu.memory_space<vmem>>, vector<1x1x16x128xbf16>
    %45 = vector.shape_cast %44 : vector<1x1x16x128xbf16> to vector<1x16x128xbf16>
    %46 = vector.shape_cast %45 : vector<1x16x128xbf16> to vector<16x128xbf16>
    %c6 = arith.constant 6 : index
    %c0_47 = arith.constant 0 : index
    %c0_48 = arith.constant 0 : index
    %47 = vector.load %arg2[%c6, %c0_47, %c0_48] : memref<9x128x128xbf16, #tpu.memory_space<vmem>>, vector<1x128x128xbf16>
    %48 = vector.shape_cast %47 : vector<1x128x128xbf16> to vector<128x128xbf16>
    %cst_49 = arith.constant dense<0.000000e+00> : vector<16x128xf32>
    %49 = tpu.matmul %46, %48, %cst_49 {dimension_numbers = #tpu.dot_dimension_numbers<[1], [0], [0], [1], [0, 0, 1, 1], [], []>} : vector<16x128xbf16>, vector<128x128xbf16>, vector<16x128xf32> -> vector<16x128xf32>
    %50 = arith.addf %29, %49 : vector<16x128xf32>
    %c0_50 = arith.constant 0 : index
    %c2_51 = arith.constant 2 : index
    %c5_52 = arith.constant 5 : index
    %c0_53 = arith.constant 0 : index
    %51 = vector.load %arg1[%c0_50, %c2_51, %c5_52, %c0_53] : memref<1x4x21x128xbf16, #tpu.memory_space<vmem>>, vector<1x1x16x128xbf16>
    %52 = vector.shape_cast %51 : vector<1x1x16x128xbf16> to vector<1x16x128xbf16>
    %53 = vector.shape_cast %52 : vector<1x16x128xbf16> to vector<16x128xbf16>
    %c7 = arith.constant 7 : index
    %c0_54 = arith.constant 0 : index
    %c0_55 = arith.constant 0 : index
    %54 = vector.load %arg2[%c7, %c0_54, %c0_55] : memref<9x128x128xbf16, #tpu.memory_space<vmem>>, vector<1x128x128xbf16>
    %55 = vector.shape_cast %54 : vector<1x128x128xbf16> to vector<128x128xbf16>
    %cst_56 = arith.constant dense<0.000000e+00> : vector<16x128xf32>
    %56 = tpu.matmul %53, %55, %cst_56 {dimension_numbers = #tpu.dot_dimension_numbers<[1], [0], [0], [1], [0, 0, 1, 1], [], []>} : vector<16x128xbf16>, vector<128x128xbf16>, vector<16x128xf32> -> vector<16x128xf32>
    %57 = arith.addf %43, %56 : vector<16x128xf32>
    %c0_57 = arith.constant 0 : index
    %c3_58 = arith.constant 3 : index
    %c5_59 = arith.constant 5 : index
    %c0_60 = arith.constant 0 : index
    %58 = vector.load %arg1[%c0_57, %c3_58, %c5_59, %c0_60] : memref<1x4x21x128xbf16, #tpu.memory_space<vmem>>, vector<1x1x16x128xbf16>
    %59 = vector.shape_cast %58 : vector<1x1x16x128xbf16> to vector<1x16x128xbf16>
    %60 = vector.shape_cast %59 : vector<1x16x128xbf16> to vector<16x128xbf16>
    %c8 = arith.constant 8 : index
    %c0_61 = arith.constant 0 : index
    %c0_62 = arith.constant 0 : index
    %61 = vector.load %arg2[%c8, %c0_61, %c0_62] : memref<9x128x128xbf16, #tpu.memory_space<vmem>>, vector<1x128x128xbf16>
    %62 = vector.shape_cast %61 : vector<1x128x128xbf16> to vector<128x128xbf16>
    %cst_63 = arith.constant dense<0.000000e+00> : vector<16x128xf32>
    %63 = tpu.matmul %60, %62, %cst_63 {dimension_numbers = #tpu.dot_dimension_numbers<[1], [0], [0], [1], [0, 0, 1, 1], [], []>} : vector<16x128xbf16>, vector<128x128xbf16>, vector<16x128xf32> -> vector<16x128xf32>
    %64 = arith.addf %57, %63 : vector<16x128xf32>
    %65 = tpu.iota {dimensions = array<i32: 0>} : vector<16x1xi32>
    %c4_i32 = arith.constant 4 : i32
    %c0_i32 = arith.constant 0 : i32
    %66 = arith.cmpi eq, %c4_i32, %c0_i32 : i32
    %c1_i32 = arith.constant 1 : i32
    %67 = arith.select %66, %c1_i32, %c4_i32 : i32
    %68 = vector.broadcast %67 : i32 to vector<16x1xi32>
    %69 = arith.remsi %65, %68 : vector<16x1xi32>
    %c0_i32_64 = arith.constant 0 : i32
    %70 = vector.broadcast %c0_i32_64 : i32 to vector<16x1xi32>
    %71 = arith.cmpi ne, %69, %70 : vector<16x1xi32>
    %c0_i32_65 = arith.constant 0 : i32
    %72 = vector.broadcast %c0_i32_65 : i32 to vector<16x1xi32>
    %73 = arith.cmpi slt, %69, %72 : vector<16x1xi32>
    %c0_i32_66 = arith.constant 0 : i32
    %74 = arith.cmpi slt, %67, %c0_i32_66 : i32
    %75 = vector.broadcast %74 : i1 to vector<16x1xi1>
    %76 = vector.broadcast %75 : vector<16x1xi1> to vector<16x1xi1>
    %77 = arith.xori %73, %76 : vector<16x1xi1>
    %78 = arith.andi %77, %71 : vector<16x1xi1>
    %79 = vector.broadcast %67 : i32 to vector<16x1xi32>
    %80 = arith.addi %69, %79 : vector<16x1xi32>
    %81 = arith.select %78, %80, %69 : vector<16x1xi1>, vector<16x1xi32>
    %c0_i32_67 = arith.constant 0 : i32
    %82 = vector.broadcast %c0_i32_67 : i32 to vector<16x1xi32>
    %83 = arith.cmpi ne, %81, %82 : vector<16x1xi32>
    %cst_68 = arith.constant 0.000000e+00 : f32
    %84 = vector.shape_cast %83 : vector<16x1xi1> to vector<16x1xi1>
    %85 = vector.broadcast %84 : vector<16x1xi1> to vector<16x128xi1>
    %86 = vector.broadcast %cst_68 : f32 to vector<16x128xf32>
    %87 = arith.select %85, %50, %86 : vector<16x128xi1>, vector<16x128xf32>
    %88 = arith.addf %64, %87 : vector<16x128xf32>
    %c0_69 = arith.constant 0 : index
    %c0_70 = arith.constant 0 : index
    %89 = vector.load %arg3[%c0_69, %c0_70] : memref<1x128xf32, #tpu.memory_space<vmem>>, vector<1x128xf32>
    %90 = vector.broadcast %89 : vector<1x128xf32> to vector<16x128xf32>
    %91 = arith.addf %88, %90 : vector<16x128xf32>
    %cst_71 = arith.constant 0.000000e+00 : f32
    %92 = vector.broadcast %cst_71 : f32 to vector<16x128xf32>
    %93 = arith.cmpf ogt, %91, %92 : vector<16x128xf32>
    %cst_72 = arith.constant 2.000000e-01 : f32
    %94 = vector.broadcast %cst_72 : f32 to vector<16x128xf32>
    %95 = arith.mulf %94, %91 : vector<16x128xf32>
    %96 = arith.select %93, %91, %95 : vector<16x128xi1>, vector<16x128xf32>
    %97 = arith.truncf %96 : vector<16x128xf32> to vector<16x128xbf16>
    %c0_73 = arith.constant 0 : index
    %c0_74 = arith.constant 0 : index
    %98 = vector.load %arg4[%c0_73, %c0_74] : memref<16x128xbf16, #tpu.memory_space<vmem>>, vector<16x128xbf16>
    tpu.vector_store %arg4[%c0_73, %c0_74], %97 {strides = array<i32>} : memref<16x128xbf16, #tpu.memory_space<vmem>>, vector<16x128xbf16>,
    return
  }
  func.func @transform_0(%arg0: i32) -> (i32, i32, i32, i32) {
    %c0_i32 = arith.constant 0 : i32
    %c0_i32_0 = arith.constant 0 : i32
    %c0_i32_1 = arith.constant 0 : i32
    %c0_i32_2 = arith.constant 0 : i32
    return %arg0, %c0_i32, %c0_i32_0, %c0_i32_1 : i32, i32, i32, i32
  }
  func.func @transform_1(%arg0: i32) -> (i32, i32, i32) {
    %c0_i32 = arith.constant 0 : i32
    %c0_i32_0 = arith.constant 0 : i32
    %c0_i32_1 = arith.constant 0 : i32
    %c0_i32_2 = arith.constant 0 : i32
    return %c0_i32, %c0_i32_0, %c0_i32_1 : i32, i32, i32
  }
  func.func @transform_2(%arg0: i32) -> (i32, i32) {
    %c0_i32 = arith.constant 0 : i32
    %c0_i32_0 = arith.constant 0 : i32
    %c0_i32_1 = arith.constant 0 : i32
    return %c0_i32, %c0_i32_0 : i32, i32
  }
  func.func @transform_3(%arg0: i32) -> (i32, i32) {
    %c0_i32 = arith.constant 0 : i32
    %c0_i32_0 = arith.constant 0 : i32
    return %arg0, %c0_i32 : i32, i32
  }
}

module attributes {stable_mosaic.version = 11 : i64} {
  func.func @_tail_kernel(%arg0: i32, %arg1: memref<1x4x7x128xbf16, #tpu.memory_space<vmem>>, %arg2: memref<9x128x256xbf16, #tpu.memory_space<vmem>>, %arg3: memref<1x256xf32, #tpu.memory_space<vmem>>, %arg4: memref<4x256x256xbf16, #tpu.memory_space<vmem>>, %arg5: memref<1x256xf32, #tpu.memory_space<vmem>>, %arg6: memref<128x128xbf16, #tpu.memory_space<vmem>>, %arg7: memref<1x128xf32, #tpu.memory_space<vmem>>, %arg8: memref<1x1x128xf32, #tpu.memory_space<vmem>>) attributes {dimension_semantics = [#tpu.dimension_semantics<parallel>], iteration_bounds = array<i64: 2>, scalar_prefetch = 0 : i64, scratch_operands = 0 : i64, tpu.core_type = #tpu.core_type<tc>, window_params = [{transform_indices = @transform_0, window_bounds = array<i64: 1, 4, 7, 128>}, {pipeline_mode = #tpu.pipeline_mode<synchronous>, transform_indices = @transform_1, window_bounds = array<i64: 9, 128, 256>}, {pipeline_mode = #tpu.pipeline_mode<synchronous>, transform_indices = @transform_2, window_bounds = array<i64: 1, 256>}, {pipeline_mode = #tpu.pipeline_mode<synchronous>, transform_indices = @transform_3, window_bounds = array<i64: 4, 256, 256>}, {pipeline_mode = #tpu.pipeline_mode<synchronous>, transform_indices = @transform_4, window_bounds = array<i64: 1, 256>}, {pipeline_mode = #tpu.pipeline_mode<synchronous>, transform_indices = @transform_5, window_bounds = array<i64: 128, 128>}, {pipeline_mode = #tpu.pipeline_mode<synchronous>, transform_indices = @transform_6, window_bounds = array<i64: 1, 128>}, {transform_indices = @transform_7, window_bounds = array<i64: 1, 1, 128>}]} {
    %cst = arith.constant 0.000000e+00 : f32
    %0 = vector.broadcast %cst : f32 to vector<1x256xf32>
    %cst_0 = arith.constant 0.000000e+00 : f32
    %1 = vector.broadcast %cst_0 : f32 to vector<1x256xf32>
    %c0 = arith.constant 0 : index
    %c0_1 = arith.constant 0 : index
    %c3 = arith.constant 3 : index
    %c0_2 = arith.constant 0 : index
    %2 = vector.load %arg1[%c0, %c0_1, %c3, %c0_2] : memref<1x4x7x128xbf16, #tpu.memory_space<vmem>>, vector<1x1x1x128xbf16>
    %3 = vector.shape_cast %2 : vector<1x1x1x128xbf16> to vector<1x128xbf16>
    %c4 = arith.constant 4 : index
    %c0_3 = arith.constant 0 : index
    %c0_4 = arith.constant 0 : index
    %4 = vector.load %arg2[%c4, %c0_3, %c0_4] : memref<9x128x256xbf16, #tpu.memory_space<vmem>>, vector<1x128x256xbf16>
    %5 = vector.shape_cast %4 : vector<1x128x256xbf16> to vector<128x256xbf16>
    %cst_5 = arith.constant dense<0.000000e+00> : vector<1x256xf32>
    %6 = tpu.matmul %3, %5, %cst_5 {dimension_numbers = #tpu.dot_dimension_numbers<[1], [0], [0], [1], [0, 0, 1, 1], [], []>} : vector<1x128xbf16>, vector<128x256xbf16>, vector<1x256xf32> -> vector<1x256xf32>
    %7 = arith.addf %1, %6 : vector<1x256xf32>
    %c0_6 = arith.constant 0 : index
    %c1 = arith.constant 1 : index
    %c3_7 = arith.constant 3 : index
    %c0_8 = arith.constant 0 : index
    %8 = vector.load %arg1[%c0_6, %c1, %c3_7, %c0_8] : memref<1x4x7x128xbf16, #tpu.memory_space<vmem>>, vector<1x1x1x128xbf16>
    %9 = vector.shape_cast %8 : vector<1x1x1x128xbf16> to vector<1x128xbf16>
    %c5 = arith.constant 5 : index
    %c0_9 = arith.constant 0 : index
    %c0_10 = arith.constant 0 : index
    %10 = vector.load %arg2[%c5, %c0_9, %c0_10] : memref<9x128x256xbf16, #tpu.memory_space<vmem>>, vector<1x128x256xbf16>
    %11 = vector.shape_cast %10 : vector<1x128x256xbf16> to vector<128x256xbf16>
    %cst_11 = arith.constant dense<0.000000e+00> : vector<1x256xf32>
    %12 = tpu.matmul %9, %11, %cst_11 {dimension_numbers = #tpu.dot_dimension_numbers<[1], [0], [0], [1], [0, 0, 1, 1], [], []>} : vector<1x128xbf16>, vector<128x256xbf16>, vector<1x256xf32> -> vector<1x256xf32>
    %13 = arith.addf %7, %12 : vector<1x256xf32>
    %c0_12 = arith.constant 0 : index
    %c2 = arith.constant 2 : index
    %c3_13 = arith.constant 3 : index
    %c0_14 = arith.constant 0 : index
    %14 = vector.load %arg1[%c0_12, %c2, %c3_13, %c0_14] : memref<1x4x7x128xbf16, #tpu.memory_space<vmem>>, vector<1x1x1x128xbf16>
    %15 = vector.shape_cast %14 : vector<1x1x1x128xbf16> to vector<1x128xbf16>
    %c7 = arith.constant 7 : index
    %c0_15 = arith.constant 0 : index
    %c0_16 = arith.constant 0 : index
    %16 = vector.load %arg2[%c7, %c0_15, %c0_16] : memref<9x128x256xbf16, #tpu.memory_space<vmem>>, vector<1x128x256xbf16>
    %17 = vector.shape_cast %16 : vector<1x128x256xbf16> to vector<128x256xbf16>
    %cst_17 = arith.constant dense<0.000000e+00> : vector<1x256xf32>
    %18 = tpu.matmul %15, %17, %cst_17 {dimension_numbers = #tpu.dot_dimension_numbers<[1], [0], [0], [1], [0, 0, 1, 1], [], []>} : vector<1x128xbf16>, vector<128x256xbf16>, vector<1x256xf32> -> vector<1x256xf32>
    %19 = arith.addf %13, %18 : vector<1x256xf32>
    %c0_18 = arith.constant 0 : index
    %c3_19 = arith.constant 3 : index
    %c3_20 = arith.constant 3 : index
    %c0_21 = arith.constant 0 : index
    %20 = vector.load %arg1[%c0_18, %c3_19, %c3_20, %c0_21] : memref<1x4x7x128xbf16, #tpu.memory_space<vmem>>, vector<1x1x1x128xbf16>
    %21 = vector.shape_cast %20 : vector<1x1x1x128xbf16> to vector<1x128xbf16>
    %c8 = arith.constant 8 : index
    %c0_22 = arith.constant 0 : index
    %c0_23 = arith.constant 0 : index
    %22 = vector.load %arg2[%c8, %c0_22, %c0_23] : memref<9x128x256xbf16, #tpu.memory_space<vmem>>, vector<1x128x256xbf16>
    %23 = vector.shape_cast %22 : vector<1x128x256xbf16> to vector<128x256xbf16>
    %cst_24 = arith.constant dense<0.000000e+00> : vector<1x256xf32>
    %24 = tpu.matmul %21, %23, %cst_24 {dimension_numbers = #tpu.dot_dimension_numbers<[1], [0], [0], [1], [0, 0, 1, 1], [], []>} : vector<1x128xbf16>, vector<128x256xbf16>, vector<1x256xf32> -> vector<1x256xf32>
    %25 = arith.addf %19, %24 : vector<1x256xf32>
    %c0_25 = arith.constant 0 : index
    %c0_26 = arith.constant 0 : index
    %26 = vector.load %arg3[%c0_25, %c0_26] : memref<1x256xf32, #tpu.memory_space<vmem>>, vector<1x256xf32>
    %27 = arith.addf %25, %26 : vector<1x256xf32>
    %cst_27 = arith.constant 0.000000e+00 : f32
    %28 = vector.broadcast %cst_27 : f32 to vector<1x256xf32>
    %29 = arith.cmpf ogt, %27, %28 : vector<1x256xf32>
    %cst_28 = arith.constant 2.000000e-01 : f32
    %30 = vector.broadcast %cst_28 : f32 to vector<1x256xf32>
    %31 = arith.mulf %30, %27 : vector<1x256xf32>
    %32 = arith.select %29, %27, %31 : vector<1x256xi1>, vector<1x256xf32>
    %33 = arith.truncf %32 : vector<1x256xf32> to vector<1x256xbf16>
    %c0_29 = arith.constant 0 : index
    %c0_30 = arith.constant 0 : index
    %c0_31 = arith.constant 0 : index
    %34 = vector.load %arg4[%c0_29, %c0_30, %c0_31] : memref<4x256x256xbf16, #tpu.memory_space<vmem>>, vector<1x256x256xbf16>
    %35 = vector.shape_cast %34 : vector<1x256x256xbf16> to vector<256x256xbf16>
    %cst_32 = arith.constant dense<0.000000e+00> : vector<1x256xf32>
    %36 = tpu.matmul %33, %35, %cst_32 {dimension_numbers = #tpu.dot_dimension_numbers<[1], [0], [0], [1], [0, 0, 1, 1], [], []>} : vector<1x256xbf16>, vector<256x256xbf16>, vector<1x256xf32> -> vector<1x256xf32>
    %37 = arith.addf %0, %36 : vector<1x256xf32>
    %cst_33 = arith.constant 0.000000e+00 : f32
    %38 = vector.broadcast %cst_33 : f32 to vector<1x256xf32>
    %c0_34 = arith.constant 0 : index
    %c1_35 = arith.constant 1 : index
    %c3_36 = arith.constant 3 : index
    %c0_37 = arith.constant 0 : index
    %39 = vector.load %arg1[%c0_34, %c1_35, %c3_36, %c0_37] : memref<1x4x7x128xbf16, #tpu.memory_space<vmem>>, vector<1x1x1x128xbf16>
    %40 = vector.shape_cast %39 : vector<1x1x1x128xbf16> to vector<1x128xbf16>
    %c3_38 = arith.constant 3 : index
    %c0_39 = arith.constant 0 : index
    %c0_40 = arith.constant 0 : index
    %41 = vector.load %arg2[%c3_38, %c0_39, %c0_40] : memref<9x128x256xbf16, #tpu.memory_space<vmem>>, vector<1x128x256xbf16>
    %42 = vector.shape_cast %41 : vector<1x128x256xbf16> to vector<128x256xbf16>
    %cst_41 = arith.constant dense<0.000000e+00> : vector<1x256xf32>
    %43 = tpu.matmul %40, %42, %cst_41 {dimension_numbers = #tpu.dot_dimension_numbers<[1], [0], [0], [1], [0, 0, 1, 1], [], []>} : vector<1x128xbf16>, vector<128x256xbf16>, vector<1x256xf32> -> vector<1x256xf32>
    %44 = arith.addf %38, %43 : vector<1x256xf32>
    %c0_42 = arith.constant 0 : index
    %c0_43 = arith.constant 0 : index
    %c4_44 = arith.constant 4 : index
    %c0_45 = arith.constant 0 : index
    %45 = vector.load %arg1[%c0_42, %c0_43, %c4_44, %c0_45] : memref<1x4x7x128xbf16, #tpu.memory_space<vmem>>, vector<1x1x1x128xbf16>
    %46 = vector.shape_cast %45 : vector<1x1x1x128xbf16> to vector<1x128xbf16>
    %c4_46 = arith.constant 4 : index
    %c0_47 = arith.constant 0 : index
    %c0_48 = arith.constant 0 : index
    %47 = vector.load %arg2[%c4_46, %c0_47, %c0_48] : memref<9x128x256xbf16, #tpu.memory_space<vmem>>, vector<1x128x256xbf16>
    %48 = vector.shape_cast %47 : vector<1x128x256xbf16> to vector<128x256xbf16>
    %cst_49 = arith.constant dense<0.000000e+00> : vector<1x256xf32>
    %49 = tpu.matmul %46, %48, %cst_49 {dimension_numbers = #tpu.dot_dimension_numbers<[1], [0], [0], [1], [0, 0, 1, 1], [], []>} : vector<1x128xbf16>, vector<128x256xbf16>, vector<1x256xf32> -> vector<1x256xf32>
    %50 = arith.addf %44, %49 : vector<1x256xf32>
    %c0_50 = arith.constant 0 : index
    %c1_51 = arith.constant 1 : index
    %c4_52 = arith.constant 4 : index
    %c0_53 = arith.constant 0 : index
    %51 = vector.load %arg1[%c0_50, %c1_51, %c4_52, %c0_53] : memref<1x4x7x128xbf16, #tpu.memory_space<vmem>>, vector<1x1x1x128xbf16>
    %52 = vector.shape_cast %51 : vector<1x1x1x128xbf16> to vector<1x128xbf16>
    %c5_54 = arith.constant 5 : index
    %c0_55 = arith.constant 0 : index
    %c0_56 = arith.constant 0 : index
    %53 = vector.load %arg2[%c5_54, %c0_55, %c0_56] : memref<9x128x256xbf16, #tpu.memory_space<vmem>>, vector<1x128x256xbf16>
    %54 = vector.shape_cast %53 : vector<1x128x256xbf16> to vector<128x256xbf16>
    %cst_57 = arith.constant dense<0.000000e+00> : vector<1x256xf32>
    %55 = tpu.matmul %52, %54, %cst_57 {dimension_numbers = #tpu.dot_dimension_numbers<[1], [0], [0], [1], [0, 0, 1, 1], [], []>} : vector<1x128xbf16>, vector<128x256xbf16>, vector<1x256xf32> -> vector<1x256xf32>
    %56 = arith.addf %50, %55 : vector<1x256xf32>
    %c0_58 = arith.constant 0 : index
    %c3_59 = arith.constant 3 : index
    %c3_60 = arith.constant 3 : index
    %c0_61 = arith.constant 0 : index
    %57 = vector.load %arg1[%c0_58, %c3_59, %c3_60, %c0_61] : memref<1x4x7x128xbf16, #tpu.memory_space<vmem>>, vector<1x1x1x128xbf16>
    %58 = vector.shape_cast %57 : vector<1x1x1x128xbf16> to vector<1x128xbf16>
    %c6 = arith.constant 6 : index
    %c0_62 = arith.constant 0 : index
    %c0_63 = arith.constant 0 : index
    %59 = vector.load %arg2[%c6, %c0_62, %c0_63] : memref<9x128x256xbf16, #tpu.memory_space<vmem>>, vector<1x128x256xbf16>
    %60 = vector.shape_cast %59 : vector<1x128x256xbf16> to vector<128x256xbf16>
    %cst_64 = arith.constant dense<0.000000e+00> : vector<1x256xf32>
    %61 = tpu.matmul %58, %60, %cst_64 {dimension_numbers = #tpu.dot_dimension_numbers<[1], [0], [0], [1], [0, 0, 1, 1], [], []>} : vector<1x128xbf16>, vector<128x256xbf16>, vector<1x256xf32> -> vector<1x256xf32>
    %62 = arith.addf %56, %61 : vector<1x256xf32>
    %c0_65 = arith.constant 0 : index
    %c2_66 = arith.constant 2 : index
    %c4_67 = arith.constant 4 : index
    %c0_68 = arith.constant 0 : index
    %63 = vector.load %arg1[%c0_65, %c2_66, %c4_67, %c0_68] : memref<1x4x7x128xbf16, #tpu.memory_space<vmem>>, vector<1x1x1x128xbf16>
    %64 = vector.shape_cast %63 : vector<1x1x1x128xbf16> to vector<1x128xbf16>
    %c7_69 = arith.constant 7 : index
    %c0_70 = arith.constant 0 : index
    %c0_71 = arith.constant 0 : index
    %65 = vector.load %arg2[%c7_69, %c0_70, %c0_71] : memref<9x128x256xbf16, #tpu.memory_space<vmem>>, vector<1x128x256xbf16>
    %66 = vector.shape_cast %65 : vector<1x128x256xbf16> to vector<128x256xbf16>
    %cst_72 = arith.constant dense<0.000000e+00> : vector<1x256xf32>
    %67 = tpu.matmul %64, %66, %cst_72 {dimension_numbers = #tpu.dot_dimension_numbers<[1], [0], [0], [1], [0, 0, 1, 1], [], []>} : vector<1x128xbf16>, vector<128x256xbf16>, vector<1x256xf32> -> vector<1x256xf32>
    %68 = arith.addf %62, %67 : vector<1x256xf32>
    %c0_73 = arith.constant 0 : index
    %c3_74 = arith.constant 3 : index
    %c4_75 = arith.constant 4 : index
    %c0_76 = arith.constant 0 : index
    %69 = vector.load %arg1[%c0_73, %c3_74, %c4_75, %c0_76] : memref<1x4x7x128xbf16, #tpu.memory_space<vmem>>, vector<1x1x1x128xbf16>
    %70 = vector.shape_cast %69 : vector<1x1x1x128xbf16> to vector<1x128xbf16>
    %c8_77 = arith.constant 8 : index
    %c0_78 = arith.constant 0 : index
    %c0_79 = arith.constant 0 : index
    %71 = vector.load %arg2[%c8_77, %c0_78, %c0_79] : memref<9x128x256xbf16, #tpu.memory_space<vmem>>, vector<1x128x256xbf16>
    %72 = vector.shape_cast %71 : vector<1x128x256xbf16> to vector<128x256xbf16>
    %cst_80 = arith.constant dense<0.000000e+00> : vector<1x256xf32>
    %73 = tpu.matmul %70, %72, %cst_80 {dimension_numbers = #tpu.dot_dimension_numbers<[1], [0], [0], [1], [0, 0, 1, 1], [], []>} : vector<1x128xbf16>, vector<128x256xbf16>, vector<1x256xf32> -> vector<1x256xf32>
    %74 = arith.addf %68, %73 : vector<1x256xf32>
    %c0_81 = arith.constant 0 : index
    %c0_82 = arith.constant 0 : index
    %75 = vector.load %arg3[%c0_81, %c0_82] : memref<1x256xf32, #tpu.memory_space<vmem>>, vector<1x256xf32>
    %76 = arith.addf %74, %75 : vector<1x256xf32>
    %cst_83 = arith.constant 0.000000e+00 : f32
    %77 = vector.broadcast %cst_83 : f32 to vector<1x256xf32>
    %78 = arith.cmpf ogt, %76, %77 : vector<1x256xf32>
    %cst_84 = arith.constant 2.000000e-01 : f32
    %79 = vector.broadcast %cst_84 : f32 to vector<1x256xf32>
    %80 = arith.mulf %79, %76 : vector<1x256xf32>
    %81 = arith.select %78, %76, %80 : vector<1x256xi1>, vector<1x256xf32>
    %82 = arith.truncf %81 : vector<1x256xf32> to vector<1x256xbf16>
    %c1_85 = arith.constant 1 : index
    %c0_86 = arith.constant 0 : index
    %c0_87 = arith.constant 0 : index
    %83 = vector.load %arg4[%c1_85, %c0_86, %c0_87] : memref<4x256x256xbf16, #tpu.memory_space<vmem>>, vector<1x256x256xbf16>
    %84 = vector.shape_cast %83 : vector<1x256x256xbf16> to vector<256x256xbf16>
    %cst_88 = arith.constant dense<0.000000e+00> : vector<1x256xf32>
    %85 = tpu.matmul %82, %84, %cst_88 {dimension_numbers = #tpu.dot_dimension_numbers<[1], [0], [0], [1], [0, 0, 1, 1], [], []>} : vector<1x256xbf16>, vector<256x256xbf16>, vector<1x256xf32> -> vector<1x256xf32>
    %86 = arith.addf %37, %85 : vector<1x256xf32>
    %cst_89 = arith.constant 0.000000e+00 : f32
    %87 = vector.broadcast %cst_89 : f32 to vector<1x256xf32>
    %c0_90 = arith.constant 0 : index
    %c2_91 = arith.constant 2 : index
    %c3_92 = arith.constant 3 : index
    %c0_93 = arith.constant 0 : index
    %88 = vector.load %arg1[%c0_90, %c2_91, %c3_92, %c0_93] : memref<1x4x7x128xbf16, #tpu.memory_space<vmem>>, vector<1x1x1x128xbf16>
    %89 = vector.shape_cast %88 : vector<1x1x1x128xbf16> to vector<1x128xbf16>
    %c1_94 = arith.constant 1 : index
    %c0_95 = arith.constant 0 : index
    %c0_96 = arith.constant 0 : index
    %90 = vector.load %arg2[%c1_94, %c0_95, %c0_96] : memref<9x128x256xbf16, #tpu.memory_space<vmem>>, vector<1x128x256xbf16>
    %91 = vector.shape_cast %90 : vector<1x128x256xbf16> to vector<128x256xbf16>
    %cst_97 = arith.constant dense<0.000000e+00> : vector<1x256xf32>
    %92 = tpu.matmul %89, %91, %cst_97 {dimension_numbers = #tpu.dot_dimension_numbers<[1], [0], [0], [1], [0, 0, 1, 1], [], []>} : vector<1x128xbf16>, vector<128x256xbf16>, vector<1x256xf32> -> vector<1x256xf32>
    %93 = arith.addf %87, %92 : vector<1x256xf32>
    %c0_98 = arith.constant 0 : index
    %c3_99 = arith.constant 3 : index
    %c3_100 = arith.constant 3 : index
    %c0_101 = arith.constant 0 : index
    %94 = vector.load %arg1[%c0_98, %c3_99, %c3_100, %c0_101] : memref<1x4x7x128xbf16, #tpu.memory_space<vmem>>, vector<1x1x1x128xbf16>
    %95 = vector.shape_cast %94 : vector<1x1x1x128xbf16> to vector<1x128xbf16>
    %c2_102 = arith.constant 2 : index
    %c0_103 = arith.constant 0 : index
    %c0_104 = arith.constant 0 : index
    %96 = vector.load %arg2[%c2_102, %c0_103, %c0_104] : memref<9x128x256xbf16, #tpu.memory_space<vmem>>, vector<1x128x256xbf16>
    %97 = vector.shape_cast %96 : vector<1x128x256xbf16> to vector<128x256xbf16>
    %cst_105 = arith.constant dense<0.000000e+00> : vector<1x256xf32>
    %98 = tpu.matmul %95, %97, %cst_105 {dimension_numbers = #tpu.dot_dimension_numbers<[1], [0], [0], [1], [0, 0, 1, 1], [], []>} : vector<1x128xbf16>, vector<128x256xbf16>, vector<1x256xf32> -> vector<1x256xf32>
    %99 = arith.addf %93, %98 : vector<1x256xf32>
    %c0_106 = arith.constant 0 : index
    %c0_107 = arith.constant 0 : index
    %c5_108 = arith.constant 5 : index
    %c0_109 = arith.constant 0 : index
    %100 = vector.load %arg1[%c0_106, %c0_107, %c5_108, %c0_109] : memref<1x4x7x128xbf16, #tpu.memory_space<vmem>>, vector<1x1x1x128xbf16>
    %101 = vector.shape_cast %100 : vector<1x1x1x128xbf16> to vector<1x128xbf16>
    %c4_110 = arith.constant 4 : index
    %c0_111 = arith.constant 0 : index
    %c0_112 = arith.constant 0 : index
    %102 = vector.load %arg2[%c4_110, %c0_111, %c0_112] : memref<9x128x256xbf16, #tpu.memory_space<vmem>>, vector<1x128x256xbf16>
    %103 = vector.shape_cast %102 : vector<1x128x256xbf16> to vector<128x256xbf16>
    %cst_113 = arith.constant dense<0.000000e+00> : vector<1x256xf32>
    %104 = tpu.matmul %101, %103, %cst_113 {dimension_numbers = #tpu.dot_dimension_numbers<[1], [0], [0], [1], [0, 0, 1, 1], [], []>} : vector<1x128xbf16>, vector<128x256xbf16>, vector<1x256xf32> -> vector<1x256xf32>
    %105 = arith.addf %99, %104 : vector<1x256xf32>
    %c0_114 = arith.constant 0 : index
    %c1_115 = arith.constant 1 : index
    %c5_116 = arith.constant 5 : index
    %c0_117 = arith.constant 0 : index
    %106 = vector.load %arg1[%c0_114, %c1_115, %c5_116, %c0_117] : memref<1x4x7x128xbf16, #tpu.memory_space<vmem>>, vector<1x1x1x128xbf16>
    %107 = vector.shape_cast %106 : vector<1x1x1x128xbf16> to vector<1x128xbf16>
    %c5_118 = arith.constant 5 : index
    %c0_119 = arith.constant 0 : index
    %c0_120 = arith.constant 0 : index
    %108 = vector.load %arg2[%c5_118, %c0_119, %c0_120] : memref<9x128x256xbf16, #tpu.memory_space<vmem>>, vector<1x128x256xbf16>
    %109 = vector.shape_cast %108 : vector<1x128x256xbf16> to vector<128x256xbf16>
    %cst_121 = arith.constant dense<0.000000e+00> : vector<1x256xf32>
    %110 = tpu.matmul %107, %109, %cst_121 {dimension_numbers = #tpu.dot_dimension_numbers<[1], [0], [0], [1], [0, 0, 1, 1], [], []>} : vector<1x128xbf16>, vector<128x256xbf16>, vector<1x256xf32> -> vector<1x256xf32>
    %111 = arith.addf %105, %110 : vector<1x256xf32>
    %c0_122 = arith.constant 0 : index
    %c2_123 = arith.constant 2 : index
    %c5_124 = arith.constant 5 : index
    %c0_125 = arith.constant 0 : index
    %112 = vector.load %arg1[%c0_122, %c2_123, %c5_124, %c0_125] : memref<1x4x7x128xbf16, #tpu.memory_space<vmem>>, vector<1x1x1x128xbf16>
    %113 = vector.shape_cast %112 : vector<1x1x1x128xbf16> to vector<1x128xbf16>
    %c7_126 = arith.constant 7 : index
    %c0_127 = arith.constant 0 : index
    %c0_128 = arith.constant 0 : index
    %114 = vector.load %arg2[%c7_126, %c0_127, %c0_128] : memref<9x128x256xbf16, #tpu.memory_space<vmem>>, vector<1x128x256xbf16>
    %115 = vector.shape_cast %114 : vector<1x128x256xbf16> to vector<128x256xbf16>
    %cst_129 = arith.constant dense<0.000000e+00> : vector<1x256xf32>
    %116 = tpu.matmul %113, %115, %cst_129 {dimension_numbers = #tpu.dot_dimension_numbers<[1], [0], [0], [1], [0, 0, 1, 1], [], []>} : vector<1x128xbf16>, vector<128x256xbf16>, vector<1x256xf32> -> vector<1x256xf32>
    %117 = arith.addf %111, %116 : vector<1x256xf32>
    %c0_130 = arith.constant 0 : index
    %c3_131 = arith.constant 3 : index
    %c5_132 = arith.constant 5 : index
    %c0_133 = arith.constant 0 : index
    %118 = vector.load %arg1[%c0_130, %c3_131, %c5_132, %c0_133] : memref<1x4x7x128xbf16, #tpu.memory_space<vmem>>, vector<1x1x1x128xbf16>
    %119 = vector.shape_cast %118 : vector<1x1x1x128xbf16> to vector<1x128xbf16>
    %c8_134 = arith.constant 8 : index
    %c0_135 = arith.constant 0 : index
    %c0_136 = arith.constant 0 : index
    %120 = vector.load %arg2[%c8_134, %c0_135, %c0_136] : memref<9x128x256xbf16, #tpu.memory_space<vmem>>, vector<1x128x256xbf16>
    %121 = vector.shape_cast %120 : vector<1x128x256xbf16> to vector<128x256xbf16>
    %cst_137 = arith.constant dense<0.000000e+00> : vector<1x256xf32>
    %122 = tpu.matmul %119, %121, %cst_137 {dimension_numbers = #tpu.dot_dimension_numbers<[1], [0], [0], [1], [0, 0, 1, 1], [], []>} : vector<1x128xbf16>, vector<128x256xbf16>, vector<1x256xf32> -> vector<1x256xf32>
    %123 = arith.addf %117, %122 : vector<1x256xf32>
    %c0_138 = arith.constant 0 : index
    %c0_139 = arith.constant 0 : index
    %124 = vector.load %arg3[%c0_138, %c0_139] : memref<1x256xf32, #tpu.memory_space<vmem>>, vector<1x256xf32>
    %125 = arith.addf %123, %124 : vector<1x256xf32>
    %cst_140 = arith.constant 0.000000e+00 : f32
    %126 = vector.broadcast %cst_140 : f32 to vector<1x256xf32>
    %127 = arith.cmpf ogt, %125, %126 : vector<1x256xf32>
    %cst_141 = arith.constant 2.000000e-01 : f32
    %128 = vector.broadcast %cst_141 : f32 to vector<1x256xf32>
    %129 = arith.mulf %128, %125 : vector<1x256xf32>
    %130 = arith.select %127, %125, %129 : vector<1x256xi1>, vector<1x256xf32>
    %131 = arith.truncf %130 : vector<1x256xf32> to vector<1x256xbf16>
    %c2_142 = arith.constant 2 : index
    %c0_143 = arith.constant 0 : index
    %c0_144 = arith.constant 0 : index
    %132 = vector.load %arg4[%c2_142, %c0_143, %c0_144] : memref<4x256x256xbf16, #tpu.memory_space<vmem>>, vector<1x256x256xbf16>
    %133 = vector.shape_cast %132 : vector<1x256x256xbf16> to vector<256x256xbf16>
    %cst_145 = arith.constant dense<0.000000e+00> : vector<1x256xf32>
    %134 = tpu.matmul %131, %133, %cst_145 {dimension_numbers = #tpu.dot_dimension_numbers<[1], [0], [0], [1], [0, 0, 1, 1], [], []>} : vector<1x256xbf16>, vector<256x256xbf16>, vector<1x256xf32> -> vector<1x256xf32>
    %135 = arith.addf %86, %134 : vector<1x256xf32>
    %cst_146 = arith.constant 0.000000e+00 : f32
    %136 = vector.broadcast %cst_146 : f32 to vector<1x256xf32>
    %c0_147 = arith.constant 0 : index
    %c3_148 = arith.constant 3 : index
    %c3_149 = arith.constant 3 : index
    %c0_150 = arith.constant 0 : index
    %137 = vector.load %arg1[%c0_147, %c3_148, %c3_149, %c0_150] : memref<1x4x7x128xbf16, #tpu.memory_space<vmem>>, vector<1x1x1x128xbf16>
    %138 = vector.shape_cast %137 : vector<1x1x1x128xbf16> to vector<1x128xbf16>
    %c0_151 = arith.constant 0 : index
    %c0_152 = arith.constant 0 : index
    %c0_153 = arith.constant 0 : index
    %139 = vector.load %arg2[%c0_151, %c0_152, %c0_153] : memref<9x128x256xbf16, #tpu.memory_space<vmem>>, vector<1x128x256xbf16>
    %140 = vector.shape_cast %139 : vector<1x128x256xbf16> to vector<128x256xbf16>
    %cst_154 = arith.constant dense<0.000000e+00> : vector<1x256xf32>
    %141 = tpu.matmul %138, %140, %cst_154 {dimension_numbers = #tpu.dot_dimension_numbers<[1], [0], [0], [1], [0, 0, 1, 1], [], []>} : vector<1x128xbf16>, vector<128x256xbf16>, vector<1x256xf32> -> vector<1x256xf32>
    %142 = arith.addf %136, %141 : vector<1x256xf32>
    %c0_155 = arith.constant 0 : index
    %c2_156 = arith.constant 2 : index
    %c4_157 = arith.constant 4 : index
    %c0_158 = arith.constant 0 : index
    %143 = vector.load %arg1[%c0_155, %c2_156, %c4_157, %c0_158] : memref<1x4x7x128xbf16, #tpu.memory_space<vmem>>, vector<1x1x1x128xbf16>
    %144 = vector.shape_cast %143 : vector<1x1x1x128xbf16> to vector<1x128xbf16>
    %c1_159 = arith.constant 1 : index
    %c0_160 = arith.constant 0 : index
    %c0_161 = arith.constant 0 : index
    %145 = vector.load %arg2[%c1_159, %c0_160, %c0_161] : memref<9x128x256xbf16, #tpu.memory_space<vmem>>, vector<1x128x256xbf16>
    %146 = vector.shape_cast %145 : vector<1x128x256xbf16> to vector<128x256xbf16>
    %cst_162 = arith.constant dense<0.000000e+00> : vector<1x256xf32>
    %147 = tpu.matmul %144, %146, %cst_162 {dimension_numbers = #tpu.dot_dimension_numbers<[1], [0], [0], [1], [0, 0, 1, 1], [], []>} : vector<1x128xbf16>, vector<128x256xbf16>, vector<1x256xf32> -> vector<1x256xf32>
    %148 = arith.addf %142, %147 : vector<1x256xf32>
    %c0_163 = arith.constant 0 : index
    %c3_164 = arith.constant 3 : index
    %c4_165 = arith.constant 4 : index
    %c0_166 = arith.constant 0 : index
    %149 = vector.load %arg1[%c0_163, %c3_164, %c4_165, %c0_166] : memref<1x4x7x128xbf16, #tpu.memory_space<vmem>>, vector<1x1x1x128xbf16>
    %150 = vector.shape_cast %149 : vector<1x1x1x128xbf16> to vector<1x128xbf16>
    %c2_167 = arith.constant 2 : index
    %c0_168 = arith.constant 0 : index
    %c0_169 = arith.constant 0 : index
    %151 = vector.load %arg2[%c2_167, %c0_168, %c0_169] : memref<9x128x256xbf16, #tpu.memory_space<vmem>>, vector<1x128x256xbf16>
    %152 = vector.shape_cast %151 : vector<1x128x256xbf16> to vector<128x256xbf16>
    %cst_170 = arith.constant dense<0.000000e+00> : vector<1x256xf32>
    %153 = tpu.matmul %150, %152, %cst_170 {dimension_numbers = #tpu.dot_dimension_numbers<[1], [0], [0], [1], [0, 0, 1, 1], [], []>} : vector<1x128xbf16>, vector<128x256xbf16>, vector<1x256xf32> -> vector<1x256xf32>
    %154 = arith.addf %148, %153 : vector<1x256xf32>
    %c0_171 = arith.constant 0 : index
    %c1_172 = arith.constant 1 : index
    %c5_173 = arith.constant 5 : index
    %c0_174 = arith.constant 0 : index
    %155 = vector.load %arg1[%c0_171, %c1_172, %c5_173, %c0_174] : memref<1x4x7x128xbf16, #tpu.memory_space<vmem>>, vector<1x1x1x128xbf16>
    %156 = vector.shape_cast %155 : vector<1x1x1x128xbf16> to vector<1x128xbf16>
    %c3_175 = arith.constant 3 : index
    %c0_176 = arith.constant 0 : index
    %c0_177 = arith.constant 0 : index
    %157 = vector.load %arg2[%c3_175, %c0_176, %c0_177] : memref<9x128x256xbf16, #tpu.memory_space<vmem>>, vector<1x128x256xbf16>
    %158 = vector.shape_cast %157 : vector<1x128x256xbf16> to vector<128x256xbf16>
    %cst_178 = arith.constant dense<0.000000e+00> : vector<1x256xf32>
    %159 = tpu.matmul %156, %158, %cst_178 {dimension_numbers = #tpu.dot_dimension_numbers<[1], [0], [0], [1], [0, 0, 1, 1], [], []>} : vector<1x128xbf16>, vector<128x256xbf16>, vector<1x256xf32> -> vector<1x256xf32>
    %160 = arith.addf %154, %159 : vector<1x256xf32>
    %c0_179 = arith.constant 0 : index
    %c0_180 = arith.constant 0 : index
    %c6_181 = arith.constant 6 : index
    %c0_182 = arith.constant 0 : index
    %161 = vector.load %arg1[%c0_179, %c0_180, %c6_181, %c0_182] : memref<1x4x7x128xbf16, #tpu.memory_space<vmem>>, vector<1x1x1x128xbf16>
    %162 = vector.shape_cast %161 : vector<1x1x1x128xbf16> to vector<1x128xbf16>
    %c4_183 = arith.constant 4 : index
    %c0_184 = arith.constant 0 : index
    %c0_185 = arith.constant 0 : index
    %163 = vector.load %arg2[%c4_183, %c0_184, %c0_185] : memref<9x128x256xbf16, #tpu.memory_space<vmem>>, vector<1x128x256xbf16>
    %164 = vector.shape_cast %163 : vector<1x128x256xbf16> to vector<128x256xbf16>
    %cst_186 = arith.constant dense<0.000000e+00> : vector<1x256xf32>
    %165 = tpu.matmul %162, %164, %cst_186 {dimension_numbers = #tpu.dot_dimension_numbers<[1], [0], [0], [1], [0, 0, 1, 1], [], []>} : vector<1x128xbf16>, vector<128x256xbf16>, vector<1x256xf32> -> vector<1x256xf32>
    %166 = arith.addf %160, %165 : vector<1x256xf32>
    %c0_187 = arith.constant 0 : index
    %c1_188 = arith.constant 1 : index
    %c6_189 = arith.constant 6 : index
    %c0_190 = arith.constant 0 : index
    %167 = vector.load %arg1[%c0_187, %c1_188, %c6_189, %c0_190] : memref<1x4x7x128xbf16, #tpu.memory_space<vmem>>, vector<1x1x1x128xbf16>
    %168 = vector.shape_cast %167 : vector<1x1x1x128xbf16> to vector<1x128xbf16>
    %c5_191 = arith.constant 5 : index
    %c0_192 = arith.constant 0 : index
    %c0_193 = arith.constant 0 : index
    %169 = vector.load %arg2[%c5_191, %c0_192, %c0_193] : memref<9x128x256xbf16, #tpu.memory_space<vmem>>, vector<1x128x256xbf16>
    %170 = vector.shape_cast %169 : vector<1x128x256xbf16> to vector<128x256xbf16>
    %cst_194 = arith.constant dense<0.000000e+00> : vector<1x256xf32>
    %171 = tpu.matmul %168, %170, %cst_194 {dimension_numbers = #tpu.dot_dimension_numbers<[1], [0], [0], [1], [0, 0, 1, 1], [], []>} : vector<1x128xbf16>, vector<128x256xbf16>, vector<1x256xf32> -> vector<1x256xf32>
    %172 = arith.addf %166, %171 : vector<1x256xf32>
    %c0_195 = arith.constant 0 : index
    %c3_196 = arith.constant 3 : index
    %c5_197 = arith.constant 5 : index
    %c0_198 = arith.constant 0 : index
    %173 = vector.load %arg1[%c0_195, %c3_196, %c5_197, %c0_198] : memref<1x4x7x128xbf16, #tpu.memory_space<vmem>>, vector<1x1x1x128xbf16>
    %174 = vector.shape_cast %173 : vector<1x1x1x128xbf16> to vector<1x128xbf16>
    %c6_199 = arith.constant 6 : index
    %c0_200 = arith.constant 0 : index
    %c0_201 = arith.constant 0 : index
    %175 = vector.load %arg2[%c6_199, %c0_200, %c0_201] : memref<9x128x256xbf16, #tpu.memory_space<vmem>>, vector<1x128x256xbf16>
    %176 = vector.shape_cast %175 : vector<1x128x256xbf16> to vector<128x256xbf16>
    %cst_202 = arith.constant dense<0.000000e+00> : vector<1x256xf32>
    %177 = tpu.matmul %174, %176, %cst_202 {dimension_numbers = #tpu.dot_dimension_numbers<[1], [0], [0], [1], [0, 0, 1, 1], [], []>} : vector<1x128xbf16>, vector<128x256xbf16>, vector<1x256xf32> -> vector<1x256xf32>
    %178 = arith.addf %172, %177 : vector<1x256xf32>
    %c0_203 = arith.constant 0 : index
    %c2_204 = arith.constant 2 : index
    %c6_205 = arith.constant 6 : index
    %c0_206 = arith.constant 0 : index
    %179 = vector.load %arg1[%c0_203, %c2_204, %c6_205, %c0_206] : memref<1x4x7x128xbf16, #tpu.memory_space<vmem>>, vector<1x1x1x128xbf16>
    %180 = vector.shape_cast %179 : vector<1x1x1x128xbf16> to vector<1x128xbf16>
    %c7_207 = arith.constant 7 : index
    %c0_208 = arith.constant 0 : index
    %c0_209 = arith.constant 0 : index
    %181 = vector.load %arg2[%c7_207, %c0_208, %c0_209] : memref<9x128x256xbf16, #tpu.memory_space<vmem>>, vector<1x128x256xbf16>
    %182 = vector.shape_cast %181 : vector<1x128x256xbf16> to vector<128x256xbf16>
    %cst_210 = arith.constant dense<0.000000e+00> : vector<1x256xf32>
    %183 = tpu.matmul %180, %182, %cst_210 {dimension_numbers = #tpu.dot_dimension_numbers<[1], [0], [0], [1], [0, 0, 1, 1], [], []>} : vector<1x128xbf16>, vector<128x256xbf16>, vector<1x256xf32> -> vector<1x256xf32>
    %184 = arith.addf %178, %183 : vector<1x256xf32>
    %c0_211 = arith.constant 0 : index
    %c3_212 = arith.constant 3 : index
    %c6_213 = arith.constant 6 : index
    %c0_214 = arith.constant 0 : index
    %185 = vector.load %arg1[%c0_211, %c3_212, %c6_213, %c0_214] : memref<1x4x7x128xbf16, #tpu.memory_space<vmem>>, vector<1x1x1x128xbf16>
    %186 = vector.shape_cast %185 : vector<1x1x1x128xbf16> to vector<1x128xbf16>
    %c8_215 = arith.constant 8 : index
    %c0_216 = arith.constant 0 : index
    %c0_217 = arith.constant 0 : index
    %187 = vector.load %arg2[%c8_215, %c0_216, %c0_217] : memref<9x128x256xbf16, #tpu.memory_space<vmem>>, vector<1x128x256xbf16>
    %188 = vector.shape_cast %187 : vector<1x128x256xbf16> to vector<128x256xbf16>
    %cst_218 = arith.constant dense<0.000000e+00> : vector<1x256xf32>
    %189 = tpu.matmul %186, %188, %cst_218 {dimension_numbers = #tpu.dot_dimension_numbers<[1], [0], [0], [1], [0, 0, 1, 1], [], []>} : vector<1x128xbf16>, vector<128x256xbf16>, vector<1x256xf32> -> vector<1x256xf32>
    %190 = arith.addf %184, %189 : vector<1x256xf32>
    %c0_219 = arith.constant 0 : index
    %c0_220 = arith.constant 0 : index
    %191 = vector.load %arg3[%c0_219, %c0_220] : memref<1x256xf32, #tpu.memory_space<vmem>>, vector<1x256xf32>
    %192 = arith.addf %190, %191 : vector<1x256xf32>
    %cst_221 = arith.constant 0.000000e+00 : f32
    %193 = vector.broadcast %cst_221 : f32 to vector<1x256xf32>
    %194 = arith.cmpf ogt, %192, %193 : vector<1x256xf32>
    %cst_222 = arith.constant 2.000000e-01 : f32
    %195 = vector.broadcast %cst_222 : f32 to vector<1x256xf32>
    %196 = arith.mulf %195, %192 : vector<1x256xf32>
    %197 = arith.select %194, %192, %196 : vector<1x256xi1>, vector<1x256xf32>
    %198 = arith.truncf %197 : vector<1x256xf32> to vector<1x256xbf16>
    %c3_223 = arith.constant 3 : index
    %c0_224 = arith.constant 0 : index
    %c0_225 = arith.constant 0 : index
    %199 = vector.load %arg4[%c3_223, %c0_224, %c0_225] : memref<4x256x256xbf16, #tpu.memory_space<vmem>>, vector<1x256x256xbf16>
    %200 = vector.shape_cast %199 : vector<1x256x256xbf16> to vector<256x256xbf16>
    %cst_226 = arith.constant dense<0.000000e+00> : vector<1x256xf32>
    %201 = tpu.matmul %198, %200, %cst_226 {dimension_numbers = #tpu.dot_dimension_numbers<[1], [0], [0], [1], [0, 0, 1, 1], [], []>} : vector<1x256xbf16>, vector<256x256xbf16>, vector<1x256xf32> -> vector<1x256xf32>
    %202 = arith.addf %135, %201 : vector<1x256xf32>
    %c0_227 = arith.constant 0 : index
    %c0_228 = arith.constant 0 : index
    %203 = vector.load %arg5[%c0_227, %c0_228] : memref<1x256xf32, #tpu.memory_space<vmem>>, vector<1x256xf32>
    %204 = arith.addf %202, %203 : vector<1x256xf32>
    %205 = vector.extract_strided_slice %204 {offsets = [0, 0], sizes = [1, 128], strides = [1, 1]} : vector<1x256xf32> to vector<1x128xf32>
    %cst_229 = arith.constant 0.000000e+00 : f32
    %206 = vector.broadcast %cst_229 : f32 to vector<1x128xf32>
    %207 = arith.maximumf %205, %206 : vector<1x128xf32>
    %208 = arith.truncf %207 : vector<1x128xf32> to vector<1x128xbf16>
    %209 = tpu.iota {dimensions = array<i32: 1>} : vector<1x256xi32>
    %c128_i32 = arith.constant 128 : i32
    %210 = vector.broadcast %c128_i32 : i32 to vector<1x256xi32>
    %211 = arith.cmpi eq, %209, %210 : vector<1x256xi32>
    %cst_230 = arith.constant 0.000000e+00 : f32
    %212 = vector.broadcast %cst_230 : f32 to vector<1x256xf32>
    %213 = arith.select %211, %204, %212 : vector<1x256xi1>, vector<1x256xf32>
    %cst_231 = arith.constant dense<0.000000e+00> : vector<1xf32>
    %214 = vector.multi_reduction <add>, %213, %cst_231 [1] : vector<1x256xf32> to vector<1xf32>
    %215 = vector.shape_cast %214 : vector<1xf32> to vector<1x1xf32>
    %c0_232 = arith.constant 0 : index
    %c0_233 = arith.constant 0 : index
    %216 = vector.load %arg6[%c0_232, %c0_233] : memref<128x128xbf16, #tpu.memory_space<vmem>>, vector<128x128xbf16>
    %cst_234 = arith.constant dense<0.000000e+00> : vector<1x128xf32>
    %217 = tpu.matmul %208, %216, %cst_234 {dimension_numbers = #tpu.dot_dimension_numbers<[1], [0], [0], [1], [0, 0, 1, 1], [], []>} : vector<1x128xbf16>, vector<128x128xbf16>, vector<1x128xf32> -> vector<1x128xf32>
    %c0_235 = arith.constant 0 : index
    %c0_236 = arith.constant 0 : index
    %218 = vector.load %arg7[%c0_235, %c0_236] : memref<1x128xf32, #tpu.memory_space<vmem>>, vector<1x128xf32>
    %219 = arith.addf %217, %218 : vector<1x128xf32>
    %220 = tpu.iota {dimensions = array<i32: 1>} : vector<1x128xi32>
    %c10_i32 = arith.constant 10 : i32
    %221 = vector.broadcast %c10_i32 : i32 to vector<1x128xi32>
    %222 = arith.cmpi eq, %220, %221 : vector<1x128xi32>
    %223 = arith.extui %222 : vector<1x128xi1> to vector<1x128xi32>
    %224 = arith.sitofp %223 : vector<1x128xi32> to vector<1x128xf32>
    %225 = vector.broadcast %215 : vector<1x1xf32> to vector<1x128xf32>
    %226 = arith.mulf %225, %224 : vector<1x128xf32>
    %227 = arith.addf %219, %226 : vector<1x128xf32>
    %c0_237 = arith.constant 0 : index
    %c0_238 = arith.constant 0 : index
    %c0_239 = arith.constant 0 : index
    %228 = vector.load %arg8[%c0_237, %c0_238, %c0_239] : memref<1x1x128xf32, #tpu.memory_space<vmem>>, vector<1x1x128xf32>
    %229 = vector.shape_cast %228 : vector<1x1x128xf32> to vector<1x128xf32>
    %230 = vector.shape_cast %227 : vector<1x128xf32> to vector<1x1x128xf32>
    tpu.vector_store %arg8[%c0_237, %c0_238, %c0_239], %230 {strides = array<i32>} : memref<1x1x128xf32, #tpu.memory_space<vmem>>, vector<1x1x128xf32>,
    return
  }
  func.func @transform_0(%arg0: i32) -> (i32, i32, i32, i32) {
    %c0_i32 = arith.constant 0 : i32
    %c0_i32_0 = arith.constant 0 : i32
    %c0_i32_1 = arith.constant 0 : i32
    %c0_i32_2 = arith.constant 0 : i32
    return %arg0, %c0_i32, %c0_i32_0, %c0_i32_1 : i32, i32, i32, i32
  }
  func.func @transform_1(%arg0: i32) -> (i32, i32, i32) {
    %c0_i32 = arith.constant 0 : i32
    %c0_i32_0 = arith.constant 0 : i32
    %c0_i32_1 = arith.constant 0 : i32
    %c0_i32_2 = arith.constant 0 : i32
    return %c0_i32, %c0_i32_0, %c0_i32_1 : i32, i32, i32
  }
  func.func @transform_2(%arg0: i32) -> (i32, i32) {
    %c0_i32 = arith.constant 0 : i32
    %c0_i32_0 = arith.constant 0 : i32
    %c0_i32_1 = arith.constant 0 : i32
    return %c0_i32, %c0_i32_0 : i32, i32
  }
  func.func @transform_3(%arg0: i32) -> (i32, i32, i32) {
    %c0_i32 = arith.constant 0 : i32
    %c0_i32_0 = arith.constant 0 : i32
    %c0_i32_1 = arith.constant 0 : i32
    %c0_i32_2 = arith.constant 0 : i32
    return %c0_i32, %c0_i32_0, %c0_i32_1 : i32, i32, i32
  }
  func.func @transform_4(%arg0: i32) -> (i32, i32) {
    %c0_i32 = arith.constant 0 : i32
    %c0_i32_0 = arith.constant 0 : i32
    %c0_i32_1 = arith.constant 0 : i32
    return %c0_i32, %c0_i32_0 : i32, i32
  }
  func.func @transform_5(%arg0: i32) -> (i32, i32) {
    %c0_i32 = arith.constant 0 : i32
    %c0_i32_0 = arith.constant 0 : i32
    %c0_i32_1 = arith.constant 0 : i32
    return %c0_i32, %c0_i32_0 : i32, i32
  }
  func.func @transform_6(%arg0: i32) -> (i32, i32) {
    %c0_i32 = arith.constant 0 : i32
    %c0_i32_0 = arith.constant 0 : i32
    %c0_i32_1 = arith.constant 0 : i32
    return %c0_i32, %c0_i32_0 : i32, i32
  }
  func.func @transform_7(%arg0: i32) -> (i32, i32, i32) {
    %c0_i32 = arith.constant 0 : i32
    %c0_i32_0 = arith.constant 0 : i32
    %c0_i32_1 = arith.constant 0 : i32
    return %arg0, %c0_i32, %c0_i32_0 : i32, i32, i32
  }
}

</mosaic_0001>

<llo_original>
// kernel: discriminator_forward.5
$region0: #{discriminator_forward.5}
  #allocation0 [shape = 'u32[]', space=smem, size = 0x4, offset = 0x4, fixed_abs, tag = 'smem constant byte address 0x4 - core index']
  #allocation1 [shape = 'u32[72,128]{1,0:T(1,128)}', space=vmem, size = 0x9000, scoped, tag = 'internal scratch']
  %s0 = inlined_call_operand.vmem [shape: bf16[2,4,73,64], index: 0, kind: input, shape index: {}]
  %s1 = inlined_call_operand.vmem [shape: bf16[9,64,128], index: 1, kind: input, shape index: {}]
  %s2 = inlined_call_operand.vmem [shape: f32[1,128], index: 2, kind: input, shape index: {}]
  %s3 = inlined_call_operand.vmem [shape: bf16[128,128], index: 3, kind: output, shape index: {}]
  %s4 = sld [smem:[#allocation0]]
  $region45: #{discriminator_forward.5} parent=0
    _
  %s6 = ssub.s32 1, %s4
  %s7 = scalar_select 0, %s6, %s4
  loop: start=0, step=1, limit=4
  $region2: #{discriminator_forward.5} parent=0 // loop_pre_header
    _
  $region3: #{discriminator_forward.5} parent=0 // loop_header
    %s9 = sphi 0, %s13
    %p10 = scmp.ge.s32.totalorder %s9, 4
    %s19 = sphi 0, %s21
    %s22 = sphi 0, %s19
    %s23 = sphi 0, %s22
    %s39 = sphi 0, %s23
    %s43 = sphi 0, %s43
    %s45 = sphi 0, %s43
    %s46 = sphi 0, %s45
    %s60 = sphi 0, %s46
    %s64 = sphi 0, %s64
    %s66 = sphi 0, %s64
    %s67 = sphi 0, %s66
    %s81 = sphi 0, %s67
    %s87 = sphi 0, %s89
    %s90 = sphi 0, %s87
    %s91 = sphi 0, %s90
    %s107 = sphi 0, %s91
  $region4: #{discriminator_forward.5} parent=0 // loop_header_branch
    %12 = sbr.rel (%p10) target = $region8
  $region5: #{discriminator_forward.5} parent=0 // loop_body
    %s14 = ssub.s32 %s9, 1
    %s15 = ssub.s32 %s9, 2
    %s16 = sadd.s32 %s9, 1
    %s17 = ssub.s32 %s9, %s16
    %p18 = scmp.eq.s32.totalorder %s17, 0
    %s20 = sadd.s32 %s19, 1
    %s21 = scalar_select %p18, %s19, %s20
    %p24 = pneg %p18
    %p25 = scmp.eq.s32.totalorder %s9, 1
    %p26 = por %p24, %p25
    %p27 = scmp.ne.s32.totalorder %s19, %s22
    %p28 = scmp.eq.s32.totalorder %s9, 0
    %p29 = por %p27, %p28
    %p30 = scmp.ne.s32.totalorder %s19, %s22
    %p31 = scmp.eq.s32.totalorder %s14, 1
    %p32 = por %p30, %p31
    %p33 = scmp.ne.s32.totalorder %s22, %s23
    %p34 = scmp.eq.s32.totalorder %s14, 0
    %p35 = por %p33, %p34
    %p36 = scmp.ne.s32.totalorder %s22, %s23
    %p37 = scmp.eq.s32.totalorder %s15, 1
    %p38 = por %p36, %p37
    %p40 = scmp.ne.s32.totalorder %s23, %s39
    %p41 = scmp.eq.s32.totalorder %s15, 0
    %p42 = por %p40, %p41
    %s44 = sadd.s32 %s43, 1
    %p47 = scmp.eq.s32.totalorder %s9, 1
    %p48 = scmp.ne.s32.totalorder %s43, %s45
    %p49 = scmp.eq.s32.totalorder %s9, 0
    %p50 = por %p48, %p49
    %p51 = scmp.ne.s32.totalorder %s43, %s45
    %p52 = scmp.eq.s32.totalorder %s14, 1
    %p53 = por %p51, %p52
    %p54 = scmp.ne.s32.totalorder %s45, %s46
    %p55 = scmp.eq.s32.totalorder %s14, 0
    %p56 = por %p54, %p55
    %p57 = scmp.ne.s32.totalorder %s45, %s46
    %p58 = scmp.eq.s32.totalorder %s15, 1
    %p59 = por %p57, %p58
    %p61 = scmp.ne.s32.totalorder %s46, %s60
    %p62 = scmp.eq.s32.totalorder %s15, 0
    %p63 = por %p61, %p62
    %s65 = sadd.s32 %s64, 1
    %p68 = scmp.eq.s32.totalorder %s9, 1
    %p69 = scmp.ne.s32.totalorder %s64, %s66
    %p70 = scmp.eq.s32.totalorder %s9, 0
    %p71 = por %p69, %p70
    %p72 = scmp.ne.s32.totalorder %s64, %s66
    %p73 = scmp.eq.s32.totalorder %s14, 1
    %p74 = por %p72, %p73
    %p75 = scmp.ne.s32.totalorder %s66, %s67
    %p76 = scmp.eq.s32.totalorder %s14, 0
    %p77 = por %p75, %p76
    %p78 = scmp.ne.s32.totalorder %s66, %s67
    %p79 = scmp.eq.s32.totalorder %s15, 1
    %p80 = por %p78, %p79
    %p82 = scmp.ne.s32.totalorder %s67, %s81
    %p83 = scmp.eq.s32.totalorder %s15, 0
    %p84 = por %p82, %p83
    %s85 = ssub.s32 %s9, %s16
    %p86 = scmp.eq.s32.totalorder %s85, 0
    %s88 = sadd.s32 %s87, 1
    %s89 = scalar_select %p86, %s87, %s88
    %p92 = pneg %p86
    %p93 = scmp.eq.s32.totalorder %s9, 1
    %p94 = por %p92, %p93
    %p95 = scmp.ne.s32.totalorder %s87, %s90
    %p96 = scmp.eq.s32.totalorder %s9, 0
    %p97 = por %p95, %p96
    %p98 = scmp.ne.s32.totalorder %s87, %s90
    %p99 = scmp.eq.s32.totalorder %s14, 1
    %p100 = por %p98, %p99
    %p101 = scmp.ne.s32.totalorder %s90, %s91
    %p102 = scmp.eq.s32.totalorder %s14, 0
    %p103 = por %p101, %p102
    %p104 = scmp.ne.s32.totalorder %s90, %s91
    %p105 = scmp.eq.s32.totalorder %s15, 1
    %p106 = por %p104, %p105
    %p108 = scmp.ne.s32.totalorder %s91, %s107
    %p109 = scmp.eq.s32.totalorder %s15, 0
    %p110 = por %p108, %p109
    %p111 = scmp.le.s32.totalorder 1, %s9
    %p112 = scmp.lt.s32.totalorder %s9, 3
    %p113 = pnand %p111, %p112
    %p114 = pneg %p113
    // Predicated region
    $region9: #{discriminator_forward.5} parent=5 // pred_check
      _
    $region10: #{discriminator_forward.5} parent=5 // pred_check_branch
      %116 = sbr.rel (%p113) target = $region12
    $region11: #{discriminator_forward.5} parent=5 // pred_region
      %s117 = ssub.s32 %s9, 1
      // Predicated region
      $region13: #{discriminator_forward.5} parent=11 // pred_check
        %p118 = pneg %p56
      $region14: #{discriminator_forward.5} parent=11 // pred_check_branch
        %120 = sbr.rel (%p118) target = $region16
      $region15: #{discriminator_forward.5} parent=11 // pred_region
        _
      $region16: #{discriminator_forward.5} parent=11 // pred_fallthru
        _
      // Predicated region
      $region17: #{discriminator_forward.5} parent=11 // pred_check
        %p121 = pneg %p77
      $region18: #{discriminator_forward.5} parent=11 // pred_check_branch
        %123 = sbr.rel (%p121) target = $region20
      $region19: #{discriminator_forward.5} parent=11 // pred_region
        _
      $region20: #{discriminator_forward.5} parent=11 // pred_fallthru
        _
    $region12: #{discriminator_forward.5} parent=5 // pred_fallthru
      _
    %p124 = scmp.lt.s32.totalorder %s9, 2
    // Predicated region
    $region21: #{discriminator_forward.5} parent=5 // pred_check
      %p125 = pneg %p124
    $region22: #{discriminator_forward.5} parent=5 // pred_check_branch
      %127 = sbr.rel (%p125) target = $region24
    $region23: #{discriminator_forward.5} parent=5 // pred_region
      // Predicated region
      $region25: #{discriminator_forward.5} parent=23 // pred_check
        %p128 = pneg %p29
      $region26: #{discriminator_forward.5} parent=23 // pred_check_branch
        %130 = sbr.rel (%p128) target = $region28
      $region27: #{discriminator_forward.5} parent=23 // pred_region
        %p131 = scmp.lt.s32.totalorder %s9, 1
        %s132 = scalar_select %p131, %s9, 1
        %s133 = smul.addr %s132, 40
        %s134 = smul.addr %s133, 4
        %s135 = scalar_lea.vmem %s0, %s134
      $region28: #{discriminator_forward.5} parent=23 // pred_fallthru
        _
    $region24: #{discriminator_forward.5} parent=5 // pred_fallthru
      _
    %p136 = scmp.le.s32.totalorder 1, %s9
    %p137 = scmp.lt.s32.totalorder %s9, 3
    %p138 = pnand %p136, %p137
    %p139 = pneg %p138
    // Predicated region
    $region29: #{discriminator_forward.5} parent=5 // pred_check
      _
    $region30: #{discriminator_forward.5} parent=5 // pred_check_branch
      %141 = sbr.rel (%p138) target = $region32
    $region31: #{discriminator_forward.5} parent=5 // pred_region
      %s142 = ssub.s32 %s9, 1
      %p143 = scmp.lt.s32.totalorder %s14, 1
      %s144 = scalar_select %p143, %s14, 1
      %s145 = smul.addr %s144, 40
      %s146 = smul.addr %s145, 4
      %s147 = scalar_lea.vmem %s0, %s146
      %p148 = pneg %p35
      %p149 = pneg %p32
      %p150 = pneg %p56
      %p151 = pneg %p53
      %p152 = pneg %p77
      %p153 = pneg %p74
      %p154 = pneg %p103
      %p155 = pneg %p100
      %s156 = smul.u32 8, %s14
      %p157 = scmp.lt.s32.totalorder %s156, 15
      %s158 = scalar_select %p157, %s156, 15
      %s159 = smul.addr %s158, 4
      %s160 = scalar_lea.vmem %s3, %s159
      %p161 = scmp.lt.s32.totalorder %s14, 1
      %s162 = scalar_select %p161, %s14, 1
      %s163 = smul.addr %s162, 40
      %s164 = smul.addr %s163, 4
      %s165 = scalar_lea.vmem %s0, %s164
      %s166 = smul.u32 8, %s14
      %p167 = scmp.lt.s32.totalorder %s166, 15
      %s168 = scalar_select %p167, %s166, 15
      %s169 = smul.addr %s168, 4
      %s170 = scalar_lea.vmem %s3, %s169
      %s171 = smul.u32 8, %s14
      %s173 = scalar_lea.vmem %s165, 120
      %v174 = vld [vmem:[%s173] sm:$0xf]
      %v175 = vld [vmem:[%s173 + $0x4] sm:$0xf]
      %v176 = vld [vmem:[%s173 + $0x8] sm:$0xf]
      %v177 = vld [vmem:[%s173 + $0xc] sm:$0xf]
      %v178 = vld [vmem:[%s173 + $0x10] sm:$0xf]
      %v179 = vld [vmem:[%s173 + $0x14] sm:$0xf]
      %v180 = vld [vmem:[%s173 + $0x18] sm:$0xf]
      %v181 = vld [vmem:[%s173 + $0x1c] sm:$0xf]
      %v182 = vld [vmem:[%s1] sm:$0xf]
      %v183 = vld [vmem:[%s1 + $0x4] sm:$0xf]
      %v184 = vld [vmem:[%s1 + $0x8] sm:$0xf]
      %v185 = vld [vmem:[%s1 + $0xc] sm:$0xf]
      %v186 = vld [vmem:[%s1 + $0x10] sm:$0xf]
      %v187 = vld [vmem:[%s1 + $0x14] sm:$0xf]
      %v188 = vld [vmem:[%s1 + $0x18] sm:$0xf]
      %v189 = vld [vmem:[%s1 + $0x1c] sm:$0xf]
      %s190 = scalar_lea.vmem %s165, 80
      %v191 = vld [vmem:[%s190] sm:$0xf]
      %v192 = vld [vmem:[%s190 + $0x4] sm:$0xf]
      %v193 = vld [vmem:[%s190 + $0x8] sm:$0xf]
      %v194 = vld [vmem:[%s190 + $0xc] sm:$0xf]
      %v195 = vld [vmem:[%s190 + $0x10] sm:$0xf]
      %v196 = vld [vmem:[%s190 + $0x14] sm:$0xf]
      %v197 = vld [vmem:[%s190 + $0x18] sm:$0xf]
      %v198 = vld [vmem:[%s190 + $0x1c] sm:$0xf]
      %v199 = vld [vmem:[%s190 + $0x20] sm:$0x1]
      %s200 = scalar_lea.vmem %s1, 32
      %v201 = vld [vmem:[%s200] sm:$0xf]
      %v202 = vld [vmem:[%s200 + $0x4] sm:$0xf]
      %v203 = vld [vmem:[%s200 + $0x8] sm:$0xf]
      %v204 = vld [vmem:[%s200 + $0xc] sm:$0xf]
      %v205 = vld [vmem:[%s200 + $0x10] sm:$0xf]
      %v206 = vld [vmem:[%s200 + $0x14] sm:$0xf]
      %v207 = vld [vmem:[%s200 + $0x18] sm:$0xf]
      %v208 = vld [vmem:[%s200 + $0x1c] sm:$0xf]
      %v209 = vld [vmem:[%s173 + $0x20] sm:$0x1]
      %s210 = scalar_lea.vmem %s1, 64
      %v211 = vld [vmem:[%s210] sm:$0xf]
      %v212 = vld [vmem:[%s210 + $0x4] sm:$0xf]
      %v213 = vld [vmem:[%s210 + $0x8] sm:$0xf]
      %v214 = vld [vmem:[%s210 + $0xc] sm:$0xf]
      %v215 = vld [vmem:[%s210 + $0x10] sm:$0xf]
      %v216 = vld [vmem:[%s210 + $0x14] sm:$0xf]
      %v217 = vld [vmem:[%s210 + $0x18] sm:$0xf]
      %v218 = vld [vmem:[%s210 + $0x1c] sm:$0xf]
      %v228 = vunpack.c.l.b16 %v174
      %v229 = vunpack.c.l.b16 %v175
      %v230 = vunpack.c.l.b16 %v176
      %v231 = vunpack.c.l.b16 %v177
      %v232 = vunpack.c.l.b16 %v178
      %v233 = vunpack.c.l.b16 %v179
      %v234 = vunpack.c.l.b16 %v180
      %v235 = vunpack.c.l.b16 %v181
      %v236 = vunpack.c.l.b16 %v209
      %v237 = vpack.c.b16 %v229, %v228
      %v238 = vpack.c.b16 %v231, %v230
      %v239 = vpack.c.b16 %v233, %v232
      %v240 = vpack.c.b16 %v235, %v234
      %v241 = vpack.c.b16 %v236, %v236
      %vm242 = vsmask.f32 7424
      %v244 = vshrl.u32 %v237, 16
      %v246 = vshll.u32 %v237, 16
      %v248 = vrot.slane %v246, 1
      %v249 = vor.u32 %v244, %v248
      %v251 = vshll.u32 %v238, 16
      %v253 = vrot.slane %v251, 1
      %v254 = vsel %vm242, %v249, %v253
      %v255 = vshrl.u32 %v238, 16
      %v257 = vor.u32 %v255, %v253
      %v259 = vshll.u32 %v239, 16
      %v261 = vrot.slane %v259, 1
      %v262 = vsel %vm242, %v257, %v261
      %v263 = vshrl.u32 %v239, 16
      %v265 = vor.u32 %v263, %v261
      %v267 = vshll.u32 %v240, 16
      %v269 = vrot.slane %v267, 1
      %v270 = vsel %vm242, %v265, %v269
      %v271 = vshrl.u32 %v240, 16
      %v273 = vor.u32 %v271, %v269
      %v275 = vshll.u32 %v241, 16
      %v277 = vrot.slane %v275, 1
      %v278 = vsel %vm242, %v273, %v277
      %v287 = vunpack.c.l.b16 %v211
      %v288 = vunpack.c.l.b16 %v212
      %v289 = vunpack.c.l.b16 %v213
      %v290 = vunpack.c.l.b16 %v214
      %v291 = vunpack.c.l.b16 %v215
      %v292 = vunpack.c.l.b16 %v216
      %v293 = vunpack.c.l.b16 %v217
      %v294 = vunpack.c.l.b16 %v218
      %v295 = vpack.c.b16 %v288, %v287
      %v296 = vpack.c.b16 %v290, %v289
      %v297 = vpack.c.b16 %v292, %v291
      %v298 = vpack.c.b16 %v294, %v293
      %vm303 = vcmask 523264
      %v305 = vsel %vm303, %v254, 0
      %v308 = vsel %vm303, %v262, 0
      %v311 = vsel %vm303, %v270, 0
      %v314 = vsel %vm303, %v278, 0
      %316 = vmatpush.bf16.msra.mxu0 0
      %317 = vmatpush.bf16.msra.mxu0 0
      %318 = vmatpush.bf16.msra.mxu0 0
      %319 = vmatpush.bf16.msra.mxu0 0
      %320 = vmatpush.bf16.msra.mxu0 %v298
      %321 = vmatpush.bf16.msra.mxu0 %v297
      %322 = vmatpush.bf16.msra.mxu0 %v296
      %323 = vmatpush.bf16.msra.mxu0 %v295
      %324 = vmatmul.bf16.gmra.mxu0 %v305
      %v325 = vpop.f32.mrf.mxu0
      %v326 = vadd.f32 0.0, %v325
      %v327 = vpop.f32.mrf.mxu0
      %v328 = vadd.f32 0.0, %v327
      %329 = vmatmul.bf16.gmra.mxu0 %v308
      %v330 = vpop.f32.mrf.mxu0
      %v331 = vadd.f32 0.0, %v330
      %v332 = vpop.f32.mrf.mxu0
      %v333 = vadd.f32 0.0, %v332
      %334 = vmatmul.bf16.gmra.mxu0 %v311
      %v335 = vpop.f32.mrf.mxu0
      %v336 = vadd.f32 0.0, %v335
      %v337 = vpop.f32.mrf.mxu0
      %v338 = vadd.f32 0.0, %v337
      %339 = vmatmul.bf16.gmra.mxu0 %v314
      %v340 = vpop.f32.mrf.mxu0
      %v341 = vadd.f32 0.0, %v340
      %v342 = vpop.f32.mrf.mxu0
      %v343 = vadd.f32 0.0, %v342
      %344 = vdwg.mxu0
      %v354 = vunpack.c.l.b16 %v191
      %v355 = vunpack.c.l.b16 %v192
      %v356 = vunpack.c.l.b16 %v193
      %v357 = vunpack.c.l.b16 %v194
      %v358 = vunpack.c.l.b16 %v195
      %v359 = vunpack.c.l.b16 %v196
      %v360 = vunpack.c.l.b16 %v197
      %v361 = vunpack.c.l.b16 %v198
      %v362 = vunpack.c.l.b16 %v199
      %v363 = vpack.c.b16 %v355, %v354
      %v364 = vpack.c.b16 %v357, %v356
      %v365 = vpack.c.b16 %v359, %v358
      %v366 = vpack.c.b16 %v361, %v360
      %v367 = vpack.c.b16 %v362, %v362
      %v369 = vshrl.u32 %v363, 16
      %v371 = vshll.u32 %v363, 16
      %v373 = vrot.slane %v371, 1
      %v374 = vor.u32 %v369, %v373
      %v376 = vshll.u32 %v364, 16
      %v378 = vrot.slane %v376, 1
      %v379 = vsel %vm242, %v374, %v378
      %v380 = vshrl.u32 %v364, 16
      %v382 = vor.u32 %v380, %v378
      %v384 = vshll.u32 %v365, 16
      %v386 = vrot.slane %v384, 1
      %v387 = vsel %vm242, %v382, %v386
      %v388 = vshrl.u32 %v365, 16
      %v390 = vor.u32 %v388, %v386
      %v392 = vshll.u32 %v366, 16
      %v394 = vrot.slane %v392, 1
      %v395 = vsel %vm242, %v390, %v394
      %v396 = vshrl.u32 %v366, 16
      %v398 = vor.u32 %v396, %v394
      %v400 = vshll.u32 %v367, 16
      %v402 = vrot.slane %v400, 1
      %v403 = vsel %vm242, %v398, %v402
      %v412 = vunpack.c.l.b16 %v201
      %v413 = vunpack.c.l.b16 %v202
      %v414 = vunpack.c.l.b16 %v203
      %v415 = vunpack.c.l.b16 %v204
      %v416 = vunpack.c.l.b16 %v205
      %v417 = vunpack.c.l.b16 %v206
      %v418 = vunpack.c.l.b16 %v207
      %v419 = vunpack.c.l.b16 %v208
      %v420 = vpack.c.b16 %v413, %v412
      %v421 = vpack.c.b16 %v415, %v414
      %v422 = vpack.c.b16 %v417, %v416
      %v423 = vpack.c.b16 %v419, %v418
      %v429 = vsel %vm303, %v379, 0
      %v432 = vsel %vm303, %v387, 0
      %v435 = vsel %vm303, %v395, 0
      %v438 = vsel %vm303, %v403, 0
      %440 = vmatpush.bf16.msra.mxu0 0
      %441 = vmatpush.bf16.msra.mxu0 0
      %442 = vmatpush.bf16.msra.mxu0 0
      %443 = vmatpush.bf16.msra.mxu0 0
      %444 = vmatpush.bf16.msra.mxu0 %v423
      %445 = vmatpush.bf16.msra.mxu0 %v422
      %446 = vmatpush.bf16.msra.mxu0 %v421
      %447 = vmatpush.bf16.msra.mxu0 %v420
      %448 = vmatmul.bf16.gmra.mxu0 %v429
      %v449 = vpop.f32.mrf.mxu0
      %v450 = vadd.f32 %v326, %v449
      %v451 = vpop.f32.mrf.mxu0
      %v452 = vadd.f32 %v328, %v451
      %453 = vmatmul.bf16.gmra.mxu0 %v432
      %v454 = vpop.f32.mrf.mxu0
      %v455 = vadd.f32 %v331, %v454
      %v456 = vpop.f32.mrf.mxu0
      %v457 = vadd.f32 %v333, %v456
      %458 = vmatmul.bf16.gmra.mxu0 %v435
      %v459 = vpop.f32.mrf.mxu0
      %v460 = vadd.f32 %v336, %v459
      %v461 = vpop.f32.mrf.mxu0
      %v462 = vadd.f32 %v338, %v461
      %463 = vmatmul.bf16.gmra.mxu0 %v438
      %v464 = vpop.f32.mrf.mxu0
      %v465 = vadd.f32 %v341, %v464
      %v466 = vpop.f32.mrf.mxu0
      %v467 = vadd.f32 %v343, %v466
      %468 = vdwg.mxu0
      %s469 = scalar_lea.vmem %s165, 40
      %v470 = vld [vmem:[%s469 + $0x4] sm:$0xf]
      %v471 = vld [vmem:[%s469 + $0x8] sm:$0xf]
      %v472 = vld [vmem:[%s469 + $0xc] sm:$0xf]
      %v473 = vld [vmem:[%s469 + $0x10] sm:$0xf]
      %v474 = vld [vmem:[%s469 + $0x14] sm:$0xf]
      %v475 = vld [vmem:[%s469 + $0x18] sm:$0xf]
      %v476 = vld [vmem:[%s469 + $0x1c] sm:$0xf]
      %v477 = vld [vmem:[%s469 + $0x20] sm:$0xf]
      %s478 = scalar_lea.vmem %s1, 96
      %v479 = vld [vmem:[%s478] sm:$0xf]
      %v480 = vld [vmem:[%s478 + $0x4] sm:$0xf]
      %v481 = vld [vmem:[%s478 + $0x8] sm:$0xf]
      %v482 = vld [vmem:[%s478 + $0xc] sm:$0xf]
      %v483 = vld [vmem:[%s478 + $0x10] sm:$0xf]
      %v484 = vld [vmem:[%s478 + $0x14] sm:$0xf]
      %v485 = vld [vmem:[%s478 + $0x18] sm:$0xf]
      %v486 = vld [vmem:[%s478 + $0x1c] sm:$0xf]
      %v495 = vunpack.c.l.b16 %v470
      %v496 = vunpack.c.l.b16 %v471
      %v497 = vunpack.c.l.b16 %v472
      %v498 = vunpack.c.l.b16 %v473
      %v499 = vunpack.c.l.b16 %v474
      %v500 = vunpack.c.l.b16 %v475
      %v501 = vunpack.c.l.b16 %v476
      %v502 = vunpack.c.l.b16 %v477
      %v503 = vpack.c.b16 %v496, %v495
      %v504 = vpack.c.b16 %v498, %v497
      %v505 = vpack.c.b16 %v500, %v499
      %v506 = vpack.c.b16 %v502, %v501
      %v515 = vunpack.c.l.b16 %v479
      %v516 = vunpack.c.l.b16 %v480
      %v517 = vunpack.c.l.b16 %v481
      %v518 = vunpack.c.l.b16 %v482
      %v519 = vunpack.c.l.b16 %v483
      %v520 = vunpack.c.l.b16 %v484
      %v521 = vunpack.c.l.b16 %v485
      %v522 = vunpack.c.l.b16 %v486
      %v523 = vpack.c.b16 %v516, %v515
      %v524 = vpack.c.b16 %v518, %v517
      %v525 = vpack.c.b16 %v520, %v519
      %v526 = vpack.c.b16 %v522, %v521
      %v532 = vsel %vm303, %v503, 0
      %v535 = vsel %vm303, %v504, 0
      %v538 = vsel %vm303, %v505, 0
      %v541 = vsel %vm303, %v506, 0
      %543 = vmatpush.bf16.msra.mxu0 0
      %544 = vmatpush.bf16.msra.mxu0 0
      %545 = vmatpush.bf16.msra.mxu0 0
      %546 = vmatpush.bf16.msra.mxu0 0
      %547 = vmatpush.bf16.msra.mxu0 %v526
      %548 = vmatpush.bf16.msra.mxu0 %v525
      %549 = vmatpush.bf16.msra.mxu0 %v524
      %550 = vmatpush.bf16.msra.mxu0 %v523
      %551 = vmatmul.bf16.gmra.mxu0 %v532
      %v552 = vpop.f32.mrf.mxu0
      %v553 = vadd.f32 0.0, %v552
      %v554 = vpop.f32.mrf.mxu0
      %v555 = vadd.f32 0.0, %v554
      %556 = vmatmul.bf16.gmra.mxu0 %v535
      %v557 = vpop.f32.mrf.mxu0
      %v558 = vadd.f32 0.0, %v557
      %v559 = vpop.f32.mrf.mxu0
      %v560 = vadd.f32 0.0, %v559
      %561 = vmatmul.bf16.gmra.mxu0 %v538
      %v562 = vpop.f32.mrf.mxu0
      %v563 = vadd.f32 0.0, %v562
      %v564 = vpop.f32.mrf.mxu0
      %v565 = vadd.f32 0.0, %v564
      %566 = vmatmul.bf16.gmra.mxu0 %v541
      %v567 = vpop.f32.mrf.mxu0
      %v568 = vadd.f32 0.0, %v567
      %v569 = vpop.f32.mrf.mxu0
      %v570 = vadd.f32 0.0, %v569
      %571 = vdwg.mxu0
      %v580 = vunpack.c.l.b16 %v182
      %v581 = vunpack.c.l.b16 %v183
      %v582 = vunpack.c.l.b16 %v184
      %v583 = vunpack.c.l.b16 %v185
      %v584 = vunpack.c.l.b16 %v186
      %v585 = vunpack.c.l.b16 %v187
      %v586 = vunpack.c.l.b16 %v188
      %v587 = vunpack.c.l.b16 %v189
      %v588 = vpack.c.b16 %v581, %v580
      %v589 = vpack.c.b16 %v583, %v582
      %v590 = vpack.c.b16 %v585, %v584
      %v591 = vpack.c.b16 %v587, %v586
      %v596 = vsel %vm303, %v237, 0
      %v598 = vsel %vm303, %v238, 0
      %v600 = vsel %vm303, %v239, 0
      %v602 = vsel %vm303, %v240, 0
      %604 = vmatpush.bf16.msra.mxu0 0
      %605 = vmatpush.bf16.msra.mxu0 0
      %606 = vmatpush.bf16.msra.mxu0 0
      %607 = vmatpush.bf16.msra.mxu0 0
      %608 = vmatpush.bf16.msra.mxu0 %v591
      %609 = vmatpush.bf16.msra.mxu0 %v590
      %610 = vmatpush.bf16.msra.mxu0 %v589
      %611 = vmatpush.bf16.msra.mxu0 %v588
      %612 = vmatmul.bf16.gmra.mxu0 %v596
      %v613 = vpop.f32.mrf.mxu0
      %v614 = vadd.f32 %v553, %v613
      %v615 = vpop.f32.mrf.mxu0
      %v616 = vadd.f32 %v555, %v615
      %617 = vmatmul.bf16.gmra.mxu0 %v598
      %v618 = vpop.f32.mrf.mxu0
      %v619 = vadd.f32 %v558, %v618
      %v620 = vpop.f32.mrf.mxu0
      %v621 = vadd.f32 %v560, %v620
      %622 = vmatmul.bf16.gmra.mxu0 %v600
      %v623 = vpop.f32.mrf.mxu0
      %v624 = vadd.f32 %v563, %v623
      %v625 = vpop.f32.mrf.mxu0
      %v626 = vadd.f32 %v565, %v625
      %627 = vmatmul.bf16.gmra.mxu0 %v602
      %v628 = vpop.f32.mrf.mxu0
      %v629 = vadd.f32 %v568, %v628
      %v630 = vpop.f32.mrf.mxu0
      %v631 = vadd.f32 %v570, %v630
      %632 = vdwg.mxu0
      %v633 = vld [vmem:[%s165 + $0x4] sm:$0xf]
      %v634 = vld [vmem:[%s165 + $0x8] sm:$0xf]
      %v635 = vld [vmem:[%s165 + $0xc] sm:$0xf]
      %v636 = vld [vmem:[%s165 + $0x10] sm:$0xf]
      %v637 = vld [vmem:[%s165 + $0x14] sm:$0xf]
      %v638 = vld [vmem:[%s165 + $0x18] sm:$0xf]
      %v639 = vld [vmem:[%s165 + $0x1c] sm:$0xf]
      %v640 = vld [vmem:[%s165 + $0x20] sm:$0xf]
      %v641 = vld [vmem:[%s165 + $0x24] sm:$0x1]
      %s642 = scalar_lea.vmem %s1, 128
      %v643 = vld [vmem:[%s642] sm:$0xf]
      %v644 = vld [vmem:[%s642 + $0x4] sm:$0xf]
      %v645 = vld [vmem:[%s642 + $0x8] sm:$0xf]
      %v646 = vld [vmem:[%s642 + $0xc] sm:$0xf]
      %v647 = vld [vmem:[%s642 + $0x10] sm:$0xf]
      %v648 = vld [vmem:[%s642 + $0x14] sm:$0xf]
      %v649 = vld [vmem:[%s642 + $0x18] sm:$0xf]
      %v650 = vld [vmem:[%s642 + $0x1c] sm:$0xf]
      %v660 = vunpack.c.l.b16 %v633
      %v661 = vunpack.c.l.b16 %v634
      %v662 = vunpack.c.l.b16 %v635
      %v663 = vunpack.c.l.b16 %v636
      %v664 = vunpack.c.l.b16 %v637
      %v665 = vunpack.c.l.b16 %v638
      %v666 = vunpack.c.l.b16 %v639
      %v667 = vunpack.c.l.b16 %v640
      %v668 = vunpack.c.l.b16 %v641
      %v669 = vpack.c.b16 %v661, %v660
      %v670 = vpack.c.b16 %v663, %v662
      %v671 = vpack.c.b16 %v665, %v664
      %v672 = vpack.c.b16 %v667, %v666
      %v673 = vpack.c.b16 %v668, %v668
      %v675 = vshrl.u32 %v669, 16
      %v677 = vshll.u32 %v669, 16
      %v679 = vrot.slane %v677, 1
      %v680 = vor.u32 %v675, %v679
      %v682 = vshll.u32 %v670, 16
      %v684 = vrot.slane %v682, 1
      %v685 = vsel %vm242, %v680, %v684
      %v686 = vshrl.u32 %v670, 16
      %v688 = vor.u32 %v686, %v684
      %v690 = vshll.u32 %v671, 16
      %v692 = vrot.slane %v690, 1
      %v693 = vsel %vm242, %v688, %v692
      %v694 = vshrl.u32 %v671, 16
      %v696 = vor.u32 %v694, %v692
      %v698 = vshll.u32 %v672, 16
      %v700 = vrot.slane %v698, 1
      %v701 = vsel %vm242, %v696, %v700
      %v702 = vshrl.u32 %v672, 16
      %v704 = vor.u32 %v702, %v700
      %v706 = vshll.u32 %v673, 16
      %v708 = vrot.slane %v706, 1
      %v709 = vsel %vm242, %v704, %v708
      %v718 = vunpack.c.l.b16 %v643
      %v719 = vunpack.c.l.b16 %v644
      %v720 = vunpack.c.l.b16 %v645
      %v721 = vunpack.c.l.b16 %v646
      %v722 = vunpack.c.l.b16 %v647
      %v723 = vunpack.c.l.b16 %v648
      %v724 = vunpack.c.l.b16 %v649
      %v725 = vunpack.c.l.b16 %v650
      %v726 = vpack.c.b16 %v719, %v718
      %v727 = vpack.c.b16 %v721, %v720
      %v728 = vpack.c.b16 %v723, %v722
      %v729 = vpack.c.b16 %v725, %v724
      %v735 = vsel %vm303, %v685, 0
      %v738 = vsel %vm303, %v693, 0
      %v741 = vsel %vm303, %v701, 0
      %v744 = vsel %vm303, %v709, 0
      %746 = vmatpush.bf16.msra.mxu0 0
      %747 = vmatpush.bf16.msra.mxu0 0
      %748 = vmatpush.bf16.msra.mxu0 0
      %749 = vmatpush.bf16.msra.mxu0 0
      %750 = vmatpush.bf16.msra.mxu0 %v729
      %751 = vmatpush.bf16.msra.mxu0 %v728
      %752 = vmatpush.bf16.msra.mxu0 %v727
      %753 = vmatpush.bf16.msra.mxu0 %v726
      %754 = vmatmul.bf16.gmra.mxu0 %v735
      %v755 = vpop.f32.mrf.mxu0
      %v756 = vadd.f32 0.0, %v755
      %v757 = vpop.f32.mrf.mxu0
      %v758 = vadd.f32 0.0, %v757
      %759 = vmatmul.bf16.gmra.mxu0 %v738
      %v760 = vpop.f32.mrf.mxu0
      %v761 = vadd.f32 0.0, %v760
      %v762 = vpop.f32.mrf.mxu0
      %v763 = vadd.f32 0.0, %v762
      %764 = vmatmul.bf16.gmra.mxu0 %v741
      %v765 = vpop.f32.mrf.mxu0
      %v766 = vadd.f32 0.0, %v765
      %v767 = vpop.f32.mrf.mxu0
      %v768 = vadd.f32 0.0, %v767
      %769 = vmatmul.bf16.gmra.mxu0 %v744
      %v770 = vpop.f32.mrf.mxu0
      %v771 = vadd.f32 0.0, %v770
      %v772 = vpop.f32.mrf.mxu0
      %v773 = vadd.f32 0.0, %v772
      %774 = vdwg.mxu0
      %v775 = vadd.f32 %v450, %v756
      %v776 = vadd.f32 %v452, %v758
      %v777 = vadd.f32 %v455, %v761
      %v778 = vadd.f32 %v457, %v763
      %v779 = vadd.f32 %v460, %v766
      %v780 = vadd.f32 %v462, %v768
      %v781 = vadd.f32 %v465, %v771
      %v782 = vadd.f32 %v467, %v773
      %v783 = vld [vmem:[%s469 + $0x4] sm:$0xf]
      %v784 = vld [vmem:[%s469 + $0x8] sm:$0xf]
      %v785 = vld [vmem:[%s469 + $0xc] sm:$0xf]
      %v786 = vld [vmem:[%s469 + $0x10] sm:$0xf]
      %v787 = vld [vmem:[%s469 + $0x14] sm:$0xf]
      %v788 = vld [vmem:[%s469 + $0x18] sm:$0xf]
      %v789 = vld [vmem:[%s469 + $0x1c] sm:$0xf]
      %v790 = vld [vmem:[%s469 + $0x20] sm:$0xf]
      %v791 = vld [vmem:[%s469 + $0x24] sm:$0x1]
      %s792 = scalar_lea.vmem %s1, 160
      %v793 = vld [vmem:[%s792] sm:$0xf]
      %v794 = vld [vmem:[%s792 + $0x4] sm:$0xf]
      %v795 = vld [vmem:[%s792 + $0x8] sm:$0xf]
      %v796 = vld [vmem:[%s792 + $0xc] sm:$0xf]
      %v797 = vld [vmem:[%s792 + $0x10] sm:$0xf]
      %v798 = vld [vmem:[%s792 + $0x14] sm:$0xf]
      %v799 = vld [vmem:[%s792 + $0x18] sm:$0xf]
      %v800 = vld [vmem:[%s792 + $0x1c] sm:$0xf]
      %v810 = vunpack.c.l.b16 %v783
      %v811 = vunpack.c.l.b16 %v784
      %v812 = vunpack.c.l.b16 %v785
      %v813 = vunpack.c.l.b16 %v786
      %v814 = vunpack.c.l.b16 %v787
      %v815 = vunpack.c.l.b16 %v788
      %v816 = vunpack.c.l.b16 %v789
      %v817 = vunpack.c.l.b16 %v790
      %v818 = vunpack.c.l.b16 %v791
      %v819 = vpack.c.b16 %v811, %v810
      %v820 = vpack.c.b16 %v813, %v812
      %v821 = vpack.c.b16 %v815, %v814
      %v822 = vpack.c.b16 %v817, %v816
      %v823 = vpack.c.b16 %v818, %v818
      %v825 = vshrl.u32 %v819, 16
      %v827 = vshll.u32 %v819, 16
      %v829 = vrot.slane %v827, 1
      %v830 = vor.u32 %v825, %v829
      %v832 = vshll.u32 %v820, 16
      %v834 = vrot.slane %v832, 1
      %v835 = vsel %vm242, %v830, %v834
      %v836 = vshrl.u32 %v820, 16
      %v838 = vor.u32 %v836, %v834
      %v840 = vshll.u32 %v821, 16
      %v842 = vrot.slane %v840, 1
      %v843 = vsel %vm242, %v838, %v842
      %v844 = vshrl.u32 %v821, 16
      %v846 = vor.u32 %v844, %v842
      %v848 = vshll.u32 %v822, 16
      %v850 = vrot.slane %v848, 1
      %v851 = vsel %vm242, %v846, %v850
      %v852 = vshrl.u32 %v822, 16
      %v854 = vor.u32 %v852, %v850
      %v856 = vshll.u32 %v823, 16
      %v858 = vrot.slane %v856, 1
      %v859 = vsel %vm242, %v854, %v858
      %v868 = vunpack.c.l.b16 %v793
      %v869 = vunpack.c.l.b16 %v794
      %v870 = vunpack.c.l.b16 %v795
      %v871 = vunpack.c.l.b16 %v796
      %v872 = vunpack.c.l.b16 %v797
      %v873 = vunpack.c.l.b16 %v798
      %v874 = vunpack.c.l.b16 %v799
      %v875 = vunpack.c.l.b16 %v800
      %v876 = vpack.c.b16 %v869, %v868
      %v877 = vpack.c.b16 %v871, %v870
      %v878 = vpack.c.b16 %v873, %v872
      %v879 = vpack.c.b16 %v875, %v874
      %v885 = vsel %vm303, %v835, 0
      %v888 = vsel %vm303, %v843, 0
      %v891 = vsel %vm303, %v851, 0
      %v894 = vsel %vm303, %v859, 0
      %896 = vmatpush.bf16.msra.mxu0 0
      %897 = vmatpush.bf16.msra.mxu0 0
      %898 = vmatpush.bf16.msra.mxu0 0
      %899 = vmatpush.bf16.msra.mxu0 0
      %900 = vmatpush.bf16.msra.mxu0 %v879
      %901 = vmatpush.bf16.msra.mxu0 %v878
      %902 = vmatpush.bf16.msra.mxu0 %v877
      %903 = vmatpush.bf16.msra.mxu0 %v876
      %904 = vmatmul.bf16.gmra.mxu0 %v885
      %v905 = vpop.f32.mrf.mxu0
      %v906 = vadd.f32 0.0, %v905
      %v907 = vpop.f32.mrf.mxu0
      %v908 = vadd.f32 0.0, %v907
      %909 = vmatmul.bf16.gmra.mxu0 %v888
      %v910 = vpop.f32.mrf.mxu0
      %v911 = vadd.f32 0.0, %v910
      %v912 = vpop.f32.mrf.mxu0
      %v913 = vadd.f32 0.0, %v912
      %914 = vmatmul.bf16.gmra.mxu0 %v891
      %v915 = vpop.f32.mrf.mxu0
      %v916 = vadd.f32 0.0, %v915
      %v917 = vpop.f32.mrf.mxu0
      %v918 = vadd.f32 0.0, %v917
      %919 = vmatmul.bf16.gmra.mxu0 %v894
      %v920 = vpop.f32.mrf.mxu0
      %v921 = vadd.f32 0.0, %v920
      %v922 = vpop.f32.mrf.mxu0
      %v923 = vadd.f32 0.0, %v922
      %924 = vdwg.mxu0
      %v925 = vadd.f32 %v775, %v906
      %v926 = vadd.f32 %v776, %v908
      %v927 = vadd.f32 %v777, %v911
      %v928 = vadd.f32 %v778, %v913
      %v929 = vadd.f32 %v779, %v916
      %v930 = vadd.f32 %v780, %v918
      %v931 = vadd.f32 %v781, %v921
      %v932 = vadd.f32 %v782, %v923
      %v933 = vld [vmem:[%s173 + $0x20] sm:$0xf]
      %s934 = scalar_lea.vmem %s1, 192
      %v935 = vld [vmem:[%s934] sm:$0xf]
      %v936 = vld [vmem:[%s934 + $0x4] sm:$0xf]
      %v937 = vld [vmem:[%s934 + $0x8] sm:$0xf]
      %v938 = vld [vmem:[%s934 + $0xc] sm:$0xf]
      %v939 = vld [vmem:[%s934 + $0x10] sm:$0xf]
      %v940 = vld [vmem:[%s934 + $0x14] sm:$0xf]
      %v941 = vld [vmem:[%s934 + $0x18] sm:$0xf]
      %v942 = vld [vmem:[%s934 + $0x1c] sm:$0xf]
      %v944 = vunpack.c.l.b16 %v933
      %v945 = vpack.c.b16 %v230, %v229
      %v946 = vpack.c.b16 %v232, %v231
      %v947 = vpack.c.b16 %v234, %v233
      %v948 = vpack.c.b16 %v944, %v235
      %v957 = vunpack.c.l.b16 %v935
      %v958 = vunpack.c.l.b16 %v936
      %v959 = vunpack.c.l.b16 %v937
      %v960 = vunpack.c.l.b16 %v938
      %v961 = vunpack.c.l.b16 %v939
      %v962 = vunpack.c.l.b16 %v940
      %v963 = vunpack.c.l.b16 %v941
      %v964 = vunpack.c.l.b16 %v942
      %v965 = vpack.c.b16 %v958, %v957
      %v966 = vpack.c.b16 %v960, %v959
      %v967 = vpack.c.b16 %v962, %v961
      %v968 = vpack.c.b16 %v964, %v963
      %v974 = vsel %vm303, %v945, 0
      %v977 = vsel %vm303, %v946, 0
      %v980 = vsel %vm303, %v947, 0
      %v983 = vsel %vm303, %v948, 0
      %985 = vmatpush.bf16.msra.mxu0 0
      %986 = vmatpush.bf16.msra.mxu0 0
      %987 = vmatpush.bf16.msra.mxu0 0
      %988 = vmatpush.bf16.msra.mxu0 0
      %989 = vmatpush.bf16.msra.mxu0 %v968
      %990 = vmatpush.bf16.msra.mxu0 %v967
      %991 = vmatpush.bf16.msra.mxu0 %v966
      %992 = vmatpush.bf16.msra.mxu0 %v965
      %993 = vmatmul.bf16.gmra.mxu0 %v974
      %v994 = vpop.f32.mrf.mxu0
      %v995 = vadd.f32 0.0, %v994
      %v996 = vpop.f32.mrf.mxu0
      %v997 = vadd.f32 0.0, %v996
      %998 = vmatmul.bf16.gmra.mxu0 %v977
      %v999 = vpop.f32.mrf.mxu0
      %v1000 = vadd.f32 0.0, %v999
      %v1001 = vpop.f32.mrf.mxu0
      %v1002 = vadd.f32 0.0, %v1001
      %1003 = vmatmul.bf16.gmra.mxu0 %v980
      %v1004 = vpop.f32.mrf.mxu0
      %v1005 = vadd.f32 0.0, %v1004
      %v1006 = vpop.f32.mrf.mxu0
      %v1007 = vadd.f32 0.0, %v1006
      %1008 = vmatmul.bf16.gmra.mxu0 %v983
      %v1009 = vpop.f32.mrf.mxu0
      %v1010 = vadd.f32 0.0, %v1009
      %v1011 = vpop.f32.mrf.mxu0
      %v1012 = vadd.f32 0.0, %v1011
      %1013 = vdwg.mxu0
      %v1014 = vadd.f32 %v614, %v995
      %v1015 = vadd.f32 %v616, %v997
      %v1016 = vadd.f32 %v619, %v1000
      %v1017 = vadd.f32 %v621, %v1002
      %v1018 = vadd.f32 %v624, %v1005
      %v1019 = vadd.f32 %v626, %v1007
      %v1020 = vadd.f32 %v629, %v1010
      %v1021 = vadd.f32 %v631, %v1012
      %v1022 = vld [vmem:[%s190 + $0x4] sm:$0xf]
      %v1023 = vld [vmem:[%s190 + $0x8] sm:$0xf]
      %v1024 = vld [vmem:[%s190 + $0xc] sm:$0xf]
      %v1025 = vld [vmem:[%s190 + $0x10] sm:$0xf]
      %v1026 = vld [vmem:[%s190 + $0x14] sm:$0xf]
      %v1027 = vld [vmem:[%s190 + $0x18] sm:$0xf]
      %v1028 = vld [vmem:[%s190 + $0x1c] sm:$0xf]
      %v1029 = vld [vmem:[%s190 + $0x20] sm:$0xf]
      %v1030 = vld [vmem:[%s190 + $0x24] sm:$0x1]
      %s1031 = scalar_lea.vmem %s1, 224
      %v1032 = vld [vmem:[%s1031] sm:$0xf]
      %v1033 = vld [vmem:[%s1031 + $0x4] sm:$0xf]
      %v1034 = vld [vmem:[%s1031 + $0x8] sm:$0xf]
      %v1035 = vld [vmem:[%s1031 + $0xc] sm:$0xf]
      %v1036 = vld [vmem:[%s1031 + $0x10] sm:$0xf]
      %v1037 = vld [vmem:[%s1031 + $0x14] sm:$0xf]
      %v1038 = vld [vmem:[%s1031 + $0x18] sm:$0xf]
      %v1039 = vld [vmem:[%s1031 + $0x1c] sm:$0xf]
      %v1049 = vunpack.c.l.b16 %v1022
      %v1050 = vunpack.c.l.b16 %v1023
      %v1051 = vunpack.c.l.b16 %v1024
      %v1052 = vunpack.c.l.b16 %v1025
      %v1053 = vunpack.c.l.b16 %v1026
      %v1054 = vunpack.c.l.b16 %v1027
      %v1055 = vunpack.c.l.b16 %v1028
      %v1056 = vunpack.c.l.b16 %v1029
      %v1057 = vunpack.c.l.b16 %v1030
      %v1058 = vpack.c.b16 %v1050, %v1049
      %v1059 = vpack.c.b16 %v1052, %v1051
      %v1060 = vpack.c.b16 %v1054, %v1053
      %v1061 = vpack.c.b16 %v1056, %v1055
      %v1062 = vpack.c.b16 %v1057, %v1057
      %v1064 = vshrl.u32 %v1058, 16
      %v1066 = vshll.u32 %v1058, 16
      %v1068 = vrot.slane %v1066, 1
      %v1069 = vor.u32 %v1064, %v1068
      %v1071 = vshll.u32 %v1059, 16
      %v1073 = vrot.slane %v1071, 1
      %v1074 = vsel %vm242, %v1069, %v1073
      %v1075 = vshrl.u32 %v1059, 16
      %v1077 = vor.u32 %v1075, %v1073
      %v1079 = vshll.u32 %v1060, 16
      %v1081 = vrot.slane %v1079, 1
      %v1082 = vsel %vm242, %v1077, %v1081
      %v1083 = vshrl.u32 %v1060, 16
      %v1085 = vor.u32 %v1083, %v1081
      %v1087 = vshll.u32 %v1061, 16
      %v1089 = vrot.slane %v1087, 1
      %v1090 = vsel %vm242, %v1085, %v1089
      %v1091 = vshrl.u32 %v1061, 16
      %v1093 = vor.u32 %v1091, %v1089
      %v1095 = vshll.u32 %v1062, 16
      %v1097 = vrot.slane %v1095, 1
      %v1098 = vsel %vm242, %v1093, %v1097
      %v1107 = vunpack.c.l.b16 %v1032
      %v1108 = vunpack.c.l.b16 %v1033
      %v1109 = vunpack.c.l.b16 %v1034
      %v1110 = vunpack.c.l.b16 %v1035
      %v1111 = vunpack.c.l.b16 %v1036
      %v1112 = vunpack.c.l.b16 %v1037
      %v1113 = vunpack.c.l.b16 %v1038
      %v1114 = vunpack.c.l.b16 %v1039
      %v1115 = vpack.c.b16 %v1108, %v1107
      %v1116 = vpack.c.b16 %v1110, %v1109
      %v1117 = vpack.c.b16 %v1112, %v1111
      %v1118 = vpack.c.b16 %v1114, %v1113
      %v1124 = vsel %vm303, %v1074, 0
      %v1127 = vsel %vm303, %v1082, 0
      %v1130 = vsel %vm303, %v1090, 0
      %v1133 = vsel %vm303, %v1098, 0
      %1135 = vmatpush.bf16.msra.mxu0 0
      %1136 = vmatpush.bf16.msra.mxu0 0
      %1137 = vmatpush.bf16.msra.mxu0 0
      %1138 = vmatpush.bf16.msra.mxu0 0
      %1139 = vmatpush.bf16.msra.mxu0 %v1118
      %1140 = vmatpush.bf16.msra.mxu0 %v1117
      %1141 = vmatpush.bf16.msra.mxu0 %v1116
      %1142 = vmatpush.bf16.msra.mxu0 %v1115
      %1143 = vmatmul.bf16.gmra.mxu0 %v1124
      %v1144 = vpop.f32.mrf.mxu0
      %v1145 = vadd.f32 0.0, %v1144
      %v1146 = vpop.f32.mrf.mxu0
      %v1147 = vadd.f32 0.0, %v1146
      %1148 = vmatmul.bf16.gmra.mxu0 %v1127
      %v1149 = vpop.f32.mrf.mxu0
      %v1150 = vadd.f32 0.0, %v1149
      %v1151 = vpop.f32.mrf.mxu0
      %v1152 = vadd.f32 0.0, %v1151
      %1153 = vmatmul.bf16.gmra.mxu0 %v1130
      %v1154 = vpop.f32.mrf.mxu0
      %v1155 = vadd.f32 0.0, %v1154
      %v1156 = vpop.f32.mrf.mxu0
      %v1157 = vadd.f32 0.0, %v1156
      %1158 = vmatmul.bf16.gmra.mxu0 %v1133
      %v1159 = vpop.f32.mrf.mxu0
      %v1160 = vadd.f32 0.0, %v1159
      %v1161 = vpop.f32.mrf.mxu0
      %v1162 = vadd.f32 0.0, %v1161
      %1163 = vdwg.mxu0
      %v1164 = vadd.f32 %v925, %v1145
      %v1165 = vadd.f32 %v926, %v1147
      %v1166 = vadd.f32 %v927, %v1150
      %v1167 = vadd.f32 %v928, %v1152
      %v1168 = vadd.f32 %v929, %v1155
      %v1169 = vadd.f32 %v930, %v1157
      %v1170 = vadd.f32 %v931, %v1160
      %v1171 = vadd.f32 %v932, %v1162
      %v1172 = vld [vmem:[%s173 + $0x4] sm:$0xf]
      %v1173 = vld [vmem:[%s173 + $0x8] sm:$0xf]
      %v1174 = vld [vmem:[%s173 + $0xc] sm:$0xf]
      %v1175 = vld [vmem:[%s173 + $0x10] sm:$0xf]
      %v1176 = vld [vmem:[%s173 + $0x14] sm:$0xf]
      %v1177 = vld [vmem:[%s173 + $0x18] sm:$0xf]
      %v1178 = vld [vmem:[%s173 + $0x1c] sm:$0xf]
      %v1179 = vld [vmem:[%s173 + $0x20] sm:$0xf]
      %v1180 = vld [vmem:[%s173 + $0x24] sm:$0x1]
      %s1181 = scalar_lea.vmem %s1, 256
      %v1182 = vld [vmem:[%s1181] sm:$0xf]
      %v1183 = vld [vmem:[%s1181 + $0x4] sm:$0xf]
      %v1184 = vld [vmem:[%s1181 + $0x8] sm:$0xf]
      %v1185 = vld [vmem:[%s1181 + $0xc] sm:$0xf]
      %v1186 = vld [vmem:[%s1181 + $0x10] sm:$0xf]
      %v1187 = vld [vmem:[%s1181 + $0x14] sm:$0xf]
      %v1188 = vld [vmem:[%s1181 + $0x18] sm:$0xf]
      %v1189 = vld [vmem:[%s1181 + $0x1c] sm:$0xf]
      %v1199 = vunpack.c.l.b16 %v1172
      %v1200 = vunpack.c.l.b16 %v1173
      %v1201 = vunpack.c.l.b16 %v1174
      %v1202 = vunpack.c.l.b16 %v1175
      %v1203 = vunpack.c.l.b16 %v1176
      %v1204 = vunpack.c.l.b16 %v1177
      %v1205 = vunpack.c.l.b16 %v1178
      %v1206 = vunpack.c.l.b16 %v1179
      %v1207 = vunpack.c.l.b16 %v1180
      %v1208 = vpack.c.b16 %v1200, %v1199
      %v1209 = vpack.c.b16 %v1202, %v1201
      %v1210 = vpack.c.b16 %v1204, %v1203
      %v1211 = vpack.c.b16 %v1206, %v1205
      %v1212 = vpack.c.b16 %v1207, %v1207
      %v1214 = vshrl.u32 %v1208, 16
      %v1216 = vshll.u32 %v1208, 16
      %v1218 = vrot.slane %v1216, 1
      %v1219 = vor.u32 %v1214, %v1218
      %v1221 = vshll.u32 %v1209, 16
      %v1223 = vrot.slane %v1221, 1
      %v1224 = vsel %vm242, %v1219, %v1223
      %v1225 = vshrl.u32 %v1209, 16
      %v1227 = vor.u32 %v1225, %v1223
      %v1229 = vshll.u32 %v1210, 16
      %v1231 = vrot.slane %v1229, 1
      %v1232 = vsel %vm242, %v1227, %v1231
      %v1233 = vshrl.u32 %v1210, 16
      %v1235 = vor.u32 %v1233, %v1231
      %v1237 = vshll.u32 %v1211, 16
      %v1239 = vrot.slane %v1237, 1
      %v1240 = vsel %vm242, %v1235, %v1239
      %v1241 = vshrl.u32 %v1211, 16
      %v1243 = vor.u32 %v1241, %v1239
      %v1245 = vshll.u32 %v1212, 16
      %v1247 = vrot.slane %v1245, 1
      %v1248 = vsel %vm242, %v1243, %v1247
      %v1257 = vunpack.c.l.b16 %v1182
      %v1258 = vunpack.c.l.b16 %v1183
      %v1259 = vunpack.c.l.b16 %v1184
      %v1260 = vunpack.c.l.b16 %v1185
      %v1261 = vunpack.c.l.b16 %v1186
      %v1262 = vunpack.c.l.b16 %v1187
      %v1263 = vunpack.c.l.b16 %v1188
      %v1264 = vunpack.c.l.b16 %v1189
      %v1265 = vpack.c.b16 %v1258, %v1257
      %v1266 = vpack.c.b16 %v1260, %v1259
      %v1267 = vpack.c.b16 %v1262, %v1261
      %v1268 = vpack.c.b16 %v1264, %v1263
      %v1274 = vsel %vm303, %v1224, 0
      %v1277 = vsel %vm303, %v1232, 0
      %v1280 = vsel %vm303, %v1240, 0
      %v1283 = vsel %vm303, %v1248, 0
      %1285 = vmatpush.bf16.msra.mxu0 0
      %1286 = vmatpush.bf16.msra.mxu0 0
      %1287 = vmatpush.bf16.msra.mxu0 0
      %1288 = vmatpush.bf16.msra.mxu0 0
      %1289 = vmatpush.bf16.msra.mxu0 %v1268
      %1290 = vmatpush.bf16.msra.mxu0 %v1267
      %1291 = vmatpush.bf16.msra.mxu0 %v1266
      %1292 = vmatpush.bf16.msra.mxu0 %v1265
      %1293 = vmatmul.bf16.gmra.mxu0 %v1274
      %v1294 = vpop.f32.mrf.mxu0
      %v1295 = vadd.f32 0.0, %v1294
      %v1296 = vpop.f32.mrf.mxu0
      %v1297 = vadd.f32 0.0, %v1296
      %1298 = vmatmul.bf16.gmra.mxu0 %v1277
      %v1299 = vpop.f32.mrf.mxu0
      %v1300 = vadd.f32 0.0, %v1299
      %v1301 = vpop.f32.mrf.mxu0
      %v1302 = vadd.f32 0.0, %v1301
      %1303 = vmatmul.bf16.gmra.mxu0 %v1280
      %v1304 = vpop.f32.mrf.mxu0
      %v1305 = vadd.f32 0.0, %v1304
      %v1306 = vpop.f32.mrf.mxu0
      %v1307 = vadd.f32 0.0, %v1306
      %1308 = vmatmul.bf16.gmra.mxu0 %v1283
      %v1309 = vpop.f32.mrf.mxu0
      %v1310 = vadd.f32 0.0, %v1309
      %v1311 = vpop.f32.mrf.mxu0
      %v1312 = vadd.f32 0.0, %v1311
      %1313 = vdwg.mxu0
      %v1314 = vadd.f32 %v1164, %v1295
      %v1315 = vadd.f32 %v1165, %v1297
      %v1316 = vadd.f32 %v1166, %v1300
      %v1317 = vadd.f32 %v1167, %v1302
      %v1318 = vadd.f32 %v1168, %v1305
      %v1319 = vadd.f32 %v1169, %v1307
      %v1320 = vadd.f32 %v1170, %v1310
      %v1321 = vadd.f32 %v1171, %v1312
      %v1322 = vlaneseq
      %v1323 = vshrl.u32 %v1322, 7
      %v1324 = vadd.s32 %v1323, 8
      %v1325 = vadd.s32 %v1323, 16
      %v1326 = vadd.s32 %v1323, 24
      %v1327 = vadd.s32 %v1323, 32
      %v1328 = vadd.s32 %v1323, 40
      %v1329 = vadd.s32 %v1323, 48
      %v1330 = vadd.s32 %v1323, 56
      %vm1331 = vcmp.lt.s32.totalorder %v1323, 0
      %v1332 = vsub.s32 0, %v1323
      %v1333 = vsel %vm1331, %v1332, %v1323
      %v1334 = vshrl.u32 %v1333, 3
      %v1335 = vand.u32 %v1333, 7
      %v1336 = vsub.s32 0, %v1335
      %v1337 = vsel %vm1331, %v1336, %v1335
      %vm1338 = vcmp.lt.s32.totalorder %v1324, 0
      %v1339 = vsub.s32 0, %v1324
      %v1340 = vsel %vm1338, %v1339, %v1324
      %v1341 = vshrl.u32 %v1340, 3
      %v1342 = vand.u32 %v1340, 7
      %v1343 = vsub.s32 0, %v1342
      %v1344 = vsel %vm1338, %v1343, %v1342
      %vm1345 = vcmp.lt.s32.totalorder %v1325, 0
      %v1346 = vsub.s32 0, %v1325
      %v1347 = vsel %vm1345, %v1346, %v1325
      %v1348 = vshrl.u32 %v1347, 3
      %v1349 = vand.u32 %v1347, 7
      %v1350 = vsub.s32 0, %v1349
      %v1351 = vsel %vm1345, %v1350, %v1349
      %vm1352 = vcmp.lt.s32.totalorder %v1326, 0
      %v1353 = vsub.s32 0, %v1326
      %v1354 = vsel %vm1352, %v1353, %v1326
      %v1355 = vshrl.u32 %v1354, 3
      %v1356 = vand.u32 %v1354, 7
      %v1357 = vsub.s32 0, %v1356
      %v1358 = vsel %vm1352, %v1357, %v1356
      %vm1359 = vcmp.lt.s32.totalorder %v1327, 0
      %v1360 = vsub.s32 0, %v1327
      %v1361 = vsel %vm1359, %v1360, %v1327
      %v1362 = vshrl.u32 %v1361, 3
      %v1363 = vand.u32 %v1361, 7
      %v1364 = vsub.s32 0, %v1363
      %v1365 = vsel %vm1359, %v1364, %v1363
      %vm1366 = vcmp.lt.s32.totalorder %v1328, 0
      %v1367 = vsub.s32 0, %v1328
      %v1368 = vsel %vm1366, %v1367, %v1328
      %v1369 = vshrl.u32 %v1368, 3
      %v1370 = vand.u32 %v1368, 7
      %v1371 = vsub.s32 0, %v1370
      %v1372 = vsel %vm1366, %v1371, %v1370
      %vm1373 = vcmp.lt.s32.totalorder %v1329, 0
      %v1374 = vsub.s32 0, %v1329
      %v1375 = vsel %vm1373, %v1374, %v1329
      %v1376 = vshrl.u32 %v1375, 3
      %v1377 = vand.u32 %v1375, 7
      %v1378 = vsub.s32 0, %v1377
      %v1379 = vsel %vm1373, %v1378, %v1377
      %vm1380 = vcmp.lt.s32.totalorder %v1330, 0
      %v1381 = vsub.s32 0, %v1330
      %v1382 = vsel %vm1380, %v1381, %v1330
      %v1383 = vshrl.u32 %v1382, 3
      %v1384 = vand.u32 %v1382, 7
      %v1385 = vsub.s32 0, %v1384
      %v1386 = vsel %vm1380, %v1385, %v1384
      %vm1387 = vcmp.ne.s32.totalorder %v1337, 0
      %vm1388 = vcmp.ne.s32.totalorder %v1344, 0
      %vm1389 = vcmp.ne.s32.totalorder %v1351, 0
      %vm1390 = vcmp.ne.s32.totalorder %v1358, 0
      %vm1391 = vcmp.ne.s32.totalorder %v1365, 0
      %vm1392 = vcmp.ne.s32.totalorder %v1372, 0
      %vm1393 = vcmp.ne.s32.totalorder %v1379, 0
      %vm1394 = vcmp.ne.s32.totalorder %v1386, 0
      %vm1395 = vcmp.lt.s32.totalorder %v1337, 0
      %vm1396 = vcmp.lt.s32.totalorder %v1344, 0
      %vm1397 = vcmp.lt.s32.totalorder %v1351, 0
      %vm1398 = vcmp.lt.s32.totalorder %v1358, 0
      %vm1399 = vcmp.lt.s32.totalorder %v1365, 0
      %vm1400 = vcmp.lt.s32.totalorder %v1372, 0
      %vm1401 = vcmp.lt.s32.totalorder %v1379, 0
      %vm1402 = vcmp.lt.s32.totalorder %v1386, 0
      %vm1403 = vmand %vm1395, %vm1387
      %vm1404 = vmand %vm1396, %vm1388
      %vm1405 = vmand %vm1397, %vm1389
      %vm1406 = vmand %vm1398, %vm1390
      %vm1407 = vmand %vm1399, %vm1391
      %vm1408 = vmand %vm1400, %vm1392
      %vm1409 = vmand %vm1401, %vm1393
      %vm1410 = vmand %vm1402, %vm1394
      %v1411 = vadd.s32 %v1337, 8
      %v1412 = vadd.s32 %v1344, 8
      %v1413 = vadd.s32 %v1351, 8
      %v1414 = vadd.s32 %v1358, 8
      %v1415 = vadd.s32 %v1365, 8
      %v1416 = vadd.s32 %v1372, 8
      %v1417 = vadd.s32 %v1379, 8
      %v1418 = vadd.s32 %v1386, 8
      %v1419 = vsel %vm1403, %v1411, %v1337
      %v1420 = vsel %vm1404, %v1412, %v1344
      %v1421 = vsel %vm1405, %v1413, %v1351
      %v1422 = vsel %vm1406, %v1414, %v1358
      %v1423 = vsel %vm1407, %v1415, %v1365
      %v1424 = vsel %vm1408, %v1416, %v1372
      %v1425 = vsel %vm1409, %v1417, %v1379
      %v1426 = vsel %vm1410, %v1418, %v1386
      %vm1427 = vcmp.ne.s32.totalorder %v1419, 0
      %vm1428 = vcmp.ne.s32.totalorder %v1420, 0
      %vm1429 = vcmp.ne.s32.totalorder %v1421, 0
      %vm1430 = vcmp.ne.s32.totalorder %v1422, 0
      %vm1431 = vcmp.ne.s32.totalorder %v1423, 0
      %vm1432 = vcmp.ne.s32.totalorder %v1424, 0
      %vm1433 = vcmp.ne.s32.totalorder %v1425, 0
      %vm1434 = vcmp.ne.s32.totalorder %v1426, 0
      %v1435 = vsel %vm1427, 1, 0
      %v1436 = vsel %vm1428, 1, 0
      %v1437 = vsel %vm1429, 1, 0
      %v1438 = vsel %vm1430, 1, 0
      %v1439 = vsel %vm1431, 1, 0
      %v1440 = vsel %vm1432, 1, 0
      %v1441 = vsel %vm1433, 1, 0
      %v1442 = vsel %vm1434, 1, 0
      %vm1443 = vcmp.eq.s32.totalorder %v1435, 1
      %vm1444 = vcmp.eq.s32.totalorder %v1436, 1
      %vm1445 = vcmp.eq.s32.totalorder %v1437, 1
      %vm1446 = vcmp.eq.s32.totalorder %v1438, 1
      %vm1447 = vcmp.eq.s32.totalorder %v1439, 1
      %vm1448 = vcmp.eq.s32.totalorder %v1440, 1
      %vm1449 = vcmp.eq.s32.totalorder %v1441, 1
      %vm1450 = vcmp.eq.s32.totalorder %v1442, 1
      %v1451 = vsel %vm1443, %v1014, 0.0
      %v1452 = vsel %vm1444, %v1015, 0.0
      %v1453 = vsel %vm1445, %v1016, 0.0
      %v1454 = vsel %vm1446, %v1017, 0.0
      %v1455 = vsel %vm1447, %v1018, 0.0
      %v1456 = vsel %vm1448, %v1019, 0.0
      %v1457 = vsel %vm1449, %v1020, 0.0
      %v1458 = vsel %vm1450, %v1021, 0.0
      %v1459 = vadd.f32 %v1314, %v1451
      %v1460 = vadd.f32 %v1315, %v1452
      %v1461 = vadd.f32 %v1316, %v1453
      %v1462 = vadd.f32 %v1317, %v1454
      %v1463 = vadd.f32 %v1318, %v1455
      %v1464 = vadd.f32 %v1319, %v1456
      %v1465 = vadd.f32 %v1320, %v1457
      %v1466 = vadd.f32 %v1321, %v1458
      %v1467 = vld [vmem:[%s2] sm:$0x1]
      %v1469 = vperm.slane %v1467, 0
      %v1471 = vadd.f32 %v1459, %v1469
      %v1472 = vadd.f32 %v1460, %v1469
      %v1473 = vadd.f32 %v1461, %v1469
      %v1474 = vadd.f32 %v1462, %v1469
      %v1475 = vadd.f32 %v1463, %v1469
      %v1476 = vadd.f32 %v1464, %v1469
      %v1477 = vadd.f32 %v1465, %v1469
      %v1478 = vadd.f32 %v1466, %v1469
      %vm1479 = vcmp.gt.f32.partialorder %v1471, 0.0
      %vm1480 = vcmp.gt.f32.partialorder %v1472, 0.0
      %vm1481 = vcmp.gt.f32.partialorder %v1473, 0.0
      %vm1482 = vcmp.gt.f32.partialorder %v1474, 0.0
      %vm1483 = vcmp.gt.f32.partialorder %v1475, 0.0
      %vm1484 = vcmp.gt.f32.partialorder %v1476, 0.0
      %vm1485 = vcmp.gt.f32.partialorder %v1477, 0.0
      %vm1486 = vcmp.gt.f32.partialorder %v1478, 0.0
      %v1487 = vmul.f32 %v1471, 0.2
      %v1488 = vmul.f32 %v1472, 0.2
      %v1489 = vmul.f32 %v1473, 0.2
      %v1490 = vmul.f32 %v1474, 0.2
      %v1491 = vmul.f32 %v1475, 0.2
      %v1492 = vmul.f32 %v1476, 0.2
      %v1493 = vmul.f32 %v1477, 0.2
      %v1494 = vmul.f32 %v1478, 0.2
      %v1495 = vsel %vm1479, %v1471, %v1487
      %v1496 = vsel %vm1480, %v1472, %v1488
      %v1497 = vsel %vm1481, %v1473, %v1489
      %v1498 = vsel %vm1482, %v1474, %v1490
      %v1499 = vsel %vm1483, %v1475, %v1491
      %v1500 = vsel %vm1484, %v1476, %v1492
      %v1501 = vsel %vm1485, %v1477, %v1493
      %v1502 = vsel %vm1486, %v1478, %v1494
      %v1503 = vpack.c.bf16 %v1495, %v1495
      %v1504 = vpack.c.bf16 %v1496, %v1496
      %v1505 = vpack.c.bf16 %v1497, %v1497
      %v1506 = vpack.c.bf16 %v1498, %v1498
      %v1507 = vpack.c.bf16 %v1499, %v1499
      %v1508 = vpack.c.bf16 %v1500, %v1500
      %v1509 = vpack.c.bf16 %v1501, %v1501
      %v1510 = vpack.c.bf16 %v1502, %v1502
      %1511 = vst [vmem:[%s170] sm:$0xf] %v1503
      %1512 = vst [vmem:[%s170 + $0x4] sm:$0xf] %v1504
      %1513 = vst [vmem:[%s170 + $0x8] sm:$0xf] %v1505
      %1514 = vst [vmem:[%s170 + $0xc] sm:$0xf] %v1506
      %1515 = vst [vmem:[%s170 + $0x10] sm:$0xf] %v1507
      %1516 = vst [vmem:[%s170 + $0x14] sm:$0xf] %v1508
      %1517 = vst [vmem:[%s170 + $0x18] sm:$0xf] %v1509
      %1518 = vst [vmem:[%s170 + $0x1c] sm:$0xf] %v1510
      %s1519 = smul.u32 8, %s14
      %p1520 = scmp.lt.s32.totalorder %s1519, 15
      %s1521 = scalar_select %p1520, %s1519, 15
      %s1522 = smul.addr %s1521, 4
      %s1523 = scalar_lea.vmem %s3, %s1522
      // Predicated region
      $region33: #{discriminator_forward.5} parent=31 // pred_check
        %p1524 = pneg %p100
      $region34: #{discriminator_forward.5} parent=31 // pred_check_branch
        %1526 = sbr.rel (%p1524) target = $region36
      $region35: #{discriminator_forward.5} parent=31 // pred_region
        %s1527 = smul.u32 8, %s14
      $region36: #{discriminator_forward.5} parent=31 // pred_fallthru
        _
    $region32: #{discriminator_forward.5} parent=5 // pred_fallthru
      _
    %p1528 = scmp.le.s32.totalorder 2, %s9
    // Predicated region
    $region37: #{discriminator_forward.5} parent=5 // pred_check
      %p1529 = pneg %p1528
    $region38: #{discriminator_forward.5} parent=5 // pred_check_branch
      %1531 = sbr.rel (%p1529) target = $region40
    $region39: #{discriminator_forward.5} parent=5 // pred_region
      %s1532 = ssub.s32 %s9, 2
      // Predicated region
      $region41: #{discriminator_forward.5} parent=39 // pred_check
        %p1533 = pneg %p106
      $region42: #{discriminator_forward.5} parent=39 // pred_check_branch
        %1535 = sbr.rel (%p1533) target = $region44
      $region43: #{discriminator_forward.5} parent=39 // pred_region
        %s1536 = smul.u32 8, %s15
        %p1537 = scmp.lt.s32.totalorder %s1536, 15
        %s1538 = scalar_select %p1537, %s1536, 15
        %s1539 = smul.addr %s1538, 4
        %s1540 = scalar_lea.vmem %s3, %s1539
      $region44: #{discriminator_forward.5} parent=39 // pred_fallthru
        _
    $region40: #{discriminator_forward.5} parent=5 // pred_fallthru
      _
  $region6: #{discriminator_forward.5} parent=0 // loop_footer
    %s13 = sadd.s32 1, %s9
  $region7: #{discriminator_forward.5} parent=0 // loop_footer_branch
    %8 = sbr.rel target = $region3
  $region8: #{discriminator_forward.5} parent=0 // loop_exit
    _

// kernel: discriminator_forward.4
$region0: #{discriminator_forward.4}
  #allocation0 [shape = 'u32[]', space=smem, size = 0x4, offset = 0x4, fixed_abs, tag = 'smem constant byte address 0x4 - core index']
  #allocation1 [shape = 'u32[72,128]{1,0:T(1,128)}', space=vmem, size = 0x9000, scoped, tag = 'internal scratch']
  %s0 = inlined_call_operand.vmem [shape: bf16[2,4,273,8], index: 0, kind: input, shape index: {}]
  %s1 = inlined_call_operand.vmem [shape: bf16[9,8,64], index: 1, kind: input, shape index: {}]
  %s2 = inlined_call_operand.vmem [shape: f32[1,64], index: 2, kind: input, shape index: {}]
  %s3 = inlined_call_operand.vmem [shape: bf16[512,64], index: 3, kind: output, shape index: {}]
  %s4 = sld [smem:[#allocation0]]
  $region45: #{discriminator_forward.4} parent=0
    _
  %s6 = ssub.s32 1, %s4
  %s7 = scalar_select 0, %s6, %s4
  loop: start=0, step=1, limit=4
  $region2: #{discriminator_forward.4} parent=0 // loop_pre_header
    _
  $region3: #{discriminator_forward.4} parent=0 // loop_header
    %s9 = sphi 0, %s13
    %p10 = scmp.ge.s32.totalorder %s9, 4
    %s19 = sphi 0, %s21
    %s22 = sphi 0, %s19
    %s23 = sphi 0, %s22
    %s39 = sphi 0, %s23
    %s43 = sphi 0, %s43
    %s45 = sphi 0, %s43
    %s46 = sphi 0, %s45
    %s60 = sphi 0, %s46
    %s64 = sphi 0, %s64
    %s66 = sphi 0, %s64
    %s67 = sphi 0, %s66
    %s81 = sphi 0, %s67
    %s87 = sphi 0, %s89
    %s90 = sphi 0, %s87
    %s91 = sphi 0, %s90
    %s107 = sphi 0, %s91
  $region4: #{discriminator_forward.4} parent=0 // loop_header_branch
    %12 = sbr.rel (%p10) target = $region8
  $region5: #{discriminator_forward.4} parent=0 // loop_body
    %s14 = ssub.s32 %s9, 1
    %s15 = ssub.s32 %s9, 2
    %s16 = sadd.s32 %s9, 1
    %s17 = ssub.s32 %s9, %s16
    %p18 = scmp.eq.s32.totalorder %s17, 0
    %s20 = sadd.s32 %s19, 1
    %s21 = scalar_select %p18, %s19, %s20
    %p24 = pneg %p18
    %p25 = scmp.eq.s32.totalorder %s9, 1
    %p26 = por %p24, %p25
    %p27 = scmp.ne.s32.totalorder %s19, %s22
    %p28 = scmp.eq.s32.totalorder %s9, 0
    %p29 = por %p27, %p28
    %p30 = scmp.ne.s32.totalorder %s19, %s22
    %p31 = scmp.eq.s32.totalorder %s14, 1
    %p32 = por %p30, %p31
    %p33 = scmp.ne.s32.totalorder %s22, %s23
    %p34 = scmp.eq.s32.totalorder %s14, 0
    %p35 = por %p33, %p34
    %p36 = scmp.ne.s32.totalorder %s22, %s23
    %p37 = scmp.eq.s32.totalorder %s15, 1
    %p38 = por %p36, %p37
    %p40 = scmp.ne.s32.totalorder %s23, %s39
    %p41 = scmp.eq.s32.totalorder %s15, 0
    %p42 = por %p40, %p41
    %s44 = sadd.s32 %s43, 1
    %p47 = scmp.eq.s32.totalorder %s9, 1
    %p48 = scmp.ne.s32.totalorder %s43, %s45
    %p49 = scmp.eq.s32.totalorder %s9, 0
    %p50 = por %p48, %p49
    %p51 = scmp.ne.s32.totalorder %s43, %s45
    %p52 = scmp.eq.s32.totalorder %s14, 1
    %p53 = por %p51, %p52
    %p54 = scmp.ne.s32.totalorder %s45, %s46
    %p55 = scmp.eq.s32.totalorder %s14, 0
    %p56 = por %p54, %p55
    %p57 = scmp.ne.s32.totalorder %s45, %s46
    %p58 = scmp.eq.s32.totalorder %s15, 1
    %p59 = por %p57, %p58
    %p61 = scmp.ne.s32.totalorder %s46, %s60
    %p62 = scmp.eq.s32.totalorder %s15, 0
    %p63 = por %p61, %p62
    %s65 = sadd.s32 %s64, 1
    %p68 = scmp.eq.s32.totalorder %s9, 1
    %p69 = scmp.ne.s32.totalorder %s64, %s66
    %p70 = scmp.eq.s32.totalorder %s9, 0
    %p71 = por %p69, %p70
    %p72 = scmp.ne.s32.totalorder %s64, %s66
    %p73 = scmp.eq.s32.totalorder %s14, 1
    %p74 = por %p72, %p73
    %p75 = scmp.ne.s32.totalorder %s66, %s67
    %p76 = scmp.eq.s32.totalorder %s14, 0
    %p77 = por %p75, %p76
    %p78 = scmp.ne.s32.totalorder %s66, %s67
    %p79 = scmp.eq.s32.totalorder %s15, 1
    %p80 = por %p78, %p79
    %p82 = scmp.ne.s32.totalorder %s67, %s81
    %p83 = scmp.eq.s32.totalorder %s15, 0
    %p84 = por %p82, %p83
    %s85 = ssub.s32 %s9, %s16
    %p86 = scmp.eq.s32.totalorder %s85, 0
    %s88 = sadd.s32 %s87, 1
    %s89 = scalar_select %p86, %s87, %s88
    %p92 = pneg %p86
    %p93 = scmp.eq.s32.totalorder %s9, 1
    %p94 = por %p92, %p93
    %p95 = scmp.ne.s32.totalorder %s87, %s90
    %p96 = scmp.eq.s32.totalorder %s9, 0
    %p97 = por %p95, %p96
    %p98 = scmp.ne.s32.totalorder %s87, %s90
    %p99 = scmp.eq.s32.totalorder %s14, 1
    %p100 = por %p98, %p99
    %p101 = scmp.ne.s32.totalorder %s90, %s91
    %p102 = scmp.eq.s32.totalorder %s14, 0
    %p103 = por %p101, %p102
    %p104 = scmp.ne.s32.totalorder %s90, %s91
    %p105 = scmp.eq.s32.totalorder %s15, 1
    %p106 = por %p104, %p105
    %p108 = scmp.ne.s32.totalorder %s91, %s107
    %p109 = scmp.eq.s32.totalorder %s15, 0
    %p110 = por %p108, %p109
    %p111 = scmp.le.s32.totalorder 1, %s9
    %p112 = scmp.lt.s32.totalorder %s9, 3
    %p113 = pnand %p111, %p112
    %p114 = pneg %p113
    // Predicated region
    $region9: #{discriminator_forward.4} parent=5 // pred_check
      _
    $region10: #{discriminator_forward.4} parent=5 // pred_check_branch
      %116 = sbr.rel (%p113) target = $region12
    $region11: #{discriminator_forward.4} parent=5 // pred_region
      %s117 = ssub.s32 %s9, 1
      // Predicated region
      $region13: #{discriminator_forward.4} parent=11 // pred_check
        %p118 = pneg %p56
      $region14: #{discriminator_forward.4} parent=11 // pred_check_branch
        %120 = sbr.rel (%p118) target = $region16
      $region15: #{discriminator_forward.4} parent=11 // pred_region
        _
      $region16: #{discriminator_forward.4} parent=11 // pred_fallthru
        _
      // Predicated region
      $region17: #{discriminator_forward.4} parent=11 // pred_check
        %p121 = pneg %p77
      $region18: #{discriminator_forward.4} parent=11 // pred_check_branch
        %123 = sbr.rel (%p121) target = $region20
      $region19: #{discriminator_forward.4} parent=11 // pred_region
        _
      $region20: #{discriminator_forward.4} parent=11 // pred_fallthru
        _
    $region12: #{discriminator_forward.4} parent=5 // pred_fallthru
      _
    %p124 = scmp.lt.s32.totalorder %s9, 2
    // Predicated region
    $region21: #{discriminator_forward.4} parent=5 // pred_check
      %p125 = pneg %p124
    $region22: #{discriminator_forward.4} parent=5 // pred_check_branch
      %127 = sbr.rel (%p125) target = $region24
    $region23: #{discriminator_forward.4} parent=5 // pred_region
      // Predicated region
      $region25: #{discriminator_forward.4} parent=23 // pred_check
        %p128 = pneg %p29
      $region26: #{discriminator_forward.4} parent=23 // pred_check_branch
        %130 = sbr.rel (%p128) target = $region28
      $region27: #{discriminator_forward.4} parent=23 // pred_region
        %p131 = scmp.lt.s32.totalorder %s9, 1
        %s132 = scalar_select %p131, %s9, 1
        %s133 = smul.addr %s132, 140
        %s134 = smul.addr %s133, 4
        %s135 = scalar_lea.vmem %s0, %s134
      $region28: #{discriminator_forward.4} parent=23 // pred_fallthru
        _
    $region24: #{discriminator_forward.4} parent=5 // pred_fallthru
      _
    %p136 = scmp.le.s32.totalorder 1, %s9
    %p137 = scmp.lt.s32.totalorder %s9, 3
    %p138 = pnand %p136, %p137
    %p139 = pneg %p138
    // Predicated region
    $region29: #{discriminator_forward.4} parent=5 // pred_check
      _
    $region30: #{discriminator_forward.4} parent=5 // pred_check_branch
      %141 = sbr.rel (%p138) target = $region32
    $region31: #{discriminator_forward.4} parent=5 // pred_region
      %s142 = ssub.s32 %s9, 1
      %p143 = scmp.lt.s32.totalorder %s14, 1
      %s144 = scalar_select %p143, %s14, 1
      %s145 = smul.addr %s144, 140
      %s146 = smul.addr %s145, 4
      %s147 = scalar_lea.vmem %s0, %s146
      %p148 = pneg %p35
      %p149 = pneg %p32
      %p150 = pneg %p56
      %p151 = pneg %p53
      %p152 = pneg %p77
      %p153 = pneg %p74
      %p154 = pneg %p103
      %p155 = pneg %p100
      %s156 = smul.u32 32, %s14
      %p157 = scmp.lt.s32.totalorder %s156, 63
      %s158 = scalar_select %p157, %s156, 63
      %s159 = smul.addr %s158, 4
      %s160 = scalar_lea.vmem %s3, %s159
      %p161 = scmp.lt.s32.totalorder %s14, 1
      %s162 = scalar_select %p161, %s14, 1
      %s163 = smul.addr %s162, 140
      %s164 = smul.addr %s163, 4
      %s165 = scalar_lea.vmem %s0, %s164
      %s166 = smul.u32 32, %s14
      %p167 = scmp.lt.s32.totalorder %s166, 63
      %s168 = scalar_select %p167, %s166, 63
      %s169 = smul.addr %s168, 4
      %s170 = scalar_lea.vmem %s3, %s169
      %s171 = smul.u32 32, %s14
      %s173 = scalar_lea.vmem %s165, 420
      %v174 = vld [vmem:[%s173] sm:$0xf]
      %v175 = vld [vmem:[%s173 + $0x4] sm:$0xf]
      %v176 = vld [vmem:[%s173 + $0x8] sm:$0xf]
      %v177 = vld [vmem:[%s173 + $0xc] sm:$0xf]
      %v178 = vld [vmem:[%s173 + $0x10] sm:$0xf]
      %v179 = vld [vmem:[%s173 + $0x14] sm:$0xf]
      %v180 = vld [vmem:[%s173 + $0x18] sm:$0xf]
      %v181 = vld [vmem:[%s173 + $0x1c] sm:$0xf]
      %v182 = vld [vmem:[%s173 + $0x20] sm:$0xf]
      %v183 = vld [vmem:[%s173 + $0x24] sm:$0xf]
      %v184 = vld [vmem:[%s173 + $0x28] sm:$0xf]
      %v185 = vld [vmem:[%s173 + $0x2c] sm:$0xf]
      %v186 = vld [vmem:[%s173 + $0x30] sm:$0xf]
      %v187 = vld [vmem:[%s173 + $0x34] sm:$0xf]
      %v188 = vld [vmem:[%s173 + $0x38] sm:$0xf]
      %v189 = vld [vmem:[%s173 + $0x3c] sm:$0xf]
      %v190 = vld [vmem:[%s173 + $0x40] sm:$0xf]
      %v191 = vld [vmem:[%s173 + $0x44] sm:$0xf]
      %v192 = vld [vmem:[%s173 + $0x48] sm:$0xf]
      %v193 = vld [vmem:[%s173 + $0x4c] sm:$0xf]
      %v194 = vld [vmem:[%s173 + $0x50] sm:$0xf]
      %v195 = vld [vmem:[%s173 + $0x54] sm:$0xf]
      %v196 = vld [vmem:[%s173 + $0x58] sm:$0xf]
      %v197 = vld [vmem:[%s173 + $0x5c] sm:$0xf]
      %v198 = vld [vmem:[%s173 + $0x60] sm:$0xf]
      %v199 = vld [vmem:[%s173 + $0x64] sm:$0xf]
      %v200 = vld [vmem:[%s173 + $0x68] sm:$0xf]
      %v201 = vld [vmem:[%s173 + $0x6c] sm:$0xf]
      %v202 = vld [vmem:[%s173 + $0x70] sm:$0xf]
      %v203 = vld [vmem:[%s173 + $0x74] sm:$0xf]
      %v204 = vld [vmem:[%s173 + $0x78] sm:$0xf]
      %v205 = vld [vmem:[%s173 + $0x7c] sm:$0xf]
      %v206 = vld [vmem:[%s1] sm:$0xf]
      %s207 = scalar_lea.vmem %s165, 280
      %v208 = vld [vmem:[%s207] sm:$0xf]
      %v209 = vld [vmem:[%s207 + $0x4] sm:$0xf]
      %v210 = vld [vmem:[%s207 + $0x8] sm:$0xf]
      %v211 = vld [vmem:[%s207 + $0xc] sm:$0xf]
      %v212 = vld [vmem:[%s207 + $0x10] sm:$0xf]
      %v213 = vld [vmem:[%s207 + $0x14] sm:$0xf]
      %v214 = vld [vmem:[%s207 + $0x18] sm:$0xf]
      %v215 = vld [vmem:[%s207 + $0x1c] sm:$0xf]
      %v216 = vld [vmem:[%s207 + $0x20] sm:$0xf]
      %v217 = vld [vmem:[%s207 + $0x24] sm:$0xf]
      %v218 = vld [vmem:[%s207 + $0x28] sm:$0xf]
      %v219 = vld [vmem:[%s207 + $0x2c] sm:$0xf]
      %v220 = vld [vmem:[%s207 + $0x30] sm:$0xf]
      %v221 = vld [vmem:[%s207 + $0x34] sm:$0xf]
      %v222 = vld [vmem:[%s207 + $0x38] sm:$0xf]
      %v223 = vld [vmem:[%s207 + $0x3c] sm:$0xf]
      %v224 = vld [vmem:[%s207 + $0x40] sm:$0xf]
      %v225 = vld [vmem:[%s207 + $0x44] sm:$0xf]
      %v226 = vld [vmem:[%s207 + $0x48] sm:$0xf]
      %v227 = vld [vmem:[%s207 + $0x4c] sm:$0xf]
      %v228 = vld [vmem:[%s207 + $0x50] sm:$0xf]
      %v229 = vld [vmem:[%s207 + $0x54] sm:$0xf]
      %v230 = vld [vmem:[%s207 + $0x58] sm:$0xf]
      %v231 = vld [vmem:[%s207 + $0x5c] sm:$0xf]
      %v232 = vld [vmem:[%s207 + $0x60] sm:$0xf]
      %v233 = vld [vmem:[%s207 + $0x64] sm:$0xf]
      %v234 = vld [vmem:[%s207 + $0x68] sm:$0xf]
      %v235 = vld [vmem:[%s207 + $0x6c] sm:$0xf]
      %v236 = vld [vmem:[%s207 + $0x70] sm:$0xf]
      %v237 = vld [vmem:[%s207 + $0x74] sm:$0xf]
      %v238 = vld [vmem:[%s207 + $0x78] sm:$0xf]
      %v239 = vld [vmem:[%s207 + $0x7c] sm:$0xf]
      %v240 = vld [vmem:[%s207 + $0x80] sm:$0x1]
      %s241 = scalar_lea.vmem %s1, 4
      %v242 = vld [vmem:[%s241] sm:$0xf]
      %v243 = vld [vmem:[%s173 + $0x80] sm:$0x1]
      %s244 = scalar_lea.vmem %s1, 8
      %v245 = vld [vmem:[%s244] sm:$0xf]
      %v279 = vunpack.c.l.b16 %v174
      %v280 = vunpack.c.l.b16 %v175
      %v281 = vunpack.c.l.b16 %v176
      %v282 = vunpack.c.l.b16 %v177
      %v283 = vunpack.c.l.b16 %v178
      %v284 = vunpack.c.l.b16 %v179
      %v285 = vunpack.c.l.b16 %v180
      %v286 = vunpack.c.l.b16 %v181
      %v287 = vunpack.c.l.b16 %v182
      %v288 = vunpack.c.l.b16 %v183
      %v289 = vunpack.c.l.b16 %v184
      %v290 = vunpack.c.l.b16 %v185
      %v291 = vunpack.c.l.b16 %v186
      %v292 = vunpack.c.l.b16 %v187
      %v293 = vunpack.c.l.b16 %v188
      %v294 = vunpack.c.l.b16 %v189
      %v295 = vunpack.c.l.b16 %v190
      %v296 = vunpack.c.l.b16 %v191
      %v297 = vunpack.c.l.b16 %v192
      %v298 = vunpack.c.l.b16 %v193
      %v299 = vunpack.c.l.b16 %v194
      %v300 = vunpack.c.l.b16 %v195
      %v301 = vunpack.c.l.b16 %v196
      %v302 = vunpack.c.l.b16 %v197
      %v303 = vunpack.c.l.b16 %v198
      %v304 = vunpack.c.l.b16 %v199
      %v305 = vunpack.c.l.b16 %v200
      %v306 = vunpack.c.l.b16 %v201
      %v307 = vunpack.c.l.b16 %v202
      %v308 = vunpack.c.l.b16 %v203
      %v309 = vunpack.c.l.b16 %v204
      %v310 = vunpack.c.l.b16 %v205
      %v311 = vunpack.c.l.b16 %v243
      %v312 = vpack.c.b16 %v280, %v279
      %v313 = vpack.c.b16 %v282, %v281
      %v314 = vpack.c.b16 %v284, %v283
      %v315 = vpack.c.b16 %v286, %v285
      %v316 = vpack.c.b16 %v288, %v287
      %v317 = vpack.c.b16 %v290, %v289
      %v318 = vpack.c.b16 %v292, %v291
      %v319 = vpack.c.b16 %v294, %v293
      %v320 = vpack.c.b16 %v296, %v295
      %v321 = vpack.c.b16 %v298, %v297
      %v322 = vpack.c.b16 %v300, %v299
      %v323 = vpack.c.b16 %v302, %v301
      %v324 = vpack.c.b16 %v304, %v303
      %v325 = vpack.c.b16 %v306, %v305
      %v326 = vpack.c.b16 %v308, %v307
      %v327 = vpack.c.b16 %v310, %v309
      %v328 = vpack.c.b16 %v311, %v311
      %vm329 = vsmask.f32 7424
      %v331 = vshrl.u32 %v312, 16
      %v333 = vshll.u32 %v312, 16
      %v335 = vrot.slane %v333, 1
      %v336 = vor.u32 %v331, %v335
      %v338 = vshll.u32 %v313, 16
      %v340 = vrot.slane %v338, 1
      %v341 = vsel %vm329, %v336, %v340
      %v342 = vshrl.u32 %v313, 16
      %v344 = vor.u32 %v342, %v340
      %v346 = vshll.u32 %v314, 16
      %v348 = vrot.slane %v346, 1
      %v349 = vsel %vm329, %v344, %v348
      %v350 = vshrl.u32 %v314, 16
      %v352 = vor.u32 %v350, %v348
      %v354 = vshll.u32 %v315, 16
      %v356 = vrot.slane %v354, 1
      %v357 = vsel %vm329, %v352, %v356
      %v358 = vshrl.u32 %v315, 16
      %v360 = vor.u32 %v358, %v356
      %v362 = vshll.u32 %v316, 16
      %v364 = vrot.slane %v362, 1
      %v365 = vsel %vm329, %v360, %v364
      %v366 = vshrl.u32 %v316, 16
      %v368 = vor.u32 %v366, %v364
      %v370 = vshll.u32 %v317, 16
      %v372 = vrot.slane %v370, 1
      %v373 = vsel %vm329, %v368, %v372
      %v374 = vshrl.u32 %v317, 16
      %v376 = vor.u32 %v374, %v372
      %v378 = vshll.u32 %v318, 16
      %v380 = vrot.slane %v378, 1
      %v381 = vsel %vm329, %v376, %v380
      %v382 = vshrl.u32 %v318, 16
      %v384 = vor.u32 %v382, %v380
      %v386 = vshll.u32 %v319, 16
      %v388 = vrot.slane %v386, 1
      %v389 = vsel %vm329, %v384, %v388
      %v390 = vshrl.u32 %v319, 16
      %v392 = vor.u32 %v390, %v388
      %v394 = vshll.u32 %v320, 16
      %v396 = vrot.slane %v394, 1
      %v397 = vsel %vm329, %v392, %v396
      %v398 = vshrl.u32 %v320, 16
      %v400 = vor.u32 %v398, %v396
      %v402 = vshll.u32 %v321, 16
      %v404 = vrot.slane %v402, 1
      %v405 = vsel %vm329, %v400, %v404
      %v406 = vshrl.u32 %v321, 16
      %v408 = vor.u32 %v406, %v404
      %v410 = vshll.u32 %v322, 16
      %v412 = vrot.slane %v410, 1
      %v413 = vsel %vm329, %v408, %v412
      %v414 = vshrl.u32 %v322, 16
      %v416 = vor.u32 %v414, %v412
      %v418 = vshll.u32 %v323, 16
      %v420 = vrot.slane %v418, 1
      %v421 = vsel %vm329, %v416, %v420
      %v422 = vshrl.u32 %v323, 16
      %v424 = vor.u32 %v422, %v420
      %v426 = vshll.u32 %v324, 16
      %v428 = vrot.slane %v426, 1
      %v429 = vsel %vm329, %v424, %v428
      %v430 = vshrl.u32 %v324, 16
      %v432 = vor.u32 %v430, %v428
      %v434 = vshll.u32 %v325, 16
      %v436 = vrot.slane %v434, 1
      %v437 = vsel %vm329, %v432, %v436
      %v438 = vshrl.u32 %v325, 16
      %v440 = vor.u32 %v438, %v436
      %v442 = vshll.u32 %v326, 16
      %v444 = vrot.slane %v442, 1
      %v445 = vsel %vm329, %v440, %v444
      %v446 = vshrl.u32 %v326, 16
      %v448 = vor.u32 %v446, %v444
      %v450 = vshll.u32 %v327, 16
      %v452 = vrot.slane %v450, 1
      %v453 = vsel %vm329, %v448, %v452
      %v454 = vshrl.u32 %v327, 16
      %v456 = vor.u32 %v454, %v452
      %v458 = vshll.u32 %v328, 16
      %v460 = vrot.slane %v458, 1
      %v461 = vsel %vm329, %v456, %v460
      %vm462 = vcmask 64512
      %v464 = vsel %vm462, %v341, 0
      %v467 = vsel %vm462, %v349, 0
      %v470 = vsel %vm462, %v357, 0
      %v473 = vsel %vm462, %v365, 0
      %v476 = vsel %vm462, %v373, 0
      %v479 = vsel %vm462, %v381, 0
      %v482 = vsel %vm462, %v389, 0
      %v485 = vsel %vm462, %v397, 0
      %v488 = vsel %vm462, %v405, 0
      %v491 = vsel %vm462, %v413, 0
      %v494 = vsel %vm462, %v421, 0
      %v497 = vsel %vm462, %v429, 0
      %v500 = vsel %vm462, %v437, 0
      %v503 = vsel %vm462, %v445, 0
      %v506 = vsel %vm462, %v453, 0
      %v509 = vsel %vm462, %v461, 0
      %vm511 = vcmask 1043456
      %v513 = vsel %vm511, %v245, 0
      %515 = vmatpush.bf16.msra.mxu0 0
      %516 = vmatpush.bf16.msra.mxu0 0
      %517 = vmatpush.bf16.msra.mxu0 0
      %518 = vmatpush.bf16.msra.mxu0 0
      %519 = vmatpush.bf16.msra.mxu0 0
      %520 = vmatpush.bf16.msra.mxu0 0
      %521 = vmatpush.bf16.msra.mxu0 0
      %522 = vmatpush.bf16.msra.mxu0 %v513
      %523 = vmatmul.bf16.gmra.mxu0 %v464
      %v524 = vpop.f32.mrf.mxu0
      %v525 = vadd.f32 0.0, %v524
      %v526 = vpop.f32.mrf.mxu0
      %v527 = vadd.f32 0.0, %v526
      %528 = vmatmul.bf16.gmra.mxu0 %v467
      %v529 = vpop.f32.mrf.mxu0
      %v530 = vadd.f32 0.0, %v529
      %v531 = vpop.f32.mrf.mxu0
      %v532 = vadd.f32 0.0, %v531
      %533 = vmatmul.bf16.gmra.mxu0 %v470
      %v534 = vpop.f32.mrf.mxu0
      %v535 = vadd.f32 0.0, %v534
      %v536 = vpop.f32.mrf.mxu0
      %v537 = vadd.f32 0.0, %v536
      %538 = vmatmul.bf16.gmra.mxu0 %v473
      %v539 = vpop.f32.mrf.mxu0
      %v540 = vadd.f32 0.0, %v539
      %v541 = vpop.f32.mrf.mxu0
      %v542 = vadd.f32 0.0, %v541
      %543 = vmatmul.bf16.gmra.mxu0 %v476
      %v544 = vpop.f32.mrf.mxu0
      %v545 = vadd.f32 0.0, %v544
      %v546 = vpop.f32.mrf.mxu0
      %v547 = vadd.f32 0.0, %v546
      %548 = vmatmul.bf16.gmra.mxu0 %v479
      %v549 = vpop.f32.mrf.mxu0
      %v550 = vadd.f32 0.0, %v549
      %v551 = vpop.f32.mrf.mxu0
      %v552 = vadd.f32 0.0, %v551
      %553 = vmatmul.bf16.gmra.mxu0 %v482
      %v554 = vpop.f32.mrf.mxu0
      %v555 = vadd.f32 0.0, %v554
      %v556 = vpop.f32.mrf.mxu0
      %v557 = vadd.f32 0.0, %v556
      %558 = vmatmul.bf16.gmra.mxu0 %v485
      %v559 = vpop.f32.mrf.mxu0
      %v560 = vadd.f32 0.0, %v559
      %v561 = vpop.f32.mrf.mxu0
      %v562 = vadd.f32 0.0, %v561
      %563 = vmatmul.bf16.gmra.mxu0 %v488
      %v564 = vpop.f32.mrf.mxu0
      %v565 = vadd.f32 0.0, %v564
      %v566 = vpop.f32.mrf.mxu0
      %v567 = vadd.f32 0.0, %v566
      %568 = vmatmul.bf16.gmra.mxu0 %v491
      %v569 = vpop.f32.mrf.mxu0
      %v570 = vadd.f32 0.0, %v569
      %v571 = vpop.f32.mrf.mxu0
      %v572 = vadd.f32 0.0, %v571
      %573 = vmatmul.bf16.gmra.mxu0 %v494
      %v574 = vpop.f32.mrf.mxu0
      %v575 = vadd.f32 0.0, %v574
      %v576 = vpop.f32.mrf.mxu0
      %v577 = vadd.f32 0.0, %v576
      %578 = vmatmul.bf16.gmra.mxu0 %v497
      %v579 = vpop.f32.mrf.mxu0
      %v580 = vadd.f32 0.0, %v579
      %v581 = vpop.f32.mrf.mxu0
      %v582 = vadd.f32 0.0, %v581
      %583 = vmatmul.bf16.gmra.mxu0 %v500
      %v584 = vpop.f32.mrf.mxu0
      %v585 = vadd.f32 0.0, %v584
      %v586 = vpop.f32.mrf.mxu0
      %v587 = vadd.f32 0.0, %v586
      %588 = vmatmul.bf16.gmra.mxu0 %v503
      %v589 = vpop.f32.mrf.mxu0
      %v590 = vadd.f32 0.0, %v589
      %v591 = vpop.f32.mrf.mxu0
      %v592 = vadd.f32 0.0, %v591
      %593 = vmatmul.bf16.gmra.mxu0 %v506
      %v594 = vpop.f32.mrf.mxu0
      %v595 = vadd.f32 0.0, %v594
      %v596 = vpop.f32.mrf.mxu0
      %v597 = vadd.f32 0.0, %v596
      %598 = vmatmul.bf16.gmra.mxu0 %v509
      %v599 = vpop.f32.mrf.mxu0
      %v600 = vadd.f32 0.0, %v599
      %v601 = vpop.f32.mrf.mxu0
      %v602 = vadd.f32 0.0, %v601
      %603 = vdwg.mxu0
      %v637 = vunpack.c.l.b16 %v208
      %v638 = vunpack.c.l.b16 %v209
      %v639 = vunpack.c.l.b16 %v210
      %v640 = vunpack.c.l.b16 %v211
      %v641 = vunpack.c.l.b16 %v212
      %v642 = vunpack.c.l.b16 %v213
      %v643 = vunpack.c.l.b16 %v214
      %v644 = vunpack.c.l.b16 %v215
      %v645 = vunpack.c.l.b16 %v216
      %v646 = vunpack.c.l.b16 %v217
      %v647 = vunpack.c.l.b16 %v218
      %v648 = vunpack.c.l.b16 %v219
      %v649 = vunpack.c.l.b16 %v220
      %v650 = vunpack.c.l.b16 %v221
      %v651 = vunpack.c.l.b16 %v222
      %v652 = vunpack.c.l.b16 %v223
      %v653 = vunpack.c.l.b16 %v224
      %v654 = vunpack.c.l.b16 %v225
      %v655 = vunpack.c.l.b16 %v226
      %v656 = vunpack.c.l.b16 %v227
      %v657 = vunpack.c.l.b16 %v228
      %v658 = vunpack.c.l.b16 %v229
      %v659 = vunpack.c.l.b16 %v230
      %v660 = vunpack.c.l.b16 %v231
      %v661 = vunpack.c.l.b16 %v232
      %v662 = vunpack.c.l.b16 %v233
      %v663 = vunpack.c.l.b16 %v234
      %v664 = vunpack.c.l.b16 %v235
      %v665 = vunpack.c.l.b16 %v236
      %v666 = vunpack.c.l.b16 %v237
      %v667 = vunpack.c.l.b16 %v238
      %v668 = vunpack.c.l.b16 %v239
      %v669 = vunpack.c.l.b16 %v240
      %v670 = vpack.c.b16 %v638, %v637
      %v671 = vpack.c.b16 %v640, %v639
      %v672 = vpack.c.b16 %v642, %v641
      %v673 = vpack.c.b16 %v644, %v643
      %v674 = vpack.c.b16 %v646, %v645
      %v675 = vpack.c.b16 %v648, %v647
      %v676 = vpack.c.b16 %v650, %v649
      %v677 = vpack.c.b16 %v652, %v651
      %v678 = vpack.c.b16 %v654, %v653
      %v679 = vpack.c.b16 %v656, %v655
      %v680 = vpack.c.b16 %v658, %v657
      %v681 = vpack.c.b16 %v660, %v659
      %v682 = vpack.c.b16 %v662, %v661
      %v683 = vpack.c.b16 %v664, %v663
      %v684 = vpack.c.b16 %v666, %v665
      %v685 = vpack.c.b16 %v668, %v667
      %v686 = vpack.c.b16 %v669, %v669
      %v688 = vshrl.u32 %v670, 16
      %v690 = vshll.u32 %v670, 16
      %v692 = vrot.slane %v690, 1
      %v693 = vor.u32 %v688, %v692
      %v695 = vshll.u32 %v671, 16
      %v697 = vrot.slane %v695, 1
      %v698 = vsel %vm329, %v693, %v697
      %v699 = vshrl.u32 %v671, 16
      %v701 = vor.u32 %v699, %v697
      %v703 = vshll.u32 %v672, 16
      %v705 = vrot.slane %v703, 1
      %v706 = vsel %vm329, %v701, %v705
      %v707 = vshrl.u32 %v672, 16
      %v709 = vor.u32 %v707, %v705
      %v711 = vshll.u32 %v673, 16
      %v713 = vrot.slane %v711, 1
      %v714 = vsel %vm329, %v709, %v713
      %v715 = vshrl.u32 %v673, 16
      %v717 = vor.u32 %v715, %v713
      %v719 = vshll.u32 %v674, 16
      %v721 = vrot.slane %v719, 1
      %v722 = vsel %vm329, %v717, %v721
      %v723 = vshrl.u32 %v674, 16
      %v725 = vor.u32 %v723, %v721
      %v727 = vshll.u32 %v675, 16
      %v729 = vrot.slane %v727, 1
      %v730 = vsel %vm329, %v725, %v729
      %v731 = vshrl.u32 %v675, 16
      %v733 = vor.u32 %v731, %v729
      %v735 = vshll.u32 %v676, 16
      %v737 = vrot.slane %v735, 1
      %v738 = vsel %vm329, %v733, %v737
      %v739 = vshrl.u32 %v676, 16
      %v741 = vor.u32 %v739, %v737
      %v743 = vshll.u32 %v677, 16
      %v745 = vrot.slane %v743, 1
      %v746 = vsel %vm329, %v741, %v745
      %v747 = vshrl.u32 %v677, 16
      %v749 = vor.u32 %v747, %v745
      %v751 = vshll.u32 %v678, 16
      %v753 = vrot.slane %v751, 1
      %v754 = vsel %vm329, %v749, %v753
      %v755 = vshrl.u32 %v678, 16
      %v757 = vor.u32 %v755, %v753
      %v759 = vshll.u32 %v679, 16
      %v761 = vrot.slane %v759, 1
      %v762 = vsel %vm329, %v757, %v761
      %v763 = vshrl.u32 %v679, 16
      %v765 = vor.u32 %v763, %v761
      %v767 = vshll.u32 %v680, 16
      %v769 = vrot.slane %v767, 1
      %v770 = vsel %vm329, %v765, %v769
      %v771 = vshrl.u32 %v680, 16
      %v773 = vor.u32 %v771, %v769
      %v775 = vshll.u32 %v681, 16
      %v777 = vrot.slane %v775, 1
      %v778 = vsel %vm329, %v773, %v777
      %v779 = vshrl.u32 %v681, 16
      %v781 = vor.u32 %v779, %v777
      %v783 = vshll.u32 %v682, 16
      %v785 = vrot.slane %v783, 1
      %v786 = vsel %vm329, %v781, %v785
      %v787 = vshrl.u32 %v682, 16
      %v789 = vor.u32 %v787, %v785
      %v791 = vshll.u32 %v683, 16
      %v793 = vrot.slane %v791, 1
      %v794 = vsel %vm329, %v789, %v793
      %v795 = vshrl.u32 %v683, 16
      %v797 = vor.u32 %v795, %v793
      %v799 = vshll.u32 %v684, 16
      %v801 = vrot.slane %v799, 1
      %v802 = vsel %vm329, %v797, %v801
      %v803 = vshrl.u32 %v684, 16
      %v805 = vor.u32 %v803, %v801
      %v807 = vshll.u32 %v685, 16
      %v809 = vrot.slane %v807, 1
      %v810 = vsel %vm329, %v805, %v809
      %v811 = vshrl.u32 %v685, 16
      %v813 = vor.u32 %v811, %v809
      %v815 = vshll.u32 %v686, 16
      %v817 = vrot.slane %v815, 1
      %v818 = vsel %vm329, %v813, %v817
      %v820 = vsel %vm462, %v698, 0
      %v823 = vsel %vm462, %v706, 0
      %v826 = vsel %vm462, %v714, 0
      %v829 = vsel %vm462, %v722, 0
      %v832 = vsel %vm462, %v730, 0
      %v835 = vsel %vm462, %v738, 0
      %v838 = vsel %vm462, %v746, 0
      %v841 = vsel %vm462, %v754, 0
      %v844 = vsel %vm462, %v762, 0
      %v847 = vsel %vm462, %v770, 0
      %v850 = vsel %vm462, %v778, 0
      %v853 = vsel %vm462, %v786, 0
      %v856 = vsel %vm462, %v794, 0
      %v859 = vsel %vm462, %v802, 0
      %v862 = vsel %vm462, %v810, 0
      %v865 = vsel %vm462, %v818, 0
      %v868 = vsel %vm511, %v242, 0
      %870 = vmatpush.bf16.msra.mxu0 0
      %871 = vmatpush.bf16.msra.mxu0 0
      %872 = vmatpush.bf16.msra.mxu0 0
      %873 = vmatpush.bf16.msra.mxu0 0
      %874 = vmatpush.bf16.msra.mxu0 0
      %875 = vmatpush.bf16.msra.mxu0 0
      %876 = vmatpush.bf16.msra.mxu0 0
      %877 = vmatpush.bf16.msra.mxu0 %v868
      %878 = vmatmul.bf16.gmra.mxu0 %v820
      %v879 = vpop.f32.mrf.mxu0
      %v880 = vadd.f32 %v525, %v879
      %v881 = vpop.f32.mrf.mxu0
      %v882 = vadd.f32 %v527, %v881
      %883 = vmatmul.bf16.gmra.mxu0 %v823
      %v884 = vpop.f32.mrf.mxu0
      %v885 = vadd.f32 %v530, %v884
      %v886 = vpop.f32.mrf.mxu0
      %v887 = vadd.f32 %v532, %v886
      %888 = vmatmul.bf16.gmra.mxu0 %v826
      %v889 = vpop.f32.mrf.mxu0
      %v890 = vadd.f32 %v535, %v889
      %v891 = vpop.f32.mrf.mxu0
      %v892 = vadd.f32 %v537, %v891
      %893 = vmatmul.bf16.gmra.mxu0 %v829
      %v894 = vpop.f32.mrf.mxu0
      %v895 = vadd.f32 %v540, %v894
      %v896 = vpop.f32.mrf.mxu0
      %v897 = vadd.f32 %v542, %v896
      %898 = vmatmul.bf16.gmra.mxu0 %v832
      %v899 = vpop.f32.mrf.mxu0
      %v900 = vadd.f32 %v545, %v899
      %v901 = vpop.f32.mrf.mxu0
      %v902 = vadd.f32 %v547, %v901
      %903 = vmatmul.bf16.gmra.mxu0 %v835
      %v904 = vpop.f32.mrf.mxu0
      %v905 = vadd.f32 %v550, %v904
      %v906 = vpop.f32.mrf.mxu0
      %v907 = vadd.f32 %v552, %v906
      %908 = vmatmul.bf16.gmra.mxu0 %v838
      %v909 = vpop.f32.mrf.mxu0
      %v910 = vadd.f32 %v555, %v909
      %v911 = vpop.f32.mrf.mxu0
      %v912 = vadd.f32 %v557, %v911
      %913 = vmatmul.bf16.gmra.mxu0 %v841
      %v914 = vpop.f32.mrf.mxu0
      %v915 = vadd.f32 %v560, %v914
      %v916 = vpop.f32.mrf.mxu0
      %v917 = vadd.f32 %v562, %v916
      %918 = vmatmul.bf16.gmra.mxu0 %v844
      %v919 = vpop.f32.mrf.mxu0
      %v920 = vadd.f32 %v565, %v919
      %v921 = vpop.f32.mrf.mxu0
      %v922 = vadd.f32 %v567, %v921
      %923 = vmatmul.bf16.gmra.mxu0 %v847
      %v924 = vpop.f32.mrf.mxu0
      %v925 = vadd.f32 %v570, %v924
      %v926 = vpop.f32.mrf.mxu0
      %v927 = vadd.f32 %v572, %v926
      %928 = vmatmul.bf16.gmra.mxu0 %v850
      %v929 = vpop.f32.mrf.mxu0
      %v930 = vadd.f32 %v575, %v929
      %v931 = vpop.f32.mrf.mxu0
      %v932 = vadd.f32 %v577, %v931
      %933 = vmatmul.bf16.gmra.mxu0 %v853
      %v934 = vpop.f32.mrf.mxu0
      %v935 = vadd.f32 %v580, %v934
      %v936 = vpop.f32.mrf.mxu0
      %v937 = vadd.f32 %v582, %v936
      %938 = vmatmul.bf16.gmra.mxu0 %v856
      %v939 = vpop.f32.mrf.mxu0
      %v940 = vadd.f32 %v585, %v939
      %v941 = vpop.f32.mrf.mxu0
      %v942 = vadd.f32 %v587, %v941
      %943 = vmatmul.bf16.gmra.mxu0 %v859
      %v944 = vpop.f32.mrf.mxu0
      %v945 = vadd.f32 %v590, %v944
      %v946 = vpop.f32.mrf.mxu0
      %v947 = vadd.f32 %v592, %v946
      %948 = vmatmul.bf16.gmra.mxu0 %v862
      %v949 = vpop.f32.mrf.mxu0
      %v950 = vadd.f32 %v595, %v949
      %v951 = vpop.f32.mrf.mxu0
      %v952 = vadd.f32 %v597, %v951
      %953 = vmatmul.bf16.gmra.mxu0 %v865
      %v954 = vpop.f32.mrf.mxu0
      %v955 = vadd.f32 %v600, %v954
      %v956 = vpop.f32.mrf.mxu0
      %v957 = vadd.f32 %v602, %v956
      %958 = vdwg.mxu0
      %s959 = scalar_lea.vmem %s165, 140
      %v960 = vld [vmem:[%s959 + $0x8] sm:$0xf]
      %v961 = vld [vmem:[%s959 + $0xc] sm:$0xf]
      %v962 = vld [vmem:[%s959 + $0x10] sm:$0xf]
      %v963 = vld [vmem:[%s959 + $0x14] sm:$0xf]
      %v964 = vld [vmem:[%s959 + $0x18] sm:$0xf]
      %v965 = vld [vmem:[%s959 + $0x1c] sm:$0xf]
      %v966 = vld [vmem:[%s959 + $0x20] sm:$0xf]
      %v967 = vld [vmem:[%s959 + $0x24] sm:$0xf]
      %v968 = vld [vmem:[%s959 + $0x28] sm:$0xf]
      %v969 = vld [vmem:[%s959 + $0x2c] sm:$0xf]
      %v970 = vld [vmem:[%s959 + $0x30] sm:$0xf]
      %v971 = vld [vmem:[%s959 + $0x34] sm:$0xf]
      %v972 = vld [vmem:[%s959 + $0x38] sm:$0xf]
      %v973 = vld [vmem:[%s959 + $0x3c] sm:$0xf]
      %v974 = vld [vmem:[%s959 + $0x40] sm:$0xf]
      %v975 = vld [vmem:[%s959 + $0x44] sm:$0xf]
      %v976 = vld [vmem:[%s959 + $0x48] sm:$0xf]
      %v977 = vld [vmem:[%s959 + $0x4c] sm:$0xf]
      %v978 = vld [vmem:[%s959 + $0x50] sm:$0xf]
      %v979 = vld [vmem:[%s959 + $0x54] sm:$0xf]
      %v980 = vld [vmem:[%s959 + $0x58] sm:$0xf]
      %v981 = vld [vmem:[%s959 + $0x5c] sm:$0xf]
      %v982 = vld [vmem:[%s959 + $0x60] sm:$0xf]
      %v983 = vld [vmem:[%s959 + $0x64] sm:$0xf]
      %v984 = vld [vmem:[%s959 + $0x68] sm:$0xf]
      %v985 = vld [vmem:[%s959 + $0x6c] sm:$0xf]
      %v986 = vld [vmem:[%s959 + $0x70] sm:$0xf]
      %v987 = vld [vmem:[%s959 + $0x74] sm:$0xf]
      %v988 = vld [vmem:[%s959 + $0x78] sm:$0xf]
      %v989 = vld [vmem:[%s959 + $0x7c] sm:$0xf]
      %v990 = vld [vmem:[%s959 + $0x80] sm:$0xf]
      %v991 = vld [vmem:[%s959 + $0x84] sm:$0xf]
      %s992 = scalar_lea.vmem %s1, 12
      %v993 = vld [vmem:[%s992] sm:$0xf]
      %v1026 = vunpack.c.l.b16 %v960
      %v1027 = vunpack.c.l.b16 %v961
      %v1028 = vunpack.c.l.b16 %v962
      %v1029 = vunpack.c.l.b16 %v963
      %v1030 = vunpack.c.l.b16 %v964
      %v1031 = vunpack.c.l.b16 %v965
      %v1032 = vunpack.c.l.b16 %v966
      %v1033 = vunpack.c.l.b16 %v967
      %v1034 = vunpack.c.l.b16 %v968
      %v1035 = vunpack.c.l.b16 %v969
      %v1036 = vunpack.c.l.b16 %v970
      %v1037 = vunpack.c.l.b16 %v971
      %v1038 = vunpack.c.l.b16 %v972
      %v1039 = vunpack.c.l.b16 %v973
      %v1040 = vunpack.c.l.b16 %v974
      %v1041 = vunpack.c.l.b16 %v975
      %v1042 = vunpack.c.l.b16 %v976
      %v1043 = vunpack.c.l.b16 %v977
      %v1044 = vunpack.c.l.b16 %v978
      %v1045 = vunpack.c.l.b16 %v979
      %v1046 = vunpack.c.l.b16 %v980
      %v1047 = vunpack.c.l.b16 %v981
      %v1048 = vunpack.c.l.b16 %v982
      %v1049 = vunpack.c.l.b16 %v983
      %v1050 = vunpack.c.l.b16 %v984
      %v1051 = vunpack.c.l.b16 %v985
      %v1052 = vunpack.c.l.b16 %v986
      %v1053 = vunpack.c.l.b16 %v987
      %v1054 = vunpack.c.l.b16 %v988
      %v1055 = vunpack.c.l.b16 %v989
      %v1056 = vunpack.c.l.b16 %v990
      %v1057 = vunpack.c.l.b16 %v991
      %v1058 = vpack.c.b16 %v1027, %v1026
      %v1059 = vpack.c.b16 %v1029, %v1028
      %v1060 = vpack.c.b16 %v1031, %v1030
      %v1061 = vpack.c.b16 %v1033, %v1032
      %v1062 = vpack.c.b16 %v1035, %v1034
      %v1063 = vpack.c.b16 %v1037, %v1036
      %v1064 = vpack.c.b16 %v1039, %v1038
      %v1065 = vpack.c.b16 %v1041, %v1040
      %v1066 = vpack.c.b16 %v1043, %v1042
      %v1067 = vpack.c.b16 %v1045, %v1044
      %v1068 = vpack.c.b16 %v1047, %v1046
      %v1069 = vpack.c.b16 %v1049, %v1048
      %v1070 = vpack.c.b16 %v1051, %v1050
      %v1071 = vpack.c.b16 %v1053, %v1052
      %v1072 = vpack.c.b16 %v1055, %v1054
      %v1073 = vpack.c.b16 %v1057, %v1056
      %v1075 = vsel %vm462, %v1058, 0
      %v1078 = vsel %vm462, %v1059, 0
      %v1081 = vsel %vm462, %v1060, 0
      %v1084 = vsel %vm462, %v1061, 0
      %v1087 = vsel %vm462, %v1062, 0
      %v1090 = vsel %vm462, %v1063, 0
      %v1093 = vsel %vm462, %v1064, 0
      %v1096 = vsel %vm462, %v1065, 0
      %v1099 = vsel %vm462, %v1066, 0
      %v1102 = vsel %vm462, %v1067, 0
      %v1105 = vsel %vm462, %v1068, 0
      %v1108 = vsel %vm462, %v1069, 0
      %v1111 = vsel %vm462, %v1070, 0
      %v1114 = vsel %vm462, %v1071, 0
      %v1117 = vsel %vm462, %v1072, 0
      %v1120 = vsel %vm462, %v1073, 0
      %v1123 = vsel %vm511, %v993, 0
      %1125 = vmatpush.bf16.msra.mxu0 0
      %1126 = vmatpush.bf16.msra.mxu0 0
      %1127 = vmatpush.bf16.msra.mxu0 0
      %1128 = vmatpush.bf16.msra.mxu0 0
      %1129 = vmatpush.bf16.msra.mxu0 0
      %1130 = vmatpush.bf16.msra.mxu0 0
      %1131 = vmatpush.bf16.msra.mxu0 0
      %1132 = vmatpush.bf16.msra.mxu0 %v1123
      %1133 = vmatmul.bf16.gmra.mxu0 %v1075
      %v1134 = vpop.f32.mrf.mxu0
      %v1135 = vadd.f32 0.0, %v1134
      %v1136 = vpop.f32.mrf.mxu0
      %v1137 = vadd.f32 0.0, %v1136
      %1138 = vmatmul.bf16.gmra.mxu0 %v1078
      %v1139 = vpop.f32.mrf.mxu0
      %v1140 = vadd.f32 0.0, %v1139
      %v1141 = vpop.f32.mrf.mxu0
      %v1142 = vadd.f32 0.0, %v1141
      %1143 = vmatmul.bf16.gmra.mxu0 %v1081
      %v1144 = vpop.f32.mrf.mxu0
      %v1145 = vadd.f32 0.0, %v1144
      %v1146 = vpop.f32.mrf.mxu0
      %v1147 = vadd.f32 0.0, %v1146
      %1148 = vmatmul.bf16.gmra.mxu0 %v1084
      %v1149 = vpop.f32.mrf.mxu0
      %v1150 = vadd.f32 0.0, %v1149
      %v1151 = vpop.f32.mrf.mxu0
      %v1152 = vadd.f32 0.0, %v1151
      %1153 = vmatmul.bf16.gmra.mxu0 %v1087
      %v1154 = vpop.f32.mrf.mxu0
      %v1155 = vadd.f32 0.0, %v1154
      %v1156 = vpop.f32.mrf.mxu0
      %v1157 = vadd.f32 0.0, %v1156
      %1158 = vmatmul.bf16.gmra.mxu0 %v1090
      %v1159 = vpop.f32.mrf.mxu0
      %v1160 = vadd.f32 0.0, %v1159
      %v1161 = vpop.f32.mrf.mxu0
      %v1162 = vadd.f32 0.0, %v1161
      %1163 = vmatmul.bf16.gmra.mxu0 %v1093
      %v1164 = vpop.f32.mrf.mxu0
      %v1165 = vadd.f32 0.0, %v1164
      %v1166 = vpop.f32.mrf.mxu0
      %v1167 = vadd.f32 0.0, %v1166
      %1168 = vmatmul.bf16.gmra.mxu0 %v1096
      %v1169 = vpop.f32.mrf.mxu0
      %v1170 = vadd.f32 0.0, %v1169
      %v1171 = vpop.f32.mrf.mxu0
      %v1172 = vadd.f32 0.0, %v1171
      %1173 = vmatmul.bf16.gmra.mxu0 %v1099
      %v1174 = vpop.f32.mrf.mxu0
      %v1175 = vadd.f32 0.0, %v1174
      %v1176 = vpop.f32.mrf.mxu0
      %v1177 = vadd.f32 0.0, %v1176
      %1178 = vmatmul.bf16.gmra.mxu0 %v1102
      %v1179 = vpop.f32.mrf.mxu0
      %v1180 = vadd.f32 0.0, %v1179
      %v1181 = vpop.f32.mrf.mxu0
      %v1182 = vadd.f32 0.0, %v1181
      %1183 = vmatmul.bf16.gmra.mxu0 %v1105
      %v1184 = vpop.f32.mrf.mxu0
      %v1185 = vadd.f32 0.0, %v1184
      %v1186 = vpop.f32.mrf.mxu0
      %v1187 = vadd.f32 0.0, %v1186
      %1188 = vmatmul.bf16.gmra.mxu0 %v1108
      %v1189 = vpop.f32.mrf.mxu0
      %v1190 = vadd.f32 0.0, %v1189
      %v1191 = vpop.f32.mrf.mxu0
      %v1192 = vadd.f32 0.0, %v1191
      %1193 = vmatmul.bf16.gmra.mxu0 %v1111
      %v1194 = vpop.f32.mrf.mxu0
      %v1195 = vadd.f32 0.0, %v1194
      %v1196 = vpop.f32.mrf.mxu0
      %v1197 = vadd.f32 0.0, %v1196
      %1198 = vmatmul.bf16.gmra.mxu0 %v1114
      %v1199 = vpop.f32.mrf.mxu0
      %v1200 = vadd.f32 0.0, %v1199
      %v1201 = vpop.f32.mrf.mxu0
      %v1202 = vadd.f32 0.0, %v1201
      %1203 = vmatmul.bf16.gmra.mxu0 %v1117
      %v1204 = vpop.f32.mrf.mxu0
      %v1205 = vadd.f32 0.0, %v1204
      %v1206 = vpop.f32.mrf.mxu0
      %v1207 = vadd.f32 0.0, %v1206
      %1208 = vmatmul.bf16.gmra.mxu0 %v1120
      %v1209 = vpop.f32.mrf.mxu0
      %v1210 = vadd.f32 0.0, %v1209
      %v1211 = vpop.f32.mrf.mxu0
      %v1212 = vadd.f32 0.0, %v1211
      %1213 = vdwg.mxu0
      %v1214 = vsel %vm462, %v312, 0
      %v1216 = vsel %vm462, %v313, 0
      %v1218 = vsel %vm462, %v314, 0
      %v1220 = vsel %vm462, %v315, 0
      %v1222 = vsel %vm462, %v316, 0
      %v1224 = vsel %vm462, %v317, 0
      %v1226 = vsel %vm462, %v318, 0
      %v1228 = vsel %vm462, %v319, 0
      %v1230 = vsel %vm462, %v320, 0
      %v1232 = vsel %vm462, %v321, 0
      %v1234 = vsel %vm462, %v322, 0
      %v1236 = vsel %vm462, %v323, 0
      %v1238 = vsel %vm462, %v324, 0
      %v1240 = vsel %vm462, %v325, 0
      %v1242 = vsel %vm462, %v326, 0
      %v1244 = vsel %vm462, %v327, 0
      %v1247 = vsel %vm511, %v206, 0
      %1249 = vmatpush.bf16.msra.mxu0 0
      %1250 = vmatpush.bf16.msra.mxu0 0
      %1251 = vmatpush.bf16.msra.mxu0 0
      %1252 = vmatpush.bf16.msra.mxu0 0
      %1253 = vmatpush.bf16.msra.mxu0 0
      %1254 = vmatpush.bf16.msra.mxu0 0
      %1255 = vmatpush.bf16.msra.mxu0 0
      %1256 = vmatpush.bf16.msra.mxu0 %v1247
      %1257 = vmatmul.bf16.gmra.mxu0 %v1214
      %v1258 = vpop.f32.mrf.mxu0
      %v1259 = vadd.f32 %v1135, %v1258
      %v1260 = vpop.f32.mrf.mxu0
      %v1261 = vadd.f32 %v1137, %v1260
      %1262 = vmatmul.bf16.gmra.mxu0 %v1216
      %v1263 = vpop.f32.mrf.mxu0
      %v1264 = vadd.f32 %v1140, %v1263
      %v1265 = vpop.f32.mrf.mxu0
      %v1266 = vadd.f32 %v1142, %v1265
      %1267 = vmatmul.bf16.gmra.mxu0 %v1218
      %v1268 = vpop.f32.mrf.mxu0
      %v1269 = vadd.f32 %v1145, %v1268
      %v1270 = vpop.f32.mrf.mxu0
      %v1271 = vadd.f32 %v1147, %v1270
      %1272 = vmatmul.bf16.gmra.mxu0 %v1220
      %v1273 = vpop.f32.mrf.mxu0
      %v1274 = vadd.f32 %v1150, %v1273
      %v1275 = vpop.f32.mrf.mxu0
      %v1276 = vadd.f32 %v1152, %v1275
      %1277 = vmatmul.bf16.gmra.mxu0 %v1222
      %v1278 = vpop.f32.mrf.mxu0
      %v1279 = vadd.f32 %v1155, %v1278
      %v1280 = vpop.f32.mrf.mxu0
      %v1281 = vadd.f32 %v1157, %v1280
      %1282 = vmatmul.bf16.gmra.mxu0 %v1224
      %v1283 = vpop.f32.mrf.mxu0
      %v1284 = vadd.f32 %v1160, %v1283
      %v1285 = vpop.f32.mrf.mxu0
      %v1286 = vadd.f32 %v1162, %v1285
      %1287 = vmatmul.bf16.gmra.mxu0 %v1226
      %v1288 = vpop.f32.mrf.mxu0
      %v1289 = vadd.f32 %v1165, %v1288
      %v1290 = vpop.f32.mrf.mxu0
      %v1291 = vadd.f32 %v1167, %v1290
      %1292 = vmatmul.bf16.gmra.mxu0 %v1228
      %v1293 = vpop.f32.mrf.mxu0
      %v1294 = vadd.f32 %v1170, %v1293
      %v1295 = vpop.f32.mrf.mxu0
      %v1296 = vadd.f32 %v1172, %v1295
      %1297 = vmatmul.bf16.gmra.mxu0 %v1230
      %v1298 = vpop.f32.mrf.mxu0
      %v1299 = vadd.f32 %v1175, %v1298
      %v1300 = vpop.f32.mrf.mxu0
      %v1301 = vadd.f32 %v1177, %v1300
      %1302 = vmatmul.bf16.gmra.mxu0 %v1232
      %v1303 = vpop.f32.mrf.mxu0
      %v1304 = vadd.f32 %v1180, %v1303
      %v1305 = vpop.f32.mrf.mxu0
      %v1306 = vadd.f32 %v1182, %v1305
      %1307 = vmatmul.bf16.gmra.mxu0 %v1234
      %v1308 = vpop.f32.mrf.mxu0
      %v1309 = vadd.f32 %v1185, %v1308
      %v1310 = vpop.f32.mrf.mxu0
      %v1311 = vadd.f32 %v1187, %v1310
      %1312 = vmatmul.bf16.gmra.mxu0 %v1236
      %v1313 = vpop.f32.mrf.mxu0
      %v1314 = vadd.f32 %v1190, %v1313
      %v1315 = vpop.f32.mrf.mxu0
      %v1316 = vadd.f32 %v1192, %v1315
      %1317 = vmatmul.bf16.gmra.mxu0 %v1238
      %v1318 = vpop.f32.mrf.mxu0
      %v1319 = vadd.f32 %v1195, %v1318
      %v1320 = vpop.f32.mrf.mxu0
      %v1321 = vadd.f32 %v1197, %v1320
      %1322 = vmatmul.bf16.gmra.mxu0 %v1240
      %v1323 = vpop.f32.mrf.mxu0
      %v1324 = vadd.f32 %v1200, %v1323
      %v1325 = vpop.f32.mrf.mxu0
      %v1326 = vadd.f32 %v1202, %v1325
      %1327 = vmatmul.bf16.gmra.mxu0 %v1242
      %v1328 = vpop.f32.mrf.mxu0
      %v1329 = vadd.f32 %v1205, %v1328
      %v1330 = vpop.f32.mrf.mxu0
      %v1331 = vadd.f32 %v1207, %v1330
      %1332 = vmatmul.bf16.gmra.mxu0 %v1244
      %v1333 = vpop.f32.mrf.mxu0
      %v1334 = vadd.f32 %v1210, %v1333
      %v1335 = vpop.f32.mrf.mxu0
      %v1336 = vadd.f32 %v1212, %v1335
      %1337 = vdwg.mxu0
      %v1338 = vld [vmem:[%s165 + $0x8] sm:$0xf]
      %v1339 = vld [vmem:[%s165 + $0xc] sm:$0xf]
      %v1340 = vld [vmem:[%s165 + $0x10] sm:$0xf]
      %v1341 = vld [vmem:[%s165 + $0x14] sm:$0xf]
      %v1342 = vld [vmem:[%s165 + $0x18] sm:$0xf]
      %v1343 = vld [vmem:[%s165 + $0x1c] sm:$0xf]
      %v1344 = vld [vmem:[%s165 + $0x20] sm:$0xf]
      %v1345 = vld [vmem:[%s165 + $0x24] sm:$0xf]
      %v1346 = vld [vmem:[%s165 + $0x28] sm:$0xf]
      %v1347 = vld [vmem:[%s165 + $0x2c] sm:$0xf]
      %v1348 = vld [vmem:[%s165 + $0x30] sm:$0xf]
      %v1349 = vld [vmem:[%s165 + $0x34] sm:$0xf]
      %v1350 = vld [vmem:[%s165 + $0x38] sm:$0xf]
      %v1351 = vld [vmem:[%s165 + $0x3c] sm:$0xf]
      %v1352 = vld [vmem:[%s165 + $0x40] sm:$0xf]
      %v1353 = vld [vmem:[%s165 + $0x44] sm:$0xf]
      %v1354 = vld [vmem:[%s165 + $0x48] sm:$0xf]
      %v1355 = vld [vmem:[%s165 + $0x4c] sm:$0xf]
      %v1356 = vld [vmem:[%s165 + $0x50] sm:$0xf]
      %v1357 = vld [vmem:[%s165 + $0x54] sm:$0xf]
      %v1358 = vld [vmem:[%s165 + $0x58] sm:$0xf]
      %v1359 = vld [vmem:[%s165 + $0x5c] sm:$0xf]
      %v1360 = vld [vmem:[%s165 + $0x60] sm:$0xf]
      %v1361 = vld [vmem:[%s165 + $0x64] sm:$0xf]
      %v1362 = vld [vmem:[%s165 + $0x68] sm:$0xf]
      %v1363 = vld [vmem:[%s165 + $0x6c] sm:$0xf]
      %v1364 = vld [vmem:[%s165 + $0x70] sm:$0xf]
      %v1365 = vld [vmem:[%s165 + $0x74] sm:$0xf]
      %v1366 = vld [vmem:[%s165 + $0x78] sm:$0xf]
      %v1367 = vld [vmem:[%s165 + $0x7c] sm:$0xf]
      %v1368 = vld [vmem:[%s165 + $0x80] sm:$0xf]
      %v1369 = vld [vmem:[%s165 + $0x84] sm:$0xf]
      %v1370 = vld [vmem:[%s165 + $0x88] sm:$0x1]
      %s1371 = scalar_lea.vmem %s1, 16
      %v1372 = vld [vmem:[%s1371] sm:$0xf]
      %v1406 = vunpack.c.l.b16 %v1338
      %v1407 = vunpack.c.l.b16 %v1339
      %v1408 = vunpack.c.l.b16 %v1340
      %v1409 = vunpack.c.l.b16 %v1341
      %v1410 = vunpack.c.l.b16 %v1342
      %v1411 = vunpack.c.l.b16 %v1343
      %v1412 = vunpack.c.l.b16 %v1344
      %v1413 = vunpack.c.l.b16 %v1345
      %v1414 = vunpack.c.l.b16 %v1346
      %v1415 = vunpack.c.l.b16 %v1347
      %v1416 = vunpack.c.l.b16 %v1348
      %v1417 = vunpack.c.l.b16 %v1349
      %v1418 = vunpack.c.l.b16 %v1350
      %v1419 = vunpack.c.l.b16 %v1351
      %v1420 = vunpack.c.l.b16 %v1352
      %v1421 = vunpack.c.l.b16 %v1353
      %v1422 = vunpack.c.l.b16 %v1354
      %v1423 = vunpack.c.l.b16 %v1355
      %v1424 = vunpack.c.l.b16 %v1356
      %v1425 = vunpack.c.l.b16 %v1357
      %v1426 = vunpack.c.l.b16 %v1358
      %v1427 = vunpack.c.l.b16 %v1359
      %v1428 = vunpack.c.l.b16 %v1360
      %v1429 = vunpack.c.l.b16 %v1361
      %v1430 = vunpack.c.l.b16 %v1362
      %v1431 = vunpack.c.l.b16 %v1363
      %v1432 = vunpack.c.l.b16 %v1364
      %v1433 = vunpack.c.l.b16 %v1365
      %v1434 = vunpack.c.l.b16 %v1366
      %v1435 = vunpack.c.l.b16 %v1367
      %v1436 = vunpack.c.l.b16 %v1368
      %v1437 = vunpack.c.l.b16 %v1369
      %v1438 = vunpack.c.l.b16 %v1370
      %v1439 = vpack.c.b16 %v1407, %v1406
      %v1440 = vpack.c.b16 %v1409, %v1408
      %v1441 = vpack.c.b16 %v1411, %v1410
      %v1442 = vpack.c.b16 %v1413, %v1412
      %v1443 = vpack.c.b16 %v1415, %v1414
      %v1444 = vpack.c.b16 %v1417, %v1416
      %v1445 = vpack.c.b16 %v1419, %v1418
      %v1446 = vpack.c.b16 %v1421, %v1420
      %v1447 = vpack.c.b16 %v1423, %v1422
      %v1448 = vpack.c.b16 %v1425, %v1424
      %v1449 = vpack.c.b16 %v1427, %v1426
      %v1450 = vpack.c.b16 %v1429, %v1428
      %v1451 = vpack.c.b16 %v1431, %v1430
      %v1452 = vpack.c.b16 %v1433, %v1432
      %v1453 = vpack.c.b16 %v1435, %v1434
      %v1454 = vpack.c.b16 %v1437, %v1436
      %v1455 = vpack.c.b16 %v1438, %v1438
      %v1457 = vshrl.u32 %v1439, 16
      %v1459 = vshll.u32 %v1439, 16
      %v1461 = vrot.slane %v1459, 1
      %v1462 = vor.u32 %v1457, %v1461
      %v1464 = vshll.u32 %v1440, 16
      %v1466 = vrot.slane %v1464, 1
      %v1467 = vsel %vm329, %v1462, %v1466
      %v1468 = vshrl.u32 %v1440, 16
      %v1470 = vor.u32 %v1468, %v1466
      %v1472 = vshll.u32 %v1441, 16
      %v1474 = vrot.slane %v1472, 1
      %v1475 = vsel %vm329, %v1470, %v1474
      %v1476 = vshrl.u32 %v1441, 16
      %v1478 = vor.u32 %v1476, %v1474
      %v1480 = vshll.u32 %v1442, 16
      %v1482 = vrot.slane %v1480, 1
      %v1483 = vsel %vm329, %v1478, %v1482
      %v1484 = vshrl.u32 %v1442, 16
      %v1486 = vor.u32 %v1484, %v1482
      %v1488 = vshll.u32 %v1443, 16
      %v1490 = vrot.slane %v1488, 1
      %v1491 = vsel %vm329, %v1486, %v1490
      %v1492 = vshrl.u32 %v1443, 16
      %v1494 = vor.u32 %v1492, %v1490
      %v1496 = vshll.u32 %v1444, 16
      %v1498 = vrot.slane %v1496, 1
      %v1499 = vsel %vm329, %v1494, %v1498
      %v1500 = vshrl.u32 %v1444, 16
      %v1502 = vor.u32 %v1500, %v1498
      %v1504 = vshll.u32 %v1445, 16
      %v1506 = vrot.slane %v1504, 1
      %v1507 = vsel %vm329, %v1502, %v1506
      %v1508 = vshrl.u32 %v1445, 16
      %v1510 = vor.u32 %v1508, %v1506
      %v1512 = vshll.u32 %v1446, 16
      %v1514 = vrot.slane %v1512, 1
      %v1515 = vsel %vm329, %v1510, %v1514
      %v1516 = vshrl.u32 %v1446, 16
      %v1518 = vor.u32 %v1516, %v1514
      %v1520 = vshll.u32 %v1447, 16
      %v1522 = vrot.slane %v1520, 1
      %v1523 = vsel %vm329, %v1518, %v1522
      %v1524 = vshrl.u32 %v1447, 16
      %v1526 = vor.u32 %v1524, %v1522
      %v1528 = vshll.u32 %v1448, 16
      %v1530 = vrot.slane %v1528, 1
      %v1531 = vsel %vm329, %v1526, %v1530
      %v1532 = vshrl.u32 %v1448, 16
      %v1534 = vor.u32 %v1532, %v1530
      %v1536 = vshll.u32 %v1449, 16
      %v1538 = vrot.slane %v1536, 1
      %v1539 = vsel %vm329, %v1534, %v1538
      %v1540 = vshrl.u32 %v1449, 16
      %v1542 = vor.u32 %v1540, %v1538
      %v1544 = vshll.u32 %v1450, 16
      %v1546 = vrot.slane %v1544, 1
      %v1547 = vsel %vm329, %v1542, %v1546
      %v1548 = vshrl.u32 %v1450, 16
      %v1550 = vor.u32 %v1548, %v1546
      %v1552 = vshll.u32 %v1451, 16
      %v1554 = vrot.slane %v1552, 1
      %v1555 = vsel %vm329, %v1550, %v1554
      %v1556 = vshrl.u32 %v1451, 16
      %v1558 = vor.u32 %v1556, %v1554
      %v1560 = vshll.u32 %v1452, 16
      %v1562 = vrot.slane %v1560, 1
      %v1563 = vsel %vm329, %v1558, %v1562
      %v1564 = vshrl.u32 %v1452, 16
      %v1566 = vor.u32 %v1564, %v1562
      %v1568 = vshll.u32 %v1453, 16
      %v1570 = vrot.slane %v1568, 1
      %v1571 = vsel %vm329, %v1566, %v1570
      %v1572 = vshrl.u32 %v1453, 16
      %v1574 = vor.u32 %v1572, %v1570
      %v1576 = vshll.u32 %v1454, 16
      %v1578 = vrot.slane %v1576, 1
      %v1579 = vsel %vm329, %v1574, %v1578
      %v1580 = vshrl.u32 %v1454, 16
      %v1582 = vor.u32 %v1580, %v1578
      %v1584 = vshll.u32 %v1455, 16
      %v1586 = vrot.slane %v1584, 1
      %v1587 = vsel %vm329, %v1582, %v1586
      %v1589 = vsel %vm462, %v1467, 0
      %v1592 = vsel %vm462, %v1475, 0
      %v1595 = vsel %vm462, %v1483, 0
      %v1598 = vsel %vm462, %v1491, 0
      %v1601 = vsel %vm462, %v1499, 0
      %v1604 = vsel %vm462, %v1507, 0
      %v1607 = vsel %vm462, %v1515, 0
      %v1610 = vsel %vm462, %v1523, 0
      %v1613 = vsel %vm462, %v1531, 0
      %v1616 = vsel %vm462, %v1539, 0
      %v1619 = vsel %vm462, %v1547, 0
      %v1622 = vsel %vm462, %v1555, 0
      %v1625 = vsel %vm462, %v1563, 0
      %v1628 = vsel %vm462, %v1571, 0
      %v1631 = vsel %vm462, %v1579, 0
      %v1634 = vsel %vm462, %v1587, 0
      %v1637 = vsel %vm511, %v1372, 0
      %1639 = vmatpush.bf16.msra.mxu0 0
      %1640 = vmatpush.bf16.msra.mxu0 0
      %1641 = vmatpush.bf16.msra.mxu0 0
      %1642 = vmatpush.bf16.msra.mxu0 0
      %1643 = vmatpush.bf16.msra.mxu0 0
      %1644 = vmatpush.bf16.msra.mxu0 0
      %1645 = vmatpush.bf16.msra.mxu0 0
      %1646 = vmatpush.bf16.msra.mxu0 %v1637
      %1647 = vmatmul.bf16.gmra.mxu0 %v1589
      %v1648 = vpop.f32.mrf.mxu0
      %v1649 = vadd.f32 0.0, %v1648
      %v1650 = vpop.f32.mrf.mxu0
      %v1651 = vadd.f32 0.0, %v1650
      %1652 = vmatmul.bf16.gmra.mxu0 %v1592
      %v1653 = vpop.f32.mrf.mxu0
      %v1654 = vadd.f32 0.0, %v1653
      %v1655 = vpop.f32.mrf.mxu0
      %v1656 = vadd.f32 0.0, %v1655
      %1657 = vmatmul.bf16.gmra.mxu0 %v1595
      %v1658 = vpop.f32.mrf.mxu0
      %v1659 = vadd.f32 0.0, %v1658
      %v1660 = vpop.f32.mrf.mxu0
      %v1661 = vadd.f32 0.0, %v1660
      %1662 = vmatmul.bf16.gmra.mxu0 %v1598
      %v1663 = vpop.f32.mrf.mxu0
      %v1664 = vadd.f32 0.0, %v1663
      %v1665 = vpop.f32.mrf.mxu0
      %v1666 = vadd.f32 0.0, %v1665
      %1667 = vmatmul.bf16.gmra.mxu0 %v1601
      %v1668 = vpop.f32.mrf.mxu0
      %v1669 = vadd.f32 0.0, %v1668
      %v1670 = vpop.f32.mrf.mxu0
      %v1671 = vadd.f32 0.0, %v1670
      %1672 = vmatmul.bf16.gmra.mxu0 %v1604
      %v1673 = vpop.f32.mrf.mxu0
      %v1674 = vadd.f32 0.0, %v1673
      %v1675 = vpop.f32.mrf.mxu0
      %v1676 = vadd.f32 0.0, %v1675
      %1677 = vmatmul.bf16.gmra.mxu0 %v1607
      %v1678 = vpop.f32.mrf.mxu0
      %v1679 = vadd.f32 0.0, %v1678
      %v1680 = vpop.f32.mrf.mxu0
      %v1681 = vadd.f32 0.0, %v1680
      %1682 = vmatmul.bf16.gmra.mxu0 %v1610
      %v1683 = vpop.f32.mrf.mxu0
      %v1684 = vadd.f32 0.0, %v1683
      %v1685 = vpop.f32.mrf.mxu0
      %v1686 = vadd.f32 0.0, %v1685
      %1687 = vmatmul.bf16.gmra.mxu0 %v1613
      %v1688 = vpop.f32.mrf.mxu0
      %v1689 = vadd.f32 0.0, %v1688
      %v1690 = vpop.f32.mrf.mxu0
      %v1691 = vadd.f32 0.0, %v1690
      %1692 = vmatmul.bf16.gmra.mxu0 %v1616
      %v1693 = vpop.f32.mrf.mxu0
      %v1694 = vadd.f32 0.0, %v1693
      %v1695 = vpop.f32.mrf.mxu0
      %v1696 = vadd.f32 0.0, %v1695
      %1697 = vmatmul.bf16.gmra.mxu0 %v1619
      %v1698 = vpop.f32.mrf.mxu0
      %v1699 = vadd.f32 0.0, %v1698
      %v1700 = vpop.f32.mrf.mxu0
      %v1701 = vadd.f32 0.0, %v1700
      %1702 = vmatmul.bf16.gmra.mxu0 %v1622
      %v1703 = vpop.f32.mrf.mxu0
      %v1704 = vadd.f32 0.0, %v1703
      %v1705 = vpop.f32.mrf.mxu0
      %v1706 = vadd.f32 0.0, %v1705
      %1707 = vmatmul.bf16.gmra.mxu0 %v1625
      %v1708 = vpop.f32.mrf.mxu0
      %v1709 = vadd.f32 0.0, %v1708
      %v1710 = vpop.f32.mrf.mxu0
      %v1711 = vadd.f32 0.0, %v1710
      %1712 = vmatmul.bf16.gmra.mxu0 %v1628
      %v1713 = vpop.f32.mrf.mxu0
      %v1714 = vadd.f32 0.0, %v1713
      %v1715 = vpop.f32.mrf.mxu0
      %v1716 = vadd.f32 0.0, %v1715
      %1717 = vmatmul.bf16.gmra.mxu0 %v1631
      %v1718 = vpop.f32.mrf.mxu0
      %v1719 = vadd.f32 0.0, %v1718
      %v1720 = vpop.f32.mrf.mxu0
      %v1721 = vadd.f32 0.0, %v1720
      %1722 = vmatmul.bf16.gmra.mxu0 %v1634
      %v1723 = vpop.f32.mrf.mxu0
      %v1724 = vadd.f32 0.0, %v1723
      %v1725 = vpop.f32.mrf.mxu0
      %v1726 = vadd.f32 0.0, %v1725
      %1727 = vdwg.mxu0
      %v1728 = vadd.f32 %v880, %v1649
      %v1729 = vadd.f32 %v882, %v1651
      %v1730 = vadd.f32 %v885, %v1654
      %v1731 = vadd.f32 %v887, %v1656
      %v1732 = vadd.f32 %v890, %v1659
      %v1733 = vadd.f32 %v892, %v1661
      %v1734 = vadd.f32 %v895, %v1664
      %v1735 = vadd.f32 %v897, %v1666
      %v1736 = vadd.f32 %v900, %v1669
      %v1737 = vadd.f32 %v902, %v1671
      %v1738 = vadd.f32 %v905, %v1674
      %v1739 = vadd.f32 %v907, %v1676
      %v1740 = vadd.f32 %v910, %v1679
      %v1741 = vadd.f32 %v912, %v1681
      %v1742 = vadd.f32 %v915, %v1684
      %v1743 = vadd.f32 %v917, %v1686
      %v1744 = vadd.f32 %v920, %v1689
      %v1745 = vadd.f32 %v922, %v1691
      %v1746 = vadd.f32 %v925, %v1694
      %v1747 = vadd.f32 %v927, %v1696
      %v1748 = vadd.f32 %v930, %v1699
      %v1749 = vadd.f32 %v932, %v1701
      %v1750 = vadd.f32 %v935, %v1704
      %v1751 = vadd.f32 %v937, %v1706
      %v1752 = vadd.f32 %v940, %v1709
      %v1753 = vadd.f32 %v942, %v1711
      %v1754 = vadd.f32 %v945, %v1714
      %v1755 = vadd.f32 %v947, %v1716
      %v1756 = vadd.f32 %v950, %v1719
      %v1757 = vadd.f32 %v952, %v1721
      %v1758 = vadd.f32 %v955, %v1724
      %v1759 = vadd.f32 %v957, %v1726
      %v1760 = vld [vmem:[%s959 + $0x8] sm:$0xf]
      %v1761 = vld [vmem:[%s959 + $0xc] sm:$0xf]
      %v1762 = vld [vmem:[%s959 + $0x10] sm:$0xf]
      %v1763 = vld [vmem:[%s959 + $0x14] sm:$0xf]
      %v1764 = vld [vmem:[%s959 + $0x18] sm:$0xf]
      %v1765 = vld [vmem:[%s959 + $0x1c] sm:$0xf]
      %v1766 = vld [vmem:[%s959 + $0x20] sm:$0xf]
      %v1767 = vld [vmem:[%s959 + $0x24] sm:$0xf]
      %v1768 = vld [vmem:[%s959 + $0x28] sm:$0xf]
      %v1769 = vld [vmem:[%s959 + $0x2c] sm:$0xf]
      %v1770 = vld [vmem:[%s959 + $0x30] sm:$0xf]
      %v1771 = vld [vmem:[%s959 + $0x34] sm:$0xf]
      %v1772 = vld [vmem:[%s959 + $0x38] sm:$0xf]
      %v1773 = vld [vmem:[%s959 + $0x3c] sm:$0xf]
      %v1774 = vld [vmem:[%s959 + $0x40] sm:$0xf]
      %v1775 = vld [vmem:[%s959 + $0x44] sm:$0xf]
      %v1776 = vld [vmem:[%s959 + $0x48] sm:$0xf]
      %v1777 = vld [vmem:[%s959 + $0x4c] sm:$0xf]
      %v1778 = vld [vmem:[%s959 + $0x50] sm:$0xf]
      %v1779 = vld [vmem:[%s959 + $0x54] sm:$0xf]
      %v1780 = vld [vmem:[%s959 + $0x58] sm:$0xf]
      %v1781 = vld [vmem:[%s959 + $0x5c] sm:$0xf]
      %v1782 = vld [vmem:[%s959 + $0x60] sm:$0xf]
      %v1783 = vld [vmem:[%s959 + $0x64] sm:$0xf]
      %v1784 = vld [vmem:[%s959 + $0x68] sm:$0xf]
      %v1785 = vld [vmem:[%s959 + $0x6c] sm:$0xf]
      %v1786 = vld [vmem:[%s959 + $0x70] sm:$0xf]
      %v1787 = vld [vmem:[%s959 + $0x74] sm:$0xf]
      %v1788 = vld [vmem:[%s959 + $0x78] sm:$0xf]
      %v1789 = vld [vmem:[%s959 + $0x7c] sm:$0xf]
      %v1790 = vld [vmem:[%s959 + $0x80] sm:$0xf]
      %v1791 = vld [vmem:[%s959 + $0x84] sm:$0xf]
      %v1792 = vld [vmem:[%s959 + $0x88] sm:$0x1]
      %s1793 = scalar_lea.vmem %s1, 20
      %v1794 = vld [vmem:[%s1793] sm:$0xf]
      %v1828 = vunpack.c.l.b16 %v1760
      %v1829 = vunpack.c.l.b16 %v1761
      %v1830 = vunpack.c.l.b16 %v1762
      %v1831 = vunpack.c.l.b16 %v1763
      %v1832 = vunpack.c.l.b16 %v1764
      %v1833 = vunpack.c.l.b16 %v1765
      %v1834 = vunpack.c.l.b16 %v1766
      %v1835 = vunpack.c.l.b16 %v1767
      %v1836 = vunpack.c.l.b16 %v1768
      %v1837 = vunpack.c.l.b16 %v1769
      %v1838 = vunpack.c.l.b16 %v1770
      %v1839 = vunpack.c.l.b16 %v1771
      %v1840 = vunpack.c.l.b16 %v1772
      %v1841 = vunpack.c.l.b16 %v1773
      %v1842 = vunpack.c.l.b16 %v1774
      %v1843 = vunpack.c.l.b16 %v1775
      %v1844 = vunpack.c.l.b16 %v1776
      %v1845 = vunpack.c.l.b16 %v1777
      %v1846 = vunpack.c.l.b16 %v1778
      %v1847 = vunpack.c.l.b16 %v1779
      %v1848 = vunpack.c.l.b16 %v1780
      %v1849 = vunpack.c.l.b16 %v1781
      %v1850 = vunpack.c.l.b16 %v1782
      %v1851 = vunpack.c.l.b16 %v1783
      %v1852 = vunpack.c.l.b16 %v1784
      %v1853 = vunpack.c.l.b16 %v1785
      %v1854 = vunpack.c.l.b16 %v1786
      %v1855 = vunpack.c.l.b16 %v1787
      %v1856 = vunpack.c.l.b16 %v1788
      %v1857 = vunpack.c.l.b16 %v1789
      %v1858 = vunpack.c.l.b16 %v1790
      %v1859 = vunpack.c.l.b16 %v1791
      %v1860 = vunpack.c.l.b16 %v1792
      %v1861 = vpack.c.b16 %v1829, %v1828
      %v1862 = vpack.c.b16 %v1831, %v1830
      %v1863 = vpack.c.b16 %v1833, %v1832
      %v1864 = vpack.c.b16 %v1835, %v1834
      %v1865 = vpack.c.b16 %v1837, %v1836
      %v1866 = vpack.c.b16 %v1839, %v1838
      %v1867 = vpack.c.b16 %v1841, %v1840
      %v1868 = vpack.c.b16 %v1843, %v1842
      %v1869 = vpack.c.b16 %v1845, %v1844
      %v1870 = vpack.c.b16 %v1847, %v1846
      %v1871 = vpack.c.b16 %v1849, %v1848
      %v1872 = vpack.c.b16 %v1851, %v1850
      %v1873 = vpack.c.b16 %v1853, %v1852
      %v1874 = vpack.c.b16 %v1855, %v1854
      %v1875 = vpack.c.b16 %v1857, %v1856
      %v1876 = vpack.c.b16 %v1859, %v1858
      %v1877 = vpack.c.b16 %v1860, %v1860
      %v1879 = vshrl.u32 %v1861, 16
      %v1881 = vshll.u32 %v1861, 16
      %v1883 = vrot.slane %v1881, 1
      %v1884 = vor.u32 %v1879, %v1883
      %v1886 = vshll.u32 %v1862, 16
      %v1888 = vrot.slane %v1886, 1
      %v1889 = vsel %vm329, %v1884, %v1888
      %v1890 = vshrl.u32 %v1862, 16
      %v1892 = vor.u32 %v1890, %v1888
      %v1894 = vshll.u32 %v1863, 16
      %v1896 = vrot.slane %v1894, 1
      %v1897 = vsel %vm329, %v1892, %v1896
      %v1898 = vshrl.u32 %v1863, 16
      %v1900 = vor.u32 %v1898, %v1896
      %v1902 = vshll.u32 %v1864, 16
      %v1904 = vrot.slane %v1902, 1
      %v1905 = vsel %vm329, %v1900, %v1904
      %v1906 = vshrl.u32 %v1864, 16
      %v1908 = vor.u32 %v1906, %v1904
      %v1910 = vshll.u32 %v1865, 16
      %v1912 = vrot.slane %v1910, 1
      %v1913 = vsel %vm329, %v1908, %v1912
      %v1914 = vshrl.u32 %v1865, 16
      %v1916 = vor.u32 %v1914, %v1912
      %v1918 = vshll.u32 %v1866, 16
      %v1920 = vrot.slane %v1918, 1
      %v1921 = vsel %vm329, %v1916, %v1920
      %v1922 = vshrl.u32 %v1866, 16
      %v1924 = vor.u32 %v1922, %v1920
      %v1926 = vshll.u32 %v1867, 16
      %v1928 = vrot.slane %v1926, 1
      %v1929 = vsel %vm329, %v1924, %v1928
      %v1930 = vshrl.u32 %v1867, 16
      %v1932 = vor.u32 %v1930, %v1928
      %v1934 = vshll.u32 %v1868, 16
      %v1936 = vrot.slane %v1934, 1
      %v1937 = vsel %vm329, %v1932, %v1936
      %v1938 = vshrl.u32 %v1868, 16
      %v1940 = vor.u32 %v1938, %v1936
      %v1942 = vshll.u32 %v1869, 16
      %v1944 = vrot.slane %v1942, 1
      %v1945 = vsel %vm329, %v1940, %v1944
      %v1946 = vshrl.u32 %v1869, 16
      %v1948 = vor.u32 %v1946, %v1944
      %v1950 = vshll.u32 %v1870, 16
      %v1952 = vrot.slane %v1950, 1
      %v1953 = vsel %vm329, %v1948, %v1952
      %v1954 = vshrl.u32 %v1870, 16
      %v1956 = vor.u32 %v1954, %v1952
      %v1958 = vshll.u32 %v1871, 16
      %v1960 = vrot.slane %v1958, 1
      %v1961 = vsel %vm329, %v1956, %v1960
      %v1962 = vshrl.u32 %v1871, 16
      %v1964 = vor.u32 %v1962, %v1960
      %v1966 = vshll.u32 %v1872, 16
      %v1968 = vrot.slane %v1966, 1
      %v1969 = vsel %vm329, %v1964, %v1968
      %v1970 = vshrl.u32 %v1872, 16
      %v1972 = vor.u32 %v1970, %v1968
      %v1974 = vshll.u32 %v1873, 16
      %v1976 = vrot.slane %v1974, 1
      %v1977 = vsel %vm329, %v1972, %v1976
      %v1978 = vshrl.u32 %v1873, 16
      %v1980 = vor.u32 %v1978, %v1976
      %v1982 = vshll.u32 %v1874, 16
      %v1984 = vrot.slane %v1982, 1
      %v1985 = vsel %vm329, %v1980, %v1984
      %v1986 = vshrl.u32 %v1874, 16
      %v1988 = vor.u32 %v1986, %v1984
      %v1990 = vshll.u32 %v1875, 16
      %v1992 = vrot.slane %v1990, 1
      %v1993 = vsel %vm329, %v1988, %v1992
      %v1994 = vshrl.u32 %v1875, 16
      %v1996 = vor.u32 %v1994, %v1992
      %v1998 = vshll.u32 %v1876, 16
      %v2000 = vrot.slane %v1998, 1
      %v2001 = vsel %vm329, %v1996, %v2000
      %v2002 = vshrl.u32 %v1876, 16
      %v2004 = vor.u32 %v2002, %v2000
      %v2006 = vshll.u32 %v1877, 16
      %v2008 = vrot.slane %v2006, 1
      %v2009 = vsel %vm329, %v2004, %v2008
      %v2011 = vsel %vm462, %v1889, 0
      %v2014 = vsel %vm462, %v1897, 0
      %v2017 = vsel %vm462, %v1905, 0
      %v2020 = vsel %vm462, %v1913, 0
      %v2023 = vsel %vm462, %v1921, 0
      %v2026 = vsel %vm462, %v1929, 0
      %v2029 = vsel %vm462, %v1937, 0
      %v2032 = vsel %vm462, %v1945, 0
      %v2035 = vsel %vm462, %v1953, 0
      %v2038 = vsel %vm462, %v1961, 0
      %v2041 = vsel %vm462, %v1969, 0
      %v2044 = vsel %vm462, %v1977, 0
      %v2047 = vsel %vm462, %v1985, 0
      %v2050 = vsel %vm462, %v1993, 0
      %v2053 = vsel %vm462, %v2001, 0
      %v2056 = vsel %vm462, %v2009, 0
      %v2059 = vsel %vm511, %v1794, 0
      %2061 = vmatpush.bf16.msra.mxu0 0
      %2062 = vmatpush.bf16.msra.mxu0 0
      %2063 = vmatpush.bf16.msra.mxu0 0
      %2064 = vmatpush.bf16.msra.mxu0 0
      %2065 = vmatpush.bf16.msra.mxu0 0
      %2066 = vmatpush.bf16.msra.mxu0 0
      %2067 = vmatpush.bf16.msra.mxu0 0
      %2068 = vmatpush.bf16.msra.mxu0 %v2059
      %2069 = vmatmul.bf16.gmra.mxu0 %v2011
      %v2070 = vpop.f32.mrf.mxu0
      %v2071 = vadd.f32 0.0, %v2070
      %v2072 = vpop.f32.mrf.mxu0
      %v2073 = vadd.f32 0.0, %v2072
      %2074 = vmatmul.bf16.gmra.mxu0 %v2014
      %v2075 = vpop.f32.mrf.mxu0
      %v2076 = vadd.f32 0.0, %v2075
      %v2077 = vpop.f32.mrf.mxu0
      %v2078 = vadd.f32 0.0, %v2077
      %2079 = vmatmul.bf16.gmra.mxu0 %v2017
      %v2080 = vpop.f32.mrf.mxu0
      %v2081 = vadd.f32 0.0, %v2080
      %v2082 = vpop.f32.mrf.mxu0
      %v2083 = vadd.f32 0.0, %v2082
      %2084 = vmatmul.bf16.gmra.mxu0 %v2020
      %v2085 = vpop.f32.mrf.mxu0
      %v2086 = vadd.f32 0.0, %v2085
      %v2087 = vpop.f32.mrf.mxu0
      %v2088 = vadd.f32 0.0, %v2087
      %2089 = vmatmul.bf16.gmra.mxu0 %v2023
      %v2090 = vpop.f32.mrf.mxu0
      %v2091 = vadd.f32 0.0, %v2090
      %v2092 = vpop.f32.mrf.mxu0
      %v2093 = vadd.f32 0.0, %v2092
      %2094 = vmatmul.bf16.gmra.mxu0 %v2026
      %v2095 = vpop.f32.mrf.mxu0
      %v2096 = vadd.f32 0.0, %v2095
      %v2097 = vpop.f32.mrf.mxu0
      %v2098 = vadd.f32 0.0, %v2097
      %2099 = vmatmul.bf16.gmra.mxu0 %v2029
      %v2100 = vpop.f32.mrf.mxu0
      %v2101 = vadd.f32 0.0, %v2100
      %v2102 = vpop.f32.mrf.mxu0
      %v2103 = vadd.f32 0.0, %v2102
      %2104 = vmatmul.bf16.gmra.mxu0 %v2032
      %v2105 = vpop.f32.mrf.mxu0
      %v2106 = vadd.f32 0.0, %v2105
      %v2107 = vpop.f32.mrf.mxu0
      %v2108 = vadd.f32 0.0, %v2107
      %2109 = vmatmul.bf16.gmra.mxu0 %v2035
      %v2110 = vpop.f32.mrf.mxu0
      %v2111 = vadd.f32 0.0, %v2110
      %v2112 = vpop.f32.mrf.mxu0
      %v2113 = vadd.f32 0.0, %v2112
      %2114 = vmatmul.bf16.gmra.mxu0 %v2038
      %v2115 = vpop.f32.mrf.mxu0
      %v2116 = vadd.f32 0.0, %v2115
      %v2117 = vpop.f32.mrf.mxu0
      %v2118 = vadd.f32 0.0, %v2117
      %2119 = vmatmul.bf16.gmra.mxu0 %v2041
      %v2120 = vpop.f32.mrf.mxu0
      %v2121 = vadd.f32 0.0, %v2120
      %v2122 = vpop.f32.mrf.mxu0
      %v2123 = vadd.f32 0.0, %v2122
      %2124 = vmatmul.bf16.gmra.mxu0 %v2044
      %v2125 = vpop.f32.mrf.mxu0
      %v2126 = vadd.f32 0.0, %v2125
      %v2127 = vpop.f32.mrf.mxu0
      %v2128 = vadd.f32 0.0, %v2127
      %2129 = vmatmul.bf16.gmra.mxu0 %v2047
      %v2130 = vpop.f32.mrf.mxu0
      %v2131 = vadd.f32 0.0, %v2130
      %v2132 = vpop.f32.mrf.mxu0
      %v2133 = vadd.f32 0.0, %v2132
      %2134 = vmatmul.bf16.gmra.mxu0 %v2050
      %v2135 = vpop.f32.mrf.mxu0
      %v2136 = vadd.f32 0.0, %v2135
      %v2137 = vpop.f32.mrf.mxu0
      %v2138 = vadd.f32 0.0, %v2137
      %2139 = vmatmul.bf16.gmra.mxu0 %v2053
      %v2140 = vpop.f32.mrf.mxu0
      %v2141 = vadd.f32 0.0, %v2140
      %v2142 = vpop.f32.mrf.mxu0
      %v2143 = vadd.f32 0.0, %v2142
      %2144 = vmatmul.bf16.gmra.mxu0 %v2056
      %v2145 = vpop.f32.mrf.mxu0
      %v2146 = vadd.f32 0.0, %v2145
      %v2147 = vpop.f32.mrf.mxu0
      %v2148 = vadd.f32 0.0, %v2147
      %2149 = vdwg.mxu0
      %v2150 = vadd.f32 %v1728, %v2071
      %v2151 = vadd.f32 %v1729, %v2073
      %v2152 = vadd.f32 %v1730, %v2076
      %v2153 = vadd.f32 %v1731, %v2078
      %v2154 = vadd.f32 %v1732, %v2081
      %v2155 = vadd.f32 %v1733, %v2083
      %v2156 = vadd.f32 %v1734, %v2086
      %v2157 = vadd.f32 %v1735, %v2088
      %v2158 = vadd.f32 %v1736, %v2091
      %v2159 = vadd.f32 %v1737, %v2093
      %v2160 = vadd.f32 %v1738, %v2096
      %v2161 = vadd.f32 %v1739, %v2098
      %v2162 = vadd.f32 %v1740, %v2101
      %v2163 = vadd.f32 %v1741, %v2103
      %v2164 = vadd.f32 %v1742, %v2106
      %v2165 = vadd.f32 %v1743, %v2108
      %v2166 = vadd.f32 %v1744, %v2111
      %v2167 = vadd.f32 %v1745, %v2113
      %v2168 = vadd.f32 %v1746, %v2116
      %v2169 = vadd.f32 %v1747, %v2118
      %v2170 = vadd.f32 %v1748, %v2121
      %v2171 = vadd.f32 %v1749, %v2123
      %v2172 = vadd.f32 %v1750, %v2126
      %v2173 = vadd.f32 %v1751, %v2128
      %v2174 = vadd.f32 %v1752, %v2131
      %v2175 = vadd.f32 %v1753, %v2133
      %v2176 = vadd.f32 %v1754, %v2136
      %v2177 = vadd.f32 %v1755, %v2138
      %v2178 = vadd.f32 %v1756, %v2141
      %v2179 = vadd.f32 %v1757, %v2143
      %v2180 = vadd.f32 %v1758, %v2146
      %v2181 = vadd.f32 %v1759, %v2148
      %v2182 = vld [vmem:[%s173 + $0x8] sm:$0xf]
      %v2183 = vld [vmem:[%s173 + $0xc] sm:$0xf]
      %v2184 = vld [vmem:[%s173 + $0x10] sm:$0xf]
      %v2185 = vld [vmem:[%s173 + $0x14] sm:$0xf]
      %v2186 = vld [vmem:[%s173 + $0x18] sm:$0xf]
      %v2187 = vld [vmem:[%s173 + $0x1c] sm:$0xf]
      %v2188 = vld [vmem:[%s173 + $0x20] sm:$0xf]
      %v2189 = vld [vmem:[%s173 + $0x24] sm:$0xf]
      %v2190 = vld [vmem:[%s173 + $0x28] sm:$0xf]
      %v2191 = vld [vmem:[%s173 + $0x2c] sm:$0xf]
      %v2192 = vld [vmem:[%s173 + $0x30] sm:$0xf]
      %v2193 = vld [vmem:[%s173 + $0x34] sm:$0xf]
      %v2194 = vld [vmem:[%s173 + $0x38] sm:$0xf]
      %v2195 = vld [vmem:[%s173 + $0x3c] sm:$0xf]
      %v2196 = vld [vmem:[%s173 + $0x40] sm:$0xf]
      %v2197 = vld [vmem:[%s173 + $0x44] sm:$0xf]
      %v2198 = vld [vmem:[%s173 + $0x48] sm:$0xf]
      %v2199 = vld [vmem:[%s173 + $0x4c] sm:$0xf]
      %v2200 = vld [vmem:[%s173 + $0x50] sm:$0xf]
      %v2201 = vld [vmem:[%s173 + $0x54] sm:$0xf]
      %v2202 = vld [vmem:[%s173 + $0x58] sm:$0xf]
      %v2203 = vld [vmem:[%s173 + $0x5c] sm:$0xf]
      %v2204 = vld [vmem:[%s173 + $0x60] sm:$0xf]
      %v2205 = vld [vmem:[%s173 + $0x64] sm:$0xf]
      %v2206 = vld [vmem:[%s173 + $0x68] sm:$0xf]
      %v2207 = vld [vmem:[%s173 + $0x6c] sm:$0xf]
      %v2208 = vld [vmem:[%s173 + $0x70] sm:$0xf]
      %v2209 = vld [vmem:[%s173 + $0x74] sm:$0xf]
      %v2210 = vld [vmem:[%s173 + $0x78] sm:$0xf]
      %v2211 = vld [vmem:[%s173 + $0x7c] sm:$0xf]
      %v2212 = vld [vmem:[%s173 + $0x80] sm:$0xf]
      %v2213 = vld [vmem:[%s173 + $0x84] sm:$0xf]
      %s2214 = scalar_lea.vmem %s1, 24
      %v2215 = vld [vmem:[%s2214] sm:$0xf]
      %v2248 = vunpack.c.l.b16 %v2182
      %v2249 = vunpack.c.l.b16 %v2183
      %v2250 = vunpack.c.l.b16 %v2184
      %v2251 = vunpack.c.l.b16 %v2185
      %v2252 = vunpack.c.l.b16 %v2186
      %v2253 = vunpack.c.l.b16 %v2187
      %v2254 = vunpack.c.l.b16 %v2188
      %v2255 = vunpack.c.l.b16 %v2189
      %v2256 = vunpack.c.l.b16 %v2190
      %v2257 = vunpack.c.l.b16 %v2191
      %v2258 = vunpack.c.l.b16 %v2192
      %v2259 = vunpack.c.l.b16 %v2193
      %v2260 = vunpack.c.l.b16 %v2194
      %v2261 = vunpack.c.l.b16 %v2195
      %v2262 = vunpack.c.l.b16 %v2196
      %v2263 = vunpack.c.l.b16 %v2197
      %v2264 = vunpack.c.l.b16 %v2198
      %v2265 = vunpack.c.l.b16 %v2199
      %v2266 = vunpack.c.l.b16 %v2200
      %v2267 = vunpack.c.l.b16 %v2201
      %v2268 = vunpack.c.l.b16 %v2202
      %v2269 = vunpack.c.l.b16 %v2203
      %v2270 = vunpack.c.l.b16 %v2204
      %v2271 = vunpack.c.l.b16 %v2205
      %v2272 = vunpack.c.l.b16 %v2206
      %v2273 = vunpack.c.l.b16 %v2207
      %v2274 = vunpack.c.l.b16 %v2208
      %v2275 = vunpack.c.l.b16 %v2209
      %v2276 = vunpack.c.l.b16 %v2210
      %v2277 = vunpack.c.l.b16 %v2211
      %v2278 = vunpack.c.l.b16 %v2212
      %v2279 = vunpack.c.l.b16 %v2213
      %v2280 = vpack.c.b16 %v2249, %v2248
      %v2281 = vpack.c.b16 %v2251, %v2250
      %v2282 = vpack.c.b16 %v2253, %v2252
      %v2283 = vpack.c.b16 %v2255, %v2254
      %v2284 = vpack.c.b16 %v2257, %v2256
      %v2285 = vpack.c.b16 %v2259, %v2258
      %v2286 = vpack.c.b16 %v2261, %v2260
      %v2287 = vpack.c.b16 %v2263, %v2262
      %v2288 = vpack.c.b16 %v2265, %v2264
      %v2289 = vpack.c.b16 %v2267, %v2266
      %v2290 = vpack.c.b16 %v2269, %v2268
      %v2291 = vpack.c.b16 %v2271, %v2270
      %v2292 = vpack.c.b16 %v2273, %v2272
      %v2293 = vpack.c.b16 %v2275, %v2274
      %v2294 = vpack.c.b16 %v2277, %v2276
      %v2295 = vpack.c.b16 %v2279, %v2278
      %v2297 = vsel %vm462, %v2280, 0
      %v2300 = vsel %vm462, %v2281, 0
      %v2303 = vsel %vm462, %v2282, 0
      %v2306 = vsel %vm462, %v2283, 0
      %v2309 = vsel %vm462, %v2284, 0
      %v2312 = vsel %vm462, %v2285, 0
      %v2315 = vsel %vm462, %v2286, 0
      %v2318 = vsel %vm462, %v2287, 0
      %v2321 = vsel %vm462, %v2288, 0
      %v2324 = vsel %vm462, %v2289, 0
      %v2327 = vsel %vm462, %v2290, 0
      %v2330 = vsel %vm462, %v2291, 0
      %v2333 = vsel %vm462, %v2292, 0
      %v2336 = vsel %vm462, %v2293, 0
      %v2339 = vsel %vm462, %v2294, 0
      %v2342 = vsel %vm462, %v2295, 0
      %v2345 = vsel %vm511, %v2215, 0
      %2347 = vmatpush.bf16.msra.mxu0 0
      %2348 = vmatpush.bf16.msra.mxu0 0
      %2349 = vmatpush.bf16.msra.mxu0 0
      %2350 = vmatpush.bf16.msra.mxu0 0
      %2351 = vmatpush.bf16.msra.mxu0 0
      %2352 = vmatpush.bf16.msra.mxu0 0
      %2353 = vmatpush.bf16.msra.mxu0 0
      %2354 = vmatpush.bf16.msra.mxu0 %v2345
      %2355 = vmatmul.bf16.gmra.mxu0 %v2297
      %v2356 = vpop.f32.mrf.mxu0
      %v2357 = vadd.f32 0.0, %v2356
      %v2358 = vpop.f32.mrf.mxu0
      %v2359 = vadd.f32 0.0, %v2358
      %2360 = vmatmul.bf16.gmra.mxu0 %v2300
      %v2361 = vpop.f32.mrf.mxu0
      %v2362 = vadd.f32 0.0, %v2361
      %v2363 = vpop.f32.mrf.mxu0
      %v2364 = vadd.f32 0.0, %v2363
      %2365 = vmatmul.bf16.gmra.mxu0 %v2303
      %v2366 = vpop.f32.mrf.mxu0
      %v2367 = vadd.f32 0.0, %v2366
      %v2368 = vpop.f32.mrf.mxu0
      %v2369 = vadd.f32 0.0, %v2368
      %2370 = vmatmul.bf16.gmra.mxu0 %v2306
      %v2371 = vpop.f32.mrf.mxu0
      %v2372 = vadd.f32 0.0, %v2371
      %v2373 = vpop.f32.mrf.mxu0
      %v2374 = vadd.f32 0.0, %v2373
      %2375 = vmatmul.bf16.gmra.mxu0 %v2309
      %v2376 = vpop.f32.mrf.mxu0
      %v2377 = vadd.f32 0.0, %v2376
      %v2378 = vpop.f32.mrf.mxu0
      %v2379 = vadd.f32 0.0, %v2378
      %2380 = vmatmul.bf16.gmra.mxu0 %v2312
      %v2381 = vpop.f32.mrf.mxu0
      %v2382 = vadd.f32 0.0, %v2381
      %v2383 = vpop.f32.mrf.mxu0
      %v2384 = vadd.f32 0.0, %v2383
      %2385 = vmatmul.bf16.gmra.mxu0 %v2315
      %v2386 = vpop.f32.mrf.mxu0
      %v2387 = vadd.f32 0.0, %v2386
      %v2388 = vpop.f32.mrf.mxu0
      %v2389 = vadd.f32 0.0, %v2388
      %2390 = vmatmul.bf16.gmra.mxu0 %v2318
      %v2391 = vpop.f32.mrf.mxu0
      %v2392 = vadd.f32 0.0, %v2391
      %v2393 = vpop.f32.mrf.mxu0
      %v2394 = vadd.f32 0.0, %v2393
      %2395 = vmatmul.bf16.gmra.mxu0 %v2321
      %v2396 = vpop.f32.mrf.mxu0
      %v2397 = vadd.f32 0.0, %v2396
      %v2398 = vpop.f32.mrf.mxu0
      %v2399 = vadd.f32 0.0, %v2398
      %2400 = vmatmul.bf16.gmra.mxu0 %v2324
      %v2401 = vpop.f32.mrf.mxu0
      %v2402 = vadd.f32 0.0, %v2401
      %v2403 = vpop.f32.mrf.mxu0
      %v2404 = vadd.f32 0.0, %v2403
      %2405 = vmatmul.bf16.gmra.mxu0 %v2327
      %v2406 = vpop.f32.mrf.mxu0
      %v2407 = vadd.f32 0.0, %v2406
      %v2408 = vpop.f32.mrf.mxu0
      %v2409 = vadd.f32 0.0, %v2408
      %2410 = vmatmul.bf16.gmra.mxu0 %v2330
      %v2411 = vpop.f32.mrf.mxu0
      %v2412 = vadd.f32 0.0, %v2411
      %v2413 = vpop.f32.mrf.mxu0
      %v2414 = vadd.f32 0.0, %v2413
      %2415 = vmatmul.bf16.gmra.mxu0 %v2333
      %v2416 = vpop.f32.mrf.mxu0
      %v2417 = vadd.f32 0.0, %v2416
      %v2418 = vpop.f32.mrf.mxu0
      %v2419 = vadd.f32 0.0, %v2418
      %2420 = vmatmul.bf16.gmra.mxu0 %v2336
      %v2421 = vpop.f32.mrf.mxu0
      %v2422 = vadd.f32 0.0, %v2421
      %v2423 = vpop.f32.mrf.mxu0
      %v2424 = vadd.f32 0.0, %v2423
      %2425 = vmatmul.bf16.gmra.mxu0 %v2339
      %v2426 = vpop.f32.mrf.mxu0
      %v2427 = vadd.f32 0.0, %v2426
      %v2428 = vpop.f32.mrf.mxu0
      %v2429 = vadd.f32 0.0, %v2428
      %2430 = vmatmul.bf16.gmra.mxu0 %v2342
      %v2431 = vpop.f32.mrf.mxu0
      %v2432 = vadd.f32 0.0, %v2431
      %v2433 = vpop.f32.mrf.mxu0
      %v2434 = vadd.f32 0.0, %v2433
      %2435 = vdwg.mxu0
      %v2436 = vadd.f32 %v1259, %v2357
      %v2437 = vadd.f32 %v1261, %v2359
      %v2438 = vadd.f32 %v1264, %v2362
      %v2439 = vadd.f32 %v1266, %v2364
      %v2440 = vadd.f32 %v1269, %v2367
      %v2441 = vadd.f32 %v1271, %v2369
      %v2442 = vadd.f32 %v1274, %v2372
      %v2443 = vadd.f32 %v1276, %v2374
      %v2444 = vadd.f32 %v1279, %v2377
      %v2445 = vadd.f32 %v1281, %v2379
      %v2446 = vadd.f32 %v1284, %v2382
      %v2447 = vadd.f32 %v1286, %v2384
      %v2448 = vadd.f32 %v1289, %v2387
      %v2449 = vadd.f32 %v1291, %v2389
      %v2450 = vadd.f32 %v1294, %v2392
      %v2451 = vadd.f32 %v1296, %v2394
      %v2452 = vadd.f32 %v1299, %v2397
      %v2453 = vadd.f32 %v1301, %v2399
      %v2454 = vadd.f32 %v1304, %v2402
      %v2455 = vadd.f32 %v1306, %v2404
      %v2456 = vadd.f32 %v1309, %v2407
      %v2457 = vadd.f32 %v1311, %v2409
      %v2458 = vadd.f32 %v1314, %v2412
      %v2459 = vadd.f32 %v1316, %v2414
      %v2460 = vadd.f32 %v1319, %v2417
      %v2461 = vadd.f32 %v1321, %v2419
      %v2462 = vadd.f32 %v1324, %v2422
      %v2463 = vadd.f32 %v1326, %v2424
      %v2464 = vadd.f32 %v1329, %v2427
      %v2465 = vadd.f32 %v1331, %v2429
      %v2466 = vadd.f32 %v1334, %v2432
      %v2467 = vadd.f32 %v1336, %v2434
      %v2468 = vld [vmem:[%s207 + $0x8] sm:$0xf]
      %v2469 = vld [vmem:[%s207 + $0xc] sm:$0xf]
      %v2470 = vld [vmem:[%s207 + $0x10] sm:$0xf]
      %v2471 = vld [vmem:[%s207 + $0x14] sm:$0xf]
      %v2472 = vld [vmem:[%s207 + $0x18] sm:$0xf]
      %v2473 = vld [vmem:[%s207 + $0x1c] sm:$0xf]
      %v2474 = vld [vmem:[%s207 + $0x20] sm:$0xf]
      %v2475 = vld [vmem:[%s207 + $0x24] sm:$0xf]
      %v2476 = vld [vmem:[%s207 + $0x28] sm:$0xf]
      %v2477 = vld [vmem:[%s207 + $0x2c] sm:$0xf]
      %v2478 = vld [vmem:[%s207 + $0x30] sm:$0xf]
      %v2479 = vld [vmem:[%s207 + $0x34] sm:$0xf]
      %v2480 = vld [vmem:[%s207 + $0x38] sm:$0xf]
      %v2481 = vld [vmem:[%s207 + $0x3c] sm:$0xf]
      %v2482 = vld [vmem:[%s207 + $0x40] sm:$0xf]
      %v2483 = vld [vmem:[%s207 + $0x44] sm:$0xf]
      %v2484 = vld [vmem:[%s207 + $0x48] sm:$0xf]
      %v2485 = vld [vmem:[%s207 + $0x4c] sm:$0xf]
      %v2486 = vld [vmem:[%s207 + $0x50] sm:$0xf]
      %v2487 = vld [vmem:[%s207 + $0x54] sm:$0xf]
      %v2488 = vld [vmem:[%s207 + $0x58] sm:$0xf]
      %v2489 = vld [vmem:[%s207 + $0x5c] sm:$0xf]
      %v2490 = vld [vmem:[%s207 + $0x60] sm:$0xf]
      %v2491 = vld [vmem:[%s207 + $0x64] sm:$0xf]
      %v2492 = vld [vmem:[%s207 + $0x68] sm:$0xf]
      %v2493 = vld [vmem:[%s207 + $0x6c] sm:$0xf]
      %v2494 = vld [vmem:[%s207 + $0x70] sm:$0xf]
      %v2495 = vld [vmem:[%s207 + $0x74] sm:$0xf]
      %v2496 = vld [vmem:[%s207 + $0x78] sm:$0xf]
      %v2497 = vld [vmem:[%s207 + $0x7c] sm:$0xf]
      %v2498 = vld [vmem:[%s207 + $0x80] sm:$0xf]
      %v2499 = vld [vmem:[%s207 + $0x84] sm:$0xf]
      %v2500 = vld [vmem:[%s207 + $0x88] sm:$0x1]
      %s2501 = scalar_lea.vmem %s1, 28
      %v2502 = vld [vmem:[%s2501] sm:$0xf]
      %v2536 = vunpack.c.l.b16 %v2468
      %v2537 = vunpack.c.l.b16 %v2469
      %v2538 = vunpack.c.l.b16 %v2470
      %v2539 = vunpack.c.l.b16 %v2471
      %v2540 = vunpack.c.l.b16 %v2472
      %v2541 = vunpack.c.l.b16 %v2473
      %v2542 = vunpack.c.l.b16 %v2474
      %v2543 = vunpack.c.l.b16 %v2475
      %v2544 = vunpack.c.l.b16 %v2476
      %v2545 = vunpack.c.l.b16 %v2477
      %v2546 = vunpack.c.l.b16 %v2478
      %v2547 = vunpack.c.l.b16 %v2479
      %v2548 = vunpack.c.l.b16 %v2480
      %v2549 = vunpack.c.l.b16 %v2481
      %v2550 = vunpack.c.l.b16 %v2482
      %v2551 = vunpack.c.l.b16 %v2483
      %v2552 = vunpack.c.l.b16 %v2484
      %v2553 = vunpack.c.l.b16 %v2485
      %v2554 = vunpack.c.l.b16 %v2486
      %v2555 = vunpack.c.l.b16 %v2487
      %v2556 = vunpack.c.l.b16 %v2488
      %v2557 = vunpack.c.l.b16 %v2489
      %v2558 = vunpack.c.l.b16 %v2490
      %v2559 = vunpack.c.l.b16 %v2491
      %v2560 = vunpack.c.l.b16 %v2492
      %v2561 = vunpack.c.l.b16 %v2493
      %v2562 = vunpack.c.l.b16 %v2494
      %v2563 = vunpack.c.l.b16 %v2495
      %v2564 = vunpack.c.l.b16 %v2496
      %v2565 = vunpack.c.l.b16 %v2497
      %v2566 = vunpack.c.l.b16 %v2498
      %v2567 = vunpack.c.l.b16 %v2499
      %v2568 = vunpack.c.l.b16 %v2500
      %v2569 = vpack.c.b16 %v2537, %v2536
      %v2570 = vpack.c.b16 %v2539, %v2538
      %v2571 = vpack.c.b16 %v2541, %v2540
      %v2572 = vpack.c.b16 %v2543, %v2542
      %v2573 = vpack.c.b16 %v2545, %v2544
      %v2574 = vpack.c.b16 %v2547, %v2546
      %v2575 = vpack.c.b16 %v2549, %v2548
      %v2576 = vpack.c.b16 %v2551, %v2550
      %v2577 = vpack.c.b16 %v2553, %v2552
      %v2578 = vpack.c.b16 %v2555, %v2554
      %v2579 = vpack.c.b16 %v2557, %v2556
      %v2580 = vpack.c.b16 %v2559, %v2558
      %v2581 = vpack.c.b16 %v2561, %v2560
      %v2582 = vpack.c.b16 %v2563, %v2562
      %v2583 = vpack.c.b16 %v2565, %v2564
      %v2584 = vpack.c.b16 %v2567, %v2566
      %v2585 = vpack.c.b16 %v2568, %v2568
      %v2587 = vshrl.u32 %v2569, 16
      %v2589 = vshll.u32 %v2569, 16
      %v2591 = vrot.slane %v2589, 1
      %v2592 = vor.u32 %v2587, %v2591
      %v2594 = vshll.u32 %v2570, 16
      %v2596 = vrot.slane %v2594, 1
      %v2597 = vsel %vm329, %v2592, %v2596
      %v2598 = vshrl.u32 %v2570, 16
      %v2600 = vor.u32 %v2598, %v2596
      %v2602 = vshll.u32 %v2571, 16
      %v2604 = vrot.slane %v2602, 1
      %v2605 = vsel %vm329, %v2600, %v2604
      %v2606 = vshrl.u32 %v2571, 16
      %v2608 = vor.u32 %v2606, %v2604
      %v2610 = vshll.u32 %v2572, 16
      %v2612 = vrot.slane %v2610, 1
      %v2613 = vsel %vm329, %v2608, %v2612
      %v2614 = vshrl.u32 %v2572, 16
      %v2616 = vor.u32 %v2614, %v2612
      %v2618 = vshll.u32 %v2573, 16
      %v2620 = vrot.slane %v2618, 1
      %v2621 = vsel %vm329, %v2616, %v2620
      %v2622 = vshrl.u32 %v2573, 16
      %v2624 = vor.u32 %v2622, %v2620
      %v2626 = vshll.u32 %v2574, 16
      %v2628 = vrot.slane %v2626, 1
      %v2629 = vsel %vm329, %v2624, %v2628
      %v2630 = vshrl.u32 %v2574, 16
      %v2632 = vor.u32 %v2630, %v2628
      %v2634 = vshll.u32 %v2575, 16
      %v2636 = vrot.slane %v2634, 1
      %v2637 = vsel %vm329, %v2632, %v2636
      %v2638 = vshrl.u32 %v2575, 16
      %v2640 = vor.u32 %v2638, %v2636
      %v2642 = vshll.u32 %v2576, 16
      %v2644 = vrot.slane %v2642, 1
      %v2645 = vsel %vm329, %v2640, %v2644
      %v2646 = vshrl.u32 %v2576, 16
      %v2648 = vor.u32 %v2646, %v2644
      %v2650 = vshll.u32 %v2577, 16
      %v2652 = vrot.slane %v2650, 1
      %v2653 = vsel %vm329, %v2648, %v2652
      %v2654 = vshrl.u32 %v2577, 16
      %v2656 = vor.u32 %v2654, %v2652
      %v2658 = vshll.u32 %v2578, 16
      %v2660 = vrot.slane %v2658, 1
      %v2661 = vsel %vm329, %v2656, %v2660
      %v2662 = vshrl.u32 %v2578, 16
      %v2664 = vor.u32 %v2662, %v2660
      %v2666 = vshll.u32 %v2579, 16
      %v2668 = vrot.slane %v2666, 1
      %v2669 = vsel %vm329, %v2664, %v2668
      %v2670 = vshrl.u32 %v2579, 16
      %v2672 = vor.u32 %v2670, %v2668
      %v2674 = vshll.u32 %v2580, 16
      %v2676 = vrot.slane %v2674, 1
      %v2677 = vsel %vm329, %v2672, %v2676
      %v2678 = vshrl.u32 %v2580, 16
      %v2680 = vor.u32 %v2678, %v2676
      %v2682 = vshll.u32 %v2581, 16
      %v2684 = vrot.slane %v2682, 1
      %v2685 = vsel %vm329, %v2680, %v2684
      %v2686 = vshrl.u32 %v2581, 16
      %v2688 = vor.u32 %v2686, %v2684
      %v2690 = vshll.u32 %v2582, 16
      %v2692 = vrot.slane %v2690, 1
      %v2693 = vsel %vm329, %v2688, %v2692
      %v2694 = vshrl.u32 %v2582, 16
      %v2696 = vor.u32 %v2694, %v2692
      %v2698 = vshll.u32 %v2583, 16
      %v2700 = vrot.slane %v2698, 1
      %v2701 = vsel %vm329, %v2696, %v2700
      %v2702 = vshrl.u32 %v2583, 16
      %v2704 = vor.u32 %v2702, %v2700
      %v2706 = vshll.u32 %v2584, 16
      %v2708 = vrot.slane %v2706, 1
      %v2709 = vsel %vm329, %v2704, %v2708
      %v2710 = vshrl.u32 %v2584, 16
      %v2712 = vor.u32 %v2710, %v2708
      %v2714 = vshll.u32 %v2585, 16
      %v2716 = vrot.slane %v2714, 1
      %v2717 = vsel %vm329, %v2712, %v2716
      %v2719 = vsel %vm462, %v2597, 0
      %v2722 = vsel %vm462, %v2605, 0
      %v2725 = vsel %vm462, %v2613, 0
      %v2728 = vsel %vm462, %v2621, 0
      %v2731 = vsel %vm462, %v2629, 0
      %v2734 = vsel %vm462, %v2637, 0
      %v2737 = vsel %vm462, %v2645, 0
      %v2740 = vsel %vm462, %v2653, 0
      %v2743 = vsel %vm462, %v2661, 0
      %v2746 = vsel %vm462, %v2669, 0
      %v2749 = vsel %vm462, %v2677, 0
      %v2752 = vsel %vm462, %v2685, 0
      %v2755 = vsel %vm462, %v2693, 0
      %v2758 = vsel %vm462, %v2701, 0
      %v2761 = vsel %vm462, %v2709, 0
      %v2764 = vsel %vm462, %v2717, 0
      %v2767 = vsel %vm511, %v2502, 0
      %2769 = vmatpush.bf16.msra.mxu0 0
      %2770 = vmatpush.bf16.msra.mxu0 0
      %2771 = vmatpush.bf16.msra.mxu0 0
      %2772 = vmatpush.bf16.msra.mxu0 0
      %2773 = vmatpush.bf16.msra.mxu0 0
      %2774 = vmatpush.bf16.msra.mxu0 0
      %2775 = vmatpush.bf16.msra.mxu0 0
      %2776 = vmatpush.bf16.msra.mxu0 %v2767
      %2777 = vmatmul.bf16.gmra.mxu0 %v2719
      %v2778 = vpop.f32.mrf.mxu0
      %v2779 = vadd.f32 0.0, %v2778
      %v2780 = vpop.f32.mrf.mxu0
      %v2781 = vadd.f32 0.0, %v2780
      %2782 = vmatmul.bf16.gmra.mxu0 %v2722
      %v2783 = vpop.f32.mrf.mxu0
      %v2784 = vadd.f32 0.0, %v2783
      %v2785 = vpop.f32.mrf.mxu0
      %v2786 = vadd.f32 0.0, %v2785
      %2787 = vmatmul.bf16.gmra.mxu0 %v2725
      %v2788 = vpop.f32.mrf.mxu0
      %v2789 = vadd.f32 0.0, %v2788
      %v2790 = vpop.f32.mrf.mxu0
      %v2791 = vadd.f32 0.0, %v2790
      %2792 = vmatmul.bf16.gmra.mxu0 %v2728
      %v2793 = vpop.f32.mrf.mxu0
      %v2794 = vadd.f32 0.0, %v2793
      %v2795 = vpop.f32.mrf.mxu0
      %v2796 = vadd.f32 0.0, %v2795
      %2797 = vmatmul.bf16.gmra.mxu0 %v2731
      %v2798 = vpop.f32.mrf.mxu0
      %v2799 = vadd.f32 0.0, %v2798
      %v2800 = vpop.f32.mrf.mxu0
      %v2801 = vadd.f32 0.0, %v2800
      %2802 = vmatmul.bf16.gmra.mxu0 %v2734
      %v2803 = vpop.f32.mrf.mxu0
      %v2804 = vadd.f32 0.0, %v2803
      %v2805 = vpop.f32.mrf.mxu0
      %v2806 = vadd.f32 0.0, %v2805
      %2807 = vmatmul.bf16.gmra.mxu0 %v2737
      %v2808 = vpop.f32.mrf.mxu0
      %v2809 = vadd.f32 0.0, %v2808
      %v2810 = vpop.f32.mrf.mxu0
      %v2811 = vadd.f32 0.0, %v2810
      %2812 = vmatmul.bf16.gmra.mxu0 %v2740
      %v2813 = vpop.f32.mrf.mxu0
      %v2814 = vadd.f32 0.0, %v2813
      %v2815 = vpop.f32.mrf.mxu0
      %v2816 = vadd.f32 0.0, %v2815
      %2817 = vmatmul.bf16.gmra.mxu0 %v2743
      %v2818 = vpop.f32.mrf.mxu0
      %v2819 = vadd.f32 0.0, %v2818
      %v2820 = vpop.f32.mrf.mxu0
      %v2821 = vadd.f32 0.0, %v2820
      %2822 = vmatmul.bf16.gmra.mxu0 %v2746
      %v2823 = vpop.f32.mrf.mxu0
      %v2824 = vadd.f32 0.0, %v2823
      %v2825 = vpop.f32.mrf.mxu0
      %v2826 = vadd.f32 0.0, %v2825
      %2827 = vmatmul.bf16.gmra.mxu0 %v2749
      %v2828 = vpop.f32.mrf.mxu0
      %v2829 = vadd.f32 0.0, %v2828
      %v2830 = vpop.f32.mrf.mxu0
      %v2831 = vadd.f32 0.0, %v2830
      %2832 = vmatmul.bf16.gmra.mxu0 %v2752
      %v2833 = vpop.f32.mrf.mxu0
      %v2834 = vadd.f32 0.0, %v2833
      %v2835 = vpop.f32.mrf.mxu0
      %v2836 = vadd.f32 0.0, %v2835
      %2837 = vmatmul.bf16.gmra.mxu0 %v2755
      %v2838 = vpop.f32.mrf.mxu0
      %v2839 = vadd.f32 0.0, %v2838
      %v2840 = vpop.f32.mrf.mxu0
      %v2841 = vadd.f32 0.0, %v2840
      %2842 = vmatmul.bf16.gmra.mxu0 %v2758
      %v2843 = vpop.f32.mrf.mxu0
      %v2844 = vadd.f32 0.0, %v2843
      %v2845 = vpop.f32.mrf.mxu0
      %v2846 = vadd.f32 0.0, %v2845
      %2847 = vmatmul.bf16.gmra.mxu0 %v2761
      %v2848 = vpop.f32.mrf.mxu0
      %v2849 = vadd.f32 0.0, %v2848
      %v2850 = vpop.f32.mrf.mxu0
      %v2851 = vadd.f32 0.0, %v2850
      %2852 = vmatmul.bf16.gmra.mxu0 %v2764
      %v2853 = vpop.f32.mrf.mxu0
      %v2854 = vadd.f32 0.0, %v2853
      %v2855 = vpop.f32.mrf.mxu0
      %v2856 = vadd.f32 0.0, %v2855
      %2857 = vdwg.mxu0
      %v2858 = vadd.f32 %v2150, %v2779
      %v2859 = vadd.f32 %v2151, %v2781
      %v2860 = vadd.f32 %v2152, %v2784
      %v2861 = vadd.f32 %v2153, %v2786
      %v2862 = vadd.f32 %v2154, %v2789
      %v2863 = vadd.f32 %v2155, %v2791
      %v2864 = vadd.f32 %v2156, %v2794
      %v2865 = vadd.f32 %v2157, %v2796
      %v2866 = vadd.f32 %v2158, %v2799
      %v2867 = vadd.f32 %v2159, %v2801
      %v2868 = vadd.f32 %v2160, %v2804
      %v2869 = vadd.f32 %v2161, %v2806
      %v2870 = vadd.f32 %v2162, %v2809
      %v2871 = vadd.f32 %v2163, %v2811
      %v2872 = vadd.f32 %v2164, %v2814
      %v2873 = vadd.f32 %v2165, %v2816
      %v2874 = vadd.f32 %v2166, %v2819
      %v2875 = vadd.f32 %v2167, %v2821
      %v2876 = vadd.f32 %v2168, %v2824
      %v2877 = vadd.f32 %v2169, %v2826
      %v2878 = vadd.f32 %v2170, %v2829
      %v2879 = vadd.f32 %v2171, %v2831
      %v2880 = vadd.f32 %v2172, %v2834
      %v2881 = vadd.f32 %v2173, %v2836
      %v2882 = vadd.f32 %v2174, %v2839
      %v2883 = vadd.f32 %v2175, %v2841
      %v2884 = vadd.f32 %v2176, %v2844
      %v2885 = vadd.f32 %v2177, %v2846
      %v2886 = vadd.f32 %v2178, %v2849
      %v2887 = vadd.f32 %v2179, %v2851
      %v2888 = vadd.f32 %v2180, %v2854
      %v2889 = vadd.f32 %v2181, %v2856
      %v2890 = vld [vmem:[%s173 + $0x8] sm:$0xf]
      %v2891 = vld [vmem:[%s173 + $0xc] sm:$0xf]
      %v2892 = vld [vmem:[%s173 + $0x10] sm:$0xf]
      %v2893 = vld [vmem:[%s173 + $0x14] sm:$0xf]
      %v2894 = vld [vmem:[%s173 + $0x18] sm:$0xf]
      %v2895 = vld [vmem:[%s173 + $0x1c] sm:$0xf]
      %v2896 = vld [vmem:[%s173 + $0x20] sm:$0xf]
      %v2897 = vld [vmem:[%s173 + $0x24] sm:$0xf]
      %v2898 = vld [vmem:[%s173 + $0x28] sm:$0xf]
      %v2899 = vld [vmem:[%s173 + $0x2c] sm:$0xf]
      %v2900 = vld [vmem:[%s173 + $0x30] sm:$0xf]
      %v2901 = vld [vmem:[%s173 + $0x34] sm:$0xf]
      %v2902 = vld [vmem:[%s173 + $0x38] sm:$0xf]
      %v2903 = vld [vmem:[%s173 + $0x3c] sm:$0xf]
      %v2904 = vld [vmem:[%s173 + $0x40] sm:$0xf]
      %v2905 = vld [vmem:[%s173 + $0x44] sm:$0xf]
      %v2906 = vld [vmem:[%s173 + $0x48] sm:$0xf]
      %v2907 = vld [vmem:[%s173 + $0x4c] sm:$0xf]
      %v2908 = vld [vmem:[%s173 + $0x50] sm:$0xf]
      %v2909 = vld [vmem:[%s173 + $0x54] sm:$0xf]
      %v2910 = vld [vmem:[%s173 + $0x58] sm:$0xf]
      %v2911 = vld [vmem:[%s173 + $0x5c] sm:$0xf]
      %v2912 = vld [vmem:[%s173 + $0x60] sm:$0xf]
      %v2913 = vld [vmem:[%s173 + $0x64] sm:$0xf]
      %v2914 = vld [vmem:[%s173 + $0x68] sm:$0xf]
      %v2915 = vld [vmem:[%s173 + $0x6c] sm:$0xf]
      %v2916 = vld [vmem:[%s173 + $0x70] sm:$0xf]
      %v2917 = vld [vmem:[%s173 + $0x74] sm:$0xf]
      %v2918 = vld [vmem:[%s173 + $0x78] sm:$0xf]
      %v2919 = vld [vmem:[%s173 + $0x7c] sm:$0xf]
      %v2920 = vld [vmem:[%s173 + $0x80] sm:$0xf]
      %v2921 = vld [vmem:[%s173 + $0x84] sm:$0xf]
      %v2922 = vld [vmem:[%s173 + $0x88] sm:$0x1]
      %s2923 = scalar_lea.vmem %s1, 32
      %v2924 = vld [vmem:[%s2923] sm:$0xf]
      %v2958 = vunpack.c.l.b16 %v2890
      %v2959 = vunpack.c.l.b16 %v2891
      %v2960 = vunpack.c.l.b16 %v2892
      %v2961 = vunpack.c.l.b16 %v2893
      %v2962 = vunpack.c.l.b16 %v2894
      %v2963 = vunpack.c.l.b16 %v2895
      %v2964 = vunpack.c.l.b16 %v2896
      %v2965 = vunpack.c.l.b16 %v2897
      %v2966 = vunpack.c.l.b16 %v2898
      %v2967 = vunpack.c.l.b16 %v2899
      %v2968 = vunpack.c.l.b16 %v2900
      %v2969 = vunpack.c.l.b16 %v2901
      %v2970 = vunpack.c.l.b16 %v2902
      %v2971 = vunpack.c.l.b16 %v2903
      %v2972 = vunpack.c.l.b16 %v2904
      %v2973 = vunpack.c.l.b16 %v2905
      %v2974 = vunpack.c.l.b16 %v2906
      %v2975 = vunpack.c.l.b16 %v2907
      %v2976 = vunpack.c.l.b16 %v2908
      %v2977 = vunpack.c.l.b16 %v2909
      %v2978 = vunpack.c.l.b16 %v2910
      %v2979 = vunpack.c.l.b16 %v2911
      %v2980 = vunpack.c.l.b16 %v2912
      %v2981 = vunpack.c.l.b16 %v2913
      %v2982 = vunpack.c.l.b16 %v2914
      %v2983 = vunpack.c.l.b16 %v2915
      %v2984 = vunpack.c.l.b16 %v2916
      %v2985 = vunpack.c.l.b16 %v2917
      %v2986 = vunpack.c.l.b16 %v2918
      %v2987 = vunpack.c.l.b16 %v2919
      %v2988 = vunpack.c.l.b16 %v2920
      %v2989 = vunpack.c.l.b16 %v2921
      %v2990 = vunpack.c.l.b16 %v2922
      %v2991 = vpack.c.b16 %v2959, %v2958
      %v2992 = vpack.c.b16 %v2961, %v2960
      %v2993 = vpack.c.b16 %v2963, %v2962
      %v2994 = vpack.c.b16 %v2965, %v2964
      %v2995 = vpack.c.b16 %v2967, %v2966
      %v2996 = vpack.c.b16 %v2969, %v2968
      %v2997 = vpack.c.b16 %v2971, %v2970
      %v2998 = vpack.c.b16 %v2973, %v2972
      %v2999 = vpack.c.b16 %v2975, %v2974
      %v3000 = vpack.c.b16 %v2977, %v2976
      %v3001 = vpack.c.b16 %v2979, %v2978
      %v3002 = vpack.c.b16 %v2981, %v2980
      %v3003 = vpack.c.b16 %v2983, %v2982
      %v3004 = vpack.c.b16 %v2985, %v2984
      %v3005 = vpack.c.b16 %v2987, %v2986
      %v3006 = vpack.c.b16 %v2989, %v2988
      %v3007 = vpack.c.b16 %v2990, %v2990
      %v3009 = vshrl.u32 %v2991, 16
      %v3011 = vshll.u32 %v2991, 16
      %v3013 = vrot.slane %v3011, 1
      %v3014 = vor.u32 %v3009, %v3013
      %v3016 = vshll.u32 %v2992, 16
      %v3018 = vrot.slane %v3016, 1
      %v3019 = vsel %vm329, %v3014, %v3018
      %v3020 = vshrl.u32 %v2992, 16
      %v3022 = vor.u32 %v3020, %v3018
      %v3024 = vshll.u32 %v2993, 16
      %v3026 = vrot.slane %v3024, 1
      %v3027 = vsel %vm329, %v3022, %v3026
      %v3028 = vshrl.u32 %v2993, 16
      %v3030 = vor.u32 %v3028, %v3026
      %v3032 = vshll.u32 %v2994, 16
      %v3034 = vrot.slane %v3032, 1
      %v3035 = vsel %vm329, %v3030, %v3034
      %v3036 = vshrl.u32 %v2994, 16
      %v3038 = vor.u32 %v3036, %v3034
      %v3040 = vshll.u32 %v2995, 16
      %v3042 = vrot.slane %v3040, 1
      %v3043 = vsel %vm329, %v3038, %v3042
      %v3044 = vshrl.u32 %v2995, 16
      %v3046 = vor.u32 %v3044, %v3042
      %v3048 = vshll.u32 %v2996, 16
      %v3050 = vrot.slane %v3048, 1
      %v3051 = vsel %vm329, %v3046, %v3050
      %v3052 = vshrl.u32 %v2996, 16
      %v3054 = vor.u32 %v3052, %v3050
      %v3056 = vshll.u32 %v2997, 16
      %v3058 = vrot.slane %v3056, 1
      %v3059 = vsel %vm329, %v3054, %v3058
      %v3060 = vshrl.u32 %v2997, 16
      %v3062 = vor.u32 %v3060, %v3058
      %v3064 = vshll.u32 %v2998, 16
      %v3066 = vrot.slane %v3064, 1
      %v3067 = vsel %vm329, %v3062, %v3066
      %v3068 = vshrl.u32 %v2998, 16
      %v3070 = vor.u32 %v3068, %v3066
      %v3072 = vshll.u32 %v2999, 16
      %v3074 = vrot.slane %v3072, 1
      %v3075 = vsel %vm329, %v3070, %v3074
      %v3076 = vshrl.u32 %v2999, 16
      %v3078 = vor.u32 %v3076, %v3074
      %v3080 = vshll.u32 %v3000, 16
      %v3082 = vrot.slane %v3080, 1
      %v3083 = vsel %vm329, %v3078, %v3082
      %v3084 = vshrl.u32 %v3000, 16
      %v3086 = vor.u32 %v3084, %v3082
      %v3088 = vshll.u32 %v3001, 16
      %v3090 = vrot.slane %v3088, 1
      %v3091 = vsel %vm329, %v3086, %v3090
      %v3092 = vshrl.u32 %v3001, 16
      %v3094 = vor.u32 %v3092, %v3090
      %v3096 = vshll.u32 %v3002, 16
      %v3098 = vrot.slane %v3096, 1
      %v3099 = vsel %vm329, %v3094, %v3098
      %v3100 = vshrl.u32 %v3002, 16
      %v3102 = vor.u32 %v3100, %v3098
      %v3104 = vshll.u32 %v3003, 16
      %v3106 = vrot.slane %v3104, 1
      %v3107 = vsel %vm329, %v3102, %v3106
      %v3108 = vshrl.u32 %v3003, 16
      %v3110 = vor.u32 %v3108, %v3106
      %v3112 = vshll.u32 %v3004, 16
      %v3114 = vrot.slane %v3112, 1
      %v3115 = vsel %vm329, %v3110, %v3114
      %v3116 = vshrl.u32 %v3004, 16
      %v3118 = vor.u32 %v3116, %v3114
      %v3120 = vshll.u32 %v3005, 16
      %v3122 = vrot.slane %v3120, 1
      %v3123 = vsel %vm329, %v3118, %v3122
      %v3124 = vshrl.u32 %v3005, 16
      %v3126 = vor.u32 %v3124, %v3122
      %v3128 = vshll.u32 %v3006, 16
      %v3130 = vrot.slane %v3128, 1
      %v3131 = vsel %vm329, %v3126, %v3130
      %v3132 = vshrl.u32 %v3006, 16
      %v3134 = vor.u32 %v3132, %v3130
      %v3136 = vshll.u32 %v3007, 16
      %v3138 = vrot.slane %v3136, 1
      %v3139 = vsel %vm329, %v3134, %v3138
      %v3141 = vsel %vm462, %v3019, 0
      %v3144 = vsel %vm462, %v3027, 0
      %v3147 = vsel %vm462, %v3035, 0
      %v3150 = vsel %vm462, %v3043, 0
      %v3153 = vsel %vm462, %v3051, 0
      %v3156 = vsel %vm462, %v3059, 0
      %v3159 = vsel %vm462, %v3067, 0
      %v3162 = vsel %vm462, %v3075, 0
      %v3165 = vsel %vm462, %v3083, 0
      %v3168 = vsel %vm462, %v3091, 0
      %v3171 = vsel %vm462, %v3099, 0
      %v3174 = vsel %vm462, %v3107, 0
      %v3177 = vsel %vm462, %v3115, 0
      %v3180 = vsel %vm462, %v3123, 0
      %v3183 = vsel %vm462, %v3131, 0
      %v3186 = vsel %vm462, %v3139, 0
      %v3189 = vsel %vm511, %v2924, 0
      %3191 = vmatpush.bf16.msra.mxu0 0
      %3192 = vmatpush.bf16.msra.mxu0 0
      %3193 = vmatpush.bf16.msra.mxu0 0
      %3194 = vmatpush.bf16.msra.mxu0 0
      %3195 = vmatpush.bf16.msra.mxu0 0
      %3196 = vmatpush.bf16.msra.mxu0 0
      %3197 = vmatpush.bf16.msra.mxu0 0
      %3198 = vmatpush.bf16.msra.mxu0 %v3189
      %3199 = vmatmul.bf16.gmra.mxu0 %v3141
      %v3200 = vpop.f32.mrf.mxu0
      %v3201 = vadd.f32 0.0, %v3200
      %v3202 = vpop.f32.mrf.mxu0
      %v3203 = vadd.f32 0.0, %v3202
      %3204 = vmatmul.bf16.gmra.mxu0 %v3144
      %v3205 = vpop.f32.mrf.mxu0
      %v3206 = vadd.f32 0.0, %v3205
      %v3207 = vpop.f32.mrf.mxu0
      %v3208 = vadd.f32 0.0, %v3207
      %3209 = vmatmul.bf16.gmra.mxu0 %v3147
      %v3210 = vpop.f32.mrf.mxu0
      %v3211 = vadd.f32 0.0, %v3210
      %v3212 = vpop.f32.mrf.mxu0
      %v3213 = vadd.f32 0.0, %v3212
      %3214 = vmatmul.bf16.gmra.mxu0 %v3150
      %v3215 = vpop.f32.mrf.mxu0
      %v3216 = vadd.f32 0.0, %v3215
      %v3217 = vpop.f32.mrf.mxu0
      %v3218 = vadd.f32 0.0, %v3217
      %3219 = vmatmul.bf16.gmra.mxu0 %v3153
      %v3220 = vpop.f32.mrf.mxu0
      %v3221 = vadd.f32 0.0, %v3220
      %v3222 = vpop.f32.mrf.mxu0
      %v3223 = vadd.f32 0.0, %v3222
      %3224 = vmatmul.bf16.gmra.mxu0 %v3156
      %v3225 = vpop.f32.mrf.mxu0
      %v3226 = vadd.f32 0.0, %v3225
      %v3227 = vpop.f32.mrf.mxu0
      %v3228 = vadd.f32 0.0, %v3227
      %3229 = vmatmul.bf16.gmra.mxu0 %v3159
      %v3230 = vpop.f32.mrf.mxu0
      %v3231 = vadd.f32 0.0, %v3230
      %v3232 = vpop.f32.mrf.mxu0
      %v3233 = vadd.f32 0.0, %v3232
      %3234 = vmatmul.bf16.gmra.mxu0 %v3162
      %v3235 = vpop.f32.mrf.mxu0
      %v3236 = vadd.f32 0.0, %v3235
      %v3237 = vpop.f32.mrf.mxu0
      %v3238 = vadd.f32 0.0, %v3237
      %3239 = vmatmul.bf16.gmra.mxu0 %v3165
      %v3240 = vpop.f32.mrf.mxu0
      %v3241 = vadd.f32 0.0, %v3240
      %v3242 = vpop.f32.mrf.mxu0
      %v3243 = vadd.f32 0.0, %v3242
      %3244 = vmatmul.bf16.gmra.mxu0 %v3168
      %v3245 = vpop.f32.mrf.mxu0
      %v3246 = vadd.f32 0.0, %v3245
      %v3247 = vpop.f32.mrf.mxu0
      %v3248 = vadd.f32 0.0, %v3247
      %3249 = vmatmul.bf16.gmra.mxu0 %v3171
      %v3250 = vpop.f32.mrf.mxu0
      %v3251 = vadd.f32 0.0, %v3250
      %v3252 = vpop.f32.mrf.mxu0
      %v3253 = vadd.f32 0.0, %v3252
      %3254 = vmatmul.bf16.gmra.mxu0 %v3174
      %v3255 = vpop.f32.mrf.mxu0
      %v3256 = vadd.f32 0.0, %v3255
      %v3257 = vpop.f32.mrf.mxu0
      %v3258 = vadd.f32 0.0, %v3257
      %3259 = vmatmul.bf16.gmra.mxu0 %v3177
      %v3260 = vpop.f32.mrf.mxu0
      %v3261 = vadd.f32 0.0, %v3260
      %v3262 = vpop.f32.mrf.mxu0
      %v3263 = vadd.f32 0.0, %v3262
      %3264 = vmatmul.bf16.gmra.mxu0 %v3180
      %v3265 = vpop.f32.mrf.mxu0
      %v3266 = vadd.f32 0.0, %v3265
      %v3267 = vpop.f32.mrf.mxu0
      %v3268 = vadd.f32 0.0, %v3267
      %3269 = vmatmul.bf16.gmra.mxu0 %v3183
      %v3270 = vpop.f32.mrf.mxu0
      %v3271 = vadd.f32 0.0, %v3270
      %v3272 = vpop.f32.mrf.mxu0
      %v3273 = vadd.f32 0.0, %v3272
      %3274 = vmatmul.bf16.gmra.mxu0 %v3186
      %v3275 = vpop.f32.mrf.mxu0
      %v3276 = vadd.f32 0.0, %v3275
      %v3277 = vpop.f32.mrf.mxu0
      %v3278 = vadd.f32 0.0, %v3277
      %3279 = vdwg.mxu0
      %v3280 = vadd.f32 %v2858, %v3201
      %v3281 = vadd.f32 %v2859, %v3203
      %v3282 = vadd.f32 %v2860, %v3206
      %v3283 = vadd.f32 %v2861, %v3208
      %v3284 = vadd.f32 %v2862, %v3211
      %v3285 = vadd.f32 %v2863, %v3213
      %v3286 = vadd.f32 %v2864, %v3216
      %v3287 = vadd.f32 %v2865, %v3218
      %v3288 = vadd.f32 %v2866, %v3221
      %v3289 = vadd.f32 %v2867, %v3223
      %v3290 = vadd.f32 %v2868, %v3226
      %v3291 = vadd.f32 %v2869, %v3228
      %v3292 = vadd.f32 %v2870, %v3231
      %v3293 = vadd.f32 %v2871, %v3233
      %v3294 = vadd.f32 %v2872, %v3236
      %v3295 = vadd.f32 %v2873, %v3238
      %v3296 = vadd.f32 %v2874, %v3241
      %v3297 = vadd.f32 %v2875, %v3243
      %v3298 = vadd.f32 %v2876, %v3246
      %v3299 = vadd.f32 %v2877, %v3248
      %v3300 = vadd.f32 %v2878, %v3251
      %v3301 = vadd.f32 %v2879, %v3253
      %v3302 = vadd.f32 %v2880, %v3256
      %v3303 = vadd.f32 %v2881, %v3258
      %v3304 = vadd.f32 %v2882, %v3261
      %v3305 = vadd.f32 %v2883, %v3263
      %v3306 = vadd.f32 %v2884, %v3266
      %v3307 = vadd.f32 %v2885, %v3268
      %v3308 = vadd.f32 %v2886, %v3271
      %v3309 = vadd.f32 %v2887, %v3273
      %v3310 = vadd.f32 %v2888, %v3276
      %v3311 = vadd.f32 %v2889, %v3278
      %v3312 = vlaneseq
      %v3313 = vshrl.u32 %v3312, 7
      %v3314 = vadd.s32 %v3313, 8
      %v3315 = vadd.s32 %v3313, 16
      %v3316 = vadd.s32 %v3313, 24
      %v3317 = vadd.s32 %v3313, 32
      %v3318 = vadd.s32 %v3313, 40
      %v3319 = vadd.s32 %v3313, 48
      %v3320 = vadd.s32 %v3313, 56
      %v3321 = vadd.s32 %v3313, 64
      %v3322 = vadd.s32 %v3313, 72
      %v3323 = vadd.s32 %v3313, 80
      %v3324 = vadd.s32 %v3313, 88
      %v3325 = vadd.s32 %v3313, 96
      %v3326 = vadd.s32 %v3313, 104
      %v3327 = vadd.s32 %v3313, 112
      %v3328 = vadd.s32 %v3313, 120
      %v3329 = vadd.s32 %v3313, 128
      %v3330 = vadd.s32 %v3313, 136
      %v3331 = vadd.s32 %v3313, 144
      %v3332 = vadd.s32 %v3313, 152
      %v3333 = vadd.s32 %v3313, 160
      %v3334 = vadd.s32 %v3313, 168
      %v3335 = vadd.s32 %v3313, 176
      %v3336 = vadd.s32 %v3313, 184
      %v3337 = vadd.s32 %v3313, 192
      %v3338 = vadd.s32 %v3313, 200
      %v3339 = vadd.s32 %v3313, 208
      %v3340 = vadd.s32 %v3313, 216
      %v3341 = vadd.s32 %v3313, 224
      %v3342 = vadd.s32 %v3313, 232
      %v3343 = vadd.s32 %v3313, 240
      %v3344 = vadd.s32 %v3313, 248
      %vm3345 = vcmp.lt.s32.totalorder %v3313, 0
      %v3346 = vsub.s32 0, %v3313
      %v3347 = vsel %vm3345, %v3346, %v3313
      %v3348 = vshrl.u32 %v3347, 4
      %v3349 = vand.u32 %v3347, 15
      %v3350 = vsub.s32 0, %v3349
      %v3351 = vsel %vm3345, %v3350, %v3349
      %vm3352 = vcmp.lt.s32.totalorder %v3314, 0
      %v3353 = vsub.s32 0, %v3314
      %v3354 = vsel %vm3352, %v3353, %v3314
      %v3355 = vshrl.u32 %v3354, 4
      %v3356 = vand.u32 %v3354, 15
      %v3357 = vsub.s32 0, %v3356
      %v3358 = vsel %vm3352, %v3357, %v3356
      %vm3359 = vcmp.lt.s32.totalorder %v3315, 0
      %v3360 = vsub.s32 0, %v3315
      %v3361 = vsel %vm3359, %v3360, %v3315
      %v3362 = vshrl.u32 %v3361, 4
      %v3363 = vand.u32 %v3361, 15
      %v3364 = vsub.s32 0, %v3363
      %v3365 = vsel %vm3359, %v3364, %v3363
      %vm3366 = vcmp.lt.s32.totalorder %v3316, 0
      %v3367 = vsub.s32 0, %v3316
      %v3368 = vsel %vm3366, %v3367, %v3316
      %v3369 = vshrl.u32 %v3368, 4
      %v3370 = vand.u32 %v3368, 15
      %v3371 = vsub.s32 0, %v3370
      %v3372 = vsel %vm3366, %v3371, %v3370
      %vm3373 = vcmp.lt.s32.totalorder %v3317, 0
      %v3374 = vsub.s32 0, %v3317
      %v3375 = vsel %vm3373, %v3374, %v3317
      %v3376 = vshrl.u32 %v3375, 4
      %v3377 = vand.u32 %v3375, 15
      %v3378 = vsub.s32 0, %v3377
      %v3379 = vsel %vm3373, %v3378, %v3377
      %vm3380 = vcmp.lt.s32.totalorder %v3318, 0
      %v3381 = vsub.s32 0, %v3318
      %v3382 = vsel %vm3380, %v3381, %v3318
      %v3383 = vshrl.u32 %v3382, 4
      %v3384 = vand.u32 %v3382, 15
      %v3385 = vsub.s32 0, %v3384
      %v3386 = vsel %vm3380, %v3385, %v3384
      %vm3387 = vcmp.lt.s32.totalorder %v3319, 0
      %v3388 = vsub.s32 0, %v3319
      %v3389 = vsel %vm3387, %v3388, %v3319
      %v3390 = vshrl.u32 %v3389, 4
      %v3391 = vand.u32 %v3389, 15
      %v3392 = vsub.s32 0, %v3391
      %v3393 = vsel %vm3387, %v3392, %v3391
      %vm3394 = vcmp.lt.s32.totalorder %v3320, 0
      %v3395 = vsub.s32 0, %v3320
      %v3396 = vsel %vm3394, %v3395, %v3320
      %v3397 = vshrl.u32 %v3396, 4
      %v3398 = vand.u32 %v3396, 15
      %v3399 = vsub.s32 0, %v3398
      %v3400 = vsel %vm3394, %v3399, %v3398
      %vm3401 = vcmp.lt.s32.totalorder %v3321, 0
      %v3402 = vsub.s32 0, %v3321
      %v3403 = vsel %vm3401, %v3402, %v3321
      %v3404 = vshrl.u32 %v3403, 4
      %v3405 = vand.u32 %v3403, 15
      %v3406 = vsub.s32 0, %v3405
      %v3407 = vsel %vm3401, %v3406, %v3405
      %vm3408 = vcmp.lt.s32.totalorder %v3322, 0
      %v3409 = vsub.s32 0, %v3322
      %v3410 = vsel %vm3408, %v3409, %v3322
      %v3411 = vshrl.u32 %v3410, 4
      %v3412 = vand.u32 %v3410, 15
      %v3413 = vsub.s32 0, %v3412
      %v3414 = vsel %vm3408, %v3413, %v3412
      %vm3415 = vcmp.lt.s32.totalorder %v3323, 0
      %v3416 = vsub.s32 0, %v3323
      %v3417 = vsel %vm3415, %v3416, %v3323
      %v3418 = vshrl.u32 %v3417, 4
      %v3419 = vand.u32 %v3417, 15
      %v3420 = vsub.s32 0, %v3419
      %v3421 = vsel %vm3415, %v3420, %v3419
      %vm3422 = vcmp.lt.s32.totalorder %v3324, 0
      %v3423 = vsub.s32 0, %v3324
      %v3424 = vsel %vm3422, %v3423, %v3324
      %v3425 = vshrl.u32 %v3424, 4
      %v3426 = vand.u32 %v3424, 15
      %v3427 = vsub.s32 0, %v3426
      %v3428 = vsel %vm3422, %v3427, %v3426
      %vm3429 = vcmp.lt.s32.totalorder %v3325, 0
      %v3430 = vsub.s32 0, %v3325
      %v3431 = vsel %vm3429, %v3430, %v3325
      %v3432 = vshrl.u32 %v3431, 4
      %v3433 = vand.u32 %v3431, 15
      %v3434 = vsub.s32 0, %v3433
      %v3435 = vsel %vm3429, %v3434, %v3433
      %vm3436 = vcmp.lt.s32.totalorder %v3326, 0
      %v3437 = vsub.s32 0, %v3326
      %v3438 = vsel %vm3436, %v3437, %v3326
      %v3439 = vshrl.u32 %v3438, 4
      %v3440 = vand.u32 %v3438, 15
      %v3441 = vsub.s32 0, %v3440
      %v3442 = vsel %vm3436, %v3441, %v3440
      %vm3443 = vcmp.lt.s32.totalorder %v3327, 0
      %v3444 = vsub.s32 0, %v3327
      %v3445 = vsel %vm3443, %v3444, %v3327
      %v3446 = vshrl.u32 %v3445, 4
      %v3447 = vand.u32 %v3445, 15
      %v3448 = vsub.s32 0, %v3447
      %v3449 = vsel %vm3443, %v3448, %v3447
      %vm3450 = vcmp.lt.s32.totalorder %v3328, 0
      %v3451 = vsub.s32 0, %v3328
      %v3452 = vsel %vm3450, %v3451, %v3328
      %v3453 = vshrl.u32 %v3452, 4
      %v3454 = vand.u32 %v3452, 15
      %v3455 = vsub.s32 0, %v3454
      %v3456 = vsel %vm3450, %v3455, %v3454
      %vm3457 = vcmp.lt.s32.totalorder %v3329, 0
      %v3458 = vsub.s32 0, %v3329
      %v3459 = vsel %vm3457, %v3458, %v3329
      %v3460 = vshrl.u32 %v3459, 4
      %v3461 = vand.u32 %v3459, 15
      %v3462 = vsub.s32 0, %v3461
      %v3463 = vsel %vm3457, %v3462, %v3461
      %vm3464 = vcmp.lt.s32.totalorder %v3330, 0
      %v3465 = vsub.s32 0, %v3330
      %v3466 = vsel %vm3464, %v3465, %v3330
      %v3467 = vshrl.u32 %v3466, 4
      %v3468 = vand.u32 %v3466, 15
      %v3469 = vsub.s32 0, %v3468
      %v3470 = vsel %vm3464, %v3469, %v3468
      %vm3471 = vcmp.lt.s32.totalorder %v3331, 0
      %v3472 = vsub.s32 0, %v3331
      %v3473 = vsel %vm3471, %v3472, %v3331
      %v3474 = vshrl.u32 %v3473, 4
      %v3475 = vand.u32 %v3473, 15
      %v3476 = vsub.s32 0, %v3475
      %v3477 = vsel %vm3471, %v3476, %v3475
      %vm3478 = vcmp.lt.s32.totalorder %v3332, 0
      %v3479 = vsub.s32 0, %v3332
      %v3480 = vsel %vm3478, %v3479, %v3332
      %v3481 = vshrl.u32 %v3480, 4
      %v3482 = vand.u32 %v3480, 15
      %v3483 = vsub.s32 0, %v3482
      %v3484 = vsel %vm3478, %v3483, %v3482
      %vm3485 = vcmp.lt.s32.totalorder %v3333, 0
      %v3486 = vsub.s32 0, %v3333
      %v3487 = vsel %vm3485, %v3486, %v3333
      %v3488 = vshrl.u32 %v3487, 4
      %v3489 = vand.u32 %v3487, 15
      %v3490 = vsub.s32 0, %v3489
      %v3491 = vsel %vm3485, %v3490, %v3489
      %vm3492 = vcmp.lt.s32.totalorder %v3334, 0
      %v3493 = vsub.s32 0, %v3334
      %v3494 = vsel %vm3492, %v3493, %v3334
      %v3495 = vshrl.u32 %v3494, 4
      %v3496 = vand.u32 %v3494, 15
      %v3497 = vsub.s32 0, %v3496
      %v3498 = vsel %vm3492, %v3497, %v3496
      %vm3499 = vcmp.lt.s32.totalorder %v3335, 0
      %v3500 = vsub.s32 0, %v3335
      %v3501 = vsel %vm3499, %v3500, %v3335
      %v3502 = vshrl.u32 %v3501, 4
      %v3503 = vand.u32 %v3501, 15
      %v3504 = vsub.s32 0, %v3503
      %v3505 = vsel %vm3499, %v3504, %v3503
      %vm3506 = vcmp.lt.s32.totalorder %v3336, 0
      %v3507 = vsub.s32 0, %v3336
      %v3508 = vsel %vm3506, %v3507, %v3336
      %v3509 = vshrl.u32 %v3508, 4
      %v3510 = vand.u32 %v3508, 15
      %v3511 = vsub.s32 0, %v3510
      %v3512 = vsel %vm3506, %v3511, %v3510
      %vm3513 = vcmp.lt.s32.totalorder %v3337, 0
      %v3514 = vsub.s32 0, %v3337
      %v3515 = vsel %vm3513, %v3514, %v3337
      %v3516 = vshrl.u32 %v3515, 4
      %v3517 = vand.u32 %v3515, 15
      %v3518 = vsub.s32 0, %v3517
      %v3519 = vsel %vm3513, %v3518, %v3517
      %vm3520 = vcmp.lt.s32.totalorder %v3338, 0
      %v3521 = vsub.s32 0, %v3338
      %v3522 = vsel %vm3520, %v3521, %v3338
      %v3523 = vshrl.u32 %v3522, 4
      %v3524 = vand.u32 %v3522, 15
      %v3525 = vsub.s32 0, %v3524
      %v3526 = vsel %vm3520, %v3525, %v3524
      %vm3527 = vcmp.lt.s32.totalorder %v3339, 0
      %v3528 = vsub.s32 0, %v3339
      %v3529 = vsel %vm3527, %v3528, %v3339
      %v3530 = vshrl.u32 %v3529, 4
      %v3531 = vand.u32 %v3529, 15
      %v3532 = vsub.s32 0, %v3531
      %v3533 = vsel %vm3527, %v3532, %v3531
      %vm3534 = vcmp.lt.s32.totalorder %v3340, 0
      %v3535 = vsub.s32 0, %v3340
      %v3536 = vsel %vm3534, %v3535, %v3340
      %v3537 = vshrl.u32 %v3536, 4
      %v3538 = vand.u32 %v3536, 15
      %v3539 = vsub.s32 0, %v3538
      %v3540 = vsel %vm3534, %v3539, %v3538
      %vm3541 = vcmp.lt.s32.totalorder %v3341, 0
      %v3542 = vsub.s32 0, %v3341
      %v3543 = vsel %vm3541, %v3542, %v3341
      %v3544 = vshrl.u32 %v3543, 4
      %v3545 = vand.u32 %v3543, 15
      %v3546 = vsub.s32 0, %v3545
      %v3547 = vsel %vm3541, %v3546, %v3545
      %vm3548 = vcmp.lt.s32.totalorder %v3342, 0
      %v3549 = vsub.s32 0, %v3342
      %v3550 = vsel %vm3548, %v3549, %v3342
      %v3551 = vshrl.u32 %v3550, 4
      %v3552 = vand.u32 %v3550, 15
      %v3553 = vsub.s32 0, %v3552
      %v3554 = vsel %vm3548, %v3553, %v3552
      %vm3555 = vcmp.lt.s32.totalorder %v3343, 0
      %v3556 = vsub.s32 0, %v3343
      %v3557 = vsel %vm3555, %v3556, %v3343
      %v3558 = vshrl.u32 %v3557, 4
      %v3559 = vand.u32 %v3557, 15
      %v3560 = vsub.s32 0, %v3559
      %v3561 = vsel %vm3555, %v3560, %v3559
      %vm3562 = vcmp.lt.s32.totalorder %v3344, 0
      %v3563 = vsub.s32 0, %v3344
      %v3564 = vsel %vm3562, %v3563, %v3344
      %v3565 = vshrl.u32 %v3564, 4
      %v3566 = vand.u32 %v3564, 15
      %v3567 = vsub.s32 0, %v3566
      %v3568 = vsel %vm3562, %v3567, %v3566
      %vm3569 = vcmp.ne.s32.totalorder %v3351, 0
      %vm3570 = vcmp.ne.s32.totalorder %v3358, 0
      %vm3571 = vcmp.ne.s32.totalorder %v3365, 0
      %vm3572 = vcmp.ne.s32.totalorder %v3372, 0
      %vm3573 = vcmp.ne.s32.totalorder %v3379, 0
      %vm3574 = vcmp.ne.s32.totalorder %v3386, 0
      %vm3575 = vcmp.ne.s32.totalorder %v3393, 0
      %vm3576 = vcmp.ne.s32.totalorder %v3400, 0
      %vm3577 = vcmp.ne.s32.totalorder %v3407, 0
      %vm3578 = vcmp.ne.s32.totalorder %v3414, 0
      %vm3579 = vcmp.ne.s32.totalorder %v3421, 0
      %vm3580 = vcmp.ne.s32.totalorder %v3428, 0
      %vm3581 = vcmp.ne.s32.totalorder %v3435, 0
      %vm3582 = vcmp.ne.s32.totalorder %v3442, 0
      %vm3583 = vcmp.ne.s32.totalorder %v3449, 0
      %vm3584 = vcmp.ne.s32.totalorder %v3456, 0
      %vm3585 = vcmp.ne.s32.totalorder %v3463, 0
      %vm3586 = vcmp.ne.s32.totalorder %v3470, 0
      %vm3587 = vcmp.ne.s32.totalorder %v3477, 0
      %vm3588 = vcmp.ne.s32.totalorder %v3484, 0
      %vm3589 = vcmp.ne.s32.totalorder %v3491, 0
      %vm3590 = vcmp.ne.s32.totalorder %v3498, 0
      %vm3591 = vcmp.ne.s32.totalorder %v3505, 0
      %vm3592 = vcmp.ne.s32.totalorder %v3512, 0
      %vm3593 = vcmp.ne.s32.totalorder %v3519, 0
      %vm3594 = vcmp.ne.s32.totalorder %v3526, 0
      %vm3595 = vcmp.ne.s32.totalorder %v3533, 0
      %vm3596 = vcmp.ne.s32.totalorder %v3540, 0
      %vm3597 = vcmp.ne.s32.totalorder %v3547, 0
      %vm3598 = vcmp.ne.s32.totalorder %v3554, 0
      %vm3599 = vcmp.ne.s32.totalorder %v3561, 0
      %vm3600 = vcmp.ne.s32.totalorder %v3568, 0
      %vm3601 = vcmp.lt.s32.totalorder %v3351, 0
      %vm3602 = vcmp.lt.s32.totalorder %v3358, 0
      %vm3603 = vcmp.lt.s32.totalorder %v3365, 0
      %vm3604 = vcmp.lt.s32.totalorder %v3372, 0
      %vm3605 = vcmp.lt.s32.totalorder %v3379, 0
      %vm3606 = vcmp.lt.s32.totalorder %v3386, 0
      %vm3607 = vcmp.lt.s32.totalorder %v3393, 0
      %vm3608 = vcmp.lt.s32.totalorder %v3400, 0
      %vm3609 = vcmp.lt.s32.totalorder %v3407, 0
      %vm3610 = vcmp.lt.s32.totalorder %v3414, 0
      %vm3611 = vcmp.lt.s32.totalorder %v3421, 0
      %vm3612 = vcmp.lt.s32.totalorder %v3428, 0
      %vm3613 = vcmp.lt.s32.totalorder %v3435, 0
      %vm3614 = vcmp.lt.s32.totalorder %v3442, 0
      %vm3615 = vcmp.lt.s32.totalorder %v3449, 0
      %vm3616 = vcmp.lt.s32.totalorder %v3456, 0
      %vm3617 = vcmp.lt.s32.totalorder %v3463, 0
      %vm3618 = vcmp.lt.s32.totalorder %v3470, 0
      %vm3619 = vcmp.lt.s32.totalorder %v3477, 0
      %vm3620 = vcmp.lt.s32.totalorder %v3484, 0
      %vm3621 = vcmp.lt.s32.totalorder %v3491, 0
      %vm3622 = vcmp.lt.s32.totalorder %v3498, 0
      %vm3623 = vcmp.lt.s32.totalorder %v3505, 0
      %vm3624 = vcmp.lt.s32.totalorder %v3512, 0
      %vm3625 = vcmp.lt.s32.totalorder %v3519, 0
      %vm3626 = vcmp.lt.s32.totalorder %v3526, 0
      %vm3627 = vcmp.lt.s32.totalorder %v3533, 0
      %vm3628 = vcmp.lt.s32.totalorder %v3540, 0
      %vm3629 = vcmp.lt.s32.totalorder %v3547, 0
      %vm3630 = vcmp.lt.s32.totalorder %v3554, 0
      %vm3631 = vcmp.lt.s32.totalorder %v3561, 0
      %vm3632 = vcmp.lt.s32.totalorder %v3568, 0
      %vm3633 = vmand %vm3601, %vm3569
      %vm3634 = vmand %vm3602, %vm3570
      %vm3635 = vmand %vm3603, %vm3571
      %vm3636 = vmand %vm3604, %vm3572
      %vm3637 = vmand %vm3605, %vm3573
      %vm3638 = vmand %vm3606, %vm3574
      %vm3639 = vmand %vm3607, %vm3575
      %vm3640 = vmand %vm3608, %vm3576
      %vm3641 = vmand %vm3609, %vm3577
      %vm3642 = vmand %vm3610, %vm3578
      %vm3643 = vmand %vm3611, %vm3579
      %vm3644 = vmand %vm3612, %vm3580
      %vm3645 = vmand %vm3613, %vm3581
      %vm3646 = vmand %vm3614, %vm3582
      %vm3647 = vmand %vm3615, %vm3583
      %vm3648 = vmand %vm3616, %vm3584
      %vm3649 = vmand %vm3617, %vm3585
      %vm3650 = vmand %vm3618, %vm3586
      %vm3651 = vmand %vm3619, %vm3587
      %vm3652 = vmand %vm3620, %vm3588
      %vm3653 = vmand %vm3621, %vm3589
      %vm3654 = vmand %vm3622, %vm3590
      %vm3655 = vmand %vm3623, %vm3591
      %vm3656 = vmand %vm3624, %vm3592
      %vm3657 = vmand %vm3625, %vm3593
      %vm3658 = vmand %vm3626, %vm3594
      %vm3659 = vmand %vm3627, %vm3595
      %vm3660 = vmand %vm3628, %vm3596
      %vm3661 = vmand %vm3629, %vm3597
      %vm3662 = vmand %vm3630, %vm3598
      %vm3663 = vmand %vm3631, %vm3599
      %vm3664 = vmand %vm3632, %vm3600
      %v3665 = vadd.s32 %v3351, 16
      %v3666 = vadd.s32 %v3358, 16
      %v3667 = vadd.s32 %v3365, 16
      %v3668 = vadd.s32 %v3372, 16
      %v3669 = vadd.s32 %v3379, 16
      %v3670 = vadd.s32 %v3386, 16
      %v3671 = vadd.s32 %v3393, 16
      %v3672 = vadd.s32 %v3400, 16
      %v3673 = vadd.s32 %v3407, 16
      %v3674 = vadd.s32 %v3414, 16
      %v3675 = vadd.s32 %v3421, 16
      %v3676 = vadd.s32 %v3428, 16
      %v3677 = vadd.s32 %v3435, 16
      %v3678 = vadd.s32 %v3442, 16
      %v3679 = vadd.s32 %v3449, 16
      %v3680 = vadd.s32 %v3456, 16
      %v3681 = vadd.s32 %v3463, 16
      %v3682 = vadd.s32 %v3470, 16
      %v3683 = vadd.s32 %v3477, 16
      %v3684 = vadd.s32 %v3484, 16
      %v3685 = vadd.s32 %v3491, 16
      %v3686 = vadd.s32 %v3498, 16
      %v3687 = vadd.s32 %v3505, 16
      %v3688 = vadd.s32 %v3512, 16
      %v3689 = vadd.s32 %v3519, 16
      %v3690 = vadd.s32 %v3526, 16
      %v3691 = vadd.s32 %v3533, 16
      %v3692 = vadd.s32 %v3540, 16
      %v3693 = vadd.s32 %v3547, 16
      %v3694 = vadd.s32 %v3554, 16
      %v3695 = vadd.s32 %v3561, 16
      %v3696 = vadd.s32 %v3568, 16
      %v3697 = vsel %vm3633, %v3665, %v3351
      %v3698 = vsel %vm3634, %v3666, %v3358
      %v3699 = vsel %vm3635, %v3667, %v3365
      %v3700 = vsel %vm3636, %v3668, %v3372
      %v3701 = vsel %vm3637, %v3669, %v3379
      %v3702 = vsel %vm3638, %v3670, %v3386
      %v3703 = vsel %vm3639, %v3671, %v3393
      %v3704 = vsel %vm3640, %v3672, %v3400
      %v3705 = vsel %vm3641, %v3673, %v3407
      %v3706 = vsel %vm3642, %v3674, %v3414
      %v3707 = vsel %vm3643, %v3675, %v3421
      %v3708 = vsel %vm3644, %v3676, %v3428
      %v3709 = vsel %vm3645, %v3677, %v3435
      %v3710 = vsel %vm3646, %v3678, %v3442
      %v3711 = vsel %vm3647, %v3679, %v3449
      %v3712 = vsel %vm3648, %v3680, %v3456
      %v3713 = vsel %vm3649, %v3681, %v3463
      %v3714 = vsel %vm3650, %v3682, %v3470
      %v3715 = vsel %vm3651, %v3683, %v3477
      %v3716 = vsel %vm3652, %v3684, %v3484
      %v3717 = vsel %vm3653, %v3685, %v3491
      %v3718 = vsel %vm3654, %v3686, %v3498
      %v3719 = vsel %vm3655, %v3687, %v3505
      %v3720 = vsel %vm3656, %v3688, %v3512
      %v3721 = vsel %vm3657, %v3689, %v3519
      %v3722 = vsel %vm3658, %v3690, %v3526
      %v3723 = vsel %vm3659, %v3691, %v3533
      %v3724 = vsel %vm3660, %v3692, %v3540
      %v3725 = vsel %vm3661, %v3693, %v3547
      %v3726 = vsel %vm3662, %v3694, %v3554
      %v3727 = vsel %vm3663, %v3695, %v3561
      %v3728 = vsel %vm3664, %v3696, %v3568
      %vm3729 = vcmp.ne.s32.totalorder %v3697, 0
      %vm3730 = vcmp.ne.s32.totalorder %v3698, 0
      %vm3731 = vcmp.ne.s32.totalorder %v3699, 0
      %vm3732 = vcmp.ne.s32.totalorder %v3700, 0
      %vm3733 = vcmp.ne.s32.totalorder %v3701, 0
      %vm3734 = vcmp.ne.s32.totalorder %v3702, 0
      %vm3735 = vcmp.ne.s32.totalorder %v3703, 0
      %vm3736 = vcmp.ne.s32.totalorder %v3704, 0
      %vm3737 = vcmp.ne.s32.totalorder %v3705, 0
      %vm3738 = vcmp.ne.s32.totalorder %v3706, 0
      %vm3739 = vcmp.ne.s32.totalorder %v3707, 0
      %vm3740 = vcmp.ne.s32.totalorder %v3708, 0
      %vm3741 = vcmp.ne.s32.totalorder %v3709, 0
      %vm3742 = vcmp.ne.s32.totalorder %v3710, 0
      %vm3743 = vcmp.ne.s32.totalorder %v3711, 0
      %vm3744 = vcmp.ne.s32.totalorder %v3712, 0
      %vm3745 = vcmp.ne.s32.totalorder %v3713, 0
      %vm3746 = vcmp.ne.s32.totalorder %v3714, 0
      %vm3747 = vcmp.ne.s32.totalorder %v3715, 0
      %vm3748 = vcmp.ne.s32.totalorder %v3716, 0
      %vm3749 = vcmp.ne.s32.totalorder %v3717, 0
      %vm3750 = vcmp.ne.s32.totalorder %v3718, 0
      %vm3751 = vcmp.ne.s32.totalorder %v3719, 0
      %vm3752 = vcmp.ne.s32.totalorder %v3720, 0
      %vm3753 = vcmp.ne.s32.totalorder %v3721, 0
      %vm3754 = vcmp.ne.s32.totalorder %v3722, 0
      %vm3755 = vcmp.ne.s32.totalorder %v3723, 0
      %vm3756 = vcmp.ne.s32.totalorder %v3724, 0
      %vm3757 = vcmp.ne.s32.totalorder %v3725, 0
      %vm3758 = vcmp.ne.s32.totalorder %v3726, 0
      %vm3759 = vcmp.ne.s32.totalorder %v3727, 0
      %vm3760 = vcmp.ne.s32.totalorder %v3728, 0
      %v3761 = vsel %vm3729, 1, 0
      %v3762 = vsel %vm3730, 1, 0
      %v3763 = vsel %vm3731, 1, 0
      %v3764 = vsel %vm3732, 1, 0
      %v3765 = vsel %vm3733, 1, 0
      %v3766 = vsel %vm3734, 1, 0
      %v3767 = vsel %vm3735, 1, 0
      %v3768 = vsel %vm3736, 1, 0
      %v3769 = vsel %vm3737, 1, 0
      %v3770 = vsel %vm3738, 1, 0
      %v3771 = vsel %vm3739, 1, 0
      %v3772 = vsel %vm3740, 1, 0
      %v3773 = vsel %vm3741, 1, 0
      %v3774 = vsel %vm3742, 1, 0
      %v3775 = vsel %vm3743, 1, 0
      %v3776 = vsel %vm3744, 1, 0
      %v3777 = vsel %vm3745, 1, 0
      %v3778 = vsel %vm3746, 1, 0
      %v3779 = vsel %vm3747, 1, 0
      %v3780 = vsel %vm3748, 1, 0
      %v3781 = vsel %vm3749, 1, 0
      %v3782 = vsel %vm3750, 1, 0
      %v3783 = vsel %vm3751, 1, 0
      %v3784 = vsel %vm3752, 1, 0
      %v3785 = vsel %vm3753, 1, 0
      %v3786 = vsel %vm3754, 1, 0
      %v3787 = vsel %vm3755, 1, 0
      %v3788 = vsel %vm3756, 1, 0
      %v3789 = vsel %vm3757, 1, 0
      %v3790 = vsel %vm3758, 1, 0
      %v3791 = vsel %vm3759, 1, 0
      %v3792 = vsel %vm3760, 1, 0
      %vm3793 = vcmp.eq.s32.totalorder %v3761, 1
      %vm3794 = vcmp.eq.s32.totalorder %v3762, 1
      %vm3795 = vcmp.eq.s32.totalorder %v3763, 1
      %vm3796 = vcmp.eq.s32.totalorder %v3764, 1
      %vm3797 = vcmp.eq.s32.totalorder %v3765, 1
      %vm3798 = vcmp.eq.s32.totalorder %v3766, 1
      %vm3799 = vcmp.eq.s32.totalorder %v3767, 1
      %vm3800 = vcmp.eq.s32.totalorder %v3768, 1
      %vm3801 = vcmp.eq.s32.totalorder %v3769, 1
      %vm3802 = vcmp.eq.s32.totalorder %v3770, 1
      %vm3803 = vcmp.eq.s32.totalorder %v3771, 1
      %vm3804 = vcmp.eq.s32.totalorder %v3772, 1
      %vm3805 = vcmp.eq.s32.totalorder %v3773, 1
      %vm3806 = vcmp.eq.s32.totalorder %v3774, 1
      %vm3807 = vcmp.eq.s32.totalorder %v3775, 1
      %vm3808 = vcmp.eq.s32.totalorder %v3776, 1
      %vm3809 = vcmp.eq.s32.totalorder %v3777, 1
      %vm3810 = vcmp.eq.s32.totalorder %v3778, 1
      %vm3811 = vcmp.eq.s32.totalorder %v3779, 1
      %vm3812 = vcmp.eq.s32.totalorder %v3780, 1
      %vm3813 = vcmp.eq.s32.totalorder %v3781, 1
      %vm3814 = vcmp.eq.s32.totalorder %v3782, 1
      %vm3815 = vcmp.eq.s32.totalorder %v3783, 1
      %vm3816 = vcmp.eq.s32.totalorder %v3784, 1
      %vm3817 = vcmp.eq.s32.totalorder %v3785, 1
      %vm3818 = vcmp.eq.s32.totalorder %v3786, 1
      %vm3819 = vcmp.eq.s32.totalorder %v3787, 1
      %vm3820 = vcmp.eq.s32.totalorder %v3788, 1
      %vm3821 = vcmp.eq.s32.totalorder %v3789, 1
      %vm3822 = vcmp.eq.s32.totalorder %v3790, 1
      %vm3823 = vcmp.eq.s32.totalorder %v3791, 1
      %vm3824 = vcmp.eq.s32.totalorder %v3792, 1
      %v3825 = vsel %vm3793, %v2436, 0.0
      %v3826 = vsel %vm3794, %v2437, 0.0
      %v3827 = vsel %vm3795, %v2438, 0.0
      %v3828 = vsel %vm3796, %v2439, 0.0
      %v3829 = vsel %vm3797, %v2440, 0.0
      %v3830 = vsel %vm3798, %v2441, 0.0
      %v3831 = vsel %vm3799, %v2442, 0.0
      %v3832 = vsel %vm3800, %v2443, 0.0
      %v3833 = vsel %vm3801, %v2444, 0.0
      %v3834 = vsel %vm3802, %v2445, 0.0
      %v3835 = vsel %vm3803, %v2446, 0.0
      %v3836 = vsel %vm3804, %v2447, 0.0
      %v3837 = vsel %vm3805, %v2448, 0.0
      %v3838 = vsel %vm3806, %v2449, 0.0
      %v3839 = vsel %vm3807, %v2450, 0.0
      %v3840 = vsel %vm3808, %v2451, 0.0
      %v3841 = vsel %vm3809, %v2452, 0.0
      %v3842 = vsel %vm3810, %v2453, 0.0
      %v3843 = vsel %vm3811, %v2454, 0.0
      %v3844 = vsel %vm3812, %v2455, 0.0
      %v3845 = vsel %vm3813, %v2456, 0.0
      %v3846 = vsel %vm3814, %v2457, 0.0
      %v3847 = vsel %vm3815, %v2458, 0.0
      %v3848 = vsel %vm3816, %v2459, 0.0
      %v3849 = vsel %vm3817, %v2460, 0.0
      %v3850 = vsel %vm3818, %v2461, 0.0
      %v3851 = vsel %vm3819, %v2462, 0.0
      %v3852 = vsel %vm3820, %v2463, 0.0
      %v3853 = vsel %vm3821, %v2464, 0.0
      %v3854 = vsel %vm3822, %v2465, 0.0
      %v3855 = vsel %vm3823, %v2466, 0.0
      %v3856 = vsel %vm3824, %v2467, 0.0
      %v3857 = vadd.f32 %v3280, %v3825
      %v3858 = vadd.f32 %v3281, %v3826
      %v3859 = vadd.f32 %v3282, %v3827
      %v3860 = vadd.f32 %v3283, %v3828
      %v3861 = vadd.f32 %v3284, %v3829
      %v3862 = vadd.f32 %v3285, %v3830
      %v3863 = vadd.f32 %v3286, %v3831
      %v3864 = vadd.f32 %v3287, %v3832
      %v3865 = vadd.f32 %v3288, %v3833
      %v3866 = vadd.f32 %v3289, %v3834
      %v3867 = vadd.f32 %v3290, %v3835
      %v3868 = vadd.f32 %v3291, %v3836
      %v3869 = vadd.f32 %v3292, %v3837
      %v3870 = vadd.f32 %v3293, %v3838
      %v3871 = vadd.f32 %v3294, %v3839
      %v3872 = vadd.f32 %v3295, %v3840
      %v3873 = vadd.f32 %v3296, %v3841
      %v3874 = vadd.f32 %v3297, %v3842
      %v3875 = vadd.f32 %v3298, %v3843
      %v3876 = vadd.f32 %v3299, %v3844
      %v3877 = vadd.f32 %v3300, %v3845
      %v3878 = vadd.f32 %v3301, %v3846
      %v3879 = vadd.f32 %v3302, %v3847
      %v3880 = vadd.f32 %v3303, %v3848
      %v3881 = vadd.f32 %v3304, %v3849
      %v3882 = vadd.f32 %v3305, %v3850
      %v3883 = vadd.f32 %v3306, %v3851
      %v3884 = vadd.f32 %v3307, %v3852
      %v3885 = vadd.f32 %v3308, %v3853
      %v3886 = vadd.f32 %v3309, %v3854
      %v3887 = vadd.f32 %v3310, %v3855
      %v3888 = vadd.f32 %v3311, %v3856
      %v3889 = vld [vmem:[%s2] sm:$0x1]
      %v3891 = vperm.slane %v3889, 0
      %v3893 = vadd.f32 %v3857, %v3891
      %v3894 = vadd.f32 %v3858, %v3891
      %v3895 = vadd.f32 %v3859, %v3891
      %v3896 = vadd.f32 %v3860, %v3891
      %v3897 = vadd.f32 %v3861, %v3891
      %v3898 = vadd.f32 %v3862, %v3891
      %v3899 = vadd.f32 %v3863, %v3891
      %v3900 = vadd.f32 %v3864, %v3891
      %v3901 = vadd.f32 %v3865, %v3891
      %v3902 = vadd.f32 %v3866, %v3891
      %v3903 = vadd.f32 %v3867, %v3891
      %v3904 = vadd.f32 %v3868, %v3891
      %v3905 = vadd.f32 %v3869, %v3891
      %v3906 = vadd.f32 %v3870, %v3891
      %v3907 = vadd.f32 %v3871, %v3891
      %v3908 = vadd.f32 %v3872, %v3891
      %v3909 = vadd.f32 %v3873, %v3891
      %v3910 = vadd.f32 %v3874, %v3891
      %v3911 = vadd.f32 %v3875, %v3891
      %v3912 = vadd.f32 %v3876, %v3891
      %v3913 = vadd.f32 %v3877, %v3891
      %v3914 = vadd.f32 %v3878, %v3891
      %v3915 = vadd.f32 %v3879, %v3891
      %v3916 = vadd.f32 %v3880, %v3891
      %v3917 = vadd.f32 %v3881, %v3891
      %v3918 = vadd.f32 %v3882, %v3891
      %v3919 = vadd.f32 %v3883, %v3891
      %v3920 = vadd.f32 %v3884, %v3891
      %v3921 = vadd.f32 %v3885, %v3891
      %v3922 = vadd.f32 %v3886, %v3891
      %v3923 = vadd.f32 %v3887, %v3891
      %v3924 = vadd.f32 %v3888, %v3891
      %vm3925 = vcmp.gt.f32.partialorder %v3893, 0.0
      %vm3926 = vcmp.gt.f32.partialorder %v3894, 0.0
      %vm3927 = vcmp.gt.f32.partialorder %v3895, 0.0
      %vm3928 = vcmp.gt.f32.partialorder %v3896, 0.0
      %vm3929 = vcmp.gt.f32.partialorder %v3897, 0.0
      %vm3930 = vcmp.gt.f32.partialorder %v3898, 0.0
      %vm3931 = vcmp.gt.f32.partialorder %v3899, 0.0
      %vm3932 = vcmp.gt.f32.partialorder %v3900, 0.0
      %vm3933 = vcmp.gt.f32.partialorder %v3901, 0.0
      %vm3934 = vcmp.gt.f32.partialorder %v3902, 0.0
      %vm3935 = vcmp.gt.f32.partialorder %v3903, 0.0
      %vm3936 = vcmp.gt.f32.partialorder %v3904, 0.0
      %vm3937 = vcmp.gt.f32.partialorder %v3905, 0.0
      %vm3938 = vcmp.gt.f32.partialorder %v3906, 0.0
      %vm3939 = vcmp.gt.f32.partialorder %v3907, 0.0
      %vm3940 = vcmp.gt.f32.partialorder %v3908, 0.0
      %vm3941 = vcmp.gt.f32.partialorder %v3909, 0.0
      %vm3942 = vcmp.gt.f32.partialorder %v3910, 0.0
      %vm3943 = vcmp.gt.f32.partialorder %v3911, 0.0
      %vm3944 = vcmp.gt.f32.partialorder %v3912, 0.0
      %vm3945 = vcmp.gt.f32.partialorder %v3913, 0.0
      %vm3946 = vcmp.gt.f32.partialorder %v3914, 0.0
      %vm3947 = vcmp.gt.f32.partialorder %v3915, 0.0
      %vm3948 = vcmp.gt.f32.partialorder %v3916, 0.0
      %vm3949 = vcmp.gt.f32.partialorder %v3917, 0.0
      %vm3950 = vcmp.gt.f32.partialorder %v3918, 0.0
      %vm3951 = vcmp.gt.f32.partialorder %v3919, 0.0
      %vm3952 = vcmp.gt.f32.partialorder %v3920, 0.0
      %vm3953 = vcmp.gt.f32.partialorder %v3921, 0.0
      %vm3954 = vcmp.gt.f32.partialorder %v3922, 0.0
      %vm3955 = vcmp.gt.f32.partialorder %v3923, 0.0
      %vm3956 = vcmp.gt.f32.partialorder %v3924, 0.0
      %v3957 = vmul.f32 %v3893, 0.2
      %v3958 = vmul.f32 %v3894, 0.2
      %v3959 = vmul.f32 %v3895, 0.2
      %v3960 = vmul.f32 %v3896, 0.2
      %v3961 = vmul.f32 %v3897, 0.2
      %v3962 = vmul.f32 %v3898, 0.2
      %v3963 = vmul.f32 %v3899, 0.2
      %v3964 = vmul.f32 %v3900, 0.2
      %v3965 = vmul.f32 %v3901, 0.2
      %v3966 = vmul.f32 %v3902, 0.2
      %v3967 = vmul.f32 %v3903, 0.2
      %v3968 = vmul.f32 %v3904, 0.2
      %v3969 = vmul.f32 %v3905, 0.2
      %v3970 = vmul.f32 %v3906, 0.2
      %v3971 = vmul.f32 %v3907, 0.2
      %v3972 = vmul.f32 %v3908, 0.2
      %v3973 = vmul.f32 %v3909, 0.2
      %v3974 = vmul.f32 %v3910, 0.2
      %v3975 = vmul.f32 %v3911, 0.2
      %v3976 = vmul.f32 %v3912, 0.2
      %v3977 = vmul.f32 %v3913, 0.2
      %v3978 = vmul.f32 %v3914, 0.2
      %v3979 = vmul.f32 %v3915, 0.2
      %v3980 = vmul.f32 %v3916, 0.2
      %v3981 = vmul.f32 %v3917, 0.2
      %v3982 = vmul.f32 %v3918, 0.2
      %v3983 = vmul.f32 %v3919, 0.2
      %v3984 = vmul.f32 %v3920, 0.2
      %v3985 = vmul.f32 %v3921, 0.2
      %v3986 = vmul.f32 %v3922, 0.2
      %v3987 = vmul.f32 %v3923, 0.2
      %v3988 = vmul.f32 %v3924, 0.2
      %v3989 = vsel %vm3925, %v3893, %v3957
      %v3990 = vsel %vm3926, %v3894, %v3958
      %v3991 = vsel %vm3927, %v3895, %v3959
      %v3992 = vsel %vm3928, %v3896, %v3960
      %v3993 = vsel %vm3929, %v3897, %v3961
      %v3994 = vsel %vm3930, %v3898, %v3962
      %v3995 = vsel %vm3931, %v3899, %v3963
      %v3996 = vsel %vm3932, %v3900, %v3964
      %v3997 = vsel %vm3933, %v3901, %v3965
      %v3998 = vsel %vm3934, %v3902, %v3966
      %v3999 = vsel %vm3935, %v3903, %v3967
      %v4000 = vsel %vm3936, %v3904, %v3968
      %v4001 = vsel %vm3937, %v3905, %v3969
      %v4002 = vsel %vm3938, %v3906, %v3970
      %v4003 = vsel %vm3939, %v3907, %v3971
      %v4004 = vsel %vm3940, %v3908, %v3972
      %v4005 = vsel %vm3941, %v3909, %v3973
      %v4006 = vsel %vm3942, %v3910, %v3974
      %v4007 = vsel %vm3943, %v3911, %v3975
      %v4008 = vsel %vm3944, %v3912, %v3976
      %v4009 = vsel %vm3945, %v3913, %v3977
      %v4010 = vsel %vm3946, %v3914, %v3978
      %v4011 = vsel %vm3947, %v3915, %v3979
      %v4012 = vsel %vm3948, %v3916, %v3980
      %v4013 = vsel %vm3949, %v3917, %v3981
      %v4014 = vsel %vm3950, %v3918, %v3982
      %v4015 = vsel %vm3951, %v3919, %v3983
      %v4016 = vsel %vm3952, %v3920, %v3984
      %v4017 = vsel %vm3953, %v3921, %v3985
      %v4018 = vsel %vm3954, %v3922, %v3986
      %v4019 = vsel %vm3955, %v3923, %v3987
      %v4020 = vsel %vm3956, %v3924, %v3988
      %v4021 = vpack.c.bf16 %v3989, %v3989
      %v4022 = vpack.c.bf16 %v3990, %v3990
      %v4023 = vpack.c.bf16 %v3991, %v3991
      %v4024 = vpack.c.bf16 %v3992, %v3992
      %v4025 = vpack.c.bf16 %v3993, %v3993
      %v4026 = vpack.c.bf16 %v3994, %v3994
      %v4027 = vpack.c.bf16 %v3995, %v3995
      %v4028 = vpack.c.bf16 %v3996, %v3996
      %v4029 = vpack.c.bf16 %v3997, %v3997
      %v4030 = vpack.c.bf16 %v3998, %v3998
      %v4031 = vpack.c.bf16 %v3999, %v3999
      %v4032 = vpack.c.bf16 %v4000, %v4000
      %v4033 = vpack.c.bf16 %v4001, %v4001
      %v4034 = vpack.c.bf16 %v4002, %v4002
      %v4035 = vpack.c.bf16 %v4003, %v4003
      %v4036 = vpack.c.bf16 %v4004, %v4004
      %v4037 = vpack.c.bf16 %v4005, %v4005
      %v4038 = vpack.c.bf16 %v4006, %v4006
      %v4039 = vpack.c.bf16 %v4007, %v4007
      %v4040 = vpack.c.bf16 %v4008, %v4008
      %v4041 = vpack.c.bf16 %v4009, %v4009
      %v4042 = vpack.c.bf16 %v4010, %v4010
      %v4043 = vpack.c.bf16 %v4011, %v4011
      %v4044 = vpack.c.bf16 %v4012, %v4012
      %v4045 = vpack.c.bf16 %v4013, %v4013
      %v4046 = vpack.c.bf16 %v4014, %v4014
      %v4047 = vpack.c.bf16 %v4015, %v4015
      %v4048 = vpack.c.bf16 %v4016, %v4016
      %v4049 = vpack.c.bf16 %v4017, %v4017
      %v4050 = vpack.c.bf16 %v4018, %v4018
      %v4051 = vpack.c.bf16 %v4019, %v4019
      %v4052 = vpack.c.bf16 %v4020, %v4020
      %vm4053 = vcmask 519168
      %4054 = vst.msk [vmem:[%s170] sm:$0xf] %vm4053, %v4021
      %4055 = vst.msk [vmem:[%s170 + $0x4] sm:$0xf] %vm4053, %v4022
      %4056 = vst.msk [vmem:[%s170 + $0x8] sm:$0xf] %vm4053, %v4023
      %4057 = vst.msk [vmem:[%s170 + $0xc] sm:$0xf] %vm4053, %v4024
      %4058 = vst.msk [vmem:[%s170 + $0x10] sm:$0xf] %vm4053, %v4025
      %4059 = vst.msk [vmem:[%s170 + $0x14] sm:$0xf] %vm4053, %v4026
      %4060 = vst.msk [vmem:[%s170 + $0x18] sm:$0xf] %vm4053, %v4027
      %4061 = vst.msk [vmem:[%s170 + $0x1c] sm:$0xf] %vm4053, %v4028
      %4062 = vst.msk [vmem:[%s170 + $0x20] sm:$0xf] %vm4053, %v4029
      %4063 = vst.msk [vmem:[%s170 + $0x24] sm:$0xf] %vm4053, %v4030
      %4064 = vst.msk [vmem:[%s170 + $0x28] sm:$0xf] %vm4053, %v4031
      %4065 = vst.msk [vmem:[%s170 + $0x2c] sm:$0xf] %vm4053, %v4032
      %4066 = vst.msk [vmem:[%s170 + $0x30] sm:$0xf] %vm4053, %v4033
      %4067 = vst.msk [vmem:[%s170 + $0x34] sm:$0xf] %vm4053, %v4034
      %4068 = vst.msk [vmem:[%s170 + $0x38] sm:$0xf] %vm4053, %v4035
      %4069 = vst.msk [vmem:[%s170 + $0x3c] sm:$0xf] %vm4053, %v4036
      %4070 = vst.msk [vmem:[%s170 + $0x40] sm:$0xf] %vm4053, %v4037
      %4071 = vst.msk [vmem:[%s170 + $0x44] sm:$0xf] %vm4053, %v4038
      %4072 = vst.msk [vmem:[%s170 + $0x48] sm:$0xf] %vm4053, %v4039
      %4073 = vst.msk [vmem:[%s170 + $0x4c] sm:$0xf] %vm4053, %v4040
      %4074 = vst.msk [vmem:[%s170 + $0x50] sm:$0xf] %vm4053, %v4041
      %4075 = vst.msk [vmem:[%s170 + $0x54] sm:$0xf] %vm4053, %v4042
      %4076 = vst.msk [vmem:[%s170 + $0x58] sm:$0xf] %vm4053, %v4043
      %4077 = vst.msk [vmem:[%s170 + $0x5c] sm:$0xf] %vm4053, %v4044
      %4078 = vst.msk [vmem:[%s170 + $0x60] sm:$0xf] %vm4053, %v4045
      %4079 = vst.msk [vmem:[%s170 + $0x64] sm:$0xf] %vm4053, %v4046
      %4080 = vst.msk [vmem:[%s170 + $0x68] sm:$0xf] %vm4053, %v4047
      %4081 = vst.msk [vmem:[%s170 + $0x6c] sm:$0xf] %vm4053, %v4048
      %4082 = vst.msk [vmem:[%s170 + $0x70] sm:$0xf] %vm4053, %v4049
      %4083 = vst.msk [vmem:[%s170 + $0x74] sm:$0xf] %vm4053, %v4050
      %4084 = vst.msk [vmem:[%s170 + $0x78] sm:$0xf] %vm4053, %v4051
      %4085 = vst.msk [vmem:[%s170 + $0x7c] sm:$0xf] %vm4053, %v4052
      %s4086 = smul.u32 32, %s14
      %p4087 = scmp.lt.s32.totalorder %s4086, 63
      %s4088 = scalar_select %p4087, %s4086, 63
      %s4089 = smul.addr %s4088, 4
      %s4090 = scalar_lea.vmem %s3, %s4089
      // Predicated region
      $region33: #{discriminator_forward.4} parent=31 // pred_check
        %p4091 = pneg %p100
      $region34: #{discriminator_forward.4} parent=31 // pred_check_branch
        %4093 = sbr.rel (%p4091) target = $region36
      $region35: #{discriminator_forward.4} parent=31 // pred_region
        %s4094 = smul.u32 32, %s14
      $region36: #{discriminator_forward.4} parent=31 // pred_fallthru
        _
    $region32: #{discriminator_forward.4} parent=5 // pred_fallthru
      _
    %p4095 = scmp.le.s32.totalorder 2, %s9
    // Predicated region
    $region37: #{discriminator_forward.4} parent=5 // pred_check
      %p4096 = pneg %p4095
    $region38: #{discriminator_forward.4} parent=5 // pred_check_branch
      %4098 = sbr.rel (%p4096) target = $region40
    $region39: #{discriminator_forward.4} parent=5 // pred_region
      %s4099 = ssub.s32 %s9, 2
      // Predicated region
      $region41: #{discriminator_forward.4} parent=39 // pred_check
        %p4100 = pneg %p106
      $region42: #{discriminator_forward.4} parent=39 // pred_check_branch
        %4102 = sbr.rel (%p4100) target = $region44
      $region43: #{discriminator_forward.4} parent=39 // pred_region
        %s4103 = smul.u32 32, %s15
        %p4104 = scmp.lt.s32.totalorder %s4103, 63
        %s4105 = scalar_select %p4104, %s4103, 63
        %s4106 = smul.addr %s4105, 4
        %s4107 = scalar_lea.vmem %s3, %s4106
      $region44: #{discriminator_forward.4} parent=39 // pred_fallthru
        _
    $region40: #{discriminator_forward.4} parent=5 // pred_fallthru
      _
  $region6: #{discriminator_forward.4} parent=0 // loop_footer
    %s13 = sadd.s32 1, %s9
  $region7: #{discriminator_forward.4} parent=0 // loop_footer_branch
    %8 = sbr.rel target = $region3
  $region8: #{discriminator_forward.4} parent=0 // loop_exit
    _

// kernel: discriminator_forward.6
$region0: #{discriminator_forward.6}
  #allocation0 [shape = 'u32[]', space=smem, size = 0x4, offset = 0x4, fixed_abs, tag = 'smem constant byte address 0x4 - core index']
  #allocation1 [shape = 'u32[72,128]{1,0:T(1,128)}', space=vmem, size = 0x9000, scoped, tag = 'internal scratch']
  %s0 = inlined_call_operand.vmem [shape: bf16[2,4,21,128], index: 0, kind: input, shape index: {}]
  %s1 = inlined_call_operand.vmem [shape: bf16[9,128,128], index: 1, kind: input, shape index: {}]
  %s2 = inlined_call_operand.vmem [shape: f32[1,128], index: 2, kind: input, shape index: {}]
  %s3 = inlined_call_operand.vmem [shape: bf16[32,128], index: 3, kind: output, shape index: {}]
  %s4 = sld [smem:[#allocation0]]
  $region45: #{discriminator_forward.6} parent=0
    _
  %s6 = ssub.s32 1, %s4
  %s7 = scalar_select 0, %s6, %s4
  loop: start=0, step=1, limit=4
  $region2: #{discriminator_forward.6} parent=0 // loop_pre_header
    _
  $region3: #{discriminator_forward.6} parent=0 // loop_header
    %s9 = sphi 0, %s13
    %p10 = scmp.ge.s32.totalorder %s9, 4
    %s19 = sphi 0, %s21
    %s22 = sphi 0, %s19
    %s23 = sphi 0, %s22
    %s39 = sphi 0, %s23
    %s43 = sphi 0, %s43
    %s45 = sphi 0, %s43
    %s46 = sphi 0, %s45
    %s60 = sphi 0, %s46
    %s64 = sphi 0, %s64
    %s66 = sphi 0, %s64
    %s67 = sphi 0, %s66
    %s81 = sphi 0, %s67
    %s87 = sphi 0, %s89
    %s90 = sphi 0, %s87
    %s91 = sphi 0, %s90
    %s107 = sphi 0, %s91
  $region4: #{discriminator_forward.6} parent=0 // loop_header_branch
    %12 = sbr.rel (%p10) target = $region8
  $region5: #{discriminator_forward.6} parent=0 // loop_body
    %s14 = ssub.s32 %s9, 1
    %s15 = ssub.s32 %s9, 2
    %s16 = sadd.s32 %s9, 1
    %s17 = ssub.s32 %s9, %s16
    %p18 = scmp.eq.s32.totalorder %s17, 0
    %s20 = sadd.s32 %s19, 1
    %s21 = scalar_select %p18, %s19, %s20
    %p24 = pneg %p18
    %p25 = scmp.eq.s32.totalorder %s9, 1
    %p26 = por %p24, %p25
    %p27 = scmp.ne.s32.totalorder %s19, %s22
    %p28 = scmp.eq.s32.totalorder %s9, 0
    %p29 = por %p27, %p28
    %p30 = scmp.ne.s32.totalorder %s19, %s22
    %p31 = scmp.eq.s32.totalorder %s14, 1
    %p32 = por %p30, %p31
    %p33 = scmp.ne.s32.totalorder %s22, %s23
    %p34 = scmp.eq.s32.totalorder %s14, 0
    %p35 = por %p33, %p34
    %p36 = scmp.ne.s32.totalorder %s22, %s23
    %p37 = scmp.eq.s32.totalorder %s15, 1
    %p38 = por %p36, %p37
    %p40 = scmp.ne.s32.totalorder %s23, %s39
    %p41 = scmp.eq.s32.totalorder %s15, 0
    %p42 = por %p40, %p41
    %s44 = sadd.s32 %s43, 1
    %p47 = scmp.eq.s32.totalorder %s9, 1
    %p48 = scmp.ne.s32.totalorder %s43, %s45
    %p49 = scmp.eq.s32.totalorder %s9, 0
    %p50 = por %p48, %p49
    %p51 = scmp.ne.s32.totalorder %s43, %s45
    %p52 = scmp.eq.s32.totalorder %s14, 1
    %p53 = por %p51, %p52
    %p54 = scmp.ne.s32.totalorder %s45, %s46
    %p55 = scmp.eq.s32.totalorder %s14, 0
    %p56 = por %p54, %p55
    %p57 = scmp.ne.s32.totalorder %s45, %s46
    %p58 = scmp.eq.s32.totalorder %s15, 1
    %p59 = por %p57, %p58
    %p61 = scmp.ne.s32.totalorder %s46, %s60
    %p62 = scmp.eq.s32.totalorder %s15, 0
    %p63 = por %p61, %p62
    %s65 = sadd.s32 %s64, 1
    %p68 = scmp.eq.s32.totalorder %s9, 1
    %p69 = scmp.ne.s32.totalorder %s64, %s66
    %p70 = scmp.eq.s32.totalorder %s9, 0
    %p71 = por %p69, %p70
    %p72 = scmp.ne.s32.totalorder %s64, %s66
    %p73 = scmp.eq.s32.totalorder %s14, 1
    %p74 = por %p72, %p73
    %p75 = scmp.ne.s32.totalorder %s66, %s67
    %p76 = scmp.eq.s32.totalorder %s14, 0
    %p77 = por %p75, %p76
    %p78 = scmp.ne.s32.totalorder %s66, %s67
    %p79 = scmp.eq.s32.totalorder %s15, 1
    %p80 = por %p78, %p79
    %p82 = scmp.ne.s32.totalorder %s67, %s81
    %p83 = scmp.eq.s32.totalorder %s15, 0
    %p84 = por %p82, %p83
    %s85 = ssub.s32 %s9, %s16
    %p86 = scmp.eq.s32.totalorder %s85, 0
    %s88 = sadd.s32 %s87, 1
    %s89 = scalar_select %p86, %s87, %s88
    %p92 = pneg %p86
    %p93 = scmp.eq.s32.totalorder %s9, 1
    %p94 = por %p92, %p93
    %p95 = scmp.ne.s32.totalorder %s87, %s90
    %p96 = scmp.eq.s32.totalorder %s9, 0
    %p97 = por %p95, %p96
    %p98 = scmp.ne.s32.totalorder %s87, %s90
    %p99 = scmp.eq.s32.totalorder %s14, 1
    %p100 = por %p98, %p99
    %p101 = scmp.ne.s32.totalorder %s90, %s91
    %p102 = scmp.eq.s32.totalorder %s14, 0
    %p103 = por %p101, %p102
    %p104 = scmp.ne.s32.totalorder %s90, %s91
    %p105 = scmp.eq.s32.totalorder %s15, 1
    %p106 = por %p104, %p105
    %p108 = scmp.ne.s32.totalorder %s91, %s107
    %p109 = scmp.eq.s32.totalorder %s15, 0
    %p110 = por %p108, %p109
    %p111 = scmp.le.s32.totalorder 1, %s9
    %p112 = scmp.lt.s32.totalorder %s9, 3
    %p113 = pnand %p111, %p112
    %p114 = pneg %p113
    // Predicated region
    $region9: #{discriminator_forward.6} parent=5 // pred_check
      _
    $region10: #{discriminator_forward.6} parent=5 // pred_check_branch
      %116 = sbr.rel (%p113) target = $region12
    $region11: #{discriminator_forward.6} parent=5 // pred_region
      %s117 = ssub.s32 %s9, 1
      // Predicated region
      $region13: #{discriminator_forward.6} parent=11 // pred_check
        %p118 = pneg %p56
      $region14: #{discriminator_forward.6} parent=11 // pred_check_branch
        %120 = sbr.rel (%p118) target = $region16
      $region15: #{discriminator_forward.6} parent=11 // pred_region
        _
      $region16: #{discriminator_forward.6} parent=11 // pred_fallthru
        _
      // Predicated region
      $region17: #{discriminator_forward.6} parent=11 // pred_check
        %p121 = pneg %p77
      $region18: #{discriminator_forward.6} parent=11 // pred_check_branch
        %123 = sbr.rel (%p121) target = $region20
      $region19: #{discriminator_forward.6} parent=11 // pred_region
        _
      $region20: #{discriminator_forward.6} parent=11 // pred_fallthru
        _
    $region12: #{discriminator_forward.6} parent=5 // pred_fallthru
      _
    %p124 = scmp.lt.s32.totalorder %s9, 2
    // Predicated region
    $region21: #{discriminator_forward.6} parent=5 // pred_check
      %p125 = pneg %p124
    $region22: #{discriminator_forward.6} parent=5 // pred_check_branch
      %127 = sbr.rel (%p125) target = $region24
    $region23: #{discriminator_forward.6} parent=5 // pred_region
      // Predicated region
      $region25: #{discriminator_forward.6} parent=23 // pred_check
        %p128 = pneg %p29
      $region26: #{discriminator_forward.6} parent=23 // pred_check_branch
        %130 = sbr.rel (%p128) target = $region28
      $region27: #{discriminator_forward.6} parent=23 // pred_region
        %p131 = scmp.lt.s32.totalorder %s9, 1
        %s132 = scalar_select %p131, %s9, 1
        %s133 = smul.addr %s132, 12
        %s134 = smul.addr %s133, 4
        %s135 = scalar_lea.vmem %s0, %s134
      $region28: #{discriminator_forward.6} parent=23 // pred_fallthru
        _
    $region24: #{discriminator_forward.6} parent=5 // pred_fallthru
      _
    %p136 = scmp.le.s32.totalorder 1, %s9
    %p137 = scmp.lt.s32.totalorder %s9, 3
    %p138 = pnand %p136, %p137
    %p139 = pneg %p138
    // Predicated region
    $region29: #{discriminator_forward.6} parent=5 // pred_check
      _
    $region30: #{discriminator_forward.6} parent=5 // pred_check_branch
      %141 = sbr.rel (%p138) target = $region32
    $region31: #{discriminator_forward.6} parent=5 // pred_region
      %s142 = ssub.s32 %s9, 1
      %p143 = scmp.lt.s32.totalorder %s14, 1
      %s144 = scalar_select %p143, %s14, 1
      %s145 = smul.addr %s144, 12
      %s146 = smul.addr %s145, 4
      %s147 = scalar_lea.vmem %s0, %s146
      %p148 = pneg %p35
      %p149 = pneg %p32
      %p150 = pneg %p56
      %p151 = pneg %p53
      %p152 = pneg %p77
      %p153 = pneg %p74
      %p154 = pneg %p103
      %p155 = pneg %p100
      %s156 = smul.u32 2, %s14
      %p157 = scmp.lt.s32.totalorder %s156, 3
      %s158 = scalar_select %p157, %s156, 3
      %s159 = smul.addr %s158, 4
      %s160 = scalar_lea.vmem %s3, %s159
      %p161 = scmp.lt.s32.totalorder %s14, 1
      %s162 = scalar_select %p161, %s14, 1
      %s163 = smul.addr %s162, 12
      %s164 = smul.addr %s163, 4
      %s165 = scalar_lea.vmem %s0, %s164
      %s166 = smul.u32 2, %s14
      %p167 = scmp.lt.s32.totalorder %s166, 3
      %s168 = scalar_select %p167, %s166, 3
      %s169 = smul.addr %s168, 4
      %s170 = scalar_lea.vmem %s3, %s169
      %s171 = smul.u32 2, %s14
      %s172 = scalar_lea.vmem %s165, 36
      %v173 = vld [vmem:[%s172] sm:$0xf]
      %v174 = vld [vmem:[%s172 + $0x4] sm:$0xf]
      %v175 = vld [vmem:[%s1] sm:$0xf]
      %v176 = vld [vmem:[%s1 + $0x4] sm:$0xf]
      %v177 = vld [vmem:[%s1 + $0x8] sm:$0xf]
      %v178 = vld [vmem:[%s1 + $0xc] sm:$0xf]
      %v179 = vld [vmem:[%s1 + $0x10] sm:$0xf]
      %v180 = vld [vmem:[%s1 + $0x14] sm:$0xf]
      %v181 = vld [vmem:[%s1 + $0x18] sm:$0xf]
      %v182 = vld [vmem:[%s1 + $0x1c] sm:$0xf]
      %v183 = vld [vmem:[%s1 + $0x20] sm:$0xf]
      %v184 = vld [vmem:[%s1 + $0x24] sm:$0xf]
      %v185 = vld [vmem:[%s1 + $0x28] sm:$0xf]
      %v186 = vld [vmem:[%s1 + $0x2c] sm:$0xf]
      %v187 = vld [vmem:[%s1 + $0x30] sm:$0xf]
      %v188 = vld [vmem:[%s1 + $0x34] sm:$0xf]
      %v189 = vld [vmem:[%s1 + $0x38] sm:$0xf]
      %v190 = vld [vmem:[%s1 + $0x3c] sm:$0xf]
      %s191 = scalar_lea.vmem %s165, 24
      %v192 = vld [vmem:[%s191] sm:$0xf]
      %v193 = vld [vmem:[%s191 + $0x4] sm:$0xf]
      %v194 = vld [vmem:[%s191 + $0x8] sm:$0x1]
      %s195 = scalar_lea.vmem %s1, 64
      %v196 = vld [vmem:[%s195] sm:$0xf]
      %v197 = vld [vmem:[%s195 + $0x4] sm:$0xf]
      %v198 = vld [vmem:[%s195 + $0x8] sm:$0xf]
      %v199 = vld [vmem:[%s195 + $0xc] sm:$0xf]
      %v200 = vld [vmem:[%s195 + $0x10] sm:$0xf]
      %v201 = vld [vmem:[%s195 + $0x14] sm:$0xf]
      %v202 = vld [vmem:[%s195 + $0x18] sm:$0xf]
      %v203 = vld [vmem:[%s195 + $0x1c] sm:$0xf]
      %v204 = vld [vmem:[%s195 + $0x20] sm:$0xf]
      %v205 = vld [vmem:[%s195 + $0x24] sm:$0xf]
      %v206 = vld [vmem:[%s195 + $0x28] sm:$0xf]
      %v207 = vld [vmem:[%s195 + $0x2c] sm:$0xf]
      %v208 = vld [vmem:[%s195 + $0x30] sm:$0xf]
      %v209 = vld [vmem:[%s195 + $0x34] sm:$0xf]
      %v210 = vld [vmem:[%s195 + $0x38] sm:$0xf]
      %v211 = vld [vmem:[%s195 + $0x3c] sm:$0xf]
      %v212 = vld [vmem:[%s172 + $0x8] sm:$0x1]
      %s213 = scalar_lea.vmem %s1, 128
      %v214 = vld [vmem:[%s213] sm:$0xf]
      %v215 = vld [vmem:[%s213 + $0x4] sm:$0xf]
      %v216 = vld [vmem:[%s213 + $0x8] sm:$0xf]
      %v217 = vld [vmem:[%s213 + $0xc] sm:$0xf]
      %v218 = vld [vmem:[%s213 + $0x10] sm:$0xf]
      %v219 = vld [vmem:[%s213 + $0x14] sm:$0xf]
      %v220 = vld [vmem:[%s213 + $0x18] sm:$0xf]
      %v221 = vld [vmem:[%s213 + $0x1c] sm:$0xf]
      %v222 = vld [vmem:[%s213 + $0x20] sm:$0xf]
      %v223 = vld [vmem:[%s213 + $0x24] sm:$0xf]
      %v224 = vld [vmem:[%s213 + $0x28] sm:$0xf]
      %v225 = vld [vmem:[%s213 + $0x2c] sm:$0xf]
      %v226 = vld [vmem:[%s213 + $0x30] sm:$0xf]
      %v227 = vld [vmem:[%s213 + $0x34] sm:$0xf]
      %v228 = vld [vmem:[%s213 + $0x38] sm:$0xf]
      %v229 = vld [vmem:[%s213 + $0x3c] sm:$0xf]
      %v233 = vunpack.c.l.b16 %v173
      %v234 = vunpack.c.l.b16 %v174
      %v235 = vunpack.c.l.b16 %v212
      %v236 = vpack.c.b16 %v234, %v233
      %v237 = vpack.c.b16 %v235, %v235
      %vm238 = vsmask.f32 7424
      %v240 = vshrl.u32 %v236, 16
      %v242 = vshll.u32 %v236, 16
      %v244 = vrot.slane %v242, 1
      %v245 = vor.u32 %v240, %v244
      %v247 = vshll.u32 %v237, 16
      %v249 = vrot.slane %v247, 1
      %v250 = vsel %vm238, %v245, %v249
      %v268 = vunpack.c.l.b16 %v214
      %v269 = vunpack.c.l.b16 %v215
      %v270 = vunpack.c.l.b16 %v216
      %v271 = vunpack.c.l.b16 %v217
      %v272 = vunpack.c.l.b16 %v218
      %v273 = vunpack.c.l.b16 %v219
      %v274 = vunpack.c.l.b16 %v220
      %v275 = vunpack.c.l.b16 %v221
      %v276 = vunpack.c.l.b16 %v222
      %v277 = vunpack.c.l.b16 %v223
      %v278 = vunpack.c.l.b16 %v224
      %v279 = vunpack.c.l.b16 %v225
      %v280 = vunpack.c.l.b16 %v226
      %v281 = vunpack.c.l.b16 %v227
      %v282 = vunpack.c.l.b16 %v228
      %v283 = vunpack.c.l.b16 %v229
      %v284 = vpack.c.b16 %v269, %v268
      %v285 = vpack.c.b16 %v271, %v270
      %v286 = vpack.c.b16 %v273, %v272
      %v287 = vpack.c.b16 %v275, %v274
      %v288 = vpack.c.b16 %v277, %v276
      %v289 = vpack.c.b16 %v279, %v278
      %v290 = vpack.c.b16 %v281, %v280
      %v291 = vpack.c.b16 %v283, %v282
      %300 = vmatpush.bf16.msra.mxu0 %v291
      %301 = vmatpush.bf16.msra.mxu0 %v290
      %302 = vmatpush.bf16.msra.mxu0 %v289
      %303 = vmatpush.bf16.msra.mxu0 %v288
      %304 = vmatpush.bf16.msra.mxu0 %v287
      %305 = vmatpush.bf16.msra.mxu0 %v286
      %306 = vmatpush.bf16.msra.mxu0 %v285
      %307 = vmatpush.bf16.msra.mxu0 %v284
      %308 = vmatmul.bf16.gmra.mxu0 %v250
      %v309 = vpop.f32.mrf.mxu0
      %v310 = vadd.f32 0.0, %v309
      %v311 = vpop.f32.mrf.mxu0
      %v312 = vadd.f32 0.0, %v311
      %313 = vdwg.mxu0
      %v317 = vunpack.c.l.b16 %v192
      %v318 = vunpack.c.l.b16 %v193
      %v319 = vunpack.c.l.b16 %v194
      %v320 = vpack.c.b16 %v318, %v317
      %v321 = vpack.c.b16 %v319, %v319
      %v323 = vshrl.u32 %v320, 16
      %v325 = vshll.u32 %v320, 16
      %v327 = vrot.slane %v325, 1
      %v328 = vor.u32 %v323, %v327
      %v330 = vshll.u32 %v321, 16
      %v332 = vrot.slane %v330, 1
      %v333 = vsel %vm238, %v328, %v332
      %v351 = vunpack.c.l.b16 %v196
      %v352 = vunpack.c.l.b16 %v197
      %v353 = vunpack.c.l.b16 %v198
      %v354 = vunpack.c.l.b16 %v199
      %v355 = vunpack.c.l.b16 %v200
      %v356 = vunpack.c.l.b16 %v201
      %v357 = vunpack.c.l.b16 %v202
      %v358 = vunpack.c.l.b16 %v203
      %v359 = vunpack.c.l.b16 %v204
      %v360 = vunpack.c.l.b16 %v205
      %v361 = vunpack.c.l.b16 %v206
      %v362 = vunpack.c.l.b16 %v207
      %v363 = vunpack.c.l.b16 %v208
      %v364 = vunpack.c.l.b16 %v209
      %v365 = vunpack.c.l.b16 %v210
      %v366 = vunpack.c.l.b16 %v211
      %v367 = vpack.c.b16 %v352, %v351
      %v368 = vpack.c.b16 %v354, %v353
      %v369 = vpack.c.b16 %v356, %v355
      %v370 = vpack.c.b16 %v358, %v357
      %v371 = vpack.c.b16 %v360, %v359
      %v372 = vpack.c.b16 %v362, %v361
      %v373 = vpack.c.b16 %v364, %v363
      %v374 = vpack.c.b16 %v366, %v365
      %383 = vmatpush.bf16.msra.mxu0 %v374
      %384 = vmatpush.bf16.msra.mxu0 %v373
      %385 = vmatpush.bf16.msra.mxu0 %v372
      %386 = vmatpush.bf16.msra.mxu0 %v371
      %387 = vmatpush.bf16.msra.mxu0 %v370
      %388 = vmatpush.bf16.msra.mxu0 %v369
      %389 = vmatpush.bf16.msra.mxu0 %v368
      %390 = vmatpush.bf16.msra.mxu0 %v367
      %391 = vmatmul.bf16.gmra.mxu0 %v333
      %v392 = vpop.f32.mrf.mxu0
      %v393 = vadd.f32 %v310, %v392
      %v394 = vpop.f32.mrf.mxu0
      %v395 = vadd.f32 %v312, %v394
      %396 = vdwg.mxu0
      %s397 = scalar_lea.vmem %s165, 12
      %v398 = vld [vmem:[%s397] sm:$0xc]
      %v399 = vld [vmem:[%s397 + $0x4] sm:$0xf]
      %v400 = vld [vmem:[%s397 + $0x8] sm:$0x3]
      %s401 = scalar_lea.vmem %s1, 192
      %v402 = vld [vmem:[%s401] sm:$0xf]
      %v403 = vld [vmem:[%s401 + $0x4] sm:$0xf]
      %v404 = vld [vmem:[%s401 + $0x8] sm:$0xf]
      %v405 = vld [vmem:[%s401 + $0xc] sm:$0xf]
      %v406 = vld [vmem:[%s401 + $0x10] sm:$0xf]
      %v407 = vld [vmem:[%s401 + $0x14] sm:$0xf]
      %v408 = vld [vmem:[%s401 + $0x18] sm:$0xf]
      %v409 = vld [vmem:[%s401 + $0x1c] sm:$0xf]
      %v410 = vld [vmem:[%s401 + $0x20] sm:$0xf]
      %v411 = vld [vmem:[%s401 + $0x24] sm:$0xf]
      %v412 = vld [vmem:[%s401 + $0x28] sm:$0xf]
      %v413 = vld [vmem:[%s401 + $0x2c] sm:$0xf]
      %v414 = vld [vmem:[%s401 + $0x30] sm:$0xf]
      %v415 = vld [vmem:[%s401 + $0x34] sm:$0xf]
      %v416 = vld [vmem:[%s401 + $0x38] sm:$0xf]
      %v417 = vld [vmem:[%s401 + $0x3c] sm:$0xf]
      %v421 = vunpack.c.l.b16 %v398
      %v422 = vunpack.c.l.b16 %v399
      %v423 = vunpack.c.l.b16 %v400
      %v424 = vpack.c.b16 %v422, %v421
      %v425 = vpack.c.b16 %v423, %v423
      %vm426 = vcmask 1045504
      %v427 = vrot.slane %v424, 2
      %v428 = vrot.slane %v425, 2
      %v429 = vsel %vm426, %v427, %v428
      %v447 = vunpack.c.l.b16 %v402
      %v448 = vunpack.c.l.b16 %v403
      %v449 = vunpack.c.l.b16 %v404
      %v450 = vunpack.c.l.b16 %v405
      %v451 = vunpack.c.l.b16 %v406
      %v452 = vunpack.c.l.b16 %v407
      %v453 = vunpack.c.l.b16 %v408
      %v454 = vunpack.c.l.b16 %v409
      %v455 = vunpack.c.l.b16 %v410
      %v456 = vunpack.c.l.b16 %v411
      %v457 = vunpack.c.l.b16 %v412
      %v458 = vunpack.c.l.b16 %v413
      %v459 = vunpack.c.l.b16 %v414
      %v460 = vunpack.c.l.b16 %v415
      %v461 = vunpack.c.l.b16 %v416
      %v462 = vunpack.c.l.b16 %v417
      %v463 = vpack.c.b16 %v448, %v447
      %v464 = vpack.c.b16 %v450, %v449
      %v465 = vpack.c.b16 %v452, %v451
      %v466 = vpack.c.b16 %v454, %v453
      %v467 = vpack.c.b16 %v456, %v455
      %v468 = vpack.c.b16 %v458, %v457
      %v469 = vpack.c.b16 %v460, %v459
      %v470 = vpack.c.b16 %v462, %v461
      %479 = vmatpush.bf16.msra.mxu0 %v470
      %480 = vmatpush.bf16.msra.mxu0 %v469
      %481 = vmatpush.bf16.msra.mxu0 %v468
      %482 = vmatpush.bf16.msra.mxu0 %v467
      %483 = vmatpush.bf16.msra.mxu0 %v466
      %484 = vmatpush.bf16.msra.mxu0 %v465
      %485 = vmatpush.bf16.msra.mxu0 %v464
      %486 = vmatpush.bf16.msra.mxu0 %v463
      %487 = vmatmul.bf16.gmra.mxu0 %v429
      %v488 = vpop.f32.mrf.mxu0
      %v489 = vadd.f32 0.0, %v488
      %v490 = vpop.f32.mrf.mxu0
      %v491 = vadd.f32 0.0, %v490
      %492 = vdwg.mxu0
      %v510 = vunpack.c.l.b16 %v175
      %v511 = vunpack.c.l.b16 %v176
      %v512 = vunpack.c.l.b16 %v177
      %v513 = vunpack.c.l.b16 %v178
      %v514 = vunpack.c.l.b16 %v179
      %v515 = vunpack.c.l.b16 %v180
      %v516 = vunpack.c.l.b16 %v181
      %v517 = vunpack.c.l.b16 %v182
      %v518 = vunpack.c.l.b16 %v183
      %v519 = vunpack.c.l.b16 %v184
      %v520 = vunpack.c.l.b16 %v185
      %v521 = vunpack.c.l.b16 %v186
      %v522 = vunpack.c.l.b16 %v187
      %v523 = vunpack.c.l.b16 %v188
      %v524 = vunpack.c.l.b16 %v189
      %v525 = vunpack.c.l.b16 %v190
      %v526 = vpack.c.b16 %v511, %v510
      %v527 = vpack.c.b16 %v513, %v512
      %v528 = vpack.c.b16 %v515, %v514
      %v529 = vpack.c.b16 %v517, %v516
      %v530 = vpack.c.b16 %v519, %v518
      %v531 = vpack.c.b16 %v521, %v520
      %v532 = vpack.c.b16 %v523, %v522
      %v533 = vpack.c.b16 %v525, %v524
      %542 = vmatpush.bf16.msra.mxu0 %v533
      %543 = vmatpush.bf16.msra.mxu0 %v532
      %544 = vmatpush.bf16.msra.mxu0 %v531
      %545 = vmatpush.bf16.msra.mxu0 %v530
      %546 = vmatpush.bf16.msra.mxu0 %v529
      %547 = vmatpush.bf16.msra.mxu0 %v528
      %548 = vmatpush.bf16.msra.mxu0 %v527
      %549 = vmatpush.bf16.msra.mxu0 %v526
      %550 = vmatmul.bf16.gmra.mxu0 %v236
      %v551 = vpop.f32.mrf.mxu0
      %v552 = vadd.f32 %v489, %v551
      %v553 = vpop.f32.mrf.mxu0
      %v554 = vadd.f32 %v491, %v553
      %555 = vdwg.mxu0
      %v556 = vld [vmem:[%s165] sm:$0xc]
      %v557 = vld [vmem:[%s165 + $0x4] sm:$0xf]
      %v558 = vld [vmem:[%s165 + $0x8] sm:$0x7]
      %s559 = scalar_lea.vmem %s1, 256
      %v560 = vld [vmem:[%s559] sm:$0xf]
      %v561 = vld [vmem:[%s559 + $0x4] sm:$0xf]
      %v562 = vld [vmem:[%s559 + $0x8] sm:$0xf]
      %v563 = vld [vmem:[%s559 + $0xc] sm:$0xf]
      %v564 = vld [vmem:[%s559 + $0x10] sm:$0xf]
      %v565 = vld [vmem:[%s559 + $0x14] sm:$0xf]
      %v566 = vld [vmem:[%s559 + $0x18] sm:$0xf]
      %v567 = vld [vmem:[%s559 + $0x1c] sm:$0xf]
      %v568 = vld [vmem:[%s559 + $0x20] sm:$0xf]
      %v569 = vld [vmem:[%s559 + $0x24] sm:$0xf]
      %v570 = vld [vmem:[%s559 + $0x28] sm:$0xf]
      %v571 = vld [vmem:[%s559 + $0x2c] sm:$0xf]
      %v572 = vld [vmem:[%s559 + $0x30] sm:$0xf]
      %v573 = vld [vmem:[%s559 + $0x34] sm:$0xf]
      %v574 = vld [vmem:[%s559 + $0x38] sm:$0xf]
      %v575 = vld [vmem:[%s559 + $0x3c] sm:$0xf]
      %v579 = vunpack.c.l.b16 %v556
      %v580 = vunpack.c.l.b16 %v557
      %v581 = vunpack.c.l.b16 %v558
      %v582 = vpack.c.b16 %v580, %v579
      %v583 = vpack.c.b16 %v581, %v581
      %vm584 = vsmask.f32 5376
      %v586 = vshrl.u32 %v582, 16
      %v588 = vrot.slane %v586, 2
      %v589 = vshll.u32 %v582, 16
      %v591 = vrot.slane %v589, 3
      %v592 = vor.u32 %v588, %v591
      %v594 = vshrl.u32 %v583, 16
      %v596 = vrot.slane %v594, 2
      %v597 = vshll.u32 %v583, 16
      %v599 = vrot.slane %v597, 3
      %v600 = vor.u32 %v596, %v599
      %v601 = vsel %vm584, %v592, %v600
      %v619 = vunpack.c.l.b16 %v560
      %v620 = vunpack.c.l.b16 %v561
      %v621 = vunpack.c.l.b16 %v562
      %v622 = vunpack.c.l.b16 %v563
      %v623 = vunpack.c.l.b16 %v564
      %v624 = vunpack.c.l.b16 %v565
      %v625 = vunpack.c.l.b16 %v566
      %v626 = vunpack.c.l.b16 %v567
      %v627 = vunpack.c.l.b16 %v568
      %v628 = vunpack.c.l.b16 %v569
      %v629 = vunpack.c.l.b16 %v570
      %v630 = vunpack.c.l.b16 %v571
      %v631 = vunpack.c.l.b16 %v572
      %v632 = vunpack.c.l.b16 %v573
      %v633 = vunpack.c.l.b16 %v574
      %v634 = vunpack.c.l.b16 %v575
      %v635 = vpack.c.b16 %v620, %v619
      %v636 = vpack.c.b16 %v622, %v621
      %v637 = vpack.c.b16 %v624, %v623
      %v638 = vpack.c.b16 %v626, %v625
      %v639 = vpack.c.b16 %v628, %v627
      %v640 = vpack.c.b16 %v630, %v629
      %v641 = vpack.c.b16 %v632, %v631
      %v642 = vpack.c.b16 %v634, %v633
      %651 = vmatpush.bf16.msra.mxu0 %v642
      %652 = vmatpush.bf16.msra.mxu0 %v641
      %653 = vmatpush.bf16.msra.mxu0 %v640
      %654 = vmatpush.bf16.msra.mxu0 %v639
      %655 = vmatpush.bf16.msra.mxu0 %v638
      %656 = vmatpush.bf16.msra.mxu0 %v637
      %657 = vmatpush.bf16.msra.mxu0 %v636
      %658 = vmatpush.bf16.msra.mxu0 %v635
      %659 = vmatmul.bf16.gmra.mxu0 %v601
      %v660 = vpop.f32.mrf.mxu0
      %v661 = vadd.f32 0.0, %v660
      %v662 = vpop.f32.mrf.mxu0
      %v663 = vadd.f32 0.0, %v662
      %664 = vdwg.mxu0
      %v665 = vadd.f32 %v393, %v661
      %v666 = vadd.f32 %v395, %v663
      %v667 = vld [vmem:[%s397 + $0x8] sm:$0x7]
      %s668 = scalar_lea.vmem %s1, 320
      %v669 = vld [vmem:[%s668] sm:$0xf]
      %v670 = vld [vmem:[%s668 + $0x4] sm:$0xf]
      %v671 = vld [vmem:[%s668 + $0x8] sm:$0xf]
      %v672 = vld [vmem:[%s668 + $0xc] sm:$0xf]
      %v673 = vld [vmem:[%s668 + $0x10] sm:$0xf]
      %v674 = vld [vmem:[%s668 + $0x14] sm:$0xf]
      %v675 = vld [vmem:[%s668 + $0x18] sm:$0xf]
      %v676 = vld [vmem:[%s668 + $0x1c] sm:$0xf]
      %v677 = vld [vmem:[%s668 + $0x20] sm:$0xf]
      %v678 = vld [vmem:[%s668 + $0x24] sm:$0xf]
      %v679 = vld [vmem:[%s668 + $0x28] sm:$0xf]
      %v680 = vld [vmem:[%s668 + $0x2c] sm:$0xf]
      %v681 = vld [vmem:[%s668 + $0x30] sm:$0xf]
      %v682 = vld [vmem:[%s668 + $0x34] sm:$0xf]
      %v683 = vld [vmem:[%s668 + $0x38] sm:$0xf]
      %v684 = vld [vmem:[%s668 + $0x3c] sm:$0xf]
      %v686 = vunpack.c.l.b16 %v667
      %v687 = vpack.c.b16 %v686, %v686
      %v689 = vshrl.u32 %v424, 16
      %v691 = vrot.slane %v689, 2
      %v692 = vshll.u32 %v424, 16
      %v694 = vrot.slane %v692, 3
      %v695 = vor.u32 %v691, %v694
      %v697 = vshrl.u32 %v687, 16
      %v699 = vrot.slane %v697, 2
      %v700 = vshll.u32 %v687, 16
      %v702 = vrot.slane %v700, 3
      %v703 = vor.u32 %v699, %v702
      %v704 = vsel %vm584, %v695, %v703
      %v722 = vunpack.c.l.b16 %v669
      %v723 = vunpack.c.l.b16 %v670
      %v724 = vunpack.c.l.b16 %v671
      %v725 = vunpack.c.l.b16 %v672
      %v726 = vunpack.c.l.b16 %v673
      %v727 = vunpack.c.l.b16 %v674
      %v728 = vunpack.c.l.b16 %v675
      %v729 = vunpack.c.l.b16 %v676
      %v730 = vunpack.c.l.b16 %v677
      %v731 = vunpack.c.l.b16 %v678
      %v732 = vunpack.c.l.b16 %v679
      %v733 = vunpack.c.l.b16 %v680
      %v734 = vunpack.c.l.b16 %v681
      %v735 = vunpack.c.l.b16 %v682
      %v736 = vunpack.c.l.b16 %v683
      %v737 = vunpack.c.l.b16 %v684
      %v738 = vpack.c.b16 %v723, %v722
      %v739 = vpack.c.b16 %v725, %v724
      %v740 = vpack.c.b16 %v727, %v726
      %v741 = vpack.c.b16 %v729, %v728
      %v742 = vpack.c.b16 %v731, %v730
      %v743 = vpack.c.b16 %v733, %v732
      %v744 = vpack.c.b16 %v735, %v734
      %v745 = vpack.c.b16 %v737, %v736
      %754 = vmatpush.bf16.msra.mxu0 %v745
      %755 = vmatpush.bf16.msra.mxu0 %v744
      %756 = vmatpush.bf16.msra.mxu0 %v743
      %757 = vmatpush.bf16.msra.mxu0 %v742
      %758 = vmatpush.bf16.msra.mxu0 %v741
      %759 = vmatpush.bf16.msra.mxu0 %v740
      %760 = vmatpush.bf16.msra.mxu0 %v739
      %761 = vmatpush.bf16.msra.mxu0 %v738
      %762 = vmatmul.bf16.gmra.mxu0 %v704
      %v763 = vpop.f32.mrf.mxu0
      %v764 = vadd.f32 0.0, %v763
      %v765 = vpop.f32.mrf.mxu0
      %v766 = vadd.f32 0.0, %v765
      %767 = vdwg.mxu0
      %v768 = vadd.f32 %v665, %v764
      %v769 = vadd.f32 %v666, %v766
      %v770 = vld [vmem:[%s172] sm:$0xc]
      %v771 = vld [vmem:[%s172 + $0x8] sm:$0x3]
      %s772 = scalar_lea.vmem %s1, 384
      %v773 = vld [vmem:[%s772] sm:$0xf]
      %v774 = vld [vmem:[%s772 + $0x4] sm:$0xf]
      %v775 = vld [vmem:[%s772 + $0x8] sm:$0xf]
      %v776 = vld [vmem:[%s772 + $0xc] sm:$0xf]
      %v777 = vld [vmem:[%s772 + $0x10] sm:$0xf]
      %v778 = vld [vmem:[%s772 + $0x14] sm:$0xf]
      %v779 = vld [vmem:[%s772 + $0x18] sm:$0xf]
      %v780 = vld [vmem:[%s772 + $0x1c] sm:$0xf]
      %v781 = vld [vmem:[%s772 + $0x20] sm:$0xf]
      %v782 = vld [vmem:[%s772 + $0x24] sm:$0xf]
      %v783 = vld [vmem:[%s772 + $0x28] sm:$0xf]
      %v784 = vld [vmem:[%s772 + $0x2c] sm:$0xf]
      %v785 = vld [vmem:[%s772 + $0x30] sm:$0xf]
      %v786 = vld [vmem:[%s772 + $0x34] sm:$0xf]
      %v787 = vld [vmem:[%s772 + $0x38] sm:$0xf]
      %v788 = vld [vmem:[%s772 + $0x3c] sm:$0xf]
      %v791 = vunpack.c.l.b16 %v770
      %v792 = vunpack.c.l.b16 %v771
      %v793 = vpack.c.b16 %v234, %v791
      %v794 = vpack.c.b16 %v792, %v792
      %v795 = vrot.slane %v793, 2
      %v796 = vrot.slane %v794, 2
      %v797 = vsel %vm426, %v795, %v796
      %v815 = vunpack.c.l.b16 %v773
      %v816 = vunpack.c.l.b16 %v774
      %v817 = vunpack.c.l.b16 %v775
      %v818 = vunpack.c.l.b16 %v776
      %v819 = vunpack.c.l.b16 %v777
      %v820 = vunpack.c.l.b16 %v778
      %v821 = vunpack.c.l.b16 %v779
      %v822 = vunpack.c.l.b16 %v780
      %v823 = vunpack.c.l.b16 %v781
      %v824 = vunpack.c.l.b16 %v782
      %v825 = vunpack.c.l.b16 %v783
      %v826 = vunpack.c.l.b16 %v784
      %v827 = vunpack.c.l.b16 %v785
      %v828 = vunpack.c.l.b16 %v786
      %v829 = vunpack.c.l.b16 %v787
      %v830 = vunpack.c.l.b16 %v788
      %v831 = vpack.c.b16 %v816, %v815
      %v832 = vpack.c.b16 %v818, %v817
      %v833 = vpack.c.b16 %v820, %v819
      %v834 = vpack.c.b16 %v822, %v821
      %v835 = vpack.c.b16 %v824, %v823
      %v836 = vpack.c.b16 %v826, %v825
      %v837 = vpack.c.b16 %v828, %v827
      %v838 = vpack.c.b16 %v830, %v829
      %847 = vmatpush.bf16.msra.mxu0 %v838
      %848 = vmatpush.bf16.msra.mxu0 %v837
      %849 = vmatpush.bf16.msra.mxu0 %v836
      %850 = vmatpush.bf16.msra.mxu0 %v835
      %851 = vmatpush.bf16.msra.mxu0 %v834
      %852 = vmatpush.bf16.msra.mxu0 %v833
      %853 = vmatpush.bf16.msra.mxu0 %v832
      %854 = vmatpush.bf16.msra.mxu0 %v831
      %855 = vmatmul.bf16.gmra.mxu0 %v797
      %v856 = vpop.f32.mrf.mxu0
      %v857 = vadd.f32 0.0, %v856
      %v858 = vpop.f32.mrf.mxu0
      %v859 = vadd.f32 0.0, %v858
      %860 = vdwg.mxu0
      %v861 = vadd.f32 %v552, %v857
      %v862 = vadd.f32 %v554, %v859
      %v863 = vld [vmem:[%s191] sm:$0xc]
      %v864 = vld [vmem:[%s191 + $0x8] sm:$0x7]
      %s865 = scalar_lea.vmem %s1, 448
      %v866 = vld [vmem:[%s865] sm:$0xf]
      %v867 = vld [vmem:[%s865 + $0x4] sm:$0xf]
      %v868 = vld [vmem:[%s865 + $0x8] sm:$0xf]
      %v869 = vld [vmem:[%s865 + $0xc] sm:$0xf]
      %v870 = vld [vmem:[%s865 + $0x10] sm:$0xf]
      %v871 = vld [vmem:[%s865 + $0x14] sm:$0xf]
      %v872 = vld [vmem:[%s865 + $0x18] sm:$0xf]
      %v873 = vld [vmem:[%s865 + $0x1c] sm:$0xf]
      %v874 = vld [vmem:[%s865 + $0x20] sm:$0xf]
      %v875 = vld [vmem:[%s865 + $0x24] sm:$0xf]
      %v876 = vld [vmem:[%s865 + $0x28] sm:$0xf]
      %v877 = vld [vmem:[%s865 + $0x2c] sm:$0xf]
      %v878 = vld [vmem:[%s865 + $0x30] sm:$0xf]
      %v879 = vld [vmem:[%s865 + $0x34] sm:$0xf]
      %v880 = vld [vmem:[%s865 + $0x38] sm:$0xf]
      %v881 = vld [vmem:[%s865 + $0x3c] sm:$0xf]
      %v884 = vunpack.c.l.b16 %v863
      %v885 = vunpack.c.l.b16 %v864
      %v886 = vpack.c.b16 %v318, %v884
      %v887 = vpack.c.b16 %v885, %v885
      %v889 = vshrl.u32 %v886, 16
      %v891 = vrot.slane %v889, 2
      %v892 = vshll.u32 %v886, 16
      %v894 = vrot.slane %v892, 3
      %v895 = vor.u32 %v891, %v894
      %v897 = vshrl.u32 %v887, 16
      %v899 = vrot.slane %v897, 2
      %v900 = vshll.u32 %v887, 16
      %v902 = vrot.slane %v900, 3
      %v903 = vor.u32 %v899, %v902
      %v904 = vsel %vm584, %v895, %v903
      %v922 = vunpack.c.l.b16 %v866
      %v923 = vunpack.c.l.b16 %v867
      %v924 = vunpack.c.l.b16 %v868
      %v925 = vunpack.c.l.b16 %v869
      %v926 = vunpack.c.l.b16 %v870
      %v927 = vunpack.c.l.b16 %v871
      %v928 = vunpack.c.l.b16 %v872
      %v929 = vunpack.c.l.b16 %v873
      %v930 = vunpack.c.l.b16 %v874
      %v931 = vunpack.c.l.b16 %v875
      %v932 = vunpack.c.l.b16 %v876
      %v933 = vunpack.c.l.b16 %v877
      %v934 = vunpack.c.l.b16 %v878
      %v935 = vunpack.c.l.b16 %v879
      %v936 = vunpack.c.l.b16 %v880
      %v937 = vunpack.c.l.b16 %v881
      %v938 = vpack.c.b16 %v923, %v922
      %v939 = vpack.c.b16 %v925, %v924
      %v940 = vpack.c.b16 %v927, %v926
      %v941 = vpack.c.b16 %v929, %v928
      %v942 = vpack.c.b16 %v931, %v930
      %v943 = vpack.c.b16 %v933, %v932
      %v944 = vpack.c.b16 %v935, %v934
      %v945 = vpack.c.b16 %v937, %v936
      %954 = vmatpush.bf16.msra.mxu0 %v945
      %955 = vmatpush.bf16.msra.mxu0 %v944
      %956 = vmatpush.bf16.msra.mxu0 %v943
      %957 = vmatpush.bf16.msra.mxu0 %v942
      %958 = vmatpush.bf16.msra.mxu0 %v941
      %959 = vmatpush.bf16.msra.mxu0 %v940
      %960 = vmatpush.bf16.msra.mxu0 %v939
      %961 = vmatpush.bf16.msra.mxu0 %v938
      %962 = vmatmul.bf16.gmra.mxu0 %v904
      %v963 = vpop.f32.mrf.mxu0
      %v964 = vadd.f32 0.0, %v963
      %v965 = vpop.f32.mrf.mxu0
      %v966 = vadd.f32 0.0, %v965
      %967 = vdwg.mxu0
      %v968 = vadd.f32 %v768, %v964
      %v969 = vadd.f32 %v769, %v966
      %v970 = vld [vmem:[%s172 + $0x8] sm:$0x7]
      %s971 = scalar_lea.vmem %s1, 512
      %v972 = vld [vmem:[%s971] sm:$0xf]
      %v973 = vld [vmem:[%s971 + $0x4] sm:$0xf]
      %v974 = vld [vmem:[%s971 + $0x8] sm:$0xf]
      %v975 = vld [vmem:[%s971 + $0xc] sm:$0xf]
      %v976 = vld [vmem:[%s971 + $0x10] sm:$0xf]
      %v977 = vld [vmem:[%s971 + $0x14] sm:$0xf]
      %v978 = vld [vmem:[%s971 + $0x18] sm:$0xf]
      %v979 = vld [vmem:[%s971 + $0x1c] sm:$0xf]
      %v980 = vld [vmem:[%s971 + $0x20] sm:$0xf]
      %v981 = vld [vmem:[%s971 + $0x24] sm:$0xf]
      %v982 = vld [vmem:[%s971 + $0x28] sm:$0xf]
      %v983 = vld [vmem:[%s971 + $0x2c] sm:$0xf]
      %v984 = vld [vmem:[%s971 + $0x30] sm:$0xf]
      %v985 = vld [vmem:[%s971 + $0x34] sm:$0xf]
      %v986 = vld [vmem:[%s971 + $0x38] sm:$0xf]
      %v987 = vld [vmem:[%s971 + $0x3c] sm:$0xf]
      %v989 = vunpack.c.l.b16 %v970
      %v990 = vpack.c.b16 %v989, %v989
      %v992 = vshrl.u32 %v793, 16
      %v994 = vrot.slane %v992, 2
      %v995 = vshll.u32 %v793, 16
      %v997 = vrot.slane %v995, 3
      %v998 = vor.u32 %v994, %v997
      %v1000 = vshrl.u32 %v990, 16
      %v1002 = vrot.slane %v1000, 2
      %v1003 = vshll.u32 %v990, 16
      %v1005 = vrot.slane %v1003, 3
      %v1006 = vor.u32 %v1002, %v1005
      %v1007 = vsel %vm584, %v998, %v1006
      %v1025 = vunpack.c.l.b16 %v972
      %v1026 = vunpack.c.l.b16 %v973
      %v1027 = vunpack.c.l.b16 %v974
      %v1028 = vunpack.c.l.b16 %v975
      %v1029 = vunpack.c.l.b16 %v976
      %v1030 = vunpack.c.l.b16 %v977
      %v1031 = vunpack.c.l.b16 %v978
      %v1032 = vunpack.c.l.b16 %v979
      %v1033 = vunpack.c.l.b16 %v980
      %v1034 = vunpack.c.l.b16 %v981
      %v1035 = vunpack.c.l.b16 %v982
      %v1036 = vunpack.c.l.b16 %v983
      %v1037 = vunpack.c.l.b16 %v984
      %v1038 = vunpack.c.l.b16 %v985
      %v1039 = vunpack.c.l.b16 %v986
      %v1040 = vunpack.c.l.b16 %v987
      %v1041 = vpack.c.b16 %v1026, %v1025
      %v1042 = vpack.c.b16 %v1028, %v1027
      %v1043 = vpack.c.b16 %v1030, %v1029
      %v1044 = vpack.c.b16 %v1032, %v1031
      %v1045 = vpack.c.b16 %v1034, %v1033
      %v1046 = vpack.c.b16 %v1036, %v1035
      %v1047 = vpack.c.b16 %v1038, %v1037
      %v1048 = vpack.c.b16 %v1040, %v1039
      %1057 = vmatpush.bf16.msra.mxu0 %v1048
      %1058 = vmatpush.bf16.msra.mxu0 %v1047
      %1059 = vmatpush.bf16.msra.mxu0 %v1046
      %1060 = vmatpush.bf16.msra.mxu0 %v1045
      %1061 = vmatpush.bf16.msra.mxu0 %v1044
      %1062 = vmatpush.bf16.msra.mxu0 %v1043
      %1063 = vmatpush.bf16.msra.mxu0 %v1042
      %1064 = vmatpush.bf16.msra.mxu0 %v1041
      %1065 = vmatmul.bf16.gmra.mxu0 %v1007
      %v1066 = vpop.f32.mrf.mxu0
      %v1067 = vadd.f32 0.0, %v1066
      %v1068 = vpop.f32.mrf.mxu0
      %v1069 = vadd.f32 0.0, %v1068
      %1070 = vdwg.mxu0
      %v1071 = vadd.f32 %v968, %v1067
      %v1072 = vadd.f32 %v969, %v1069
      %v1073 = vlaneseq
      %v1074 = vshrl.u32 %v1073, 7
      %v1075 = vadd.s32 %v1074, 8
      %vm1076 = vcmp.lt.s32.totalorder %v1074, 0
      %v1077 = vsub.s32 0, %v1074
      %v1078 = vsel %vm1076, %v1077, %v1074
      %v1079 = vshrl.u32 %v1078, 2
      %v1080 = vand.u32 %v1078, 3
      %v1081 = vsub.s32 0, %v1080
      %v1082 = vsel %vm1076, %v1081, %v1080
      %vm1083 = vcmp.lt.s32.totalorder %v1075, 0
      %v1084 = vsub.s32 0, %v1075
      %v1085 = vsel %vm1083, %v1084, %v1075
      %v1086 = vshrl.u32 %v1085, 2
      %v1087 = vand.u32 %v1085, 3
      %v1088 = vsub.s32 0, %v1087
      %v1089 = vsel %vm1083, %v1088, %v1087
      %vm1090 = vcmp.ne.s32.totalorder %v1082, 0
      %vm1091 = vcmp.ne.s32.totalorder %v1089, 0
      %vm1092 = vcmp.lt.s32.totalorder %v1082, 0
      %vm1093 = vcmp.lt.s32.totalorder %v1089, 0
      %vm1094 = vmand %vm1092, %vm1090
      %vm1095 = vmand %vm1093, %vm1091
      %v1096 = vadd.s32 %v1082, 4
      %v1097 = vadd.s32 %v1089, 4
      %v1098 = vsel %vm1094, %v1096, %v1082
      %v1099 = vsel %vm1095, %v1097, %v1089
      %vm1100 = vcmp.ne.s32.totalorder %v1098, 0
      %vm1101 = vcmp.ne.s32.totalorder %v1099, 0
      %v1102 = vsel %vm1100, 1, 0
      %v1103 = vsel %vm1101, 1, 0
      %vm1104 = vcmp.eq.s32.totalorder %v1102, 1
      %vm1105 = vcmp.eq.s32.totalorder %v1103, 1
      %v1106 = vsel %vm1104, %v861, 0.0
      %v1107 = vsel %vm1105, %v862, 0.0
      %v1108 = vadd.f32 %v1071, %v1106
      %v1109 = vadd.f32 %v1072, %v1107
      %v1110 = vld [vmem:[%s2] sm:$0x1]
      %v1112 = vperm.slane %v1110, 0
      %v1114 = vadd.f32 %v1108, %v1112
      %v1115 = vadd.f32 %v1109, %v1112
      %vm1116 = vcmp.gt.f32.partialorder %v1114, 0.0
      %vm1117 = vcmp.gt.f32.partialorder %v1115, 0.0
      %v1118 = vmul.f32 %v1114, 0.2
      %v1119 = vmul.f32 %v1115, 0.2
      %v1120 = vsel %vm1116, %v1114, %v1118
      %v1121 = vsel %vm1117, %v1115, %v1119
      %v1122 = vpack.c.bf16 %v1120, %v1120
      %v1123 = vpack.c.bf16 %v1121, %v1121
      %1124 = vst [vmem:[%s170] sm:$0xf] %v1122
      %1125 = vst [vmem:[%s170 + $0x4] sm:$0xf] %v1123
      %s1126 = smul.u32 2, %s14
      %p1127 = scmp.lt.s32.totalorder %s1126, 3
      %s1128 = scalar_select %p1127, %s1126, 3
      %s1129 = smul.addr %s1128, 4
      %s1130 = scalar_lea.vmem %s3, %s1129
      // Predicated region
      $region33: #{discriminator_forward.6} parent=31 // pred_check
        %p1131 = pneg %p100
      $region34: #{discriminator_forward.6} parent=31 // pred_check_branch
        %1133 = sbr.rel (%p1131) target = $region36
      $region35: #{discriminator_forward.6} parent=31 // pred_region
        %s1134 = smul.u32 2, %s14
      $region36: #{discriminator_forward.6} parent=31 // pred_fallthru
        _
    $region32: #{discriminator_forward.6} parent=5 // pred_fallthru
      _
    %p1135 = scmp.le.s32.totalorder 2, %s9
    // Predicated region
    $region37: #{discriminator_forward.6} parent=5 // pred_check
      %p1136 = pneg %p1135
    $region38: #{discriminator_forward.6} parent=5 // pred_check_branch
      %1138 = sbr.rel (%p1136) target = $region40
    $region39: #{discriminator_forward.6} parent=5 // pred_region
      %s1139 = ssub.s32 %s9, 2
      // Predicated region
      $region41: #{discriminator_forward.6} parent=39 // pred_check
        %p1140 = pneg %p106
      $region42: #{discriminator_forward.6} parent=39 // pred_check_branch
        %1142 = sbr.rel (%p1140) target = $region44
      $region43: #{discriminator_forward.6} parent=39 // pred_region
        %s1143 = smul.u32 2, %s15
        %p1144 = scmp.lt.s32.totalorder %s1143, 3
        %s1145 = scalar_select %p1144, %s1143, 3
        %s1146 = smul.addr %s1145, 4
        %s1147 = scalar_lea.vmem %s3, %s1146
      $region44: #{discriminator_forward.6} parent=39 // pred_fallthru
        _
    $region40: #{discriminator_forward.6} parent=5 // pred_fallthru
      _
  $region6: #{discriminator_forward.6} parent=0 // loop_footer
    %s13 = sadd.s32 1, %s9
  $region7: #{discriminator_forward.6} parent=0 // loop_footer_branch
    %8 = sbr.rel target = $region3
  $region8: #{discriminator_forward.6} parent=0 // loop_exit
    _

// kernel: discriminator_forward.7
$region0: #{discriminator_forward.7}
  #allocation0 [shape = 'u32[]', space=smem, size = 0x4, offset = 0x4, fixed_abs, tag = 'smem constant byte address 0x4 - core index']
  #allocation1 [shape = 'u32[72,128]{1,0:T(1,128)}', space=vmem, size = 0x9000, scoped, tag = 'internal scratch']
  %s0 = inlined_call_operand.vmem [shape: bf16[2,4,7,128], index: 0, kind: input, shape index: {}]
  %s1 = inlined_call_operand.vmem [shape: bf16[9,128,256], index: 1, kind: input, shape index: {}]
  %s2 = inlined_call_operand.vmem [shape: f32[1,256], index: 2, kind: input, shape index: {}]
  %s3 = inlined_call_operand.vmem [shape: bf16[4,256,256], index: 3, kind: input, shape index: {}]
  %s4 = inlined_call_operand.vmem [shape: f32[1,256], index: 4, kind: input, shape index: {}]
  %s5 = inlined_call_operand.vmem [shape: bf16[128,128], index: 5, kind: input, shape index: {}]
  %s6 = inlined_call_operand.vmem [shape: f32[1,128], index: 6, kind: input, shape index: {}]
  %s7 = inlined_call_operand.vmem [shape: f32[2,1,128], index: 7, kind: output, shape index: {}]
  %s8 = sld [smem:[#allocation0]]
  $region61: #{discriminator_forward.7} parent=0
    _
  %s10 = ssub.s32 1, %s8
  %s11 = scalar_select 0, %s10, %s8
  loop: start=0, step=1, limit=4
  $region2: #{discriminator_forward.7} parent=0 // loop_pre_header
    _
  $region3: #{discriminator_forward.7} parent=0 // loop_header
    %s13 = sphi 0, %s17
    %p14 = scmp.ge.s32.totalorder %s13, 4
    %s23 = sphi 0, %s25
    %s26 = sphi 0, %s23
    %s27 = sphi 0, %s26
    %s43 = sphi 0, %s27
    %s47 = sphi 0, %s47
    %s49 = sphi 0, %s47
    %s50 = sphi 0, %s49
    %s64 = sphi 0, %s50
    %s68 = sphi 0, %s68
    %s70 = sphi 0, %s68
    %s71 = sphi 0, %s70
    %s85 = sphi 0, %s71
    %s89 = sphi 0, %s89
    %s91 = sphi 0, %s89
    %s92 = sphi 0, %s91
    %s106 = sphi 0, %s92
    %s110 = sphi 0, %s110
    %s112 = sphi 0, %s110
    %s113 = sphi 0, %s112
    %s127 = sphi 0, %s113
    %s131 = sphi 0, %s131
    %s133 = sphi 0, %s131
    %s134 = sphi 0, %s133
    %s148 = sphi 0, %s134
    %s152 = sphi 0, %s152
    %s154 = sphi 0, %s152
    %s155 = sphi 0, %s154
    %s169 = sphi 0, %s155
    %s175 = sphi 0, %s177
    %s178 = sphi 0, %s175
    %s179 = sphi 0, %s178
    %s195 = sphi 0, %s179
  $region4: #{discriminator_forward.7} parent=0 // loop_header_branch
    %16 = sbr.rel (%p14) target = $region8
  $region5: #{discriminator_forward.7} parent=0 // loop_body
    %s18 = ssub.s32 %s13, 1
    %s19 = ssub.s32 %s13, 2
    %s20 = sadd.s32 %s13, 1
    %s21 = ssub.s32 %s13, %s20
    %p22 = scmp.eq.s32.totalorder %s21, 0
    %s24 = sadd.s32 %s23, 1
    %s25 = scalar_select %p22, %s23, %s24
    %p28 = pneg %p22
    %p29 = scmp.eq.s32.totalorder %s13, 1
    %p30 = por %p28, %p29
    %p31 = scmp.ne.s32.totalorder %s23, %s26
    %p32 = scmp.eq.s32.totalorder %s13, 0
    %p33 = por %p31, %p32
    %p34 = scmp.ne.s32.totalorder %s23, %s26
    %p35 = scmp.eq.s32.totalorder %s18, 1
    %p36 = por %p34, %p35
    %p37 = scmp.ne.s32.totalorder %s26, %s27
    %p38 = scmp.eq.s32.totalorder %s18, 0
    %p39 = por %p37, %p38
    %p40 = scmp.ne.s32.totalorder %s26, %s27
    %p41 = scmp.eq.s32.totalorder %s19, 1
    %p42 = por %p40, %p41
    %p44 = scmp.ne.s32.totalorder %s27, %s43
    %p45 = scmp.eq.s32.totalorder %s19, 0
    %p46 = por %p44, %p45
    %s48 = sadd.s32 %s47, 1
    %p51 = scmp.eq.s32.totalorder %s13, 1
    %p52 = scmp.ne.s32.totalorder %s47, %s49
    %p53 = scmp.eq.s32.totalorder %s13, 0
    %p54 = por %p52, %p53
    %p55 = scmp.ne.s32.totalorder %s47, %s49
    %p56 = scmp.eq.s32.totalorder %s18, 1
    %p57 = por %p55, %p56
    %p58 = scmp.ne.s32.totalorder %s49, %s50
    %p59 = scmp.eq.s32.totalorder %s18, 0
    %p60 = por %p58, %p59
    %p61 = scmp.ne.s32.totalorder %s49, %s50
    %p62 = scmp.eq.s32.totalorder %s19, 1
    %p63 = por %p61, %p62
    %p65 = scmp.ne.s32.totalorder %s50, %s64
    %p66 = scmp.eq.s32.totalorder %s19, 0
    %p67 = por %p65, %p66
    %s69 = sadd.s32 %s68, 1
    %p72 = scmp.eq.s32.totalorder %s13, 1
    %p73 = scmp.ne.s32.totalorder %s68, %s70
    %p74 = scmp.eq.s32.totalorder %s13, 0
    %p75 = por %p73, %p74
    %p76 = scmp.ne.s32.totalorder %s68, %s70
    %p77 = scmp.eq.s32.totalorder %s18, 1
    %p78 = por %p76, %p77
    %p79 = scmp.ne.s32.totalorder %s70, %s71
    %p80 = scmp.eq.s32.totalorder %s18, 0
    %p81 = por %p79, %p80
    %p82 = scmp.ne.s32.totalorder %s70, %s71
    %p83 = scmp.eq.s32.totalorder %s19, 1
    %p84 = por %p82, %p83
    %p86 = scmp.ne.s32.totalorder %s71, %s85
    %p87 = scmp.eq.s32.totalorder %s19, 0
    %p88 = por %p86, %p87
    %s90 = sadd.s32 %s89, 1
    %p93 = scmp.eq.s32.totalorder %s13, 1
    %p94 = scmp.ne.s32.totalorder %s89, %s91
    %p95 = scmp.eq.s32.totalorder %s13, 0
    %p96 = por %p94, %p95
    %p97 = scmp.ne.s32.totalorder %s89, %s91
    %p98 = scmp.eq.s32.totalorder %s18, 1
    %p99 = por %p97, %p98
    %p100 = scmp.ne.s32.totalorder %s91, %s92
    %p101 = scmp.eq.s32.totalorder %s18, 0
    %p102 = por %p100, %p101
    %p103 = scmp.ne.s32.totalorder %s91, %s92
    %p104 = scmp.eq.s32.totalorder %s19, 1
    %p105 = por %p103, %p104
    %p107 = scmp.ne.s32.totalorder %s92, %s106
    %p108 = scmp.eq.s32.totalorder %s19, 0
    %p109 = por %p107, %p108
    %s111 = sadd.s32 %s110, 1
    %p114 = scmp.eq.s32.totalorder %s13, 1
    %p115 = scmp.ne.s32.totalorder %s110, %s112
    %p116 = scmp.eq.s32.totalorder %s13, 0
    %p117 = por %p115, %p116
    %p118 = scmp.ne.s32.totalorder %s110, %s112
    %p119 = scmp.eq.s32.totalorder %s18, 1
    %p120 = por %p118, %p119
    %p121 = scmp.ne.s32.totalorder %s112, %s113
    %p122 = scmp.eq.s32.totalorder %s18, 0
    %p123 = por %p121, %p122
    %p124 = scmp.ne.s32.totalorder %s112, %s113
    %p125 = scmp.eq.s32.totalorder %s19, 1
    %p126 = por %p124, %p125
    %p128 = scmp.ne.s32.totalorder %s113, %s127
    %p129 = scmp.eq.s32.totalorder %s19, 0
    %p130 = por %p128, %p129
    %s132 = sadd.s32 %s131, 1
    %p135 = scmp.eq.s32.totalorder %s13, 1
    %p136 = scmp.ne.s32.totalorder %s131, %s133
    %p137 = scmp.eq.s32.totalorder %s13, 0
    %p138 = por %p136, %p137
    %p139 = scmp.ne.s32.totalorder %s131, %s133
    %p140 = scmp.eq.s32.totalorder %s18, 1
    %p141 = por %p139, %p140
    %p142 = scmp.ne.s32.totalorder %s133, %s134
    %p143 = scmp.eq.s32.totalorder %s18, 0
    %p144 = por %p142, %p143
    %p145 = scmp.ne.s32.totalorder %s133, %s134
    %p146 = scmp.eq.s32.totalorder %s19, 1
    %p147 = por %p145, %p146
    %p149 = scmp.ne.s32.totalorder %s134, %s148
    %p150 = scmp.eq.s32.totalorder %s19, 0
    %p151 = por %p149, %p150
    %s153 = sadd.s32 %s152, 1
    %p156 = scmp.eq.s32.totalorder %s13, 1
    %p157 = scmp.ne.s32.totalorder %s152, %s154
    %p158 = scmp.eq.s32.totalorder %s13, 0
    %p159 = por %p157, %p158
    %p160 = scmp.ne.s32.totalorder %s152, %s154
    %p161 = scmp.eq.s32.totalorder %s18, 1
    %p162 = por %p160, %p161
    %p163 = scmp.ne.s32.totalorder %s154, %s155
    %p164 = scmp.eq.s32.totalorder %s18, 0
    %p165 = por %p163, %p164
    %p166 = scmp.ne.s32.totalorder %s154, %s155
    %p167 = scmp.eq.s32.totalorder %s19, 1
    %p168 = por %p166, %p167
    %p170 = scmp.ne.s32.totalorder %s155, %s169
    %p171 = scmp.eq.s32.totalorder %s19, 0
    %p172 = por %p170, %p171
    %s173 = ssub.s32 %s13, %s20
    %p174 = scmp.eq.s32.totalorder %s173, 0
    %s176 = sadd.s32 %s175, 1
    %s177 = scalar_select %p174, %s175, %s176
    %p180 = pneg %p174
    %p181 = scmp.eq.s32.totalorder %s13, 1
    %p182 = por %p180, %p181
    %p183 = scmp.ne.s32.totalorder %s175, %s178
    %p184 = scmp.eq.s32.totalorder %s13, 0
    %p185 = por %p183, %p184
    %p186 = scmp.ne.s32.totalorder %s175, %s178
    %p187 = scmp.eq.s32.totalorder %s18, 1
    %p188 = por %p186, %p187
    %p189 = scmp.ne.s32.totalorder %s178, %s179
    %p190 = scmp.eq.s32.totalorder %s18, 0
    %p191 = por %p189, %p190
    %p192 = scmp.ne.s32.totalorder %s178, %s179
    %p193 = scmp.eq.s32.totalorder %s19, 1
    %p194 = por %p192, %p193
    %p196 = scmp.ne.s32.totalorder %s179, %s195
    %p197 = scmp.eq.s32.totalorder %s19, 0
    %p198 = por %p196, %p197
    %p199 = scmp.le.s32.totalorder 1, %s13
    %p200 = scmp.lt.s32.totalorder %s13, 3
    %p201 = pnand %p199, %p200
    %p202 = pneg %p201
    // Predicated region
    $region9: #{discriminator_forward.7} parent=5 // pred_check
      _
    $region10: #{discriminator_forward.7} parent=5 // pred_check_branch
      %204 = sbr.rel (%p201) target = $region12
    $region11: #{discriminator_forward.7} parent=5 // pred_region
      %s205 = ssub.s32 %s13, 1
      // Predicated region
      $region13: #{discriminator_forward.7} parent=11 // pred_check
        %p206 = pneg %p60
      $region14: #{discriminator_forward.7} parent=11 // pred_check_branch
        %208 = sbr.rel (%p206) target = $region16
      $region15: #{discriminator_forward.7} parent=11 // pred_region
        _
      $region16: #{discriminator_forward.7} parent=11 // pred_fallthru
        _
      // Predicated region
      $region17: #{discriminator_forward.7} parent=11 // pred_check
        %p209 = pneg %p81
      $region18: #{discriminator_forward.7} parent=11 // pred_check_branch
        %211 = sbr.rel (%p209) target = $region20
      $region19: #{discriminator_forward.7} parent=11 // pred_region
        _
      $region20: #{discriminator_forward.7} parent=11 // pred_fallthru
        _
      // Predicated region
      $region21: #{discriminator_forward.7} parent=11 // pred_check
        %p212 = pneg %p102
      $region22: #{discriminator_forward.7} parent=11 // pred_check_branch
        %214 = sbr.rel (%p212) target = $region24
      $region23: #{discriminator_forward.7} parent=11 // pred_region
        _
      $region24: #{discriminator_forward.7} parent=11 // pred_fallthru
        _
      // Predicated region
      $region25: #{discriminator_forward.7} parent=11 // pred_check
        %p215 = pneg %p123
      $region26: #{discriminator_forward.7} parent=11 // pred_check_branch
        %217 = sbr.rel (%p215) target = $region28
      $region27: #{discriminator_forward.7} parent=11 // pred_region
        _
      $region28: #{discriminator_forward.7} parent=11 // pred_fallthru
        _
      // Predicated region
      $region29: #{discriminator_forward.7} parent=11 // pred_check
        %p218 = pneg %p144
      $region30: #{discriminator_forward.7} parent=11 // pred_check_branch
        %220 = sbr.rel (%p218) target = $region32
      $region31: #{discriminator_forward.7} parent=11 // pred_region
        _
      $region32: #{discriminator_forward.7} parent=11 // pred_fallthru
        _
      // Predicated region
      $region33: #{discriminator_forward.7} parent=11 // pred_check
        %p221 = pneg %p165
      $region34: #{discriminator_forward.7} parent=11 // pred_check_branch
        %223 = sbr.rel (%p221) target = $region36
      $region35: #{discriminator_forward.7} parent=11 // pred_region
        _
      $region36: #{discriminator_forward.7} parent=11 // pred_fallthru
        _
    $region12: #{discriminator_forward.7} parent=5 // pred_fallthru
      _
    %p224 = scmp.lt.s32.totalorder %s13, 2
    // Predicated region
    $region37: #{discriminator_forward.7} parent=5 // pred_check
      %p225 = pneg %p224
    $region38: #{discriminator_forward.7} parent=5 // pred_check_branch
      %227 = sbr.rel (%p225) target = $region40
    $region39: #{discriminator_forward.7} parent=5 // pred_region
      // Predicated region
      $region41: #{discriminator_forward.7} parent=39 // pred_check
        %p228 = pneg %p33
      $region42: #{discriminator_forward.7} parent=39 // pred_check_branch
        %230 = sbr.rel (%p228) target = $region44
      $region43: #{discriminator_forward.7} parent=39 // pred_region
        %p231 = scmp.lt.s32.totalorder %s13, 1
        %s232 = scalar_select %p231, %s13, 1
        %s233 = smul.addr %s232, 4
        %s234 = smul.addr %s233, 4
        %s235 = scalar_lea.vmem %s0, %s234
      $region44: #{discriminator_forward.7} parent=39 // pred_fallthru
        _
    $region40: #{discriminator_forward.7} parent=5 // pred_fallthru
      _
    %p236 = scmp.le.s32.totalorder 1, %s13
    %p237 = scmp.lt.s32.totalorder %s13, 3
    %p238 = pnand %p236, %p237
    %p239 = pneg %p238
    // Predicated region
    $region45: #{discriminator_forward.7} parent=5 // pred_check
      _
    $region46: #{discriminator_forward.7} parent=5 // pred_check_branch
      %241 = sbr.rel (%p238) target = $region48
    $region47: #{discriminator_forward.7} parent=5 // pred_region
      %s242 = ssub.s32 %s13, 1
      %p243 = scmp.lt.s32.totalorder %s18, 1
      %s244 = scalar_select %p243, %s18, 1
      %s245 = smul.addr %s244, 4
      %s246 = smul.addr %s245, 4
      %s247 = scalar_lea.vmem %s0, %s246
      %p248 = pneg %p39
      %p249 = pneg %p36
      %p250 = pneg %p60
      %p251 = pneg %p57
      %p252 = pneg %p81
      %p253 = pneg %p78
      %p254 = pneg %p102
      %p255 = pneg %p99
      %p256 = pneg %p123
      %p257 = pneg %p120
      %p258 = pneg %p144
      %p259 = pneg %p141
      %p260 = pneg %p165
      %p261 = pneg %p162
      %p262 = pneg %p191
      %p263 = pneg %p188
      %p264 = scmp.lt.s32.totalorder %s18, 1
      %s265 = scalar_select %p264, %s18, 1
      %s266 = scalar_lea.vmem %s7, %s265
      %p267 = scmp.lt.s32.totalorder %s18, 1
      %s268 = scalar_select %p267, %s18, 1
      %s269 = smul.addr %s268, 4
      %s270 = smul.addr %s269, 4
      %s271 = scalar_lea.vmem %s0, %s270
      %p272 = scmp.lt.s32.totalorder %s18, 1
      %s273 = scalar_select %p272, %s18, 1
      %s274 = scalar_lea.vmem %s7, %s273
      %v275 = vld [vmem:[%s271] sm:$0x2]
      %s276 = scalar_lea.vmem %s1, 512
      %v277 = vld [vmem:[%s276] sm:$0xff]
      %v278 = vld [vmem:[%s276 + $0x8] sm:$0xff]
      %v279 = vld [vmem:[%s276 + $0x10] sm:$0xff]
      %v280 = vld [vmem:[%s276 + $0x18] sm:$0xff]
      %v281 = vld [vmem:[%s276 + $0x20] sm:$0xff]
      %v282 = vld [vmem:[%s276 + $0x28] sm:$0xff]
      %v283 = vld [vmem:[%s276 + $0x30] sm:$0xff]
      %v284 = vld [vmem:[%s276 + $0x38] sm:$0xff]
      %v285 = vld [vmem:[%s276 + $0x40] sm:$0xff]
      %v286 = vld [vmem:[%s276 + $0x48] sm:$0xff]
      %v287 = vld [vmem:[%s276 + $0x50] sm:$0xff]
      %v288 = vld [vmem:[%s276 + $0x58] sm:$0xff]
      %v289 = vld [vmem:[%s276 + $0x60] sm:$0xff]
      %v290 = vld [vmem:[%s276 + $0x68] sm:$0xff]
      %v291 = vld [vmem:[%s276 + $0x70] sm:$0xff]
      %v292 = vld [vmem:[%s276 + $0x78] sm:$0xff]
      %s293 = scalar_lea.vmem %s271, 4
      %v294 = vld [vmem:[%s293] sm:$0x2]
      %s295 = scalar_lea.vmem %s1, 640
      %v296 = vld [vmem:[%s295] sm:$0xff]
      %v297 = vld [vmem:[%s295 + $0x8] sm:$0xff]
      %v298 = vld [vmem:[%s295 + $0x10] sm:$0xff]
      %v299 = vld [vmem:[%s295 + $0x18] sm:$0xff]
      %v300 = vld [vmem:[%s295 + $0x20] sm:$0xff]
      %v301 = vld [vmem:[%s295 + $0x28] sm:$0xff]
      %v302 = vld [vmem:[%s295 + $0x30] sm:$0xff]
      %v303 = vld [vmem:[%s295 + $0x38] sm:$0xff]
      %v304 = vld [vmem:[%s295 + $0x40] sm:$0xff]
      %v305 = vld [vmem:[%s295 + $0x48] sm:$0xff]
      %v306 = vld [vmem:[%s295 + $0x50] sm:$0xff]
      %v307 = vld [vmem:[%s295 + $0x58] sm:$0xff]
      %v308 = vld [vmem:[%s295 + $0x60] sm:$0xff]
      %v309 = vld [vmem:[%s295 + $0x68] sm:$0xff]
      %v310 = vld [vmem:[%s295 + $0x70] sm:$0xff]
      %v311 = vld [vmem:[%s295 + $0x78] sm:$0xff]
      %v313 = vunpack.c.l.b16 %v294
      %v314 = vpack.c.b16 %v313, %v313
      %v316 = vshrl.u32 %v314, 16
      %v318 = vrot.slane %v316, 1
      %v336 = vunpack.c.l.b16 %v296
      %v337 = vunpack.c.h.b16 %v296
      %v338 = vunpack.c.l.b16 %v297
      %v339 = vunpack.c.h.b16 %v297
      %v340 = vunpack.c.l.b16 %v298
      %v341 = vunpack.c.h.b16 %v298
      %v342 = vunpack.c.l.b16 %v299
      %v343 = vunpack.c.h.b16 %v299
      %v344 = vunpack.c.l.b16 %v300
      %v345 = vunpack.c.h.b16 %v300
      %v346 = vunpack.c.l.b16 %v301
      %v347 = vunpack.c.h.b16 %v301
      %v348 = vunpack.c.l.b16 %v302
      %v349 = vunpack.c.h.b16 %v302
      %v350 = vunpack.c.l.b16 %v303
      %v351 = vunpack.c.h.b16 %v303
      %v352 = vunpack.c.l.b16 %v304
      %v353 = vunpack.c.h.b16 %v304
      %v354 = vunpack.c.l.b16 %v305
      %v355 = vunpack.c.h.b16 %v305
      %v356 = vunpack.c.l.b16 %v306
      %v357 = vunpack.c.h.b16 %v306
      %v358 = vunpack.c.l.b16 %v307
      %v359 = vunpack.c.h.b16 %v307
      %v360 = vunpack.c.l.b16 %v308
      %v361 = vunpack.c.h.b16 %v308
      %v362 = vunpack.c.l.b16 %v309
      %v363 = vunpack.c.h.b16 %v309
      %v364 = vunpack.c.l.b16 %v310
      %v365 = vunpack.c.h.b16 %v310
      %v366 = vunpack.c.l.b16 %v311
      %v367 = vunpack.c.h.b16 %v311
      %v368 = vpack.c.b16 %v338, %v336
      %v369 = vpack.c.b16 %v339, %v337
      %v370 = vpack.c.b16 %v342, %v340
      %v371 = vpack.c.b16 %v343, %v341
      %v372 = vpack.c.b16 %v346, %v344
      %v373 = vpack.c.b16 %v347, %v345
      %v374 = vpack.c.b16 %v350, %v348
      %v375 = vpack.c.b16 %v351, %v349
      %v376 = vpack.c.b16 %v354, %v352
      %v377 = vpack.c.b16 %v355, %v353
      %v378 = vpack.c.b16 %v358, %v356
      %v379 = vpack.c.b16 %v359, %v357
      %v380 = vpack.c.b16 %v362, %v360
      %v381 = vpack.c.b16 %v363, %v361
      %v382 = vpack.c.b16 %v366, %v364
      %v383 = vpack.c.b16 %v367, %v365
      %400 = vmatpush.bf16.msra.mxu0 %v382
      %401 = vmatpush.bf16.msra.mxu0 %v380
      %402 = vmatpush.bf16.msra.mxu0 %v378
      %403 = vmatpush.bf16.msra.mxu0 %v376
      %404 = vmatpush.bf16.msra.mxu0 %v374
      %405 = vmatpush.bf16.msra.mxu0 %v372
      %406 = vmatpush.bf16.msra.mxu0 %v370
      %407 = vmatpush.bf16.msra.mxu0 %v368
      %408 = vmatmul.bf16.gmra.mxu0 %v318
      %v409 = vpop.f32.mrf.mxu0
      %v410 = vadd.f32 0.0, %v409
      %v411 = vpop.f32.mrf.mxu0
      %412 = vdwg.mxu0
      %413 = vmatpush.bf16.msra.mxu0 %v383
      %414 = vmatpush.bf16.msra.mxu0 %v381
      %415 = vmatpush.bf16.msra.mxu0 %v379
      %416 = vmatpush.bf16.msra.mxu0 %v377
      %417 = vmatpush.bf16.msra.mxu0 %v375
      %418 = vmatpush.bf16.msra.mxu0 %v373
      %419 = vmatpush.bf16.msra.mxu0 %v371
      %420 = vmatpush.bf16.msra.mxu0 %v369
      %421 = vmatmul.bf16.gmra.mxu0 %v318
      %v422 = vpop.f32.mrf.mxu0
      %v423 = vadd.f32 0.0, %v422
      %v424 = vpop.f32.mrf.mxu0
      %425 = vdwg.mxu0
      %v427 = vunpack.c.l.b16 %v275
      %v428 = vpack.c.b16 %v427, %v427
      %v430 = vshrl.u32 %v428, 16
      %v432 = vrot.slane %v430, 1
      %v450 = vunpack.c.l.b16 %v277
      %v451 = vunpack.c.h.b16 %v277
      %v452 = vunpack.c.l.b16 %v278
      %v453 = vunpack.c.h.b16 %v278
      %v454 = vunpack.c.l.b16 %v279
      %v455 = vunpack.c.h.b16 %v279
      %v456 = vunpack.c.l.b16 %v280
      %v457 = vunpack.c.h.b16 %v280
      %v458 = vunpack.c.l.b16 %v281
      %v459 = vunpack.c.h.b16 %v281
      %v460 = vunpack.c.l.b16 %v282
      %v461 = vunpack.c.h.b16 %v282
      %v462 = vunpack.c.l.b16 %v283
      %v463 = vunpack.c.h.b16 %v283
      %v464 = vunpack.c.l.b16 %v284
      %v465 = vunpack.c.h.b16 %v284
      %v466 = vunpack.c.l.b16 %v285
      %v467 = vunpack.c.h.b16 %v285
      %v468 = vunpack.c.l.b16 %v286
      %v469 = vunpack.c.h.b16 %v286
      %v470 = vunpack.c.l.b16 %v287
      %v471 = vunpack.c.h.b16 %v287
      %v472 = vunpack.c.l.b16 %v288
      %v473 = vunpack.c.h.b16 %v288
      %v474 = vunpack.c.l.b16 %v289
      %v475 = vunpack.c.h.b16 %v289
      %v476 = vunpack.c.l.b16 %v290
      %v477 = vunpack.c.h.b16 %v290
      %v478 = vunpack.c.l.b16 %v291
      %v479 = vunpack.c.h.b16 %v291
      %v480 = vunpack.c.l.b16 %v292
      %v481 = vunpack.c.h.b16 %v292
      %v482 = vpack.c.b16 %v452, %v450
      %v483 = vpack.c.b16 %v453, %v451
      %v484 = vpack.c.b16 %v456, %v454
      %v485 = vpack.c.b16 %v457, %v455
      %v486 = vpack.c.b16 %v460, %v458
      %v487 = vpack.c.b16 %v461, %v459
      %v488 = vpack.c.b16 %v464, %v462
      %v489 = vpack.c.b16 %v465, %v463
      %v490 = vpack.c.b16 %v468, %v466
      %v491 = vpack.c.b16 %v469, %v467
      %v492 = vpack.c.b16 %v472, %v470
      %v493 = vpack.c.b16 %v473, %v471
      %v494 = vpack.c.b16 %v476, %v474
      %v495 = vpack.c.b16 %v477, %v475
      %v496 = vpack.c.b16 %v480, %v478
      %v497 = vpack.c.b16 %v481, %v479
      %514 = vmatpush.bf16.msra.mxu0 %v496
      %515 = vmatpush.bf16.msra.mxu0 %v494
      %516 = vmatpush.bf16.msra.mxu0 %v492
      %517 = vmatpush.bf16.msra.mxu0 %v490
      %518 = vmatpush.bf16.msra.mxu0 %v488
      %519 = vmatpush.bf16.msra.mxu0 %v486
      %520 = vmatpush.bf16.msra.mxu0 %v484
      %521 = vmatpush.bf16.msra.mxu0 %v482
      %522 = vmatmul.bf16.gmra.mxu0 %v432
      %v523 = vpop.f32.mrf.mxu0
      %v524 = vadd.f32 %v410, %v523
      %v525 = vpop.f32.mrf.mxu0
      %526 = vdwg.mxu0
      %527 = vmatpush.bf16.msra.mxu0 %v497
      %528 = vmatpush.bf16.msra.mxu0 %v495
      %529 = vmatpush.bf16.msra.mxu0 %v493
      %530 = vmatpush.bf16.msra.mxu0 %v491
      %531 = vmatpush.bf16.msra.mxu0 %v489
      %532 = vmatpush.bf16.msra.mxu0 %v487
      %533 = vmatpush.bf16.msra.mxu0 %v485
      %534 = vmatpush.bf16.msra.mxu0 %v483
      %535 = vmatmul.bf16.gmra.mxu0 %v432
      %v536 = vpop.f32.mrf.mxu0
      %v537 = vadd.f32 %v423, %v536
      %v538 = vpop.f32.mrf.mxu0
      %539 = vdwg.mxu0
      %s540 = scalar_lea.vmem %s271, 8
      %v541 = vld [vmem:[%s540] sm:$0x2]
      %s542 = scalar_lea.vmem %s1, 896
      %v543 = vld [vmem:[%s542] sm:$0xff]
      %v544 = vld [vmem:[%s542 + $0x8] sm:$0xff]
      %v545 = vld [vmem:[%s542 + $0x10] sm:$0xff]
      %v546 = vld [vmem:[%s542 + $0x18] sm:$0xff]
      %v547 = vld [vmem:[%s542 + $0x20] sm:$0xff]
      %v548 = vld [vmem:[%s542 + $0x28] sm:$0xff]
      %v549 = vld [vmem:[%s542 + $0x30] sm:$0xff]
      %v550 = vld [vmem:[%s542 + $0x38] sm:$0xff]
      %v551 = vld [vmem:[%s542 + $0x40] sm:$0xff]
      %v552 = vld [vmem:[%s542 + $0x48] sm:$0xff]
      %v553 = vld [vmem:[%s542 + $0x50] sm:$0xff]
      %v554 = vld [vmem:[%s542 + $0x58] sm:$0xff]
      %v555 = vld [vmem:[%s542 + $0x60] sm:$0xff]
      %v556 = vld [vmem:[%s542 + $0x68] sm:$0xff]
      %v557 = vld [vmem:[%s542 + $0x70] sm:$0xff]
      %v558 = vld [vmem:[%s542 + $0x78] sm:$0xff]
      %v560 = vunpack.c.l.b16 %v541
      %v561 = vpack.c.b16 %v560, %v560
      %v563 = vshrl.u32 %v561, 16
      %v565 = vrot.slane %v563, 1
      %v583 = vunpack.c.l.b16 %v543
      %v584 = vunpack.c.h.b16 %v543
      %v585 = vunpack.c.l.b16 %v544
      %v586 = vunpack.c.h.b16 %v544
      %v587 = vunpack.c.l.b16 %v545
      %v588 = vunpack.c.h.b16 %v545
      %v589 = vunpack.c.l.b16 %v546
      %v590 = vunpack.c.h.b16 %v546
      %v591 = vunpack.c.l.b16 %v547
      %v592 = vunpack.c.h.b16 %v547
      %v593 = vunpack.c.l.b16 %v548
      %v594 = vunpack.c.h.b16 %v548
      %v595 = vunpack.c.l.b16 %v549
      %v596 = vunpack.c.h.b16 %v549
      %v597 = vunpack.c.l.b16 %v550
      %v598 = vunpack.c.h.b16 %v550
      %v599 = vunpack.c.l.b16 %v551
      %v600 = vunpack.c.h.b16 %v551
      %v601 = vunpack.c.l.b16 %v552
      %v602 = vunpack.c.h.b16 %v552
      %v603 = vunpack.c.l.b16 %v553
      %v604 = vunpack.c.h.b16 %v553
      %v605 = vunpack.c.l.b16 %v554
      %v606 = vunpack.c.h.b16 %v554
      %v607 = vunpack.c.l.b16 %v555
      %v608 = vunpack.c.h.b16 %v555
      %v609 = vunpack.c.l.b16 %v556
      %v610 = vunpack.c.h.b16 %v556
      %v611 = vunpack.c.l.b16 %v557
      %v612 = vunpack.c.h.b16 %v557
      %v613 = vunpack.c.l.b16 %v558
      %v614 = vunpack.c.h.b16 %v558
      %v615 = vpack.c.b16 %v585, %v583
      %v616 = vpack.c.b16 %v586, %v584
      %v617 = vpack.c.b16 %v589, %v587
      %v618 = vpack.c.b16 %v590, %v588
      %v619 = vpack.c.b16 %v593, %v591
      %v620 = vpack.c.b16 %v594, %v592
      %v621 = vpack.c.b16 %v597, %v595
      %v622 = vpack.c.b16 %v598, %v596
      %v623 = vpack.c.b16 %v601, %v599
      %v624 = vpack.c.b16 %v602, %v600
      %v625 = vpack.c.b16 %v605, %v603
      %v626 = vpack.c.b16 %v606, %v604
      %v627 = vpack.c.b16 %v609, %v607
      %v628 = vpack.c.b16 %v610, %v608
      %v629 = vpack.c.b16 %v613, %v611
      %v630 = vpack.c.b16 %v614, %v612
      %647 = vmatpush.bf16.msra.mxu0 %v629
      %648 = vmatpush.bf16.msra.mxu0 %v627
      %649 = vmatpush.bf16.msra.mxu0 %v625
      %650 = vmatpush.bf16.msra.mxu0 %v623
      %651 = vmatpush.bf16.msra.mxu0 %v621
      %652 = vmatpush.bf16.msra.mxu0 %v619
      %653 = vmatpush.bf16.msra.mxu0 %v617
      %654 = vmatpush.bf16.msra.mxu0 %v615
      %655 = vmatmul.bf16.gmra.mxu0 %v565
      %v656 = vpop.f32.mrf.mxu0
      %v657 = vadd.f32 0.0, %v656
      %v658 = vpop.f32.mrf.mxu0
      %659 = vdwg.mxu0
      %660 = vmatpush.bf16.msra.mxu0 %v630
      %661 = vmatpush.bf16.msra.mxu0 %v628
      %662 = vmatpush.bf16.msra.mxu0 %v626
      %663 = vmatpush.bf16.msra.mxu0 %v624
      %664 = vmatpush.bf16.msra.mxu0 %v622
      %665 = vmatpush.bf16.msra.mxu0 %v620
      %666 = vmatpush.bf16.msra.mxu0 %v618
      %667 = vmatpush.bf16.msra.mxu0 %v616
      %668 = vmatmul.bf16.gmra.mxu0 %v565
      %v669 = vpop.f32.mrf.mxu0
      %v670 = vadd.f32 0.0, %v669
      %v671 = vpop.f32.mrf.mxu0
      %672 = vdwg.mxu0
      %v673 = vadd.f32 %v524, %v657
      %v674 = vadd.f32 %v537, %v670
      %s675 = scalar_lea.vmem %s271, 12
      %v676 = vld [vmem:[%s675] sm:$0x2]
      %s677 = scalar_lea.vmem %s1, 1024
      %v678 = vld [vmem:[%s677] sm:$0xff]
      %v679 = vld [vmem:[%s677 + $0x8] sm:$0xff]
      %v680 = vld [vmem:[%s677 + $0x10] sm:$0xff]
      %v681 = vld [vmem:[%s677 + $0x18] sm:$0xff]
      %v682 = vld [vmem:[%s677 + $0x20] sm:$0xff]
      %v683 = vld [vmem:[%s677 + $0x28] sm:$0xff]
      %v684 = vld [vmem:[%s677 + $0x30] sm:$0xff]
      %v685 = vld [vmem:[%s677 + $0x38] sm:$0xff]
      %v686 = vld [vmem:[%s677 + $0x40] sm:$0xff]
      %v687 = vld [vmem:[%s677 + $0x48] sm:$0xff]
      %v688 = vld [vmem:[%s677 + $0x50] sm:$0xff]
      %v689 = vld [vmem:[%s677 + $0x58] sm:$0xff]
      %v690 = vld [vmem:[%s677 + $0x60] sm:$0xff]
      %v691 = vld [vmem:[%s677 + $0x68] sm:$0xff]
      %v692 = vld [vmem:[%s677 + $0x70] sm:$0xff]
      %v693 = vld [vmem:[%s677 + $0x78] sm:$0xff]
      %v695 = vunpack.c.l.b16 %v676
      %v696 = vpack.c.b16 %v695, %v695
      %v698 = vshrl.u32 %v696, 16
      %v700 = vrot.slane %v698, 1
      %v718 = vunpack.c.l.b16 %v678
      %v719 = vunpack.c.h.b16 %v678
      %v720 = vunpack.c.l.b16 %v679
      %v721 = vunpack.c.h.b16 %v679
      %v722 = vunpack.c.l.b16 %v680
      %v723 = vunpack.c.h.b16 %v680
      %v724 = vunpack.c.l.b16 %v681
      %v725 = vunpack.c.h.b16 %v681
      %v726 = vunpack.c.l.b16 %v682
      %v727 = vunpack.c.h.b16 %v682
      %v728 = vunpack.c.l.b16 %v683
      %v729 = vunpack.c.h.b16 %v683
      %v730 = vunpack.c.l.b16 %v684
      %v731 = vunpack.c.h.b16 %v684
      %v732 = vunpack.c.l.b16 %v685
      %v733 = vunpack.c.h.b16 %v685
      %v734 = vunpack.c.l.b16 %v686
      %v735 = vunpack.c.h.b16 %v686
      %v736 = vunpack.c.l.b16 %v687
      %v737 = vunpack.c.h.b16 %v687
      %v738 = vunpack.c.l.b16 %v688
      %v739 = vunpack.c.h.b16 %v688
      %v740 = vunpack.c.l.b16 %v689
      %v741 = vunpack.c.h.b16 %v689
      %v742 = vunpack.c.l.b16 %v690
      %v743 = vunpack.c.h.b16 %v690
      %v744 = vunpack.c.l.b16 %v691
      %v745 = vunpack.c.h.b16 %v691
      %v746 = vunpack.c.l.b16 %v692
      %v747 = vunpack.c.h.b16 %v692
      %v748 = vunpack.c.l.b16 %v693
      %v749 = vunpack.c.h.b16 %v693
      %v750 = vpack.c.b16 %v720, %v718
      %v751 = vpack.c.b16 %v721, %v719
      %v752 = vpack.c.b16 %v724, %v722
      %v753 = vpack.c.b16 %v725, %v723
      %v754 = vpack.c.b16 %v728, %v726
      %v755 = vpack.c.b16 %v729, %v727
      %v756 = vpack.c.b16 %v732, %v730
      %v757 = vpack.c.b16 %v733, %v731
      %v758 = vpack.c.b16 %v736, %v734
      %v759 = vpack.c.b16 %v737, %v735
      %v760 = vpack.c.b16 %v740, %v738
      %v761 = vpack.c.b16 %v741, %v739
      %v762 = vpack.c.b16 %v744, %v742
      %v763 = vpack.c.b16 %v745, %v743
      %v764 = vpack.c.b16 %v748, %v746
      %v765 = vpack.c.b16 %v749, %v747
      %782 = vmatpush.bf16.msra.mxu0 %v764
      %783 = vmatpush.bf16.msra.mxu0 %v762
      %784 = vmatpush.bf16.msra.mxu0 %v760
      %785 = vmatpush.bf16.msra.mxu0 %v758
      %786 = vmatpush.bf16.msra.mxu0 %v756
      %787 = vmatpush.bf16.msra.mxu0 %v754
      %788 = vmatpush.bf16.msra.mxu0 %v752
      %789 = vmatpush.bf16.msra.mxu0 %v750
      %790 = vmatmul.bf16.gmra.mxu0 %v700
      %v791 = vpop.f32.mrf.mxu0
      %v792 = vadd.f32 0.0, %v791
      %v793 = vpop.f32.mrf.mxu0
      %794 = vdwg.mxu0
      %795 = vmatpush.bf16.msra.mxu0 %v765
      %796 = vmatpush.bf16.msra.mxu0 %v763
      %797 = vmatpush.bf16.msra.mxu0 %v761
      %798 = vmatpush.bf16.msra.mxu0 %v759
      %799 = vmatpush.bf16.msra.mxu0 %v757
      %800 = vmatpush.bf16.msra.mxu0 %v755
      %801 = vmatpush.bf16.msra.mxu0 %v753
      %802 = vmatpush.bf16.msra.mxu0 %v751
      %803 = vmatmul.bf16.gmra.mxu0 %v700
      %v804 = vpop.f32.mrf.mxu0
      %v805 = vadd.f32 0.0, %v804
      %v806 = vpop.f32.mrf.mxu0
      %807 = vdwg.mxu0
      %v808 = vadd.f32 %v673, %v792
      %v809 = vadd.f32 %v674, %v805
      %v810 = vld [vmem:[%s2] sm:$0x3]
      %v812 = vperm.slane %v810, 0
      %v813 = vperm.slane %v810, 1
      %v816 = vadd.f32 %v808, %v812
      %v817 = vadd.f32 %v809, %v813
      %vm818 = vcmp.gt.f32.partialorder %v816, 0.0
      %vm819 = vcmp.gt.f32.partialorder %v817, 0.0
      %v820 = vmul.f32 %v816, 0.2
      %v821 = vmul.f32 %v817, 0.2
      %v822 = vsel %vm818, %v816, %v820
      %v823 = vsel %vm819, %v817, %v821
      %v824 = vpack.c.bf16 %v822, %v822
      %v825 = vpack.c.bf16 %v823, %v823
      %v826 = vld [vmem:[%s3] sm:$0xff]
      %v827 = vld [vmem:[%s3 + $0x8] sm:$0xff]
      %v828 = vld [vmem:[%s3 + $0x10] sm:$0xff]
      %v829 = vld [vmem:[%s3 + $0x18] sm:$0xff]
      %v830 = vld [vmem:[%s3 + $0x20] sm:$0xff]
      %v831 = vld [vmem:[%s3 + $0x28] sm:$0xff]
      %v832 = vld [vmem:[%s3 + $0x30] sm:$0xff]
      %v833 = vld [vmem:[%s3 + $0x38] sm:$0xff]
      %v834 = vld [vmem:[%s3 + $0x40] sm:$0xff]
      %v835 = vld [vmem:[%s3 + $0x48] sm:$0xff]
      %v836 = vld [vmem:[%s3 + $0x50] sm:$0xff]
      %v837 = vld [vmem:[%s3 + $0x58] sm:$0xff]
      %v838 = vld [vmem:[%s3 + $0x60] sm:$0xff]
      %v839 = vld [vmem:[%s3 + $0x68] sm:$0xff]
      %v840 = vld [vmem:[%s3 + $0x70] sm:$0xff]
      %v841 = vld [vmem:[%s3 + $0x78] sm:$0xff]
      %v842 = vld [vmem:[%s3 + $0x80] sm:$0xff]
      %v843 = vld [vmem:[%s3 + $0x88] sm:$0xff]
      %v844 = vld [vmem:[%s3 + $0x90] sm:$0xff]
      %v845 = vld [vmem:[%s3 + $0x98] sm:$0xff]
      %v846 = vld [vmem:[%s3 + $0xa0] sm:$0xff]
      %v847 = vld [vmem:[%s3 + $0xa8] sm:$0xff]
      %v848 = vld [vmem:[%s3 + $0xb0] sm:$0xff]
      %v849 = vld [vmem:[%s3 + $0xb8] sm:$0xff]
      %v850 = vld [vmem:[%s3 + $0xc0] sm:$0xff]
      %v851 = vld [vmem:[%s3 + $0xc8] sm:$0xff]
      %v852 = vld [vmem:[%s3 + $0xd0] sm:$0xff]
      %v853 = vld [vmem:[%s3 + $0xd8] sm:$0xff]
      %v854 = vld [vmem:[%s3 + $0xe0] sm:$0xff]
      %v855 = vld [vmem:[%s3 + $0xe8] sm:$0xff]
      %v856 = vld [vmem:[%s3 + $0xf0] sm:$0xff]
      %v857 = vld [vmem:[%s3 + $0xf8] sm:$0xff]
      %s858 = scalar_lea.vmem %s1, 384
      %v859 = vld [vmem:[%s858] sm:$0xff]
      %v860 = vld [vmem:[%s858 + $0x8] sm:$0xff]
      %v861 = vld [vmem:[%s858 + $0x10] sm:$0xff]
      %v862 = vld [vmem:[%s858 + $0x18] sm:$0xff]
      %v863 = vld [vmem:[%s858 + $0x20] sm:$0xff]
      %v864 = vld [vmem:[%s858 + $0x28] sm:$0xff]
      %v865 = vld [vmem:[%s858 + $0x30] sm:$0xff]
      %v866 = vld [vmem:[%s858 + $0x38] sm:$0xff]
      %v867 = vld [vmem:[%s858 + $0x40] sm:$0xff]
      %v868 = vld [vmem:[%s858 + $0x48] sm:$0xff]
      %v869 = vld [vmem:[%s858 + $0x50] sm:$0xff]
      %v870 = vld [vmem:[%s858 + $0x58] sm:$0xff]
      %v871 = vld [vmem:[%s858 + $0x60] sm:$0xff]
      %v872 = vld [vmem:[%s858 + $0x68] sm:$0xff]
      %v873 = vld [vmem:[%s858 + $0x70] sm:$0xff]
      %v874 = vld [vmem:[%s858 + $0x78] sm:$0xff]
      %v875 = vld [vmem:[%s271] sm:$0x4]
      %v877 = vunpack.c.l.b16 %v875
      %v878 = vpack.c.b16 %v877, %v877
      %v879 = vrot.slane %v878, 2
      %881 = vmatpush.bf16.msra.mxu0 %v496
      %882 = vmatpush.bf16.msra.mxu0 %v494
      %883 = vmatpush.bf16.msra.mxu0 %v492
      %884 = vmatpush.bf16.msra.mxu0 %v490
      %885 = vmatpush.bf16.msra.mxu0 %v488
      %886 = vmatpush.bf16.msra.mxu0 %v486
      %887 = vmatpush.bf16.msra.mxu0 %v484
      %888 = vmatpush.bf16.msra.mxu0 %v482
      %889 = vmatmul.bf16.gmra.mxu0 %v879
      %v890 = vpop.f32.mrf.mxu0
      %v891 = vadd.f32 0.0, %v890
      %v892 = vpop.f32.mrf.mxu0
      %893 = vdwg.mxu0
      %894 = vmatpush.bf16.msra.mxu0 %v497
      %895 = vmatpush.bf16.msra.mxu0 %v495
      %896 = vmatpush.bf16.msra.mxu0 %v493
      %897 = vmatpush.bf16.msra.mxu0 %v491
      %898 = vmatpush.bf16.msra.mxu0 %v489
      %899 = vmatpush.bf16.msra.mxu0 %v487
      %900 = vmatpush.bf16.msra.mxu0 %v485
      %901 = vmatpush.bf16.msra.mxu0 %v483
      %902 = vmatmul.bf16.gmra.mxu0 %v879
      %v903 = vpop.f32.mrf.mxu0
      %v904 = vadd.f32 0.0, %v903
      %v905 = vpop.f32.mrf.mxu0
      %906 = vdwg.mxu0
      %v923 = vunpack.c.l.b16 %v859
      %v924 = vunpack.c.h.b16 %v859
      %v925 = vunpack.c.l.b16 %v860
      %v926 = vunpack.c.h.b16 %v860
      %v927 = vunpack.c.l.b16 %v861
      %v928 = vunpack.c.h.b16 %v861
      %v929 = vunpack.c.l.b16 %v862
      %v930 = vunpack.c.h.b16 %v862
      %v931 = vunpack.c.l.b16 %v863
      %v932 = vunpack.c.h.b16 %v863
      %v933 = vunpack.c.l.b16 %v864
      %v934 = vunpack.c.h.b16 %v864
      %v935 = vunpack.c.l.b16 %v865
      %v936 = vunpack.c.h.b16 %v865
      %v937 = vunpack.c.l.b16 %v866
      %v938 = vunpack.c.h.b16 %v866
      %v939 = vunpack.c.l.b16 %v867
      %v940 = vunpack.c.h.b16 %v867
      %v941 = vunpack.c.l.b16 %v868
      %v942 = vunpack.c.h.b16 %v868
      %v943 = vunpack.c.l.b16 %v869
      %v944 = vunpack.c.h.b16 %v869
      %v945 = vunpack.c.l.b16 %v870
      %v946 = vunpack.c.h.b16 %v870
      %v947 = vunpack.c.l.b16 %v871
      %v948 = vunpack.c.h.b16 %v871
      %v949 = vunpack.c.l.b16 %v872
      %v950 = vunpack.c.h.b16 %v872
      %v951 = vunpack.c.l.b16 %v873
      %v952 = vunpack.c.h.b16 %v873
      %v953 = vunpack.c.l.b16 %v874
      %v954 = vunpack.c.h.b16 %v874
      %v955 = vpack.c.b16 %v925, %v923
      %v956 = vpack.c.b16 %v926, %v924
      %v957 = vpack.c.b16 %v929, %v927
      %v958 = vpack.c.b16 %v930, %v928
      %v959 = vpack.c.b16 %v933, %v931
      %v960 = vpack.c.b16 %v934, %v932
      %v961 = vpack.c.b16 %v937, %v935
      %v962 = vpack.c.b16 %v938, %v936
      %v963 = vpack.c.b16 %v941, %v939
      %v964 = vpack.c.b16 %v942, %v940
      %v965 = vpack.c.b16 %v945, %v943
      %v966 = vpack.c.b16 %v946, %v944
      %v967 = vpack.c.b16 %v949, %v947
      %v968 = vpack.c.b16 %v950, %v948
      %v969 = vpack.c.b16 %v953, %v951
      %v970 = vpack.c.b16 %v954, %v952
      %987 = vmatpush.bf16.msra.mxu0 %v969
      %988 = vmatpush.bf16.msra.mxu0 %v967
      %989 = vmatpush.bf16.msra.mxu0 %v965
      %990 = vmatpush.bf16.msra.mxu0 %v963
      %991 = vmatpush.bf16.msra.mxu0 %v961
      %992 = vmatpush.bf16.msra.mxu0 %v959
      %993 = vmatpush.bf16.msra.mxu0 %v957
      %994 = vmatpush.bf16.msra.mxu0 %v955
      %995 = vmatmul.bf16.gmra.mxu0 %v318
      %v996 = vpop.f32.mrf.mxu0
      %v997 = vadd.f32 %v891, %v996
      %v998 = vpop.f32.mrf.mxu0
      %999 = vdwg.mxu0
      %1000 = vmatpush.bf16.msra.mxu0 %v970
      %1001 = vmatpush.bf16.msra.mxu0 %v968
      %1002 = vmatpush.bf16.msra.mxu0 %v966
      %1003 = vmatpush.bf16.msra.mxu0 %v964
      %1004 = vmatpush.bf16.msra.mxu0 %v962
      %1005 = vmatpush.bf16.msra.mxu0 %v960
      %1006 = vmatpush.bf16.msra.mxu0 %v958
      %1007 = vmatpush.bf16.msra.mxu0 %v956
      %1008 = vmatmul.bf16.gmra.mxu0 %v318
      %v1009 = vpop.f32.mrf.mxu0
      %v1010 = vadd.f32 %v904, %v1009
      %v1011 = vpop.f32.mrf.mxu0
      %1012 = vdwg.mxu0
      %v1013 = vld [vmem:[%s293] sm:$0x4]
      %v1015 = vunpack.c.l.b16 %v1013
      %v1016 = vpack.c.b16 %v1015, %v1015
      %v1017 = vrot.slane %v1016, 2
      %1019 = vmatpush.bf16.msra.mxu0 %v382
      %1020 = vmatpush.bf16.msra.mxu0 %v380
      %1021 = vmatpush.bf16.msra.mxu0 %v378
      %1022 = vmatpush.bf16.msra.mxu0 %v376
      %1023 = vmatpush.bf16.msra.mxu0 %v374
      %1024 = vmatpush.bf16.msra.mxu0 %v372
      %1025 = vmatpush.bf16.msra.mxu0 %v370
      %1026 = vmatpush.bf16.msra.mxu0 %v368
      %1027 = vmatmul.bf16.gmra.mxu0 %v1017
      %v1028 = vpop.f32.mrf.mxu0
      %v1029 = vadd.f32 0.0, %v1028
      %v1030 = vpop.f32.mrf.mxu0
      %1031 = vdwg.mxu0
      %1032 = vmatpush.bf16.msra.mxu0 %v383
      %1033 = vmatpush.bf16.msra.mxu0 %v381
      %1034 = vmatpush.bf16.msra.mxu0 %v379
      %1035 = vmatpush.bf16.msra.mxu0 %v377
      %1036 = vmatpush.bf16.msra.mxu0 %v375
      %1037 = vmatpush.bf16.msra.mxu0 %v373
      %1038 = vmatpush.bf16.msra.mxu0 %v371
      %1039 = vmatpush.bf16.msra.mxu0 %v369
      %1040 = vmatmul.bf16.gmra.mxu0 %v1017
      %v1041 = vpop.f32.mrf.mxu0
      %v1042 = vadd.f32 0.0, %v1041
      %v1043 = vpop.f32.mrf.mxu0
      %1044 = vdwg.mxu0
      %v1045 = vadd.f32 %v997, %v1029
      %v1046 = vadd.f32 %v1010, %v1042
      %s1047 = scalar_lea.vmem %s1, 768
      %v1048 = vld [vmem:[%s1047] sm:$0xff]
      %v1049 = vld [vmem:[%s1047 + $0x8] sm:$0xff]
      %v1050 = vld [vmem:[%s1047 + $0x10] sm:$0xff]
      %v1051 = vld [vmem:[%s1047 + $0x18] sm:$0xff]
      %v1052 = vld [vmem:[%s1047 + $0x20] sm:$0xff]
      %v1053 = vld [vmem:[%s1047 + $0x28] sm:$0xff]
      %v1054 = vld [vmem:[%s1047 + $0x30] sm:$0xff]
      %v1055 = vld [vmem:[%s1047 + $0x38] sm:$0xff]
      %v1056 = vld [vmem:[%s1047 + $0x40] sm:$0xff]
      %v1057 = vld [vmem:[%s1047 + $0x48] sm:$0xff]
      %v1058 = vld [vmem:[%s1047 + $0x50] sm:$0xff]
      %v1059 = vld [vmem:[%s1047 + $0x58] sm:$0xff]
      %v1060 = vld [vmem:[%s1047 + $0x60] sm:$0xff]
      %v1061 = vld [vmem:[%s1047 + $0x68] sm:$0xff]
      %v1062 = vld [vmem:[%s1047 + $0x70] sm:$0xff]
      %v1063 = vld [vmem:[%s1047 + $0x78] sm:$0xff]
      %v1080 = vunpack.c.l.b16 %v1048
      %v1081 = vunpack.c.h.b16 %v1048
      %v1082 = vunpack.c.l.b16 %v1049
      %v1083 = vunpack.c.h.b16 %v1049
      %v1084 = vunpack.c.l.b16 %v1050
      %v1085 = vunpack.c.h.b16 %v1050
      %v1086 = vunpack.c.l.b16 %v1051
      %v1087 = vunpack.c.h.b16 %v1051
      %v1088 = vunpack.c.l.b16 %v1052
      %v1089 = vunpack.c.h.b16 %v1052
      %v1090 = vunpack.c.l.b16 %v1053
      %v1091 = vunpack.c.h.b16 %v1053
      %v1092 = vunpack.c.l.b16 %v1054
      %v1093 = vunpack.c.h.b16 %v1054
      %v1094 = vunpack.c.l.b16 %v1055
      %v1095 = vunpack.c.h.b16 %v1055
      %v1096 = vunpack.c.l.b16 %v1056
      %v1097 = vunpack.c.h.b16 %v1056
      %v1098 = vunpack.c.l.b16 %v1057
      %v1099 = vunpack.c.h.b16 %v1057
      %v1100 = vunpack.c.l.b16 %v1058
      %v1101 = vunpack.c.h.b16 %v1058
      %v1102 = vunpack.c.l.b16 %v1059
      %v1103 = vunpack.c.h.b16 %v1059
      %v1104 = vunpack.c.l.b16 %v1060
      %v1105 = vunpack.c.h.b16 %v1060
      %v1106 = vunpack.c.l.b16 %v1061
      %v1107 = vunpack.c.h.b16 %v1061
      %v1108 = vunpack.c.l.b16 %v1062
      %v1109 = vunpack.c.h.b16 %v1062
      %v1110 = vunpack.c.l.b16 %v1063
      %v1111 = vunpack.c.h.b16 %v1063
      %v1112 = vpack.c.b16 %v1082, %v1080
      %v1113 = vpack.c.b16 %v1083, %v1081
      %v1114 = vpack.c.b16 %v1086, %v1084
      %v1115 = vpack.c.b16 %v1087, %v1085
      %v1116 = vpack.c.b16 %v1090, %v1088
      %v1117 = vpack.c.b16 %v1091, %v1089
      %v1118 = vpack.c.b16 %v1094, %v1092
      %v1119 = vpack.c.b16 %v1095, %v1093
      %v1120 = vpack.c.b16 %v1098, %v1096
      %v1121 = vpack.c.b16 %v1099, %v1097
      %v1122 = vpack.c.b16 %v1102, %v1100
      %v1123 = vpack.c.b16 %v1103, %v1101
      %v1124 = vpack.c.b16 %v1106, %v1104
      %v1125 = vpack.c.b16 %v1107, %v1105
      %v1126 = vpack.c.b16 %v1110, %v1108
      %v1127 = vpack.c.b16 %v1111, %v1109
      %1144 = vmatpush.bf16.msra.mxu0 %v1126
      %1145 = vmatpush.bf16.msra.mxu0 %v1124
      %1146 = vmatpush.bf16.msra.mxu0 %v1122
      %1147 = vmatpush.bf16.msra.mxu0 %v1120
      %1148 = vmatpush.bf16.msra.mxu0 %v1118
      %1149 = vmatpush.bf16.msra.mxu0 %v1116
      %1150 = vmatpush.bf16.msra.mxu0 %v1114
      %1151 = vmatpush.bf16.msra.mxu0 %v1112
      %1152 = vmatmul.bf16.gmra.mxu0 %v700
      %v1153 = vpop.f32.mrf.mxu0
      %v1154 = vadd.f32 0.0, %v1153
      %v1155 = vpop.f32.mrf.mxu0
      %1156 = vdwg.mxu0
      %1157 = vmatpush.bf16.msra.mxu0 %v1127
      %1158 = vmatpush.bf16.msra.mxu0 %v1125
      %1159 = vmatpush.bf16.msra.mxu0 %v1123
      %1160 = vmatpush.bf16.msra.mxu0 %v1121
      %1161 = vmatpush.bf16.msra.mxu0 %v1119
      %1162 = vmatpush.bf16.msra.mxu0 %v1117
      %1163 = vmatpush.bf16.msra.mxu0 %v1115
      %1164 = vmatpush.bf16.msra.mxu0 %v1113
      %1165 = vmatmul.bf16.gmra.mxu0 %v700
      %v1166 = vpop.f32.mrf.mxu0
      %v1167 = vadd.f32 0.0, %v1166
      %v1168 = vpop.f32.mrf.mxu0
      %1169 = vdwg.mxu0
      %v1170 = vadd.f32 %v1045, %v1154
      %v1171 = vadd.f32 %v1046, %v1167
      %v1172 = vld [vmem:[%s540] sm:$0x4]
      %v1174 = vunpack.c.l.b16 %v1172
      %v1175 = vpack.c.b16 %v1174, %v1174
      %v1176 = vrot.slane %v1175, 2
      %1178 = vmatpush.bf16.msra.mxu0 %v629
      %1179 = vmatpush.bf16.msra.mxu0 %v627
      %1180 = vmatpush.bf16.msra.mxu0 %v625
      %1181 = vmatpush.bf16.msra.mxu0 %v623
      %1182 = vmatpush.bf16.msra.mxu0 %v621
      %1183 = vmatpush.bf16.msra.mxu0 %v619
      %1184 = vmatpush.bf16.msra.mxu0 %v617
      %1185 = vmatpush.bf16.msra.mxu0 %v615
      %1186 = vmatmul.bf16.gmra.mxu0 %v1176
      %v1187 = vpop.f32.mrf.mxu0
      %v1188 = vadd.f32 0.0, %v1187
      %v1189 = vpop.f32.mrf.mxu0
      %1190 = vdwg.mxu0
      %1191 = vmatpush.bf16.msra.mxu0 %v630
      %1192 = vmatpush.bf16.msra.mxu0 %v628
      %1193 = vmatpush.bf16.msra.mxu0 %v626
      %1194 = vmatpush.bf16.msra.mxu0 %v624
      %1195 = vmatpush.bf16.msra.mxu0 %v622
      %1196 = vmatpush.bf16.msra.mxu0 %v620
      %1197 = vmatpush.bf16.msra.mxu0 %v618
      %1198 = vmatpush.bf16.msra.mxu0 %v616
      %1199 = vmatmul.bf16.gmra.mxu0 %v1176
      %v1200 = vpop.f32.mrf.mxu0
      %v1201 = vadd.f32 0.0, %v1200
      %v1202 = vpop.f32.mrf.mxu0
      %1203 = vdwg.mxu0
      %v1204 = vadd.f32 %v1170, %v1188
      %v1205 = vadd.f32 %v1171, %v1201
      %v1206 = vld [vmem:[%s675] sm:$0x4]
      %v1208 = vunpack.c.l.b16 %v1206
      %v1209 = vpack.c.b16 %v1208, %v1208
      %v1210 = vrot.slane %v1209, 2
      %1212 = vmatpush.bf16.msra.mxu0 %v764
      %1213 = vmatpush.bf16.msra.mxu0 %v762
      %1214 = vmatpush.bf16.msra.mxu0 %v760
      %1215 = vmatpush.bf16.msra.mxu0 %v758
      %1216 = vmatpush.bf16.msra.mxu0 %v756
      %1217 = vmatpush.bf16.msra.mxu0 %v754
      %1218 = vmatpush.bf16.msra.mxu0 %v752
      %1219 = vmatpush.bf16.msra.mxu0 %v750
      %1220 = vmatmul.bf16.gmra.mxu0 %v1210
      %v1221 = vpop.f32.mrf.mxu0
      %v1222 = vadd.f32 0.0, %v1221
      %v1223 = vpop.f32.mrf.mxu0
      %1224 = vdwg.mxu0
      %1225 = vmatpush.bf16.msra.mxu0 %v765
      %1226 = vmatpush.bf16.msra.mxu0 %v763
      %1227 = vmatpush.bf16.msra.mxu0 %v761
      %1228 = vmatpush.bf16.msra.mxu0 %v759
      %1229 = vmatpush.bf16.msra.mxu0 %v757
      %1230 = vmatpush.bf16.msra.mxu0 %v755
      %1231 = vmatpush.bf16.msra.mxu0 %v753
      %1232 = vmatpush.bf16.msra.mxu0 %v751
      %1233 = vmatmul.bf16.gmra.mxu0 %v1210
      %v1234 = vpop.f32.mrf.mxu0
      %v1235 = vadd.f32 0.0, %v1234
      %v1236 = vpop.f32.mrf.mxu0
      %1237 = vdwg.mxu0
      %v1238 = vadd.f32 %v1204, %v1222
      %v1239 = vadd.f32 %v1205, %v1235
      %v1240 = vadd.f32 %v1238, %v812
      %v1241 = vadd.f32 %v1239, %v813
      %vm1242 = vcmp.gt.f32.partialorder %v1240, 0.0
      %vm1243 = vcmp.gt.f32.partialorder %v1241, 0.0
      %v1244 = vmul.f32 %v1240, 0.2
      %v1245 = vmul.f32 %v1241, 0.2
      %v1246 = vsel %vm1242, %v1240, %v1244
      %v1247 = vsel %vm1243, %v1241, %v1245
      %v1248 = vpack.c.bf16 %v1246, %v1246
      %v1249 = vpack.c.bf16 %v1247, %v1247
      %s1250 = scalar_lea.vmem %s3, 256
      %v1251 = vld [vmem:[%s1250] sm:$0xff]
      %v1252 = vld [vmem:[%s1250 + $0x8] sm:$0xff]
      %v1253 = vld [vmem:[%s1250 + $0x10] sm:$0xff]
      %v1254 = vld [vmem:[%s1250 + $0x18] sm:$0xff]
      %v1255 = vld [vmem:[%s1250 + $0x20] sm:$0xff]
      %v1256 = vld [vmem:[%s1250 + $0x28] sm:$0xff]
      %v1257 = vld [vmem:[%s1250 + $0x30] sm:$0xff]
      %v1258 = vld [vmem:[%s1250 + $0x38] sm:$0xff]
      %v1259 = vld [vmem:[%s1250 + $0x40] sm:$0xff]
      %v1260 = vld [vmem:[%s1250 + $0x48] sm:$0xff]
      %v1261 = vld [vmem:[%s1250 + $0x50] sm:$0xff]
      %v1262 = vld [vmem:[%s1250 + $0x58] sm:$0xff]
      %v1263 = vld [vmem:[%s1250 + $0x60] sm:$0xff]
      %v1264 = vld [vmem:[%s1250 + $0x68] sm:$0xff]
      %v1265 = vld [vmem:[%s1250 + $0x70] sm:$0xff]
      %v1266 = vld [vmem:[%s1250 + $0x78] sm:$0xff]
      %v1267 = vld [vmem:[%s1250 + $0x80] sm:$0xff]
      %v1268 = vld [vmem:[%s1250 + $0x88] sm:$0xff]
      %v1269 = vld [vmem:[%s1250 + $0x90] sm:$0xff]
      %v1270 = vld [vmem:[%s1250 + $0x98] sm:$0xff]
      %v1271 = vld [vmem:[%s1250 + $0xa0] sm:$0xff]
      %v1272 = vld [vmem:[%s1250 + $0xa8] sm:$0xff]
      %v1273 = vld [vmem:[%s1250 + $0xb0] sm:$0xff]
      %v1274 = vld [vmem:[%s1250 + $0xb8] sm:$0xff]
      %v1275 = vld [vmem:[%s1250 + $0xc0] sm:$0xff]
      %v1276 = vld [vmem:[%s1250 + $0xc8] sm:$0xff]
      %v1277 = vld [vmem:[%s1250 + $0xd0] sm:$0xff]
      %v1278 = vld [vmem:[%s1250 + $0xd8] sm:$0xff]
      %v1279 = vld [vmem:[%s1250 + $0xe0] sm:$0xff]
      %v1280 = vld [vmem:[%s1250 + $0xe8] sm:$0xff]
      %v1281 = vld [vmem:[%s1250 + $0xf0] sm:$0xff]
      %v1282 = vld [vmem:[%s1250 + $0xf8] sm:$0xff]
      %v1315 = vunpack.c.l.b16 %v1251
      %v1316 = vunpack.c.h.b16 %v1251
      %v1317 = vunpack.c.l.b16 %v1252
      %v1318 = vunpack.c.h.b16 %v1252
      %v1319 = vunpack.c.l.b16 %v1253
      %v1320 = vunpack.c.h.b16 %v1253
      %v1321 = vunpack.c.l.b16 %v1254
      %v1322 = vunpack.c.h.b16 %v1254
      %v1323 = vunpack.c.l.b16 %v1255
      %v1324 = vunpack.c.h.b16 %v1255
      %v1325 = vunpack.c.l.b16 %v1256
      %v1326 = vunpack.c.h.b16 %v1256
      %v1327 = vunpack.c.l.b16 %v1257
      %v1328 = vunpack.c.h.b16 %v1257
      %v1329 = vunpack.c.l.b16 %v1258
      %v1330 = vunpack.c.h.b16 %v1258
      %v1331 = vunpack.c.l.b16 %v1259
      %v1332 = vunpack.c.h.b16 %v1259
      %v1333 = vunpack.c.l.b16 %v1260
      %v1334 = vunpack.c.h.b16 %v1260
      %v1335 = vunpack.c.l.b16 %v1261
      %v1336 = vunpack.c.h.b16 %v1261
      %v1337 = vunpack.c.l.b16 %v1262
      %v1338 = vunpack.c.h.b16 %v1262
      %v1339 = vunpack.c.l.b16 %v1263
      %v1340 = vunpack.c.h.b16 %v1263
      %v1341 = vunpack.c.l.b16 %v1264
      %v1342 = vunpack.c.h.b16 %v1264
      %v1343 = vunpack.c.l.b16 %v1265
      %v1344 = vunpack.c.h.b16 %v1265
      %v1345 = vunpack.c.l.b16 %v1266
      %v1346 = vunpack.c.h.b16 %v1266
      %v1347 = vunpack.c.l.b16 %v1267
      %v1348 = vunpack.c.h.b16 %v1267
      %v1349 = vunpack.c.l.b16 %v1268
      %v1350 = vunpack.c.h.b16 %v1268
      %v1351 = vunpack.c.l.b16 %v1269
      %v1352 = vunpack.c.h.b16 %v1269
      %v1353 = vunpack.c.l.b16 %v1270
      %v1354 = vunpack.c.h.b16 %v1270
      %v1355 = vunpack.c.l.b16 %v1271
      %v1356 = vunpack.c.h.b16 %v1271
      %v1357 = vunpack.c.l.b16 %v1272
      %v1358 = vunpack.c.h.b16 %v1272
      %v1359 = vunpack.c.l.b16 %v1273
      %v1360 = vunpack.c.h.b16 %v1273
      %v1361 = vunpack.c.l.b16 %v1274
      %v1362 = vunpack.c.h.b16 %v1274
      %v1363 = vunpack.c.l.b16 %v1275
      %v1364 = vunpack.c.h.b16 %v1275
      %v1365 = vunpack.c.l.b16 %v1276
      %v1366 = vunpack.c.h.b16 %v1276
      %v1367 = vunpack.c.l.b16 %v1277
      %v1368 = vunpack.c.h.b16 %v1277
      %v1369 = vunpack.c.l.b16 %v1278
      %v1370 = vunpack.c.h.b16 %v1278
      %v1371 = vunpack.c.l.b16 %v1279
      %v1372 = vunpack.c.h.b16 %v1279
      %v1373 = vunpack.c.l.b16 %v1280
      %v1374 = vunpack.c.h.b16 %v1280
      %v1375 = vunpack.c.l.b16 %v1281
      %v1376 = vunpack.c.h.b16 %v1281
      %v1377 = vunpack.c.l.b16 %v1282
      %v1378 = vunpack.c.h.b16 %v1282
      %v1379 = vpack.c.b16 %v1317, %v1315
      %v1380 = vpack.c.b16 %v1318, %v1316
      %v1381 = vpack.c.b16 %v1321, %v1319
      %v1382 = vpack.c.b16 %v1322, %v1320
      %v1383 = vpack.c.b16 %v1325, %v1323
      %v1384 = vpack.c.b16 %v1326, %v1324
      %v1385 = vpack.c.b16 %v1329, %v1327
      %v1386 = vpack.c.b16 %v1330, %v1328
      %v1387 = vpack.c.b16 %v1333, %v1331
      %v1388 = vpack.c.b16 %v1334, %v1332
      %v1389 = vpack.c.b16 %v1337, %v1335
      %v1390 = vpack.c.b16 %v1338, %v1336
      %v1391 = vpack.c.b16 %v1341, %v1339
      %v1392 = vpack.c.b16 %v1342, %v1340
      %v1393 = vpack.c.b16 %v1345, %v1343
      %v1394 = vpack.c.b16 %v1346, %v1344
      %v1395 = vpack.c.b16 %v1349, %v1347
      %v1396 = vpack.c.b16 %v1350, %v1348
      %v1397 = vpack.c.b16 %v1353, %v1351
      %v1398 = vpack.c.b16 %v1354, %v1352
      %v1399 = vpack.c.b16 %v1357, %v1355
      %v1400 = vpack.c.b16 %v1358, %v1356
      %v1401 = vpack.c.b16 %v1361, %v1359
      %v1402 = vpack.c.b16 %v1362, %v1360
      %v1403 = vpack.c.b16 %v1365, %v1363
      %v1404 = vpack.c.b16 %v1366, %v1364
      %v1405 = vpack.c.b16 %v1369, %v1367
      %v1406 = vpack.c.b16 %v1370, %v1368
      %v1407 = vpack.c.b16 %v1373, %v1371
      %v1408 = vpack.c.b16 %v1374, %v1372
      %v1409 = vpack.c.b16 %v1377, %v1375
      %v1410 = vpack.c.b16 %v1378, %v1376
      %1443 = vmatpush.bf16.msra.mxu0 %v1393
      %1444 = vmatpush.bf16.msra.mxu0 %v1391
      %1445 = vmatpush.bf16.msra.mxu0 %v1389
      %1446 = vmatpush.bf16.msra.mxu0 %v1387
      %1447 = vmatpush.bf16.msra.mxu0 %v1385
      %1448 = vmatpush.bf16.msra.mxu0 %v1383
      %1449 = vmatpush.bf16.msra.mxu0 %v1381
      %1450 = vmatpush.bf16.msra.mxu0 %v1379
      %1451 = vmatmul.bf16.gmra.mxu0 %v1248
      %v1452 = vpop.f32.mrf.mxu0
      %v1453 = vadd.f32 0.0, %v1452
      %v1454 = vpop.f32.mrf.mxu0
      %1455 = vdwg.mxu0
      %1456 = vmatpush.bf16.msra.mxu0 %v1409
      %1457 = vmatpush.bf16.msra.mxu0 %v1407
      %1458 = vmatpush.bf16.msra.mxu0 %v1405
      %1459 = vmatpush.bf16.msra.mxu0 %v1403
      %1460 = vmatpush.bf16.msra.mxu0 %v1401
      %1461 = vmatpush.bf16.msra.mxu0 %v1399
      %1462 = vmatpush.bf16.msra.mxu0 %v1397
      %1463 = vmatpush.bf16.msra.mxu0 %v1395
      %1464 = vmatmul.bf16.gmra.mxu0 %v1249
      %v1465 = vpop.f32.mrf.mxu0
      %v1466 = vadd.f32 %v1453, %v1465
      %v1467 = vpop.f32.mrf.mxu0
      %1468 = vdwg.mxu0
      %1469 = vmatpush.bf16.msra.mxu0 %v1394
      %1470 = vmatpush.bf16.msra.mxu0 %v1392
      %1471 = vmatpush.bf16.msra.mxu0 %v1390
      %1472 = vmatpush.bf16.msra.mxu0 %v1388
      %1473 = vmatpush.bf16.msra.mxu0 %v1386
      %1474 = vmatpush.bf16.msra.mxu0 %v1384
      %1475 = vmatpush.bf16.msra.mxu0 %v1382
      %1476 = vmatpush.bf16.msra.mxu0 %v1380
      %1477 = vmatmul.bf16.gmra.mxu0 %v1248
      %v1478 = vpop.f32.mrf.mxu0
      %v1479 = vadd.f32 0.0, %v1478
      %v1480 = vpop.f32.mrf.mxu0
      %1481 = vdwg.mxu0
      %1482 = vmatpush.bf16.msra.mxu0 %v1410
      %1483 = vmatpush.bf16.msra.mxu0 %v1408
      %1484 = vmatpush.bf16.msra.mxu0 %v1406
      %1485 = vmatpush.bf16.msra.mxu0 %v1404
      %1486 = vmatpush.bf16.msra.mxu0 %v1402
      %1487 = vmatpush.bf16.msra.mxu0 %v1400
      %1488 = vmatpush.bf16.msra.mxu0 %v1398
      %1489 = vmatpush.bf16.msra.mxu0 %v1396
      %1490 = vmatmul.bf16.gmra.mxu0 %v1249
      %v1491 = vpop.f32.mrf.mxu0
      %v1492 = vadd.f32 %v1479, %v1491
      %v1493 = vpop.f32.mrf.mxu0
      %1494 = vdwg.mxu0
      %v1527 = vunpack.c.l.b16 %v826
      %v1528 = vunpack.c.h.b16 %v826
      %v1529 = vunpack.c.l.b16 %v827
      %v1530 = vunpack.c.h.b16 %v827
      %v1531 = vunpack.c.l.b16 %v828
      %v1532 = vunpack.c.h.b16 %v828
      %v1533 = vunpack.c.l.b16 %v829
      %v1534 = vunpack.c.h.b16 %v829
      %v1535 = vunpack.c.l.b16 %v830
      %v1536 = vunpack.c.h.b16 %v830
      %v1537 = vunpack.c.l.b16 %v831
      %v1538 = vunpack.c.h.b16 %v831
      %v1539 = vunpack.c.l.b16 %v832
      %v1540 = vunpack.c.h.b16 %v832
      %v1541 = vunpack.c.l.b16 %v833
      %v1542 = vunpack.c.h.b16 %v833
      %v1543 = vunpack.c.l.b16 %v834
      %v1544 = vunpack.c.h.b16 %v834
      %v1545 = vunpack.c.l.b16 %v835
      %v1546 = vunpack.c.h.b16 %v835
      %v1547 = vunpack.c.l.b16 %v836
      %v1548 = vunpack.c.h.b16 %v836
      %v1549 = vunpack.c.l.b16 %v837
      %v1550 = vunpack.c.h.b16 %v837
      %v1551 = vunpack.c.l.b16 %v838
      %v1552 = vunpack.c.h.b16 %v838
      %v1553 = vunpack.c.l.b16 %v839
      %v1554 = vunpack.c.h.b16 %v839
      %v1555 = vunpack.c.l.b16 %v840
      %v1556 = vunpack.c.h.b16 %v840
      %v1557 = vunpack.c.l.b16 %v841
      %v1558 = vunpack.c.h.b16 %v841
      %v1559 = vunpack.c.l.b16 %v842
      %v1560 = vunpack.c.h.b16 %v842
      %v1561 = vunpack.c.l.b16 %v843
      %v1562 = vunpack.c.h.b16 %v843
      %v1563 = vunpack.c.l.b16 %v844
      %v1564 = vunpack.c.h.b16 %v844
      %v1565 = vunpack.c.l.b16 %v845
      %v1566 = vunpack.c.h.b16 %v845
      %v1567 = vunpack.c.l.b16 %v846
      %v1568 = vunpack.c.h.b16 %v846
      %v1569 = vunpack.c.l.b16 %v847
      %v1570 = vunpack.c.h.b16 %v847
      %v1571 = vunpack.c.l.b16 %v848
      %v1572 = vunpack.c.h.b16 %v848
      %v1573 = vunpack.c.l.b16 %v849
      %v1574 = vunpack.c.h.b16 %v849
      %v1575 = vunpack.c.l.b16 %v850
      %v1576 = vunpack.c.h.b16 %v850
      %v1577 = vunpack.c.l.b16 %v851
      %v1578 = vunpack.c.h.b16 %v851
      %v1579 = vunpack.c.l.b16 %v852
      %v1580 = vunpack.c.h.b16 %v852
      %v1581 = vunpack.c.l.b16 %v853
      %v1582 = vunpack.c.h.b16 %v853
      %v1583 = vunpack.c.l.b16 %v854
      %v1584 = vunpack.c.h.b16 %v854
      %v1585 = vunpack.c.l.b16 %v855
      %v1586 = vunpack.c.h.b16 %v855
      %v1587 = vunpack.c.l.b16 %v856
      %v1588 = vunpack.c.h.b16 %v856
      %v1589 = vunpack.c.l.b16 %v857
      %v1590 = vunpack.c.h.b16 %v857
      %v1591 = vpack.c.b16 %v1529, %v1527
      %v1592 = vpack.c.b16 %v1530, %v1528
      %v1593 = vpack.c.b16 %v1533, %v1531
      %v1594 = vpack.c.b16 %v1534, %v1532
      %v1595 = vpack.c.b16 %v1537, %v1535
      %v1596 = vpack.c.b16 %v1538, %v1536
      %v1597 = vpack.c.b16 %v1541, %v1539
      %v1598 = vpack.c.b16 %v1542, %v1540
      %v1599 = vpack.c.b16 %v1545, %v1543
      %v1600 = vpack.c.b16 %v1546, %v1544
      %v1601 = vpack.c.b16 %v1549, %v1547
      %v1602 = vpack.c.b16 %v1550, %v1548
      %v1603 = vpack.c.b16 %v1553, %v1551
      %v1604 = vpack.c.b16 %v1554, %v1552
      %v1605 = vpack.c.b16 %v1557, %v1555
      %v1606 = vpack.c.b16 %v1558, %v1556
      %v1607 = vpack.c.b16 %v1561, %v1559
      %v1608 = vpack.c.b16 %v1562, %v1560
      %v1609 = vpack.c.b16 %v1565, %v1563
      %v1610 = vpack.c.b16 %v1566, %v1564
      %v1611 = vpack.c.b16 %v1569, %v1567
      %v1612 = vpack.c.b16 %v1570, %v1568
      %v1613 = vpack.c.b16 %v1573, %v1571
      %v1614 = vpack.c.b16 %v1574, %v1572
      %v1615 = vpack.c.b16 %v1577, %v1575
      %v1616 = vpack.c.b16 %v1578, %v1576
      %v1617 = vpack.c.b16 %v1581, %v1579
      %v1618 = vpack.c.b16 %v1582, %v1580
      %v1619 = vpack.c.b16 %v1585, %v1583
      %v1620 = vpack.c.b16 %v1586, %v1584
      %v1621 = vpack.c.b16 %v1589, %v1587
      %v1622 = vpack.c.b16 %v1590, %v1588
      %1655 = vmatpush.bf16.msra.mxu0 %v1605
      %1656 = vmatpush.bf16.msra.mxu0 %v1603
      %1657 = vmatpush.bf16.msra.mxu0 %v1601
      %1658 = vmatpush.bf16.msra.mxu0 %v1599
      %1659 = vmatpush.bf16.msra.mxu0 %v1597
      %1660 = vmatpush.bf16.msra.mxu0 %v1595
      %1661 = vmatpush.bf16.msra.mxu0 %v1593
      %1662 = vmatpush.bf16.msra.mxu0 %v1591
      %1663 = vmatmul.bf16.gmra.mxu0 %v824
      %v1664 = vpop.f32.mrf.mxu0
      %v1665 = vadd.f32 %v1466, %v1664
      %v1666 = vpop.f32.mrf.mxu0
      %1667 = vdwg.mxu0
      %1668 = vmatpush.bf16.msra.mxu0 %v1621
      %1669 = vmatpush.bf16.msra.mxu0 %v1619
      %1670 = vmatpush.bf16.msra.mxu0 %v1617
      %1671 = vmatpush.bf16.msra.mxu0 %v1615
      %1672 = vmatpush.bf16.msra.mxu0 %v1613
      %1673 = vmatpush.bf16.msra.mxu0 %v1611
      %1674 = vmatpush.bf16.msra.mxu0 %v1609
      %1675 = vmatpush.bf16.msra.mxu0 %v1607
      %1676 = vmatmul.bf16.gmra.mxu0 %v825
      %v1677 = vpop.f32.mrf.mxu0
      %v1678 = vadd.f32 %v1665, %v1677
      %v1679 = vpop.f32.mrf.mxu0
      %1680 = vdwg.mxu0
      %1681 = vmatpush.bf16.msra.mxu0 %v1606
      %1682 = vmatpush.bf16.msra.mxu0 %v1604
      %1683 = vmatpush.bf16.msra.mxu0 %v1602
      %1684 = vmatpush.bf16.msra.mxu0 %v1600
      %1685 = vmatpush.bf16.msra.mxu0 %v1598
      %1686 = vmatpush.bf16.msra.mxu0 %v1596
      %1687 = vmatpush.bf16.msra.mxu0 %v1594
      %1688 = vmatpush.bf16.msra.mxu0 %v1592
      %1689 = vmatmul.bf16.gmra.mxu0 %v824
      %v1690 = vpop.f32.mrf.mxu0
      %v1691 = vadd.f32 %v1492, %v1690
      %v1692 = vpop.f32.mrf.mxu0
      %1693 = vdwg.mxu0
      %1694 = vmatpush.bf16.msra.mxu0 %v1622
      %1695 = vmatpush.bf16.msra.mxu0 %v1620
      %1696 = vmatpush.bf16.msra.mxu0 %v1618
      %1697 = vmatpush.bf16.msra.mxu0 %v1616
      %1698 = vmatpush.bf16.msra.mxu0 %v1614
      %1699 = vmatpush.bf16.msra.mxu0 %v1612
      %1700 = vmatpush.bf16.msra.mxu0 %v1610
      %1701 = vmatpush.bf16.msra.mxu0 %v1608
      %1702 = vmatmul.bf16.gmra.mxu0 %v825
      %v1703 = vpop.f32.mrf.mxu0
      %v1704 = vadd.f32 %v1691, %v1703
      %v1705 = vpop.f32.mrf.mxu0
      %1706 = vdwg.mxu0
      %s1707 = scalar_lea.vmem %s1, 128
      %v1708 = vld [vmem:[%s1707] sm:$0xff]
      %v1709 = vld [vmem:[%s1707 + $0x8] sm:$0xff]
      %v1710 = vld [vmem:[%s1707 + $0x10] sm:$0xff]
      %v1711 = vld [vmem:[%s1707 + $0x18] sm:$0xff]
      %v1712 = vld [vmem:[%s1707 + $0x20] sm:$0xff]
      %v1713 = vld [vmem:[%s1707 + $0x28] sm:$0xff]
      %v1714 = vld [vmem:[%s1707 + $0x30] sm:$0xff]
      %v1715 = vld [vmem:[%s1707 + $0x38] sm:$0xff]
      %v1716 = vld [vmem:[%s1707 + $0x40] sm:$0xff]
      %v1717 = vld [vmem:[%s1707 + $0x48] sm:$0xff]
      %v1718 = vld [vmem:[%s1707 + $0x50] sm:$0xff]
      %v1719 = vld [vmem:[%s1707 + $0x58] sm:$0xff]
      %v1720 = vld [vmem:[%s1707 + $0x60] sm:$0xff]
      %v1721 = vld [vmem:[%s1707 + $0x68] sm:$0xff]
      %v1722 = vld [vmem:[%s1707 + $0x70] sm:$0xff]
      %v1723 = vld [vmem:[%s1707 + $0x78] sm:$0xff]
      %s1724 = scalar_lea.vmem %s1, 256
      %v1725 = vld [vmem:[%s1724] sm:$0xff]
      %v1726 = vld [vmem:[%s1724 + $0x8] sm:$0xff]
      %v1727 = vld [vmem:[%s1724 + $0x10] sm:$0xff]
      %v1728 = vld [vmem:[%s1724 + $0x18] sm:$0xff]
      %v1729 = vld [vmem:[%s1724 + $0x20] sm:$0xff]
      %v1730 = vld [vmem:[%s1724 + $0x28] sm:$0xff]
      %v1731 = vld [vmem:[%s1724 + $0x30] sm:$0xff]
      %v1732 = vld [vmem:[%s1724 + $0x38] sm:$0xff]
      %v1733 = vld [vmem:[%s1724 + $0x40] sm:$0xff]
      %v1734 = vld [vmem:[%s1724 + $0x48] sm:$0xff]
      %v1735 = vld [vmem:[%s1724 + $0x50] sm:$0xff]
      %v1736 = vld [vmem:[%s1724 + $0x58] sm:$0xff]
      %v1737 = vld [vmem:[%s1724 + $0x60] sm:$0xff]
      %v1738 = vld [vmem:[%s1724 + $0x68] sm:$0xff]
      %v1739 = vld [vmem:[%s1724 + $0x70] sm:$0xff]
      %v1740 = vld [vmem:[%s1724 + $0x78] sm:$0xff]
      %v1757 = vunpack.c.l.b16 %v1725
      %v1758 = vunpack.c.h.b16 %v1725
      %v1759 = vunpack.c.l.b16 %v1726
      %v1760 = vunpack.c.h.b16 %v1726
      %v1761 = vunpack.c.l.b16 %v1727
      %v1762 = vunpack.c.h.b16 %v1727
      %v1763 = vunpack.c.l.b16 %v1728
      %v1764 = vunpack.c.h.b16 %v1728
      %v1765 = vunpack.c.l.b16 %v1729
      %v1766 = vunpack.c.h.b16 %v1729
      %v1767 = vunpack.c.l.b16 %v1730
      %v1768 = vunpack.c.h.b16 %v1730
      %v1769 = vunpack.c.l.b16 %v1731
      %v1770 = vunpack.c.h.b16 %v1731
      %v1771 = vunpack.c.l.b16 %v1732
      %v1772 = vunpack.c.h.b16 %v1732
      %v1773 = vunpack.c.l.b16 %v1733
      %v1774 = vunpack.c.h.b16 %v1733
      %v1775 = vunpack.c.l.b16 %v1734
      %v1776 = vunpack.c.h.b16 %v1734
      %v1777 = vunpack.c.l.b16 %v1735
      %v1778 = vunpack.c.h.b16 %v1735
      %v1779 = vunpack.c.l.b16 %v1736
      %v1780 = vunpack.c.h.b16 %v1736
      %v1781 = vunpack.c.l.b16 %v1737
      %v1782 = vunpack.c.h.b16 %v1737
      %v1783 = vunpack.c.l.b16 %v1738
      %v1784 = vunpack.c.h.b16 %v1738
      %v1785 = vunpack.c.l.b16 %v1739
      %v1786 = vunpack.c.h.b16 %v1739
      %v1787 = vunpack.c.l.b16 %v1740
      %v1788 = vunpack.c.h.b16 %v1740
      %v1789 = vpack.c.b16 %v1759, %v1757
      %v1790 = vpack.c.b16 %v1760, %v1758
      %v1791 = vpack.c.b16 %v1763, %v1761
      %v1792 = vpack.c.b16 %v1764, %v1762
      %v1793 = vpack.c.b16 %v1767, %v1765
      %v1794 = vpack.c.b16 %v1768, %v1766
      %v1795 = vpack.c.b16 %v1771, %v1769
      %v1796 = vpack.c.b16 %v1772, %v1770
      %v1797 = vpack.c.b16 %v1775, %v1773
      %v1798 = vpack.c.b16 %v1776, %v1774
      %v1799 = vpack.c.b16 %v1779, %v1777
      %v1800 = vpack.c.b16 %v1780, %v1778
      %v1801 = vpack.c.b16 %v1783, %v1781
      %v1802 = vpack.c.b16 %v1784, %v1782
      %v1803 = vpack.c.b16 %v1787, %v1785
      %v1804 = vpack.c.b16 %v1788, %v1786
      %1821 = vmatpush.bf16.msra.mxu0 %v1803
      %1822 = vmatpush.bf16.msra.mxu0 %v1801
      %1823 = vmatpush.bf16.msra.mxu0 %v1799
      %1824 = vmatpush.bf16.msra.mxu0 %v1797
      %1825 = vmatpush.bf16.msra.mxu0 %v1795
      %1826 = vmatpush.bf16.msra.mxu0 %v1793
      %1827 = vmatpush.bf16.msra.mxu0 %v1791
      %1828 = vmatpush.bf16.msra.mxu0 %v1789
      %1829 = vmatmul.bf16.gmra.mxu0 %v700
      %v1830 = vpop.f32.mrf.mxu0
      %v1831 = vadd.f32 0.0, %v1830
      %v1832 = vpop.f32.mrf.mxu0
      %1833 = vdwg.mxu0
      %1834 = vmatpush.bf16.msra.mxu0 %v1804
      %1835 = vmatpush.bf16.msra.mxu0 %v1802
      %1836 = vmatpush.bf16.msra.mxu0 %v1800
      %1837 = vmatpush.bf16.msra.mxu0 %v1798
      %1838 = vmatpush.bf16.msra.mxu0 %v1796
      %1839 = vmatpush.bf16.msra.mxu0 %v1794
      %1840 = vmatpush.bf16.msra.mxu0 %v1792
      %1841 = vmatpush.bf16.msra.mxu0 %v1790
      %1842 = vmatmul.bf16.gmra.mxu0 %v700
      %v1843 = vpop.f32.mrf.mxu0
      %v1844 = vadd.f32 0.0, %v1843
      %v1845 = vpop.f32.mrf.mxu0
      %1846 = vdwg.mxu0
      %v1863 = vunpack.c.l.b16 %v1708
      %v1864 = vunpack.c.h.b16 %v1708
      %v1865 = vunpack.c.l.b16 %v1709
      %v1866 = vunpack.c.h.b16 %v1709
      %v1867 = vunpack.c.l.b16 %v1710
      %v1868 = vunpack.c.h.b16 %v1710
      %v1869 = vunpack.c.l.b16 %v1711
      %v1870 = vunpack.c.h.b16 %v1711
      %v1871 = vunpack.c.l.b16 %v1712
      %v1872 = vunpack.c.h.b16 %v1712
      %v1873 = vunpack.c.l.b16 %v1713
      %v1874 = vunpack.c.h.b16 %v1713
      %v1875 = vunpack.c.l.b16 %v1714
      %v1876 = vunpack.c.h.b16 %v1714
      %v1877 = vunpack.c.l.b16 %v1715
      %v1878 = vunpack.c.h.b16 %v1715
      %v1879 = vunpack.c.l.b16 %v1716
      %v1880 = vunpack.c.h.b16 %v1716
      %v1881 = vunpack.c.l.b16 %v1717
      %v1882 = vunpack.c.h.b16 %v1717
      %v1883 = vunpack.c.l.b16 %v1718
      %v1884 = vunpack.c.h.b16 %v1718
      %v1885 = vunpack.c.l.b16 %v1719
      %v1886 = vunpack.c.h.b16 %v1719
      %v1887 = vunpack.c.l.b16 %v1720
      %v1888 = vunpack.c.h.b16 %v1720
      %v1889 = vunpack.c.l.b16 %v1721
      %v1890 = vunpack.c.h.b16 %v1721
      %v1891 = vunpack.c.l.b16 %v1722
      %v1892 = vunpack.c.h.b16 %v1722
      %v1893 = vunpack.c.l.b16 %v1723
      %v1894 = vunpack.c.h.b16 %v1723
      %v1895 = vpack.c.b16 %v1865, %v1863
      %v1896 = vpack.c.b16 %v1866, %v1864
      %v1897 = vpack.c.b16 %v1869, %v1867
      %v1898 = vpack.c.b16 %v1870, %v1868
      %v1899 = vpack.c.b16 %v1873, %v1871
      %v1900 = vpack.c.b16 %v1874, %v1872
      %v1901 = vpack.c.b16 %v1877, %v1875
      %v1902 = vpack.c.b16 %v1878, %v1876
      %v1903 = vpack.c.b16 %v1881, %v1879
      %v1904 = vpack.c.b16 %v1882, %v1880
      %v1905 = vpack.c.b16 %v1885, %v1883
      %v1906 = vpack.c.b16 %v1886, %v1884
      %v1907 = vpack.c.b16 %v1889, %v1887
      %v1908 = vpack.c.b16 %v1890, %v1888
      %v1909 = vpack.c.b16 %v1893, %v1891
      %v1910 = vpack.c.b16 %v1894, %v1892
      %1927 = vmatpush.bf16.msra.mxu0 %v1909
      %1928 = vmatpush.bf16.msra.mxu0 %v1907
      %1929 = vmatpush.bf16.msra.mxu0 %v1905
      %1930 = vmatpush.bf16.msra.mxu0 %v1903
      %1931 = vmatpush.bf16.msra.mxu0 %v1901
      %1932 = vmatpush.bf16.msra.mxu0 %v1899
      %1933 = vmatpush.bf16.msra.mxu0 %v1897
      %1934 = vmatpush.bf16.msra.mxu0 %v1895
      %1935 = vmatmul.bf16.gmra.mxu0 %v565
      %v1936 = vpop.f32.mrf.mxu0
      %v1937 = vadd.f32 %v1831, %v1936
      %v1938 = vpop.f32.mrf.mxu0
      %1939 = vdwg.mxu0
      %1940 = vmatpush.bf16.msra.mxu0 %v1910
      %1941 = vmatpush.bf16.msra.mxu0 %v1908
      %1942 = vmatpush.bf16.msra.mxu0 %v1906
      %1943 = vmatpush.bf16.msra.mxu0 %v1904
      %1944 = vmatpush.bf16.msra.mxu0 %v1902
      %1945 = vmatpush.bf16.msra.mxu0 %v1900
      %1946 = vmatpush.bf16.msra.mxu0 %v1898
      %1947 = vmatpush.bf16.msra.mxu0 %v1896
      %1948 = vmatmul.bf16.gmra.mxu0 %v565
      %v1949 = vpop.f32.mrf.mxu0
      %v1950 = vadd.f32 %v1844, %v1949
      %v1951 = vpop.f32.mrf.mxu0
      %1952 = vdwg.mxu0
      %v1954 = vshrl.u32 %v878, 16
      %v1956 = vrot.slane %v1954, 2
      %1958 = vmatpush.bf16.msra.mxu0 %v496
      %1959 = vmatpush.bf16.msra.mxu0 %v494
      %1960 = vmatpush.bf16.msra.mxu0 %v492
      %1961 = vmatpush.bf16.msra.mxu0 %v490
      %1962 = vmatpush.bf16.msra.mxu0 %v488
      %1963 = vmatpush.bf16.msra.mxu0 %v486
      %1964 = vmatpush.bf16.msra.mxu0 %v484
      %1965 = vmatpush.bf16.msra.mxu0 %v482
      %1966 = vmatmul.bf16.gmra.mxu0 %v1956
      %v1967 = vpop.f32.mrf.mxu0
      %v1968 = vadd.f32 0.0, %v1967
      %v1969 = vpop.f32.mrf.mxu0
      %1970 = vdwg.mxu0
      %1971 = vmatpush.bf16.msra.mxu0 %v497
      %1972 = vmatpush.bf16.msra.mxu0 %v495
      %1973 = vmatpush.bf16.msra.mxu0 %v493
      %1974 = vmatpush.bf16.msra.mxu0 %v491
      %1975 = vmatpush.bf16.msra.mxu0 %v489
      %1976 = vmatpush.bf16.msra.mxu0 %v487
      %1977 = vmatpush.bf16.msra.mxu0 %v485
      %1978 = vmatpush.bf16.msra.mxu0 %v483
      %1979 = vmatmul.bf16.gmra.mxu0 %v1956
      %v1980 = vpop.f32.mrf.mxu0
      %v1981 = vadd.f32 0.0, %v1980
      %v1982 = vpop.f32.mrf.mxu0
      %1983 = vdwg.mxu0
      %v1984 = vadd.f32 %v1937, %v1968
      %v1985 = vadd.f32 %v1950, %v1981
      %v1987 = vshrl.u32 %v1016, 16
      %v1989 = vrot.slane %v1987, 2
      %1991 = vmatpush.bf16.msra.mxu0 %v382
      %1992 = vmatpush.bf16.msra.mxu0 %v380
      %1993 = vmatpush.bf16.msra.mxu0 %v378
      %1994 = vmatpush.bf16.msra.mxu0 %v376
      %1995 = vmatpush.bf16.msra.mxu0 %v374
      %1996 = vmatpush.bf16.msra.mxu0 %v372
      %1997 = vmatpush.bf16.msra.mxu0 %v370
      %1998 = vmatpush.bf16.msra.mxu0 %v368
      %1999 = vmatmul.bf16.gmra.mxu0 %v1989
      %v2000 = vpop.f32.mrf.mxu0
      %v2001 = vadd.f32 0.0, %v2000
      %v2002 = vpop.f32.mrf.mxu0
      %2003 = vdwg.mxu0
      %2004 = vmatpush.bf16.msra.mxu0 %v383
      %2005 = vmatpush.bf16.msra.mxu0 %v381
      %2006 = vmatpush.bf16.msra.mxu0 %v379
      %2007 = vmatpush.bf16.msra.mxu0 %v377
      %2008 = vmatpush.bf16.msra.mxu0 %v375
      %2009 = vmatpush.bf16.msra.mxu0 %v373
      %2010 = vmatpush.bf16.msra.mxu0 %v371
      %2011 = vmatpush.bf16.msra.mxu0 %v369
      %2012 = vmatmul.bf16.gmra.mxu0 %v1989
      %v2013 = vpop.f32.mrf.mxu0
      %v2014 = vadd.f32 0.0, %v2013
      %v2015 = vpop.f32.mrf.mxu0
      %2016 = vdwg.mxu0
      %v2017 = vadd.f32 %v1984, %v2001
      %v2018 = vadd.f32 %v1985, %v2014
      %v2020 = vshrl.u32 %v1175, 16
      %v2022 = vrot.slane %v2020, 2
      %2024 = vmatpush.bf16.msra.mxu0 %v629
      %2025 = vmatpush.bf16.msra.mxu0 %v627
      %2026 = vmatpush.bf16.msra.mxu0 %v625
      %2027 = vmatpush.bf16.msra.mxu0 %v623
      %2028 = vmatpush.bf16.msra.mxu0 %v621
      %2029 = vmatpush.bf16.msra.mxu0 %v619
      %2030 = vmatpush.bf16.msra.mxu0 %v617
      %2031 = vmatpush.bf16.msra.mxu0 %v615
      %2032 = vmatmul.bf16.gmra.mxu0 %v2022
      %v2033 = vpop.f32.mrf.mxu0
      %v2034 = vadd.f32 0.0, %v2033
      %v2035 = vpop.f32.mrf.mxu0
      %2036 = vdwg.mxu0
      %2037 = vmatpush.bf16.msra.mxu0 %v630
      %2038 = vmatpush.bf16.msra.mxu0 %v628
      %2039 = vmatpush.bf16.msra.mxu0 %v626
      %2040 = vmatpush.bf16.msra.mxu0 %v624
      %2041 = vmatpush.bf16.msra.mxu0 %v622
      %2042 = vmatpush.bf16.msra.mxu0 %v620
      %2043 = vmatpush.bf16.msra.mxu0 %v618
      %2044 = vmatpush.bf16.msra.mxu0 %v616
      %2045 = vmatmul.bf16.gmra.mxu0 %v2022
      %v2046 = vpop.f32.mrf.mxu0
      %v2047 = vadd.f32 0.0, %v2046
      %v2048 = vpop.f32.mrf.mxu0
      %2049 = vdwg.mxu0
      %v2050 = vadd.f32 %v2017, %v2034
      %v2051 = vadd.f32 %v2018, %v2047
      %v2053 = vshrl.u32 %v1209, 16
      %v2055 = vrot.slane %v2053, 2
      %2057 = vmatpush.bf16.msra.mxu0 %v764
      %2058 = vmatpush.bf16.msra.mxu0 %v762
      %2059 = vmatpush.bf16.msra.mxu0 %v760
      %2060 = vmatpush.bf16.msra.mxu0 %v758
      %2061 = vmatpush.bf16.msra.mxu0 %v756
      %2062 = vmatpush.bf16.msra.mxu0 %v754
      %2063 = vmatpush.bf16.msra.mxu0 %v752
      %2064 = vmatpush.bf16.msra.mxu0 %v750
      %2065 = vmatmul.bf16.gmra.mxu0 %v2055
      %v2066 = vpop.f32.mrf.mxu0
      %v2067 = vadd.f32 0.0, %v2066
      %v2068 = vpop.f32.mrf.mxu0
      %2069 = vdwg.mxu0
      %2070 = vmatpush.bf16.msra.mxu0 %v765
      %2071 = vmatpush.bf16.msra.mxu0 %v763
      %2072 = vmatpush.bf16.msra.mxu0 %v761
      %2073 = vmatpush.bf16.msra.mxu0 %v759
      %2074 = vmatpush.bf16.msra.mxu0 %v757
      %2075 = vmatpush.bf16.msra.mxu0 %v755
      %2076 = vmatpush.bf16.msra.mxu0 %v753
      %2077 = vmatpush.bf16.msra.mxu0 %v751
      %2078 = vmatmul.bf16.gmra.mxu0 %v2055
      %v2079 = vpop.f32.mrf.mxu0
      %v2080 = vadd.f32 0.0, %v2079
      %v2081 = vpop.f32.mrf.mxu0
      %2082 = vdwg.mxu0
      %v2083 = vadd.f32 %v2050, %v2067
      %v2084 = vadd.f32 %v2051, %v2080
      %v2085 = vadd.f32 %v2083, %v812
      %v2086 = vadd.f32 %v2084, %v813
      %vm2087 = vcmp.gt.f32.partialorder %v2085, 0.0
      %vm2088 = vcmp.gt.f32.partialorder %v2086, 0.0
      %v2089 = vmul.f32 %v2085, 0.2
      %v2090 = vmul.f32 %v2086, 0.2
      %v2091 = vsel %vm2087, %v2085, %v2089
      %v2092 = vsel %vm2088, %v2086, %v2090
      %v2093 = vpack.c.bf16 %v2091, %v2091
      %v2094 = vpack.c.bf16 %v2092, %v2092
      %s2095 = scalar_lea.vmem %s3, 512
      %v2096 = vld [vmem:[%s2095] sm:$0xff]
      %v2097 = vld [vmem:[%s2095 + $0x8] sm:$0xff]
      %v2098 = vld [vmem:[%s2095 + $0x10] sm:$0xff]
      %v2099 = vld [vmem:[%s2095 + $0x18] sm:$0xff]
      %v2100 = vld [vmem:[%s2095 + $0x20] sm:$0xff]
      %v2101 = vld [vmem:[%s2095 + $0x28] sm:$0xff]
      %v2102 = vld [vmem:[%s2095 + $0x30] sm:$0xff]
      %v2103 = vld [vmem:[%s2095 + $0x38] sm:$0xff]
      %v2104 = vld [vmem:[%s2095 + $0x40] sm:$0xff]
      %v2105 = vld [vmem:[%s2095 + $0x48] sm:$0xff]
      %v2106 = vld [vmem:[%s2095 + $0x50] sm:$0xff]
      %v2107 = vld [vmem:[%s2095 + $0x58] sm:$0xff]
      %v2108 = vld [vmem:[%s2095 + $0x60] sm:$0xff]
      %v2109 = vld [vmem:[%s2095 + $0x68] sm:$0xff]
      %v2110 = vld [vmem:[%s2095 + $0x70] sm:$0xff]
      %v2111 = vld [vmem:[%s2095 + $0x78] sm:$0xff]
      %v2112 = vld [vmem:[%s2095 + $0x80] sm:$0xff]
      %v2113 = vld [vmem:[%s2095 + $0x88] sm:$0xff]
      %v2114 = vld [vmem:[%s2095 + $0x90] sm:$0xff]
      %v2115 = vld [vmem:[%s2095 + $0x98] sm:$0xff]
      %v2116 = vld [vmem:[%s2095 + $0xa0] sm:$0xff]
      %v2117 = vld [vmem:[%s2095 + $0xa8] sm:$0xff]
      %v2118 = vld [vmem:[%s2095 + $0xb0] sm:$0xff]
      %v2119 = vld [vmem:[%s2095 + $0xb8] sm:$0xff]
      %v2120 = vld [vmem:[%s2095 + $0xc0] sm:$0xff]
      %v2121 = vld [vmem:[%s2095 + $0xc8] sm:$0xff]
      %v2122 = vld [vmem:[%s2095 + $0xd0] sm:$0xff]
      %v2123 = vld [vmem:[%s2095 + $0xd8] sm:$0xff]
      %v2124 = vld [vmem:[%s2095 + $0xe0] sm:$0xff]
      %v2125 = vld [vmem:[%s2095 + $0xe8] sm:$0xff]
      %v2126 = vld [vmem:[%s2095 + $0xf0] sm:$0xff]
      %v2127 = vld [vmem:[%s2095 + $0xf8] sm:$0xff]
      %v2160 = vunpack.c.l.b16 %v2096
      %v2161 = vunpack.c.h.b16 %v2096
      %v2162 = vunpack.c.l.b16 %v2097
      %v2163 = vunpack.c.h.b16 %v2097
      %v2164 = vunpack.c.l.b16 %v2098
      %v2165 = vunpack.c.h.b16 %v2098
      %v2166 = vunpack.c.l.b16 %v2099
      %v2167 = vunpack.c.h.b16 %v2099
      %v2168 = vunpack.c.l.b16 %v2100
      %v2169 = vunpack.c.h.b16 %v2100
      %v2170 = vunpack.c.l.b16 %v2101
      %v2171 = vunpack.c.h.b16 %v2101
      %v2172 = vunpack.c.l.b16 %v2102
      %v2173 = vunpack.c.h.b16 %v2102
      %v2174 = vunpack.c.l.b16 %v2103
      %v2175 = vunpack.c.h.b16 %v2103
      %v2176 = vunpack.c.l.b16 %v2104
      %v2177 = vunpack.c.h.b16 %v2104
      %v2178 = vunpack.c.l.b16 %v2105
      %v2179 = vunpack.c.h.b16 %v2105
      %v2180 = vunpack.c.l.b16 %v2106
      %v2181 = vunpack.c.h.b16 %v2106
      %v2182 = vunpack.c.l.b16 %v2107
      %v2183 = vunpack.c.h.b16 %v2107
      %v2184 = vunpack.c.l.b16 %v2108
      %v2185 = vunpack.c.h.b16 %v2108
      %v2186 = vunpack.c.l.b16 %v2109
      %v2187 = vunpack.c.h.b16 %v2109
      %v2188 = vunpack.c.l.b16 %v2110
      %v2189 = vunpack.c.h.b16 %v2110
      %v2190 = vunpack.c.l.b16 %v2111
      %v2191 = vunpack.c.h.b16 %v2111
      %v2192 = vunpack.c.l.b16 %v2112
      %v2193 = vunpack.c.h.b16 %v2112
      %v2194 = vunpack.c.l.b16 %v2113
      %v2195 = vunpack.c.h.b16 %v2113
      %v2196 = vunpack.c.l.b16 %v2114
      %v2197 = vunpack.c.h.b16 %v2114
      %v2198 = vunpack.c.l.b16 %v2115
      %v2199 = vunpack.c.h.b16 %v2115
      %v2200 = vunpack.c.l.b16 %v2116
      %v2201 = vunpack.c.h.b16 %v2116
      %v2202 = vunpack.c.l.b16 %v2117
      %v2203 = vunpack.c.h.b16 %v2117
      %v2204 = vunpack.c.l.b16 %v2118
      %v2205 = vunpack.c.h.b16 %v2118
      %v2206 = vunpack.c.l.b16 %v2119
      %v2207 = vunpack.c.h.b16 %v2119
      %v2208 = vunpack.c.l.b16 %v2120
      %v2209 = vunpack.c.h.b16 %v2120
      %v2210 = vunpack.c.l.b16 %v2121
      %v2211 = vunpack.c.h.b16 %v2121
      %v2212 = vunpack.c.l.b16 %v2122
      %v2213 = vunpack.c.h.b16 %v2122
      %v2214 = vunpack.c.l.b16 %v2123
      %v2215 = vunpack.c.h.b16 %v2123
      %v2216 = vunpack.c.l.b16 %v2124
      %v2217 = vunpack.c.h.b16 %v2124
      %v2218 = vunpack.c.l.b16 %v2125
      %v2219 = vunpack.c.h.b16 %v2125
      %v2220 = vunpack.c.l.b16 %v2126
      %v2221 = vunpack.c.h.b16 %v2126
      %v2222 = vunpack.c.l.b16 %v2127
      %v2223 = vunpack.c.h.b16 %v2127
      %v2224 = vpack.c.b16 %v2162, %v2160
      %v2225 = vpack.c.b16 %v2163, %v2161
      %v2226 = vpack.c.b16 %v2166, %v2164
      %v2227 = vpack.c.b16 %v2167, %v2165
      %v2228 = vpack.c.b16 %v2170, %v2168
      %v2229 = vpack.c.b16 %v2171, %v2169
      %v2230 = vpack.c.b16 %v2174, %v2172
      %v2231 = vpack.c.b16 %v2175, %v2173
      %v2232 = vpack.c.b16 %v2178, %v2176
      %v2233 = vpack.c.b16 %v2179, %v2177
      %v2234 = vpack.c.b16 %v2182, %v2180
      %v2235 = vpack.c.b16 %v2183, %v2181
      %v2236 = vpack.c.b16 %v2186, %v2184
      %v2237 = vpack.c.b16 %v2187, %v2185
      %v2238 = vpack.c.b16 %v2190, %v2188
      %v2239 = vpack.c.b16 %v2191, %v2189
      %v2240 = vpack.c.b16 %v2194, %v2192
      %v2241 = vpack.c.b16 %v2195, %v2193
      %v2242 = vpack.c.b16 %v2198, %v2196
      %v2243 = vpack.c.b16 %v2199, %v2197
      %v2244 = vpack.c.b16 %v2202, %v2200
      %v2245 = vpack.c.b16 %v2203, %v2201
      %v2246 = vpack.c.b16 %v2206, %v2204
      %v2247 = vpack.c.b16 %v2207, %v2205
      %v2248 = vpack.c.b16 %v2210, %v2208
      %v2249 = vpack.c.b16 %v2211, %v2209
      %v2250 = vpack.c.b16 %v2214, %v2212
      %v2251 = vpack.c.b16 %v2215, %v2213
      %v2252 = vpack.c.b16 %v2218, %v2216
      %v2253 = vpack.c.b16 %v2219, %v2217
      %v2254 = vpack.c.b16 %v2222, %v2220
      %v2255 = vpack.c.b16 %v2223, %v2221
      %2288 = vmatpush.bf16.msra.mxu0 %v2238
      %2289 = vmatpush.bf16.msra.mxu0 %v2236
      %2290 = vmatpush.bf16.msra.mxu0 %v2234
      %2291 = vmatpush.bf16.msra.mxu0 %v2232
      %2292 = vmatpush.bf16.msra.mxu0 %v2230
      %2293 = vmatpush.bf16.msra.mxu0 %v2228
      %2294 = vmatpush.bf16.msra.mxu0 %v2226
      %2295 = vmatpush.bf16.msra.mxu0 %v2224
      %2296 = vmatmul.bf16.gmra.mxu0 %v2093
      %v2297 = vpop.f32.mrf.mxu0
      %v2298 = vadd.f32 0.0, %v2297
      %v2299 = vpop.f32.mrf.mxu0
      %2300 = vdwg.mxu0
      %2301 = vmatpush.bf16.msra.mxu0 %v2254
      %2302 = vmatpush.bf16.msra.mxu0 %v2252
      %2303 = vmatpush.bf16.msra.mxu0 %v2250
      %2304 = vmatpush.bf16.msra.mxu0 %v2248
      %2305 = vmatpush.bf16.msra.mxu0 %v2246
      %2306 = vmatpush.bf16.msra.mxu0 %v2244
      %2307 = vmatpush.bf16.msra.mxu0 %v2242
      %2308 = vmatpush.bf16.msra.mxu0 %v2240
      %2309 = vmatmul.bf16.gmra.mxu0 %v2094
      %v2310 = vpop.f32.mrf.mxu0
      %v2311 = vadd.f32 %v2298, %v2310
      %v2312 = vpop.f32.mrf.mxu0
      %2313 = vdwg.mxu0
      %2314 = vmatpush.bf16.msra.mxu0 %v2239
      %2315 = vmatpush.bf16.msra.mxu0 %v2237
      %2316 = vmatpush.bf16.msra.mxu0 %v2235
      %2317 = vmatpush.bf16.msra.mxu0 %v2233
      %2318 = vmatpush.bf16.msra.mxu0 %v2231
      %2319 = vmatpush.bf16.msra.mxu0 %v2229
      %2320 = vmatpush.bf16.msra.mxu0 %v2227
      %2321 = vmatpush.bf16.msra.mxu0 %v2225
      %2322 = vmatmul.bf16.gmra.mxu0 %v2093
      %v2323 = vpop.f32.mrf.mxu0
      %v2324 = vadd.f32 0.0, %v2323
      %v2325 = vpop.f32.mrf.mxu0
      %2326 = vdwg.mxu0
      %2327 = vmatpush.bf16.msra.mxu0 %v2255
      %2328 = vmatpush.bf16.msra.mxu0 %v2253
      %2329 = vmatpush.bf16.msra.mxu0 %v2251
      %2330 = vmatpush.bf16.msra.mxu0 %v2249
      %2331 = vmatpush.bf16.msra.mxu0 %v2247
      %2332 = vmatpush.bf16.msra.mxu0 %v2245
      %2333 = vmatpush.bf16.msra.mxu0 %v2243
      %2334 = vmatpush.bf16.msra.mxu0 %v2241
      %2335 = vmatmul.bf16.gmra.mxu0 %v2094
      %v2336 = vpop.f32.mrf.mxu0
      %v2337 = vadd.f32 %v2324, %v2336
      %v2338 = vpop.f32.mrf.mxu0
      %2339 = vdwg.mxu0
      %v2340 = vadd.f32 %v1678, %v2311
      %v2341 = vadd.f32 %v1704, %v2337
      %v2342 = vld [vmem:[%s1] sm:$0xff]
      %v2343 = vld [vmem:[%s1 + $0x8] sm:$0xff]
      %v2344 = vld [vmem:[%s1 + $0x10] sm:$0xff]
      %v2345 = vld [vmem:[%s1 + $0x18] sm:$0xff]
      %v2346 = vld [vmem:[%s1 + $0x20] sm:$0xff]
      %v2347 = vld [vmem:[%s1 + $0x28] sm:$0xff]
      %v2348 = vld [vmem:[%s1 + $0x30] sm:$0xff]
      %v2349 = vld [vmem:[%s1 + $0x38] sm:$0xff]
      %v2350 = vld [vmem:[%s1 + $0x40] sm:$0xff]
      %v2351 = vld [vmem:[%s1 + $0x48] sm:$0xff]
      %v2352 = vld [vmem:[%s1 + $0x50] sm:$0xff]
      %v2353 = vld [vmem:[%s1 + $0x58] sm:$0xff]
      %v2354 = vld [vmem:[%s1 + $0x60] sm:$0xff]
      %v2355 = vld [vmem:[%s1 + $0x68] sm:$0xff]
      %v2356 = vld [vmem:[%s1 + $0x70] sm:$0xff]
      %v2357 = vld [vmem:[%s1 + $0x78] sm:$0xff]
      %2358 = vmatpush.bf16.msra.mxu0 %v1909
      %2359 = vmatpush.bf16.msra.mxu0 %v1907
      %2360 = vmatpush.bf16.msra.mxu0 %v1905
      %2361 = vmatpush.bf16.msra.mxu0 %v1903
      %2362 = vmatpush.bf16.msra.mxu0 %v1901
      %2363 = vmatpush.bf16.msra.mxu0 %v1899
      %2364 = vmatpush.bf16.msra.mxu0 %v1897
      %2365 = vmatpush.bf16.msra.mxu0 %v1895
      %2366 = vmatmul.bf16.gmra.mxu0 %v1176
      %v2367 = vpop.f32.mrf.mxu0
      %v2368 = vadd.f32 0.0, %v2367
      %v2369 = vpop.f32.mrf.mxu0
      %2370 = vdwg.mxu0
      %2371 = vmatpush.bf16.msra.mxu0 %v1910
      %2372 = vmatpush.bf16.msra.mxu0 %v1908
      %2373 = vmatpush.bf16.msra.mxu0 %v1906
      %2374 = vmatpush.bf16.msra.mxu0 %v1904
      %2375 = vmatpush.bf16.msra.mxu0 %v1902
      %2376 = vmatpush.bf16.msra.mxu0 %v1900
      %2377 = vmatpush.bf16.msra.mxu0 %v1898
      %2378 = vmatpush.bf16.msra.mxu0 %v1896
      %2379 = vmatmul.bf16.gmra.mxu0 %v1176
      %v2380 = vpop.f32.mrf.mxu0
      %v2381 = vadd.f32 0.0, %v2380
      %v2382 = vpop.f32.mrf.mxu0
      %2383 = vdwg.mxu0
      %v2400 = vunpack.c.l.b16 %v2342
      %v2401 = vunpack.c.h.b16 %v2342
      %v2402 = vunpack.c.l.b16 %v2343
      %v2403 = vunpack.c.h.b16 %v2343
      %v2404 = vunpack.c.l.b16 %v2344
      %v2405 = vunpack.c.h.b16 %v2344
      %v2406 = vunpack.c.l.b16 %v2345
      %v2407 = vunpack.c.h.b16 %v2345
      %v2408 = vunpack.c.l.b16 %v2346
      %v2409 = vunpack.c.h.b16 %v2346
      %v2410 = vunpack.c.l.b16 %v2347
      %v2411 = vunpack.c.h.b16 %v2347
      %v2412 = vunpack.c.l.b16 %v2348
      %v2413 = vunpack.c.h.b16 %v2348
      %v2414 = vunpack.c.l.b16 %v2349
      %v2415 = vunpack.c.h.b16 %v2349
      %v2416 = vunpack.c.l.b16 %v2350
      %v2417 = vunpack.c.h.b16 %v2350
      %v2418 = vunpack.c.l.b16 %v2351
      %v2419 = vunpack.c.h.b16 %v2351
      %v2420 = vunpack.c.l.b16 %v2352
      %v2421 = vunpack.c.h.b16 %v2352
      %v2422 = vunpack.c.l.b16 %v2353
      %v2423 = vunpack.c.h.b16 %v2353
      %v2424 = vunpack.c.l.b16 %v2354
      %v2425 = vunpack.c.h.b16 %v2354
      %v2426 = vunpack.c.l.b16 %v2355
      %v2427 = vunpack.c.h.b16 %v2355
      %v2428 = vunpack.c.l.b16 %v2356
      %v2429 = vunpack.c.h.b16 %v2356
      %v2430 = vunpack.c.l.b16 %v2357
      %v2431 = vunpack.c.h.b16 %v2357
      %v2432 = vpack.c.b16 %v2402, %v2400
      %v2433 = vpack.c.b16 %v2403, %v2401
      %v2434 = vpack.c.b16 %v2406, %v2404
      %v2435 = vpack.c.b16 %v2407, %v2405
      %v2436 = vpack.c.b16 %v2410, %v2408
      %v2437 = vpack.c.b16 %v2411, %v2409
      %v2438 = vpack.c.b16 %v2414, %v2412
      %v2439 = vpack.c.b16 %v2415, %v2413
      %v2440 = vpack.c.b16 %v2418, %v2416
      %v2441 = vpack.c.b16 %v2419, %v2417
      %v2442 = vpack.c.b16 %v2422, %v2420
      %v2443 = vpack.c.b16 %v2423, %v2421
      %v2444 = vpack.c.b16 %v2426, %v2424
      %v2445 = vpack.c.b16 %v2427, %v2425
      %v2446 = vpack.c.b16 %v2430, %v2428
      %v2447 = vpack.c.b16 %v2431, %v2429
      %2464 = vmatpush.bf16.msra.mxu0 %v2446
      %2465 = vmatpush.bf16.msra.mxu0 %v2444
      %2466 = vmatpush.bf16.msra.mxu0 %v2442
      %2467 = vmatpush.bf16.msra.mxu0 %v2440
      %2468 = vmatpush.bf16.msra.mxu0 %v2438
      %2469 = vmatpush.bf16.msra.mxu0 %v2436
      %2470 = vmatpush.bf16.msra.mxu0 %v2434
      %2471 = vmatpush.bf16.msra.mxu0 %v2432
      %2472 = vmatmul.bf16.gmra.mxu0 %v700
      %v2473 = vpop.f32.mrf.mxu0
      %v2474 = vadd.f32 %v2368, %v2473
      %v2475 = vpop.f32.mrf.mxu0
      %2476 = vdwg.mxu0
      %2477 = vmatpush.bf16.msra.mxu0 %v2447
      %2478 = vmatpush.bf16.msra.mxu0 %v2445
      %2479 = vmatpush.bf16.msra.mxu0 %v2443
      %2480 = vmatpush.bf16.msra.mxu0 %v2441
      %2481 = vmatpush.bf16.msra.mxu0 %v2439
      %2482 = vmatpush.bf16.msra.mxu0 %v2437
      %2483 = vmatpush.bf16.msra.mxu0 %v2435
      %2484 = vmatpush.bf16.msra.mxu0 %v2433
      %2485 = vmatmul.bf16.gmra.mxu0 %v700
      %v2486 = vpop.f32.mrf.mxu0
      %v2487 = vadd.f32 %v2381, %v2486
      %v2488 = vpop.f32.mrf.mxu0
      %2489 = vdwg.mxu0
      %2490 = vmatpush.bf16.msra.mxu0 %v1803
      %2491 = vmatpush.bf16.msra.mxu0 %v1801
      %2492 = vmatpush.bf16.msra.mxu0 %v1799
      %2493 = vmatpush.bf16.msra.mxu0 %v1797
      %2494 = vmatpush.bf16.msra.mxu0 %v1795
      %2495 = vmatpush.bf16.msra.mxu0 %v1793
      %2496 = vmatpush.bf16.msra.mxu0 %v1791
      %2497 = vmatpush.bf16.msra.mxu0 %v1789
      %2498 = vmatmul.bf16.gmra.mxu0 %v1210
      %v2499 = vpop.f32.mrf.mxu0
      %v2500 = vadd.f32 0.0, %v2499
      %v2501 = vpop.f32.mrf.mxu0
      %2502 = vdwg.mxu0
      %2503 = vmatpush.bf16.msra.mxu0 %v1804
      %2504 = vmatpush.bf16.msra.mxu0 %v1802
      %2505 = vmatpush.bf16.msra.mxu0 %v1800
      %2506 = vmatpush.bf16.msra.mxu0 %v1798
      %2507 = vmatpush.bf16.msra.mxu0 %v1796
      %2508 = vmatpush.bf16.msra.mxu0 %v1794
      %2509 = vmatpush.bf16.msra.mxu0 %v1792
      %2510 = vmatpush.bf16.msra.mxu0 %v1790
      %2511 = vmatmul.bf16.gmra.mxu0 %v1210
      %v2512 = vpop.f32.mrf.mxu0
      %v2513 = vadd.f32 0.0, %v2512
      %v2514 = vpop.f32.mrf.mxu0
      %2515 = vdwg.mxu0
      %v2516 = vadd.f32 %v2474, %v2500
      %v2517 = vadd.f32 %v2487, %v2513
      %2518 = vmatpush.bf16.msra.mxu0 %v969
      %2519 = vmatpush.bf16.msra.mxu0 %v967
      %2520 = vmatpush.bf16.msra.mxu0 %v965
      %2521 = vmatpush.bf16.msra.mxu0 %v963
      %2522 = vmatpush.bf16.msra.mxu0 %v961
      %2523 = vmatpush.bf16.msra.mxu0 %v959
      %2524 = vmatpush.bf16.msra.mxu0 %v957
      %2525 = vmatpush.bf16.msra.mxu0 %v955
      %2526 = vmatmul.bf16.gmra.mxu0 %v1989
      %v2527 = vpop.f32.mrf.mxu0
      %v2528 = vadd.f32 0.0, %v2527
      %v2529 = vpop.f32.mrf.mxu0
      %2530 = vdwg.mxu0
      %2531 = vmatpush.bf16.msra.mxu0 %v970
      %2532 = vmatpush.bf16.msra.mxu0 %v968
      %2533 = vmatpush.bf16.msra.mxu0 %v966
      %2534 = vmatpush.bf16.msra.mxu0 %v964
      %2535 = vmatpush.bf16.msra.mxu0 %v962
      %2536 = vmatpush.bf16.msra.mxu0 %v960
      %2537 = vmatpush.bf16.msra.mxu0 %v958
      %2538 = vmatpush.bf16.msra.mxu0 %v956
      %2539 = vmatmul.bf16.gmra.mxu0 %v1989
      %v2540 = vpop.f32.mrf.mxu0
      %v2541 = vadd.f32 0.0, %v2540
      %v2542 = vpop.f32.mrf.mxu0
      %2543 = vdwg.mxu0
      %v2544 = vadd.f32 %v2516, %v2528
      %v2545 = vadd.f32 %v2517, %v2541
      %v2546 = vld [vmem:[%s271] sm:$0x8]
      %v2548 = vunpack.c.l.b16 %v2546
      %v2549 = vpack.c.b16 %v2548, %v2548
      %v2550 = vrot.slane %v2549, 3
      %2552 = vmatpush.bf16.msra.mxu0 %v496
      %2553 = vmatpush.bf16.msra.mxu0 %v494
      %2554 = vmatpush.bf16.msra.mxu0 %v492
      %2555 = vmatpush.bf16.msra.mxu0 %v490
      %2556 = vmatpush.bf16.msra.mxu0 %v488
      %2557 = vmatpush.bf16.msra.mxu0 %v486
      %2558 = vmatpush.bf16.msra.mxu0 %v484
      %2559 = vmatpush.bf16.msra.mxu0 %v482
      %2560 = vmatmul.bf16.gmra.mxu0 %v2550
      %v2561 = vpop.f32.mrf.mxu0
      %v2562 = vadd.f32 0.0, %v2561
      %v2563 = vpop.f32.mrf.mxu0
      %2564 = vdwg.mxu0
      %2565 = vmatpush.bf16.msra.mxu0 %v497
      %2566 = vmatpush.bf16.msra.mxu0 %v495
      %2567 = vmatpush.bf16.msra.mxu0 %v493
      %2568 = vmatpush.bf16.msra.mxu0 %v491
      %2569 = vmatpush.bf16.msra.mxu0 %v489
      %2570 = vmatpush.bf16.msra.mxu0 %v487
      %2571 = vmatpush.bf16.msra.mxu0 %v485
      %2572 = vmatpush.bf16.msra.mxu0 %v483
      %2573 = vmatmul.bf16.gmra.mxu0 %v2550
      %v2574 = vpop.f32.mrf.mxu0
      %v2575 = vadd.f32 0.0, %v2574
      %v2576 = vpop.f32.mrf.mxu0
      %2577 = vdwg.mxu0
      %v2578 = vadd.f32 %v2544, %v2562
      %v2579 = vadd.f32 %v2545, %v2575
      %v2580 = vld [vmem:[%s293] sm:$0x8]
      %v2582 = vunpack.c.l.b16 %v2580
      %v2583 = vpack.c.b16 %v2582, %v2582
      %v2584 = vrot.slane %v2583, 3
      %2586 = vmatpush.bf16.msra.mxu0 %v382
      %2587 = vmatpush.bf16.msra.mxu0 %v380
      %2588 = vmatpush.bf16.msra.mxu0 %v378
      %2589 = vmatpush.bf16.msra.mxu0 %v376
      %2590 = vmatpush.bf16.msra.mxu0 %v374
      %2591 = vmatpush.bf16.msra.mxu0 %v372
      %2592 = vmatpush.bf16.msra.mxu0 %v370
      %2593 = vmatpush.bf16.msra.mxu0 %v368
      %2594 = vmatmul.bf16.gmra.mxu0 %v2584
      %v2595 = vpop.f32.mrf.mxu0
      %v2596 = vadd.f32 0.0, %v2595
      %v2597 = vpop.f32.mrf.mxu0
      %2598 = vdwg.mxu0
      %2599 = vmatpush.bf16.msra.mxu0 %v383
      %2600 = vmatpush.bf16.msra.mxu0 %v381
      %2601 = vmatpush.bf16.msra.mxu0 %v379
      %2602 = vmatpush.bf16.msra.mxu0 %v377
      %2603 = vmatpush.bf16.msra.mxu0 %v375
      %2604 = vmatpush.bf16.msra.mxu0 %v373
      %2605 = vmatpush.bf16.msra.mxu0 %v371
      %2606 = vmatpush.bf16.msra.mxu0 %v369
      %2607 = vmatmul.bf16.gmra.mxu0 %v2584
      %v2608 = vpop.f32.mrf.mxu0
      %v2609 = vadd.f32 0.0, %v2608
      %v2610 = vpop.f32.mrf.mxu0
      %2611 = vdwg.mxu0
      %v2612 = vadd.f32 %v2578, %v2596
      %v2613 = vadd.f32 %v2579, %v2609
      %2614 = vmatpush.bf16.msra.mxu0 %v1126
      %2615 = vmatpush.bf16.msra.mxu0 %v1124
      %2616 = vmatpush.bf16.msra.mxu0 %v1122
      %2617 = vmatpush.bf16.msra.mxu0 %v1120
      %2618 = vmatpush.bf16.msra.mxu0 %v1118
      %2619 = vmatpush.bf16.msra.mxu0 %v1116
      %2620 = vmatpush.bf16.msra.mxu0 %v1114
      %2621 = vmatpush.bf16.msra.mxu0 %v1112
      %2622 = vmatmul.bf16.gmra.mxu0 %v2055
      %v2623 = vpop.f32.mrf.mxu0
      %v2624 = vadd.f32 0.0, %v2623
      %v2625 = vpop.f32.mrf.mxu0
      %2626 = vdwg.mxu0
      %2627 = vmatpush.bf16.msra.mxu0 %v1127
      %2628 = vmatpush.bf16.msra.mxu0 %v1125
      %2629 = vmatpush.bf16.msra.mxu0 %v1123
      %2630 = vmatpush.bf16.msra.mxu0 %v1121
      %2631 = vmatpush.bf16.msra.mxu0 %v1119
      %2632 = vmatpush.bf16.msra.mxu0 %v1117
      %2633 = vmatpush.bf16.msra.mxu0 %v1115
      %2634 = vmatpush.bf16.msra.mxu0 %v1113
      %2635 = vmatmul.bf16.gmra.mxu0 %v2055
      %v2636 = vpop.f32.mrf.mxu0
      %v2637 = vadd.f32 0.0, %v2636
      %v2638 = vpop.f32.mrf.mxu0
      %2639 = vdwg.mxu0
      %v2640 = vadd.f32 %v2612, %v2624
      %v2641 = vadd.f32 %v2613, %v2637
      %v2642 = vld [vmem:[%s540] sm:$0x8]
      %v2644 = vunpack.c.l.b16 %v2642
      %v2645 = vpack.c.b16 %v2644, %v2644
      %v2646 = vrot.slane %v2645, 3
      %2648 = vmatpush.bf16.msra.mxu0 %v629
      %2649 = vmatpush.bf16.msra.mxu0 %v627
      %2650 = vmatpush.bf16.msra.mxu0 %v625
      %2651 = vmatpush.bf16.msra.mxu0 %v623
      %2652 = vmatpush.bf16.msra.mxu0 %v621
      %2653 = vmatpush.bf16.msra.mxu0 %v619
      %2654 = vmatpush.bf16.msra.mxu0 %v617
      %2655 = vmatpush.bf16.msra.mxu0 %v615
      %2656 = vmatmul.bf16.gmra.mxu0 %v2646
      %v2657 = vpop.f32.mrf.mxu0
      %v2658 = vadd.f32 0.0, %v2657
      %v2659 = vpop.f32.mrf.mxu0
      %2660 = vdwg.mxu0
      %2661 = vmatpush.bf16.msra.mxu0 %v630
      %2662 = vmatpush.bf16.msra.mxu0 %v628
      %2663 = vmatpush.bf16.msra.mxu0 %v626
      %2664 = vmatpush.bf16.msra.mxu0 %v624
      %2665 = vmatpush.bf16.msra.mxu0 %v622
      %2666 = vmatpush.bf16.msra.mxu0 %v620
      %2667 = vmatpush.bf16.msra.mxu0 %v618
      %2668 = vmatpush.bf16.msra.mxu0 %v616
      %2669 = vmatmul.bf16.gmra.mxu0 %v2646
      %v2670 = vpop.f32.mrf.mxu0
      %v2671 = vadd.f32 0.0, %v2670
      %v2672 = vpop.f32.mrf.mxu0
      %2673 = vdwg.mxu0
      %v2674 = vadd.f32 %v2640, %v2658
      %v2675 = vadd.f32 %v2641, %v2671
      %v2676 = vld [vmem:[%s675] sm:$0x8]
      %v2678 = vunpack.c.l.b16 %v2676
      %v2679 = vpack.c.b16 %v2678, %v2678
      %v2680 = vrot.slane %v2679, 3
      %2682 = vmatpush.bf16.msra.mxu0 %v764
      %2683 = vmatpush.bf16.msra.mxu0 %v762
      %2684 = vmatpush.bf16.msra.mxu0 %v760
      %2685 = vmatpush.bf16.msra.mxu0 %v758
      %2686 = vmatpush.bf16.msra.mxu0 %v756
      %2687 = vmatpush.bf16.msra.mxu0 %v754
      %2688 = vmatpush.bf16.msra.mxu0 %v752
      %2689 = vmatpush.bf16.msra.mxu0 %v750
      %2690 = vmatmul.bf16.gmra.mxu0 %v2680
      %v2691 = vpop.f32.mrf.mxu0
      %v2692 = vadd.f32 0.0, %v2691
      %v2693 = vpop.f32.mrf.mxu0
      %2694 = vdwg.mxu0
      %2695 = vmatpush.bf16.msra.mxu0 %v765
      %2696 = vmatpush.bf16.msra.mxu0 %v763
      %2697 = vmatpush.bf16.msra.mxu0 %v761
      %2698 = vmatpush.bf16.msra.mxu0 %v759
      %2699 = vmatpush.bf16.msra.mxu0 %v757
      %2700 = vmatpush.bf16.msra.mxu0 %v755
      %2701 = vmatpush.bf16.msra.mxu0 %v753
      %2702 = vmatpush.bf16.msra.mxu0 %v751
      %2703 = vmatmul.bf16.gmra.mxu0 %v2680
      %v2704 = vpop.f32.mrf.mxu0
      %v2705 = vadd.f32 0.0, %v2704
      %v2706 = vpop.f32.mrf.mxu0
      %2707 = vdwg.mxu0
      %v2708 = vadd.f32 %v2674, %v2692
      %v2709 = vadd.f32 %v2675, %v2705
      %v2710 = vadd.f32 %v2708, %v812
      %v2711 = vadd.f32 %v2709, %v813
      %vm2712 = vcmp.gt.f32.partialorder %v2710, 0.0
      %vm2713 = vcmp.gt.f32.partialorder %v2711, 0.0
      %v2714 = vmul.f32 %v2710, 0.2
      %v2715 = vmul.f32 %v2711, 0.2
      %v2716 = vsel %vm2712, %v2710, %v2714
      %v2717 = vsel %vm2713, %v2711, %v2715
      %v2718 = vpack.c.bf16 %v2716, %v2716
      %v2719 = vpack.c.bf16 %v2717, %v2717
      %s2720 = scalar_lea.vmem %s3, 768
      %v2721 = vld [vmem:[%s2720] sm:$0xff]
      %v2722 = vld [vmem:[%s2720 + $0x8] sm:$0xff]
      %v2723 = vld [vmem:[%s2720 + $0x10] sm:$0xff]
      %v2724 = vld [vmem:[%s2720 + $0x18] sm:$0xff]
      %v2725 = vld [vmem:[%s2720 + $0x20] sm:$0xff]
      %v2726 = vld [vmem:[%s2720 + $0x28] sm:$0xff]
      %v2727 = vld [vmem:[%s2720 + $0x30] sm:$0xff]
      %v2728 = vld [vmem:[%s2720 + $0x38] sm:$0xff]
      %v2729 = vld [vmem:[%s2720 + $0x40] sm:$0xff]
      %v2730 = vld [vmem:[%s2720 + $0x48] sm:$0xff]
      %v2731 = vld [vmem:[%s2720 + $0x50] sm:$0xff]
      %v2732 = vld [vmem:[%s2720 + $0x58] sm:$0xff]
      %v2733 = vld [vmem:[%s2720 + $0x60] sm:$0xff]
      %v2734 = vld [vmem:[%s2720 + $0x68] sm:$0xff]
      %v2735 = vld [vmem:[%s2720 + $0x70] sm:$0xff]
      %v2736 = vld [vmem:[%s2720 + $0x78] sm:$0xff]
      %v2737 = vld [vmem:[%s2720 + $0x80] sm:$0xff]
      %v2738 = vld [vmem:[%s2720 + $0x88] sm:$0xff]
      %v2739 = vld [vmem:[%s2720 + $0x90] sm:$0xff]
      %v2740 = vld [vmem:[%s2720 + $0x98] sm:$0xff]
      %v2741 = vld [vmem:[%s2720 + $0xa0] sm:$0xff]
      %v2742 = vld [vmem:[%s2720 + $0xa8] sm:$0xff]
      %v2743 = vld [vmem:[%s2720 + $0xb0] sm:$0xff]
      %v2744 = vld [vmem:[%s2720 + $0xb8] sm:$0xff]
      %v2745 = vld [vmem:[%s2720 + $0xc0] sm:$0xff]
      %v2746 = vld [vmem:[%s2720 + $0xc8] sm:$0xff]
      %v2747 = vld [vmem:[%s2720 + $0xd0] sm:$0xff]
      %v2748 = vld [vmem:[%s2720 + $0xd8] sm:$0xff]
      %v2749 = vld [vmem:[%s2720 + $0xe0] sm:$0xff]
      %v2750 = vld [vmem:[%s2720 + $0xe8] sm:$0xff]
      %v2751 = vld [vmem:[%s2720 + $0xf0] sm:$0xff]
      %v2752 = vld [vmem:[%s2720 + $0xf8] sm:$0xff]
      %v2785 = vunpack.c.l.b16 %v2721
      %v2786 = vunpack.c.h.b16 %v2721
      %v2787 = vunpack.c.l.b16 %v2722
      %v2788 = vunpack.c.h.b16 %v2722
      %v2789 = vunpack.c.l.b16 %v2723
      %v2790 = vunpack.c.h.b16 %v2723
      %v2791 = vunpack.c.l.b16 %v2724
      %v2792 = vunpack.c.h.b16 %v2724
      %v2793 = vunpack.c.l.b16 %v2725
      %v2794 = vunpack.c.h.b16 %v2725
      %v2795 = vunpack.c.l.b16 %v2726
      %v2796 = vunpack.c.h.b16 %v2726
      %v2797 = vunpack.c.l.b16 %v2727
      %v2798 = vunpack.c.h.b16 %v2727
      %v2799 = vunpack.c.l.b16 %v2728
      %v2800 = vunpack.c.h.b16 %v2728
      %v2801 = vunpack.c.l.b16 %v2729
      %v2802 = vunpack.c.h.b16 %v2729
      %v2803 = vunpack.c.l.b16 %v2730
      %v2804 = vunpack.c.h.b16 %v2730
      %v2805 = vunpack.c.l.b16 %v2731
      %v2806 = vunpack.c.h.b16 %v2731
      %v2807 = vunpack.c.l.b16 %v2732
      %v2808 = vunpack.c.h.b16 %v2732
      %v2809 = vunpack.c.l.b16 %v2733
      %v2810 = vunpack.c.h.b16 %v2733
      %v2811 = vunpack.c.l.b16 %v2734
      %v2812 = vunpack.c.h.b16 %v2734
      %v2813 = vunpack.c.l.b16 %v2735
      %v2814 = vunpack.c.h.b16 %v2735
      %v2815 = vunpack.c.l.b16 %v2736
      %v2816 = vunpack.c.h.b16 %v2736
      %v2817 = vunpack.c.l.b16 %v2737
      %v2818 = vunpack.c.h.b16 %v2737
      %v2819 = vunpack.c.l.b16 %v2738
      %v2820 = vunpack.c.h.b16 %v2738
      %v2821 = vunpack.c.l.b16 %v2739
      %v2822 = vunpack.c.h.b16 %v2739
      %v2823 = vunpack.c.l.b16 %v2740
      %v2824 = vunpack.c.h.b16 %v2740
      %v2825 = vunpack.c.l.b16 %v2741
      %v2826 = vunpack.c.h.b16 %v2741
      %v2827 = vunpack.c.l.b16 %v2742
      %v2828 = vunpack.c.h.b16 %v2742
      %v2829 = vunpack.c.l.b16 %v2743
      %v2830 = vunpack.c.h.b16 %v2743
      %v2831 = vunpack.c.l.b16 %v2744
      %v2832 = vunpack.c.h.b16 %v2744
      %v2833 = vunpack.c.l.b16 %v2745
      %v2834 = vunpack.c.h.b16 %v2745
      %v2835 = vunpack.c.l.b16 %v2746
      %v2836 = vunpack.c.h.b16 %v2746
      %v2837 = vunpack.c.l.b16 %v2747
      %v2838 = vunpack.c.h.b16 %v2747
      %v2839 = vunpack.c.l.b16 %v2748
      %v2840 = vunpack.c.h.b16 %v2748
      %v2841 = vunpack.c.l.b16 %v2749
      %v2842 = vunpack.c.h.b16 %v2749
      %v2843 = vunpack.c.l.b16 %v2750
      %v2844 = vunpack.c.h.b16 %v2750
      %v2845 = vunpack.c.l.b16 %v2751
      %v2846 = vunpack.c.h.b16 %v2751
      %v2847 = vunpack.c.l.b16 %v2752
      %v2848 = vunpack.c.h.b16 %v2752
      %v2849 = vpack.c.b16 %v2787, %v2785
      %v2850 = vpack.c.b16 %v2788, %v2786
      %v2851 = vpack.c.b16 %v2791, %v2789
      %v2852 = vpack.c.b16 %v2792, %v2790
      %v2853 = vpack.c.b16 %v2795, %v2793
      %v2854 = vpack.c.b16 %v2796, %v2794
      %v2855 = vpack.c.b16 %v2799, %v2797
      %v2856 = vpack.c.b16 %v2800, %v2798
      %v2857 = vpack.c.b16 %v2803, %v2801
      %v2858 = vpack.c.b16 %v2804, %v2802
      %v2859 = vpack.c.b16 %v2807, %v2805
      %v2860 = vpack.c.b16 %v2808, %v2806
      %v2861 = vpack.c.b16 %v2811, %v2809
      %v2862 = vpack.c.b16 %v2812, %v2810
      %v2863 = vpack.c.b16 %v2815, %v2813
      %v2864 = vpack.c.b16 %v2816, %v2814
      %v2865 = vpack.c.b16 %v2819, %v2817
      %v2866 = vpack.c.b16 %v2820, %v2818
      %v2867 = vpack.c.b16 %v2823, %v2821
      %v2868 = vpack.c.b16 %v2824, %v2822
      %v2869 = vpack.c.b16 %v2827, %v2825
      %v2870 = vpack.c.b16 %v2828, %v2826
      %v2871 = vpack.c.b16 %v2831, %v2829
      %v2872 = vpack.c.b16 %v2832, %v2830
      %v2873 = vpack.c.b16 %v2835, %v2833
      %v2874 = vpack.c.b16 %v2836, %v2834
      %v2875 = vpack.c.b16 %v2839, %v2837
      %v2876 = vpack.c.b16 %v2840, %v2838
      %v2877 = vpack.c.b16 %v2843, %v2841
      %v2878 = vpack.c.b16 %v2844, %v2842
      %v2879 = vpack.c.b16 %v2847, %v2845
      %v2880 = vpack.c.b16 %v2848, %v2846
      %2913 = vmatpush.bf16.msra.mxu0 %v2863
      %2914 = vmatpush.bf16.msra.mxu0 %v2861
      %2915 = vmatpush.bf16.msra.mxu0 %v2859
      %2916 = vmatpush.bf16.msra.mxu0 %v2857
      %2917 = vmatpush.bf16.msra.mxu0 %v2855
      %2918 = vmatpush.bf16.msra.mxu0 %v2853
      %2919 = vmatpush.bf16.msra.mxu0 %v2851
      %2920 = vmatpush.bf16.msra.mxu0 %v2849
      %2921 = vmatmul.bf16.gmra.mxu0 %v2718
      %v2922 = vpop.f32.mrf.mxu0
      %v2923 = vadd.f32 0.0, %v2922
      %v2924 = vpop.f32.mrf.mxu0
      %2925 = vdwg.mxu0
      %2926 = vmatpush.bf16.msra.mxu0 %v2879
      %2927 = vmatpush.bf16.msra.mxu0 %v2877
      %2928 = vmatpush.bf16.msra.mxu0 %v2875
      %2929 = vmatpush.bf16.msra.mxu0 %v2873
      %2930 = vmatpush.bf16.msra.mxu0 %v2871
      %2931 = vmatpush.bf16.msra.mxu0 %v2869
      %2932 = vmatpush.bf16.msra.mxu0 %v2867
      %2933 = vmatpush.bf16.msra.mxu0 %v2865
      %2934 = vmatmul.bf16.gmra.mxu0 %v2719
      %v2935 = vpop.f32.mrf.mxu0
      %v2936 = vadd.f32 %v2923, %v2935
      %v2937 = vpop.f32.mrf.mxu0
      %2938 = vdwg.mxu0
      %2939 = vmatpush.bf16.msra.mxu0 %v2864
      %2940 = vmatpush.bf16.msra.mxu0 %v2862
      %2941 = vmatpush.bf16.msra.mxu0 %v2860
      %2942 = vmatpush.bf16.msra.mxu0 %v2858
      %2943 = vmatpush.bf16.msra.mxu0 %v2856
      %2944 = vmatpush.bf16.msra.mxu0 %v2854
      %2945 = vmatpush.bf16.msra.mxu0 %v2852
      %2946 = vmatpush.bf16.msra.mxu0 %v2850
      %2947 = vmatmul.bf16.gmra.mxu0 %v2718
      %v2948 = vpop.f32.mrf.mxu0
      %v2949 = vadd.f32 0.0, %v2948
      %v2950 = vpop.f32.mrf.mxu0
      %2951 = vdwg.mxu0
      %2952 = vmatpush.bf16.msra.mxu0 %v2880
      %2953 = vmatpush.bf16.msra.mxu0 %v2878
      %2954 = vmatpush.bf16.msra.mxu0 %v2876
      %2955 = vmatpush.bf16.msra.mxu0 %v2874
      %2956 = vmatpush.bf16.msra.mxu0 %v2872
      %2957 = vmatpush.bf16.msra.mxu0 %v2870
      %2958 = vmatpush.bf16.msra.mxu0 %v2868
      %2959 = vmatpush.bf16.msra.mxu0 %v2866
      %2960 = vmatmul.bf16.gmra.mxu0 %v2719
      %v2961 = vpop.f32.mrf.mxu0
      %v2962 = vadd.f32 %v2949, %v2961
      %v2963 = vpop.f32.mrf.mxu0
      %2964 = vdwg.mxu0
      %v2965 = vadd.f32 %v2340, %v2936
      %v2966 = vadd.f32 %v2341, %v2962
      %v2967 = vld [vmem:[%s4] sm:$0x3]
      %v2969 = vperm.slane %v2967, 0
      %v2970 = vperm.slane %v2967, 1
      %v2973 = vadd.f32 %v2965, %v2969
      %v2974 = vadd.f32 %v2966, %v2970
      %v2975 = vmax.f32 %v2973, 0.0
      %v2976 = vpack.c.bf16 %v2975, %v2975
      %v2977 = vlaneseq
      %v2978 = vand.u32 %v2977, 127
      %v2979 = vadd.s32 %v2978, 128
      %vm2980 = vcmp.eq.s32.totalorder %v2978, 128
      %vm2981 = vcmp.eq.s32.totalorder %v2979, 128
      %v2982 = vsel %vm2980, %v2973, 0.0
      %v2983 = vsel %vm2981, %v2974, 0.0
      %vm2984 = vcmask 1040384
      %v2985 = vsel %vm2984, %v2982, 0.0
      %v2986 = vsel %vm2984, %v2983, 0.0
      %v2987 = vadd.f32 %v2985, %v2986
      %2988 = vadd.xlane.f32.xlu0 %v2987
      %v2989 = vpop.xlane.xlu0 %2988
      %v2990 = vld [vmem:[%s5] sm:$0xf]
      %v2991 = vld [vmem:[%s5 + $0x4] sm:$0xf]
      %v2992 = vld [vmem:[%s5 + $0x8] sm:$0xf]
      %v2993 = vld [vmem:[%s5 + $0xc] sm:$0xf]
      %v2994 = vld [vmem:[%s5 + $0x10] sm:$0xf]
      %v2995 = vld [vmem:[%s5 + $0x14] sm:$0xf]
      %v2996 = vld [vmem:[%s5 + $0x18] sm:$0xf]
      %v2997 = vld [vmem:[%s5 + $0x1c] sm:$0xf]
      %v2998 = vld [vmem:[%s5 + $0x20] sm:$0xf]
      %v2999 = vld [vmem:[%s5 + $0x24] sm:$0xf]
      %v3000 = vld [vmem:[%s5 + $0x28] sm:$0xf]
      %v3001 = vld [vmem:[%s5 + $0x2c] sm:$0xf]
      %v3002 = vld [vmem:[%s5 + $0x30] sm:$0xf]
      %v3003 = vld [vmem:[%s5 + $0x34] sm:$0xf]
      %v3004 = vld [vmem:[%s5 + $0x38] sm:$0xf]
      %v3005 = vld [vmem:[%s5 + $0x3c] sm:$0xf]
      %v3006 = vld [vmem:[%s6] sm:$0x1]
      %v3023 = vunpack.c.l.b16 %v2990
      %v3024 = vunpack.c.l.b16 %v2991
      %v3025 = vunpack.c.l.b16 %v2992
      %v3026 = vunpack.c.l.b16 %v2993
      %v3027 = vunpack.c.l.b16 %v2994
      %v3028 = vunpack.c.l.b16 %v2995
      %v3029 = vunpack.c.l.b16 %v2996
      %v3030 = vunpack.c.l.b16 %v2997
      %v3031 = vunpack.c.l.b16 %v2998
      %v3032 = vunpack.c.l.b16 %v2999
      %v3033 = vunpack.c.l.b16 %v3000
      %v3034 = vunpack.c.l.b16 %v3001
      %v3035 = vunpack.c.l.b16 %v3002
      %v3036 = vunpack.c.l.b16 %v3003
      %v3037 = vunpack.c.l.b16 %v3004
      %v3038 = vunpack.c.l.b16 %v3005
      %v3039 = vpack.c.b16 %v3024, %v3023
      %v3040 = vpack.c.b16 %v3026, %v3025
      %v3041 = vpack.c.b16 %v3028, %v3027
      %v3042 = vpack.c.b16 %v3030, %v3029
      %v3043 = vpack.c.b16 %v3032, %v3031
      %v3044 = vpack.c.b16 %v3034, %v3033
      %v3045 = vpack.c.b16 %v3036, %v3035
      %v3046 = vpack.c.b16 %v3038, %v3037
      %3055 = vmatpush.bf16.msra.mxu0 %v3046
      %3056 = vmatpush.bf16.msra.mxu0 %v3045
      %3057 = vmatpush.bf16.msra.mxu0 %v3044
      %3058 = vmatpush.bf16.msra.mxu0 %v3043
      %3059 = vmatpush.bf16.msra.mxu0 %v3042
      %3060 = vmatpush.bf16.msra.mxu0 %v3041
      %3061 = vmatpush.bf16.msra.mxu0 %v3040
      %3062 = vmatpush.bf16.msra.mxu0 %v3039
      %3063 = vmatmul.bf16.gmra.mxu0 %v2976
      %v3064 = vpop.f32.mrf.mxu0
      %v3065 = vadd.f32 %v3006, %v3064
      %v3066 = vpop.f32.mrf.mxu0
      %3067 = vdwg.mxu0
      %vm3068 = vcmp.eq.s32.totalorder %v2978, 10
      %v3069 = vsel %vm3068, 1, 0
      %v3070 = vcvt.s32.f32 %v3069
      %v3071 = vmul.f32 %v2989, %v3070
      %v3072 = vadd.f32 %v3065, %v3071
      %3073 = vst [vmem:[%s274] sm:$0x1] %v3072
      %p3074 = scmp.lt.s32.totalorder %s18, 1
      %s3075 = scalar_select %p3074, %s18, 1
      %s3076 = scalar_lea.vmem %s7, %s3075
      // Predicated region
      $region49: #{discriminator_forward.7} parent=47 // pred_check
        %p3077 = pneg %p188
      $region50: #{discriminator_forward.7} parent=47 // pred_check_branch
        %3079 = sbr.rel (%p3077) target = $region52
      $region51: #{discriminator_forward.7} parent=47 // pred_region
        _
      $region52: #{discriminator_forward.7} parent=47 // pred_fallthru
        _
    $region48: #{discriminator_forward.7} parent=5 // pred_fallthru
      _
    %p3080 = scmp.le.s32.totalorder 2, %s13
    // Predicated region
    $region53: #{discriminator_forward.7} parent=5 // pred_check
      %p3081 = pneg %p3080
    $region54: #{discriminator_forward.7} parent=5 // pred_check_branch
      %3083 = sbr.rel (%p3081) target = $region56
    $region55: #{discriminator_forward.7} parent=5 // pred_region
      %s3084 = ssub.s32 %s13, 2
      // Predicated region
      $region57: #{discriminator_forward.7} parent=55 // pred_check
        %p3085 = pneg %p194
      $region58: #{discriminator_forward.7} parent=55 // pred_check_branch
        %3087 = sbr.rel (%p3085) target = $region60
      $region59: #{discriminator_forward.7} parent=55 // pred_region
        %p3088 = scmp.lt.s32.totalorder %s19, 1
        %s3089 = scalar_select %p3088, %s19, 1
        %s3090 = scalar_lea.vmem %s7, %s3089
      $region60: #{discriminator_forward.7} parent=55 // pred_fallthru
        _
    $region56: #{discriminator_forward.7} parent=5 // pred_fallthru
      _
  $region6: #{discriminator_forward.7} parent=0 // loop_footer
    %s17 = sadd.s32 1, %s13
  $region7: #{discriminator_forward.7} parent=0 // loop_footer_branch
    %12 = sbr.rel target = $region3
  $region8: #{discriminator_forward.7} parent=0 // loop_exit
    _

</llo_original>
